<compile_context>
chip_gen: v7x
topology: tpu7x:2x2x1
jax: 0.10.0
libtpu: 0.0.40
codegen_flags: <defaults>
</compile_context>

<pallas_src>
import numpy as np

import jax
import jax.numpy as jnp
from jax import lax
from jax.experimental import pallas as pl
from jax.experimental.pallas import tpu as pltpu


# ------------------------------- fused kernel --------------------------------

def _netc_kernel(p1_ref, w1_ref, b1_ref, s2_ref, t2_ref,
                 w2_ref, b2_ref, w3_ref, w6_ref, b6_ref, w9_ref, b9_ref,
                 o_ref):
    f32, bf16 = jnp.float32, jnp.bfloat16
    tb = p1_ref.shape[1]

    # conv1 (1->32, 3x3/s2/p1) grouped over the 4 output parities of each 2x2
    # output block -> one (49*tb, 36) @ (36, 128) GEMM.  Rows are (block_pos,
    # batch) so the batch stays the tile-aligned minor row group throughout.
    p1 = p1_ref[...].reshape(49 * tb, 36)
    h1 = jnp.dot(p1, w1_ref[...], preferred_element_type=f32)          # (49tb,128)
    h1 = jnp.maximum(h1 + b1_ref[...], 0.0)                            # +bias, relu1
    h1 = jnp.maximum(h1 * s2_ref[...] + t2_ref[...], 0.0)              # bn2(eval), relu
    h1 = h1.astype(bf16).reshape(7, 7, tb, 128)

    # Zero row/col on the top/left for the "-1" taps of the stride-2 conv2.
    h1 = jnp.concatenate([jnp.zeros((1, 7, tb, 128), bf16), h1], axis=0)
    h1 = jnp.concatenate([jnp.zeros((8, 1, tb, 128), bf16), h1], axis=1)  # (8,8,tb,128)

    # conv2 (32->64, bn3 folded into weights/bias): each of the 9 taps is a
    # static (parity, shifted-window) slice; stack them into one im2col GEMM.
    par = ((1, 0), (0, 1), (1, 1))      # kernel offset -> (parity, padded offset)
    taps = []
    for di in range(3):
        pe, ro = par[di]
        for dj in range(3):
            pw, co = par[dj]
            g = pe * 2 + pw
            taps.append(h1[ro:ro + 7, co:co + 7, :, g * 32:(g + 1) * 32])
    patches2 = jnp.concatenate(taps, axis=-1).reshape(49 * tb, 288)
    h2 = jnp.dot(patches2, w2_ref[...], preferred_element_type=f32)     # (49tb,64)
    h2 = jnp.maximum(h2 + b2_ref[...], 0.0)                             # bn3 shift, relu
    h2 = h2.astype(bf16).reshape(7, 7, tb, 64)

    # conv3 (64->64): pad 7x7 -> 9x9, gather the stride-2 taps as single-row /
    # single-column slices, one (16*tb, 576) GEMM.  No bias / activation.
    zr = jnp.zeros((1, 7, tb, 64), bf16)
    h2 = jnp.concatenate([zr, h2, zr], axis=0)                          # (9,7,tb,64)
    zc = jnp.zeros((9, 1, tb, 64), bf16)
    h2 = jnp.concatenate([zc, h2, zc], axis=1)                          # (9,9,tb,64)
    taps = []
    for di in range(3):
        rows = jnp.concatenate(
            [h2[di + 2 * k:di + 2 * k + 1] for k in range(4)], axis=0)  # (4,9,tb,64)
        for dj in range(3):
            taps.append(jnp.concatenate(
                [rows[:, dj + 2 * k:dj + 2 * k + 1] for k in range(4)], axis=1))
    patches3 = jnp.concatenate(taps, axis=-1).reshape(16 * tb, 576)
    h3 = jnp.dot(patches3, w3_ref[...], preferred_element_type=f32)     # (16tb,64)
    h3 = h3.astype(bf16)

    # linear6 + relu7.  h3 rows are (pixel p, batch), so the NCHW flatten is
    # contracted as 16 accumulated GEMMs against the matching 64-row strip of
    # the (K-permuted) lin6 weight; the first strip initializes the accumulator.
    h4 = jnp.dot(h3[0:tb, :], w6_ref[0:64, :], preferred_element_type=f32)
    for p in range(1, 16):
        h4 = h4 + jnp.dot(h3[p * tb:(p + 1) * tb, :],
                          w6_ref[p * 64:(p + 1) * 64, :],
                          preferred_element_type=f32)
    h4 = jnp.maximum(h4 + b6_ref[...], 0.0).astype(bf16)                # (tb,512)
    # TODO(synk): dropout8(p=0.3) is the identity in eval mode; training-mode dropout not implemented.

    # linear9, 10 logits padded to 128 lanes (unmasked lane-dense store).
    o_ref[...] = (jnp.dot(h4, w9_ref[...], preferred_element_type=f32)
                  + b9_ref[...]).astype(o_ref.dtype)


# --------------------------- one-time parameter prep --------------------------

def prepare_params(params, eps=1e-5):
    """Hoisted weight re-packing / eval-mode BN folding (runs once)."""
    f32, bf16 = jnp.float32, jnp.bfloat16

    # conv1: OIHW (32,1,3,3) -> (t=di*3+dj, o), then block-diagonal over the 4
    # output parity groups g=(oh%2)*2+(ow%2) so one GEMM emits all 4 phases of
    # a 2x2 output block across 128 lanes.
    w1t = jnp.transpose(params["conv1_w"], (2, 3, 1, 0)).reshape(9, 32)
    w1blk = jnp.zeros((36, 128), f32)
    for g in range(4):
        w1blk = w1blk.at[g * 9:(g + 1) * 9, g * 32:(g + 1) * 32].set(w1t)
    w1blk = w1blk.astype(bf16)
    b1 = jnp.tile(params["conv1_b"], 4).reshape(1, 128).astype(f32)

    # bn2 (eval): applied after relu1, tiled across the 4 parity groups.
    s2 = params["bn2_gamma"] / jnp.sqrt(params["bn2_var"] + eps)
    t2 = params["bn2_beta"] - params["bn2_mean"] * s2
    s2t = jnp.tile(s2, 4).reshape(1, 128).astype(f32)
    t2t = jnp.tile(t2, 4).reshape(1, 128).astype(f32)

    # bn3 (eval) folded exactly into conv2 (no nonlinearity in between, conv2
    # has no bias): scale output channels, absorb the shift as a bias.
    s3 = params["bn3_gamma"] / jnp.sqrt(params["bn3_var"] + eps)
    t3 = params["bn3_beta"] - params["bn3_mean"] * s3
    w2 = jnp.transpose(params["conv2_w"], (2, 3, 1, 0)).reshape(288, 64)
    w2 = (w2 * s3[None, :]).astype(bf16)
    b2 = t3.reshape(1, 64).astype(f32)

    w3 = jnp.transpose(params["conv3_w"], (2, 3, 1, 0)).reshape(576, 64).astype(bf16)

    # linear6: PyTorch flattens NCHW (k_torch = c*16 + p); the kernel's conv3
    # output is p-major (k_mine = p*64 + c).  Permute lin6's K axis once.
    perm = np.array([(k % 64) * 16 + (k // 64) for k in range(1024)], np.int32)
    w6 = params["lin6_w"][:, perm].T.astype(bf16)                       # (1024,512)
    b6 = params["lin6_b"].reshape(1, 512).astype(f32)

    # linear9: pad the 10 output lanes to 128; slice in the wrapper.
    w9 = jnp.zeros((512, 128), f32).at[:, :10].set(params["lin9_w"].T).astype(bf16)
    b9 = jnp.zeros((1, 128), f32).at[0, :10].set(params["lin9_b"])

    return {"w1": w1blk, "b1": b1, "s2": s2t, "t2": t2t,
            "w2": w2, "b2": b2, "w3": w3,
            "w6": w6, "b6": b6, "w9": w9, "b9": b9}


# -------------------------------- forward pass --------------------------------

def _conv1_patches(x):
    """Grouped conv1 im2col -> (49, B, 36).

    rows  : i*7 + j           (within-parity 7x7 position of the 2x2 output block)
    lanes : g*9 + (di*3+dj)   g = (oh%2)*2 + (ow%2) = output parity group
    """
    B = x.shape[0]
    xp = jnp.pad(x[:, 0], ((0, 0), (1, 1), (1, 1)))                    # (B,30,30)
    cols = []
    for pe in range(2):
        for pw in range(2):
            for di in range(3):
                for dj in range(3):
                    t = xp[:, di:di + 28:2, dj:dj + 28:2]              # tap for all 14x14 outputs
                    cols.append(t[:, pe::2, pw::2].reshape(B, 49))     # restrict to parity (pe,pw)
    p = jnp.stack(cols, axis=-1)                                       # (B,49,36)
    return jnp.transpose(p, (1, 0, 2)).astype(jnp.bfloat16)            # (49,B,36)


def _round_up(n, m):
    return ((n + m - 1) // m) * m


def net_c_mnist_forward(prep, x_nchw):
    B = x_nchw.shape[0]
    p1 = _conv1_patches(x_nchw)                                        # (49,B,36)

    tb = min(32, _round_up(B, 16))          # 32 for real batches; keeps v7x VMEM safe
    BP = _round_up(B, tb)
    if BP != B:
        p1 = jnp.pad(p1, ((0, 0), (0, BP - B), (0, 0)))

    logits = pl.pallas_call(
        _netc_kernel,
        out_shape=jax.ShapeDtypeStruct((BP, 128), jnp.float32),
        grid=(BP // tb,),
        in_specs=[
            pl.BlockSpec((49, tb, 36), lambda i: (0, i, 0)),           # conv1 patches
            pl.BlockSpec((36, 128), lambda i: (0, 0)),                 # w1 (grouped)
            pl.BlockSpec((1, 128), lambda i: (0, 0)),                  # b1
            pl.BlockSpec((1, 128), lambda i: (0, 0)),                  # bn2 scale
            pl.BlockSpec((1, 128), lambda i: (0, 0)),                  # bn2 shift
            pl.BlockSpec((288, 64), lambda i: (0, 0)),                 # w2 (+bn3)
            pl.BlockSpec((1, 64), lambda i: (0, 0)),                   # b2 (bn3 shift)
            pl.BlockSpec((576, 64), lambda i: (0, 0)),                 # w3
            pl.BlockSpec((1024, 512), lambda i: (0, 0)),               # w6 (K-permuted)
            pl.BlockSpec((1, 512), lambda i: (0, 0)),                  # b6
            pl.BlockSpec((512, 128), lambda i: (0, 0)),                # w9 (padded)
            pl.BlockSpec((1, 128), lambda i: (0, 0)),                  # b9 (padded)
        ],
        out_specs=pl.BlockSpec((tb, 128), lambda i: (i, 0)),
        compiler_params=pltpu.CompilerParams(
            dimension_semantics=("parallel",),
            vmem_limit_bytes=32 * 1024 * 1024),
    )(p1, prep["w1"], prep["b1"], prep["s2"], prep["t2"],
      prep["w2"], prep["b2"], prep["w3"],
      prep["w6"], prep["b6"], prep["w9"], prep["b9"])

    return logits[:B, :10]


# --------------------------- reference (pure JAX) ------------------------------

def _conv_ref(x, w, b, stride, pad):
    out = lax.conv_general_dilated(
        x, w, (stride, stride), [(pad, pad), (pad, pad)],
        dimension_numbers=("NCHW", "OIHW", "NCHW"))
    if b is not None:
        out = out + b[None, :, None, None]
    return out


def _bn_ref(x, gamma, beta, mean, var, eps=1e-5):
    inv = gamma / jnp.sqrt(var + eps)
    return x * inv[None, :, None, None] + (beta - mean * inv)[None, :, None, None]


def reference_forward(params, x):
    h = jnp.maximum(_conv_ref(x, params["conv1_w"], params["conv1_b"], 2, 1), 0.0)
    h = _conv_ref(
        jnp.maximum(_bn_ref(h, params["bn2_gamma"], params["bn2_beta"],
                            params["bn2_mean"], params["bn2_var"]), 0.0),
        params["conv2_w"], None, 2, 1)
    h = _conv_ref(
        jnp.maximum(_bn_ref(h, params["bn3_gamma"], params["bn3_beta"],
                            params["bn3_mean"], params["bn3_var"]), 0.0),
        params["conv3_w"], None, 2, 1)
    h = h.reshape(h.shape[0], -1)
    h = jnp.maximum(h @ params["lin6_w"].T + params["lin6_b"], 0.0)
    return h @ params["lin9_w"].T + params["lin9_b"]


# ------------------------------------ main -------------------------------------

def init_params(key):
    ks = jax.random.split(key, 16)
    f32 = jnp.float32
    return {
        "conv1_w": 0.1 * jax.random.normal(ks[0], (32, 1, 3, 3), f32),
        "conv1_b": 0.1 * jax.random.normal(ks[1], (32,), f32),
        "bn2_gamma": 1.0 + 0.1 * jax.random.normal(ks[2], (32,), f32),
        "bn2_beta": 0.1 * jax.random.normal(ks[3], (32,), f32),
        "bn2_mean": 0.1 * jax.random.normal(ks[4], (32,), f32),
        "bn2_var": 0.5 + jax.random.uniform(ks[5], (32,), f32),
        "conv2_w": 0.1 * jax.random.normal(ks[6], (64, 32, 3, 3), f32),
        "bn3_gamma": 1.0 + 0.1 * jax.random.normal(ks[7], (64,), f32),
        "bn3_beta": 0.1 * jax.random.normal(ks[8], (64,), f32),
        "bn3_mean": 0.1 * jax.random.normal(ks[9], (64,), f32),
        "bn3_var": 0.5 + jax.random.uniform(ks[10], (64,), f32),
        "conv3_w": 0.1 * jax.random.normal(ks[11], (64, 64, 3, 3), f32),
        "lin6_w": 0.05 * jax.random.normal(ks[12], (512, 64 * 4 * 4), f32),
        "lin6_b": 0.05 * jax.random.normal(ks[13], (512,), f32),
        "lin9_w": 0.05 * jax.random.normal(ks[14], (10, 512), f32),
        "lin9_b": 0.05 * jax.random.normal(ks[15], (10,), f32),
    }


if __name__ == "__main__":
    key = jax.random.PRNGKey(0)
    pkey, xkey = jax.random.split(key)
    params = init_params(pkey)
    prep = prepare_params(params)      # one-time repacking, off the hot path

    # MNIST geometry is required by linear6 (64*4*4): 28 -> 14 -> 7 -> 4.
    x = jax.random.normal(xkey, (2, 1, 28, 28), jnp.float32)

    fwd = jax.jit(net_c_mnist_forward)
    out = jax.block_until_ready(fwd(prep, x))
    ref = jax.block_until_ready(reference_forward(params, x))

    assert out.shape == (2, 10), out.shape
    err = float(jnp.max(jnp.abs(out - ref)))
    # bf16 MXU operands (f32 accumulation) across 5 layers -> relaxed tolerance.
    assert jnp.allclose(out, ref, atol=5e-2, rtol=5e-2), f"max abs err {err}"
    print("KERNEL_OK")
</pallas_src>

<mosaic_0001>
module attributes {stable_mosaic.version = 11 : i64} {
  func.func @_netc_kernel(%arg0: i32, %arg1: memref<49x16x36xbf16, #tpu.memory_space<vmem>>, %arg2: memref<36x128xbf16, #tpu.memory_space<vmem>>, %arg3: memref<1x128xf32, #tpu.memory_space<vmem>>, %arg4: memref<1x128xf32, #tpu.memory_space<vmem>>, %arg5: memref<1x128xf32, #tpu.memory_space<vmem>>, %arg6: memref<288x64xbf16, #tpu.memory_space<vmem>>, %arg7: memref<1x64xf32, #tpu.memory_space<vmem>>, %arg8: memref<576x64xbf16, #tpu.memory_space<vmem>>, %arg9: memref<1024x512xbf16, #tpu.memory_space<vmem>>, %arg10: memref<1x512xf32, #tpu.memory_space<vmem>>, %arg11: memref<512x128xbf16, #tpu.memory_space<vmem>>, %arg12: memref<1x128xf32, #tpu.memory_space<vmem>>, %arg13: memref<16x128xf32, #tpu.memory_space<vmem>>) attributes {dimension_semantics = [#tpu.dimension_semantics<parallel>], iteration_bounds = array<i64: 1>, scalar_prefetch = 0 : i64, scratch_operands = 0 : i64, tpu.core_type = #tpu.core_type<tc>, window_params = [{transform_indices = @transform_0, window_bounds = array<i64: 49, 16, 36>}, {pipeline_mode = #tpu.pipeline_mode<synchronous>, transform_indices = @transform_1, window_bounds = array<i64: 36, 128>}, {pipeline_mode = #tpu.pipeline_mode<synchronous>, transform_indices = @transform_2, window_bounds = array<i64: 1, 128>}, {pipeline_mode = #tpu.pipeline_mode<synchronous>, transform_indices = @transform_3, window_bounds = array<i64: 1, 128>}, {pipeline_mode = #tpu.pipeline_mode<synchronous>, transform_indices = @transform_4, window_bounds = array<i64: 1, 128>}, {pipeline_mode = #tpu.pipeline_mode<synchronous>, transform_indices = @transform_5, window_bounds = array<i64: 288, 64>}, {pipeline_mode = #tpu.pipeline_mode<synchronous>, transform_indices = @transform_6, window_bounds = array<i64: 1, 64>}, {pipeline_mode = #tpu.pipeline_mode<synchronous>, transform_indices = @transform_7, window_bounds = array<i64: 576, 64>}, {pipeline_mode = #tpu.pipeline_mode<synchronous>, transform_indices = @transform_8, window_bounds = array<i64: 1024, 512>}, {pipeline_mode = #tpu.pipeline_mode<synchronous>, transform_indices = @transform_9, window_bounds = array<i64: 1, 512>}, {pipeline_mode = #tpu.pipeline_mode<synchronous>, transform_indices = @transform_10, window_bounds = array<i64: 512, 128>}, {pipeline_mode = #tpu.pipeline_mode<synchronous>, transform_indices = @transform_11, window_bounds = array<i64: 1, 128>}, {transform_indices = @transform_12, window_bounds = array<i64: 16, 128>}]} {
    %c0 = arith.constant 0 : index
    %c0_0 = arith.constant 0 : index
    %c0_1 = arith.constant 0 : index
    %0 = vector.load %arg1[%c0, %c0_0, %c0_1] : memref<49x16x36xbf16, #tpu.memory_space<vmem>>, vector<49x16x36xbf16>
    %1 = vector.shape_cast %0 : vector<49x16x36xbf16> to vector<784x36xbf16>
    %c0_2 = arith.constant 0 : index
    %c0_3 = arith.constant 0 : index
    %2 = vector.load %arg2[%c0_2, %c0_3] : memref<36x128xbf16, #tpu.memory_space<vmem>>, vector<36x128xbf16>
    %cst = arith.constant dense<0.000000e+00> : vector<784x128xf32>
    %3 = tpu.matmul %1, %2, %cst {dimension_numbers = #tpu.dot_dimension_numbers<[1], [0], [0], [1], [0, 0, 1, 1], [], []>} : vector<784x36xbf16>, vector<36x128xbf16>, vector<784x128xf32> -> vector<784x128xf32>
    %c0_4 = arith.constant 0 : index
    %c0_5 = arith.constant 0 : index
    %4 = vector.load %arg3[%c0_4, %c0_5] : memref<1x128xf32, #tpu.memory_space<vmem>>, vector<1x128xf32>
    %5 = vector.broadcast %4 : vector<1x128xf32> to vector<784x128xf32>
    %6 = arith.addf %3, %5 : vector<784x128xf32>
    %cst_6 = arith.constant 0.000000e+00 : f32
    %7 = vector.broadcast %cst_6 : f32 to vector<784x128xf32>
    %8 = arith.maximumf %6, %7 : vector<784x128xf32>
    %c0_7 = arith.constant 0 : index
    %c0_8 = arith.constant 0 : index
    %9 = vector.load %arg4[%c0_7, %c0_8] : memref<1x128xf32, #tpu.memory_space<vmem>>, vector<1x128xf32>
    %10 = vector.broadcast %9 : vector<1x128xf32> to vector<784x128xf32>
    %11 = arith.mulf %8, %10 : vector<784x128xf32>
    %c0_9 = arith.constant 0 : index
    %c0_10 = arith.constant 0 : index
    %12 = vector.load %arg5[%c0_9, %c0_10] : memref<1x128xf32, #tpu.memory_space<vmem>>, vector<1x128xf32>
    %13 = vector.broadcast %12 : vector<1x128xf32> to vector<784x128xf32>
    %14 = arith.addf %11, %13 : vector<784x128xf32>
    %cst_11 = arith.constant 0.000000e+00 : f32
    %15 = vector.broadcast %cst_11 : f32 to vector<784x128xf32>
    %16 = arith.maximumf %14, %15 : vector<784x128xf32>
    %17 = arith.truncf %16 : vector<784x128xf32> to vector<784x128xbf16>
    %18 = vector.shape_cast %17 : vector<784x128xbf16> to vector<7x7x16x128xbf16>
    %cst_12 = arith.constant 0.000000e+00 : bf16
    %19 = vector.broadcast %cst_12 : bf16 to vector<1x7x16x128xbf16>
    %20 = tpu.concatenate %19, %18 in 0 : vector<1x7x16x128xbf16>, vector<7x7x16x128xbf16> -> vector<8x7x16x128xbf16>
    %cst_13 = arith.constant 0.000000e+00 : bf16
    %21 = vector.broadcast %cst_13 : bf16 to vector<8x1x16x128xbf16>
    %22 = tpu.concatenate %21, %20 in 1 : vector<8x1x16x128xbf16>, vector<8x7x16x128xbf16> -> vector<8x8x16x128xbf16>
    %23 = vector.extract_strided_slice %22 {offsets = [0, 0, 0, 96], sizes = [7, 7, 16, 32], strides = [1, 1, 1, 1]} : vector<8x8x16x128xbf16> to vector<7x7x16x32xbf16>
    %24 = vector.extract_strided_slice %22 {offsets = [0, 1, 0, 64], sizes = [7, 7, 16, 32], strides = [1, 1, 1, 1]} : vector<8x8x16x128xbf16> to vector<7x7x16x32xbf16>
    %25 = vector.extract_strided_slice %22 {offsets = [0, 1, 0, 96], sizes = [7, 7, 16, 32], strides = [1, 1, 1, 1]} : vector<8x8x16x128xbf16> to vector<7x7x16x32xbf16>
    %26 = vector.extract_strided_slice %22 {offsets = [1, 0, 0, 32], sizes = [7, 7, 16, 32], strides = [1, 1, 1, 1]} : vector<8x8x16x128xbf16> to vector<7x7x16x32xbf16>
    %27 = vector.extract_strided_slice %22 {offsets = [1, 1, 0, 0], sizes = [7, 7, 16, 32], strides = [1, 1, 1, 1]} : vector<8x8x16x128xbf16> to vector<7x7x16x32xbf16>
    %28 = vector.extract_strided_slice %22 {offsets = [1, 1, 0, 32], sizes = [7, 7, 16, 32], strides = [1, 1, 1, 1]} : vector<8x8x16x128xbf16> to vector<7x7x16x32xbf16>
    %29 = vector.extract_strided_slice %22 {offsets = [1, 0, 0, 96], sizes = [7, 7, 16, 32], strides = [1, 1, 1, 1]} : vector<8x8x16x128xbf16> to vector<7x7x16x32xbf16>
    %30 = vector.extract_strided_slice %22 {offsets = [1, 1, 0, 64], sizes = [7, 7, 16, 32], strides = [1, 1, 1, 1]} : vector<8x8x16x128xbf16> to vector<7x7x16x32xbf16>
    %31 = vector.extract_strided_slice %22 {offsets = [1, 1, 0, 96], sizes = [7, 7, 16, 32], strides = [1, 1, 1, 1]} : vector<8x8x16x128xbf16> to vector<7x7x16x32xbf16>
    %32 = tpu.concatenate %23, %24, %25, %26, %27, %28, %29, %30, %31 in 3 : vector<7x7x16x32xbf16>, vector<7x7x16x32xbf16>, vector<7x7x16x32xbf16>, vector<7x7x16x32xbf16>, vector<7x7x16x32xbf16>, vector<7x7x16x32xbf16>, vector<7x7x16x32xbf16>, vector<7x7x16x32xbf16>, vector<7x7x16x32xbf16> -> vector<7x7x16x288xbf16>
    %33 = vector.shape_cast %32 : vector<7x7x16x288xbf16> to vector<784x288xbf16>
    %c0_14 = arith.constant 0 : index
    %c0_15 = arith.constant 0 : index
    %34 = vector.load %arg6[%c0_14, %c0_15] : memref<288x64xbf16, #tpu.memory_space<vmem>>, vector<288x64xbf16>
    %cst_16 = arith.constant dense<0.000000e+00> : vector<784x64xf32>
    %35 = tpu.matmul %33, %34, %cst_16 {dimension_numbers = #tpu.dot_dimension_numbers<[1], [0], [0], [1], [0, 0, 1, 1], [], []>} : vector<784x288xbf16>, vector<288x64xbf16>, vector<784x64xf32> -> vector<784x64xf32>
    %c0_17 = arith.constant 0 : index
    %c0_18 = arith.constant 0 : index
    %36 = vector.load %arg7[%c0_17, %c0_18] : memref<1x64xf32, #tpu.memory_space<vmem>>, vector<1x64xf32>
    %37 = vector.broadcast %36 : vector<1x64xf32> to vector<784x64xf32>
    %38 = arith.addf %35, %37 : vector<784x64xf32>
    %cst_19 = arith.constant 0.000000e+00 : f32
    %39 = vector.broadcast %cst_19 : f32 to vector<784x64xf32>
    %40 = arith.maximumf %38, %39 : vector<784x64xf32>
    %41 = arith.truncf %40 : vector<784x64xf32> to vector<784x64xbf16>
    %42 = vector.shape_cast %41 : vector<784x64xbf16> to vector<7x7x16x64xbf16>
    %cst_20 = arith.constant 0.000000e+00 : bf16
    %43 = vector.broadcast %cst_20 : bf16 to vector<1x7x16x64xbf16>
    %44 = tpu.concatenate %43, %42, %43 in 0 : vector<1x7x16x64xbf16>, vector<7x7x16x64xbf16>, vector<1x7x16x64xbf16> -> vector<9x7x16x64xbf16>
    %cst_21 = arith.constant 0.000000e+00 : bf16
    %45 = vector.broadcast %cst_21 : bf16 to vector<9x1x16x64xbf16>
    %46 = tpu.concatenate %45, %44, %45 in 1 : vector<9x1x16x64xbf16>, vector<9x7x16x64xbf16>, vector<9x1x16x64xbf16> -> vector<9x9x16x64xbf16>
    %47 = vector.extract_strided_slice %46 {offsets = [0, 0, 0, 0], sizes = [1, 9, 16, 64], strides = [1, 1, 1, 1]} : vector<9x9x16x64xbf16> to vector<1x9x16x64xbf16>
    %48 = vector.extract_strided_slice %46 {offsets = [2, 0, 0, 0], sizes = [1, 9, 16, 64], strides = [1, 1, 1, 1]} : vector<9x9x16x64xbf16> to vector<1x9x16x64xbf16>
    %49 = vector.extract_strided_slice %46 {offsets = [4, 0, 0, 0], sizes = [1, 9, 16, 64], strides = [1, 1, 1, 1]} : vector<9x9x16x64xbf16> to vector<1x9x16x64xbf16>
    %50 = vector.extract_strided_slice %46 {offsets = [6, 0, 0, 0], sizes = [1, 9, 16, 64], strides = [1, 1, 1, 1]} : vector<9x9x16x64xbf16> to vector<1x9x16x64xbf16>
    %51 = tpu.concatenate %47, %48, %49, %50 in 0 : vector<1x9x16x64xbf16>, vector<1x9x16x64xbf16>, vector<1x9x16x64xbf16>, vector<1x9x16x64xbf16> -> vector<4x9x16x64xbf16>
    %52 = vector.extract_strided_slice %51 {offsets = [0, 0, 0, 0], sizes = [4, 1, 16, 64], strides = [1, 1, 1, 1]} : vector<4x9x16x64xbf16> to vector<4x1x16x64xbf16>
    %53 = vector.extract_strided_slice %51 {offsets = [0, 2, 0, 0], sizes = [4, 1, 16, 64], strides = [1, 1, 1, 1]} : vector<4x9x16x64xbf16> to vector<4x1x16x64xbf16>
    %54 = vector.extract_strided_slice %51 {offsets = [0, 4, 0, 0], sizes = [4, 1, 16, 64], strides = [1, 1, 1, 1]} : vector<4x9x16x64xbf16> to vector<4x1x16x64xbf16>
    %55 = vector.extract_strided_slice %51 {offsets = [0, 6, 0, 0], sizes = [4, 1, 16, 64], strides = [1, 1, 1, 1]} : vector<4x9x16x64xbf16> to vector<4x1x16x64xbf16>
    %56 = tpu.concatenate %52, %53, %54, %55 in 1 : vector<4x1x16x64xbf16>, vector<4x1x16x64xbf16>, vector<4x1x16x64xbf16>, vector<4x1x16x64xbf16> -> vector<4x4x16x64xbf16>
    %57 = vector.extract_strided_slice %51 {offsets = [0, 1, 0, 0], sizes = [4, 1, 16, 64], strides = [1, 1, 1, 1]} : vector<4x9x16x64xbf16> to vector<4x1x16x64xbf16>
    %58 = vector.extract_strided_slice %51 {offsets = [0, 3, 0, 0], sizes = [4, 1, 16, 64], strides = [1, 1, 1, 1]} : vector<4x9x16x64xbf16> to vector<4x1x16x64xbf16>
    %59 = vector.extract_strided_slice %51 {offsets = [0, 5, 0, 0], sizes = [4, 1, 16, 64], strides = [1, 1, 1, 1]} : vector<4x9x16x64xbf16> to vector<4x1x16x64xbf16>
    %60 = vector.extract_strided_slice %51 {offsets = [0, 7, 0, 0], sizes = [4, 1, 16, 64], strides = [1, 1, 1, 1]} : vector<4x9x16x64xbf16> to vector<4x1x16x64xbf16>
    %61 = tpu.concatenate %57, %58, %59, %60 in 1 : vector<4x1x16x64xbf16>, vector<4x1x16x64xbf16>, vector<4x1x16x64xbf16>, vector<4x1x16x64xbf16> -> vector<4x4x16x64xbf16>
    %62 = vector.extract_strided_slice %51 {offsets = [0, 2, 0, 0], sizes = [4, 1, 16, 64], strides = [1, 1, 1, 1]} : vector<4x9x16x64xbf16> to vector<4x1x16x64xbf16>
    %63 = vector.extract_strided_slice %51 {offsets = [0, 4, 0, 0], sizes = [4, 1, 16, 64], strides = [1, 1, 1, 1]} : vector<4x9x16x64xbf16> to vector<4x1x16x64xbf16>
    %64 = vector.extract_strided_slice %51 {offsets = [0, 6, 0, 0], sizes = [4, 1, 16, 64], strides = [1, 1, 1, 1]} : vector<4x9x16x64xbf16> to vector<4x1x16x64xbf16>
    %65 = vector.extract_strided_slice %51 {offsets = [0, 8, 0, 0], sizes = [4, 1, 16, 64], strides = [1, 1, 1, 1]} : vector<4x9x16x64xbf16> to vector<4x1x16x64xbf16>
    %66 = tpu.concatenate %62, %63, %64, %65 in 1 : vector<4x1x16x64xbf16>, vector<4x1x16x64xbf16>, vector<4x1x16x64xbf16>, vector<4x1x16x64xbf16> -> vector<4x4x16x64xbf16>
    %67 = vector.extract_strided_slice %46 {offsets = [1, 0, 0, 0], sizes = [1, 9, 16, 64], strides = [1, 1, 1, 1]} : vector<9x9x16x64xbf16> to vector<1x9x16x64xbf16>
    %68 = vector.extract_strided_slice %46 {offsets = [3, 0, 0, 0], sizes = [1, 9, 16, 64], strides = [1, 1, 1, 1]} : vector<9x9x16x64xbf16> to vector<1x9x16x64xbf16>
    %69 = vector.extract_strided_slice %46 {offsets = [5, 0, 0, 0], sizes = [1, 9, 16, 64], strides = [1, 1, 1, 1]} : vector<9x9x16x64xbf16> to vector<1x9x16x64xbf16>
    %70 = vector.extract_strided_slice %46 {offsets = [7, 0, 0, 0], sizes = [1, 9, 16, 64], strides = [1, 1, 1, 1]} : vector<9x9x16x64xbf16> to vector<1x9x16x64xbf16>
    %71 = tpu.concatenate %67, %68, %69, %70 in 0 : vector<1x9x16x64xbf16>, vector<1x9x16x64xbf16>, vector<1x9x16x64xbf16>, vector<1x9x16x64xbf16> -> vector<4x9x16x64xbf16>
    %72 = vector.extract_strided_slice %71 {offsets = [0, 0, 0, 0], sizes = [4, 1, 16, 64], strides = [1, 1, 1, 1]} : vector<4x9x16x64xbf16> to vector<4x1x16x64xbf16>
    %73 = vector.extract_strided_slice %71 {offsets = [0, 2, 0, 0], sizes = [4, 1, 16, 64], strides = [1, 1, 1, 1]} : vector<4x9x16x64xbf16> to vector<4x1x16x64xbf16>
    %74 = vector.extract_strided_slice %71 {offsets = [0, 4, 0, 0], sizes = [4, 1, 16, 64], strides = [1, 1, 1, 1]} : vector<4x9x16x64xbf16> to vector<4x1x16x64xbf16>
    %75 = vector.extract_strided_slice %71 {offsets = [0, 6, 0, 0], sizes = [4, 1, 16, 64], strides = [1, 1, 1, 1]} : vector<4x9x16x64xbf16> to vector<4x1x16x64xbf16>
    %76 = tpu.concatenate %72, %73, %74, %75 in 1 : vector<4x1x16x64xbf16>, vector<4x1x16x64xbf16>, vector<4x1x16x64xbf16>, vector<4x1x16x64xbf16> -> vector<4x4x16x64xbf16>
    %77 = vector.extract_strided_slice %71 {offsets = [0, 1, 0, 0], sizes = [4, 1, 16, 64], strides = [1, 1, 1, 1]} : vector<4x9x16x64xbf16> to vector<4x1x16x64xbf16>
    %78 = vector.extract_strided_slice %71 {offsets = [0, 3, 0, 0], sizes = [4, 1, 16, 64], strides = [1, 1, 1, 1]} : vector<4x9x16x64xbf16> to vector<4x1x16x64xbf16>
    %79 = vector.extract_strided_slice %71 {offsets = [0, 5, 0, 0], sizes = [4, 1, 16, 64], strides = [1, 1, 1, 1]} : vector<4x9x16x64xbf16> to vector<4x1x16x64xbf16>
    %80 = vector.extract_strided_slice %71 {offsets = [0, 7, 0, 0], sizes = [4, 1, 16, 64], strides = [1, 1, 1, 1]} : vector<4x9x16x64xbf16> to vector<4x1x16x64xbf16>
    %81 = tpu.concatenate %77, %78, %79, %80 in 1 : vector<4x1x16x64xbf16>, vector<4x1x16x64xbf16>, vector<4x1x16x64xbf16>, vector<4x1x16x64xbf16> -> vector<4x4x16x64xbf16>
    %82 = vector.extract_strided_slice %71 {offsets = [0, 2, 0, 0], sizes = [4, 1, 16, 64], strides = [1, 1, 1, 1]} : vector<4x9x16x64xbf16> to vector<4x1x16x64xbf16>
    %83 = vector.extract_strided_slice %71 {offsets = [0, 4, 0, 0], sizes = [4, 1, 16, 64], strides = [1, 1, 1, 1]} : vector<4x9x16x64xbf16> to vector<4x1x16x64xbf16>
    %84 = vector.extract_strided_slice %71 {offsets = [0, 6, 0, 0], sizes = [4, 1, 16, 64], strides = [1, 1, 1, 1]} : vector<4x9x16x64xbf16> to vector<4x1x16x64xbf16>
    %85 = vector.extract_strided_slice %71 {offsets = [0, 8, 0, 0], sizes = [4, 1, 16, 64], strides = [1, 1, 1, 1]} : vector<4x9x16x64xbf16> to vector<4x1x16x64xbf16>
    %86 = tpu.concatenate %82, %83, %84, %85 in 1 : vector<4x1x16x64xbf16>, vector<4x1x16x64xbf16>, vector<4x1x16x64xbf16>, vector<4x1x16x64xbf16> -> vector<4x4x16x64xbf16>
    %87 = vector.extract_strided_slice %46 {offsets = [2, 0, 0, 0], sizes = [1, 9, 16, 64], strides = [1, 1, 1, 1]} : vector<9x9x16x64xbf16> to vector<1x9x16x64xbf16>
    %88 = vector.extract_strided_slice %46 {offsets = [4, 0, 0, 0], sizes = [1, 9, 16, 64], strides = [1, 1, 1, 1]} : vector<9x9x16x64xbf16> to vector<1x9x16x64xbf16>
    %89 = vector.extract_strided_slice %46 {offsets = [6, 0, 0, 0], sizes = [1, 9, 16, 64], strides = [1, 1, 1, 1]} : vector<9x9x16x64xbf16> to vector<1x9x16x64xbf16>
    %90 = vector.extract_strided_slice %46 {offsets = [8, 0, 0, 0], sizes = [1, 9, 16, 64], strides = [1, 1, 1, 1]} : vector<9x9x16x64xbf16> to vector<1x9x16x64xbf16>
    %91 = tpu.concatenate %87, %88, %89, %90 in 0 : vector<1x9x16x64xbf16>, vector<1x9x16x64xbf16>, vector<1x9x16x64xbf16>, vector<1x9x16x64xbf16> -> vector<4x9x16x64xbf16>
    %92 = vector.extract_strided_slice %91 {offsets = [0, 0, 0, 0], sizes = [4, 1, 16, 64], strides = [1, 1, 1, 1]} : vector<4x9x16x64xbf16> to vector<4x1x16x64xbf16>
    %93 = vector.extract_strided_slice %91 {offsets = [0, 2, 0, 0], sizes = [4, 1, 16, 64], strides = [1, 1, 1, 1]} : vector<4x9x16x64xbf16> to vector<4x1x16x64xbf16>
    %94 = vector.extract_strided_slice %91 {offsets = [0, 4, 0, 0], sizes = [4, 1, 16, 64], strides = [1, 1, 1, 1]} : vector<4x9x16x64xbf16> to vector<4x1x16x64xbf16>
    %95 = vector.extract_strided_slice %91 {offsets = [0, 6, 0, 0], sizes = [4, 1, 16, 64], strides = [1, 1, 1, 1]} : vector<4x9x16x64xbf16> to vector<4x1x16x64xbf16>
    %96 = tpu.concatenate %92, %93, %94, %95 in 1 : vector<4x1x16x64xbf16>, vector<4x1x16x64xbf16>, vector<4x1x16x64xbf16>, vector<4x1x16x64xbf16> -> vector<4x4x16x64xbf16>
    %97 = vector.extract_strided_slice %91 {offsets = [0, 1, 0, 0], sizes = [4, 1, 16, 64], strides = [1, 1, 1, 1]} : vector<4x9x16x64xbf16> to vector<4x1x16x64xbf16>
    %98 = vector.extract_strided_slice %91 {offsets = [0, 3, 0, 0], sizes = [4, 1, 16, 64], strides = [1, 1, 1, 1]} : vector<4x9x16x64xbf16> to vector<4x1x16x64xbf16>
    %99 = vector.extract_strided_slice %91 {offsets = [0, 5, 0, 0], sizes = [4, 1, 16, 64], strides = [1, 1, 1, 1]} : vector<4x9x16x64xbf16> to vector<4x1x16x64xbf16>
    %100 = vector.extract_strided_slice %91 {offsets = [0, 7, 0, 0], sizes = [4, 1, 16, 64], strides = [1, 1, 1, 1]} : vector<4x9x16x64xbf16> to vector<4x1x16x64xbf16>
    %101 = tpu.concatenate %97, %98, %99, %100 in 1 : vector<4x1x16x64xbf16>, vector<4x1x16x64xbf16>, vector<4x1x16x64xbf16>, vector<4x1x16x64xbf16> -> vector<4x4x16x64xbf16>
    %102 = vector.extract_strided_slice %91 {offsets = [0, 2, 0, 0], sizes = [4, 1, 16, 64], strides = [1, 1, 1, 1]} : vector<4x9x16x64xbf16> to vector<4x1x16x64xbf16>
    %103 = vector.extract_strided_slice %91 {offsets = [0, 4, 0, 0], sizes = [4, 1, 16, 64], strides = [1, 1, 1, 1]} : vector<4x9x16x64xbf16> to vector<4x1x16x64xbf16>
    %104 = vector.extract_strided_slice %91 {offsets = [0, 6, 0, 0], sizes = [4, 1, 16, 64], strides = [1, 1, 1, 1]} : vector<4x9x16x64xbf16> to vector<4x1x16x64xbf16>
    %105 = vector.extract_strided_slice %91 {offsets = [0, 8, 0, 0], sizes = [4, 1, 16, 64], strides = [1, 1, 1, 1]} : vector<4x9x16x64xbf16> to vector<4x1x16x64xbf16>
    %106 = tpu.concatenate %102, %103, %104, %105 in 1 : vector<4x1x16x64xbf16>, vector<4x1x16x64xbf16>, vector<4x1x16x64xbf16>, vector<4x1x16x64xbf16> -> vector<4x4x16x64xbf16>
    %107 = tpu.concatenate %56, %61, %66, %76, %81, %86, %96, %101, %106 in 3 : vector<4x4x16x64xbf16>, vector<4x4x16x64xbf16>, vector<4x4x16x64xbf16>, vector<4x4x16x64xbf16>, vector<4x4x16x64xbf16>, vector<4x4x16x64xbf16>, vector<4x4x16x64xbf16>, vector<4x4x16x64xbf16>, vector<4x4x16x64xbf16> -> vector<4x4x16x576xbf16>
    %108 = vector.shape_cast %107 : vector<4x4x16x576xbf16> to vector<256x576xbf16>
    %c0_22 = arith.constant 0 : index
    %c0_23 = arith.constant 0 : index
    %109 = vector.load %arg8[%c0_22, %c0_23] : memref<576x64xbf16, #tpu.memory_space<vmem>>, vector<576x64xbf16>
    %cst_24 = arith.constant dense<0.000000e+00> : vector<256x64xf32>
    %110 = tpu.matmul %108, %109, %cst_24 {dimension_numbers = #tpu.dot_dimension_numbers<[1], [0], [0], [1], [0, 0, 1, 1], [], []>} : vector<256x576xbf16>, vector<576x64xbf16>, vector<256x64xf32> -> vector<256x64xf32>
    %111 = arith.truncf %110 : vector<256x64xf32> to vector<256x64xbf16>
    %112 = vector.extract_strided_slice %111 {offsets = [0, 0], sizes = [16, 64], strides = [1, 1]} : vector<256x64xbf16> to vector<16x64xbf16>
    %c0_25 = arith.constant 0 : index
    %c0_26 = arith.constant 0 : index
    %113 = vector.load %arg9[%c0_25, %c0_26] : memref<1024x512xbf16, #tpu.memory_space<vmem>>, vector<64x512xbf16>
    %cst_27 = arith.constant dense<0.000000e+00> : vector<16x512xf32>
    %114 = tpu.matmul %112, %113, %cst_27 {dimension_numbers = #tpu.dot_dimension_numbers<[1], [0], [0], [1], [0, 0, 1, 1], [], []>} : vector<16x64xbf16>, vector<64x512xbf16>, vector<16x512xf32> -> vector<16x512xf32>
    %115 = vector.extract_strided_slice %111 {offsets = [16, 0], sizes = [16, 64], strides = [1, 1]} : vector<256x64xbf16> to vector<16x64xbf16>
    %c64 = arith.constant 64 : index
    %c0_28 = arith.constant 0 : index
    %116 = vector.load %arg9[%c64, %c0_28] : memref<1024x512xbf16, #tpu.memory_space<vmem>>, vector<64x512xbf16>
    %cst_29 = arith.constant dense<0.000000e+00> : vector<16x512xf32>
    %117 = tpu.matmul %115, %116, %cst_29 {dimension_numbers = #tpu.dot_dimension_numbers<[1], [0], [0], [1], [0, 0, 1, 1], [], []>} : vector<16x64xbf16>, vector<64x512xbf16>, vector<16x512xf32> -> vector<16x512xf32>
    %118 = arith.addf %114, %117 : vector<16x512xf32>
    %119 = vector.extract_strided_slice %111 {offsets = [32, 0], sizes = [16, 64], strides = [1, 1]} : vector<256x64xbf16> to vector<16x64xbf16>
    %c128 = arith.constant 128 : index
    %c0_30 = arith.constant 0 : index
    %120 = vector.load %arg9[%c128, %c0_30] : memref<1024x512xbf16, #tpu.memory_space<vmem>>, vector<64x512xbf16>
    %cst_31 = arith.constant dense<0.000000e+00> : vector<16x512xf32>
    %121 = tpu.matmul %119, %120, %cst_31 {dimension_numbers = #tpu.dot_dimension_numbers<[1], [0], [0], [1], [0, 0, 1, 1], [], []>} : vector<16x64xbf16>, vector<64x512xbf16>, vector<16x512xf32> -> vector<16x512xf32>
    %122 = arith.addf %118, %121 : vector<16x512xf32>
    %123 = vector.extract_strided_slice %111 {offsets = [48, 0], sizes = [16, 64], strides = [1, 1]} : vector<256x64xbf16> to vector<16x64xbf16>
    %c192 = arith.constant 192 : index
    %c0_32 = arith.constant 0 : index
    %124 = vector.load %arg9[%c192, %c0_32] : memref<1024x512xbf16, #tpu.memory_space<vmem>>, vector<64x512xbf16>
    %cst_33 = arith.constant dense<0.000000e+00> : vector<16x512xf32>
    %125 = tpu.matmul %123, %124, %cst_33 {dimension_numbers = #tpu.dot_dimension_numbers<[1], [0], [0], [1], [0, 0, 1, 1], [], []>} : vector<16x64xbf16>, vector<64x512xbf16>, vector<16x512xf32> -> vector<16x512xf32>
    %126 = arith.addf %122, %125 : vector<16x512xf32>
    %127 = vector.extract_strided_slice %111 {offsets = [64, 0], sizes = [16, 64], strides = [1, 1]} : vector<256x64xbf16> to vector<16x64xbf16>
    %c256 = arith.constant 256 : index
    %c0_34 = arith.constant 0 : index
    %128 = vector.load %arg9[%c256, %c0_34] : memref<1024x512xbf16, #tpu.memory_space<vmem>>, vector<64x512xbf16>
    %cst_35 = arith.constant dense<0.000000e+00> : vector<16x512xf32>
    %129 = tpu.matmul %127, %128, %cst_35 {dimension_numbers = #tpu.dot_dimension_numbers<[1], [0], [0], [1], [0, 0, 1, 1], [], []>} : vector<16x64xbf16>, vector<64x512xbf16>, vector<16x512xf32> -> vector<16x512xf32>
    %130 = arith.addf %126, %129 : vector<16x512xf32>
    %131 = vector.extract_strided_slice %111 {offsets = [80, 0], sizes = [16, 64], strides = [1, 1]} : vector<256x64xbf16> to vector<16x64xbf16>
    %c320 = arith.constant 320 : index
    %c0_36 = arith.constant 0 : index
    %132 = vector.load %arg9[%c320, %c0_36] : memref<1024x512xbf16, #tpu.memory_space<vmem>>, vector<64x512xbf16>
    %cst_37 = arith.constant dense<0.000000e+00> : vector<16x512xf32>
    %133 = tpu.matmul %131, %132, %cst_37 {dimension_numbers = #tpu.dot_dimension_numbers<[1], [0], [0], [1], [0, 0, 1, 1], [], []>} : vector<16x64xbf16>, vector<64x512xbf16>, vector<16x512xf32> -> vector<16x512xf32>
    %134 = arith.addf %130, %133 : vector<16x512xf32>
    %135 = vector.extract_strided_slice %111 {offsets = [96, 0], sizes = [16, 64], strides = [1, 1]} : vector<256x64xbf16> to vector<16x64xbf16>
    %c384 = arith.constant 384 : index
    %c0_38 = arith.constant 0 : index
    %136 = vector.load %arg9[%c384, %c0_38] : memref<1024x512xbf16, #tpu.memory_space<vmem>>, vector<64x512xbf16>
    %cst_39 = arith.constant dense<0.000000e+00> : vector<16x512xf32>
    %137 = tpu.matmul %135, %136, %cst_39 {dimension_numbers = #tpu.dot_dimension_numbers<[1], [0], [0], [1], [0, 0, 1, 1], [], []>} : vector<16x64xbf16>, vector<64x512xbf16>, vector<16x512xf32> -> vector<16x512xf32>
    %138 = arith.addf %134, %137 : vector<16x512xf32>
    %139 = vector.extract_strided_slice %111 {offsets = [112, 0], sizes = [16, 64], strides = [1, 1]} : vector<256x64xbf16> to vector<16x64xbf16>
    %c448 = arith.constant 448 : index
    %c0_40 = arith.constant 0 : index
    %140 = vector.load %arg9[%c448, %c0_40] : memref<1024x512xbf16, #tpu.memory_space<vmem>>, vector<64x512xbf16>
    %cst_41 = arith.constant dense<0.000000e+00> : vector<16x512xf32>
    %141 = tpu.matmul %139, %140, %cst_41 {dimension_numbers = #tpu.dot_dimension_numbers<[1], [0], [0], [1], [0, 0, 1, 1], [], []>} : vector<16x64xbf16>, vector<64x512xbf16>, vector<16x512xf32> -> vector<16x512xf32>
    %142 = arith.addf %138, %141 : vector<16x512xf32>
    %143 = vector.extract_strided_slice %111 {offsets = [128, 0], sizes = [16, 64], strides = [1, 1]} : vector<256x64xbf16> to vector<16x64xbf16>
    %c512 = arith.constant 512 : index
    %c0_42 = arith.constant 0 : index
    %144 = vector.load %arg9[%c512, %c0_42] : memref<1024x512xbf16, #tpu.memory_space<vmem>>, vector<64x512xbf16>
    %cst_43 = arith.constant dense<0.000000e+00> : vector<16x512xf32>
    %145 = tpu.matmul %143, %144, %cst_43 {dimension_numbers = #tpu.dot_dimension_numbers<[1], [0], [0], [1], [0, 0, 1, 1], [], []>} : vector<16x64xbf16>, vector<64x512xbf16>, vector<16x512xf32> -> vector<16x512xf32>
    %146 = arith.addf %142, %145 : vector<16x512xf32>
    %147 = vector.extract_strided_slice %111 {offsets = [144, 0], sizes = [16, 64], strides = [1, 1]} : vector<256x64xbf16> to vector<16x64xbf16>
    %c576 = arith.constant 576 : index
    %c0_44 = arith.constant 0 : index
    %148 = vector.load %arg9[%c576, %c0_44] : memref<1024x512xbf16, #tpu.memory_space<vmem>>, vector<64x512xbf16>
    %cst_45 = arith.constant dense<0.000000e+00> : vector<16x512xf32>
    %149 = tpu.matmul %147, %148, %cst_45 {dimension_numbers = #tpu.dot_dimension_numbers<[1], [0], [0], [1], [0, 0, 1, 1], [], []>} : vector<16x64xbf16>, vector<64x512xbf16>, vector<16x512xf32> -> vector<16x512xf32>
    %150 = arith.addf %146, %149 : vector<16x512xf32>
    %151 = vector.extract_strided_slice %111 {offsets = [160, 0], sizes = [16, 64], strides = [1, 1]} : vector<256x64xbf16> to vector<16x64xbf16>
    %c640 = arith.constant 640 : index
    %c0_46 = arith.constant 0 : index
    %152 = vector.load %arg9[%c640, %c0_46] : memref<1024x512xbf16, #tpu.memory_space<vmem>>, vector<64x512xbf16>
    %cst_47 = arith.constant dense<0.000000e+00> : vector<16x512xf32>
    %153 = tpu.matmul %151, %152, %cst_47 {dimension_numbers = #tpu.dot_dimension_numbers<[1], [0], [0], [1], [0, 0, 1, 1], [], []>} : vector<16x64xbf16>, vector<64x512xbf16>, vector<16x512xf32> -> vector<16x512xf32>
    %154 = arith.addf %150, %153 : vector<16x512xf32>
    %155 = vector.extract_strided_slice %111 {offsets = [176, 0], sizes = [16, 64], strides = [1, 1]} : vector<256x64xbf16> to vector<16x64xbf16>
    %c704 = arith.constant 704 : index
    %c0_48 = arith.constant 0 : index
    %156 = vector.load %arg9[%c704, %c0_48] : memref<1024x512xbf16, #tpu.memory_space<vmem>>, vector<64x512xbf16>
    %cst_49 = arith.constant dense<0.000000e+00> : vector<16x512xf32>
    %157 = tpu.matmul %155, %156, %cst_49 {dimension_numbers = #tpu.dot_dimension_numbers<[1], [0], [0], [1], [0, 0, 1, 1], [], []>} : vector<16x64xbf16>, vector<64x512xbf16>, vector<16x512xf32> -> vector<16x512xf32>
    %158 = arith.addf %154, %157 : vector<16x512xf32>
    %159 = vector.extract_strided_slice %111 {offsets = [192, 0], sizes = [16, 64], strides = [1, 1]} : vector<256x64xbf16> to vector<16x64xbf16>
    %c768 = arith.constant 768 : index
    %c0_50 = arith.constant 0 : index
    %160 = vector.load %arg9[%c768, %c0_50] : memref<1024x512xbf16, #tpu.memory_space<vmem>>, vector<64x512xbf16>
    %cst_51 = arith.constant dense<0.000000e+00> : vector<16x512xf32>
    %161 = tpu.matmul %159, %160, %cst_51 {dimension_numbers = #tpu.dot_dimension_numbers<[1], [0], [0], [1], [0, 0, 1, 1], [], []>} : vector<16x64xbf16>, vector<64x512xbf16>, vector<16x512xf32> -> vector<16x512xf32>
    %162 = arith.addf %158, %161 : vector<16x512xf32>
    %163 = vector.extract_strided_slice %111 {offsets = [208, 0], sizes = [16, 64], strides = [1, 1]} : vector<256x64xbf16> to vector<16x64xbf16>
    %c832 = arith.constant 832 : index
    %c0_52 = arith.constant 0 : index
    %164 = vector.load %arg9[%c832, %c0_52] : memref<1024x512xbf16, #tpu.memory_space<vmem>>, vector<64x512xbf16>
    %cst_53 = arith.constant dense<0.000000e+00> : vector<16x512xf32>
    %165 = tpu.matmul %163, %164, %cst_53 {dimension_numbers = #tpu.dot_dimension_numbers<[1], [0], [0], [1], [0, 0, 1, 1], [], []>} : vector<16x64xbf16>, vector<64x512xbf16>, vector<16x512xf32> -> vector<16x512xf32>
    %166 = arith.addf %162, %165 : vector<16x512xf32>
    %167 = vector.extract_strided_slice %111 {offsets = [224, 0], sizes = [16, 64], strides = [1, 1]} : vector<256x64xbf16> to vector<16x64xbf16>
    %c896 = arith.constant 896 : index
    %c0_54 = arith.constant 0 : index
    %168 = vector.load %arg9[%c896, %c0_54] : memref<1024x512xbf16, #tpu.memory_space<vmem>>, vector<64x512xbf16>
    %cst_55 = arith.constant dense<0.000000e+00> : vector<16x512xf32>
    %169 = tpu.matmul %167, %168, %cst_55 {dimension_numbers = #tpu.dot_dimension_numbers<[1], [0], [0], [1], [0, 0, 1, 1], [], []>} : vector<16x64xbf16>, vector<64x512xbf16>, vector<16x512xf32> -> vector<16x512xf32>
    %170 = arith.addf %166, %169 : vector<16x512xf32>
    %171 = vector.extract_strided_slice %111 {offsets = [240, 0], sizes = [16, 64], strides = [1, 1]} : vector<256x64xbf16> to vector<16x64xbf16>
    %c960 = arith.constant 960 : index
    %c0_56 = arith.constant 0 : index
    %172 = vector.load %arg9[%c960, %c0_56] : memref<1024x512xbf16, #tpu.memory_space<vmem>>, vector<64x512xbf16>
    %cst_57 = arith.constant dense<0.000000e+00> : vector<16x512xf32>
    %173 = tpu.matmul %171, %172, %cst_57 {dimension_numbers = #tpu.dot_dimension_numbers<[1], [0], [0], [1], [0, 0, 1, 1], [], []>} : vector<16x64xbf16>, vector<64x512xbf16>, vector<16x512xf32> -> vector<16x512xf32>
    %174 = arith.addf %170, %173 : vector<16x512xf32>
    %c0_58 = arith.constant 0 : index
    %c0_59 = arith.constant 0 : index
    %175 = vector.load %arg10[%c0_58, %c0_59] : memref<1x512xf32, #tpu.memory_space<vmem>>, vector<1x512xf32>
    %176 = vector.broadcast %175 : vector<1x512xf32> to vector<16x512xf32>
    %177 = arith.addf %174, %176 : vector<16x512xf32>
    %cst_60 = arith.constant 0.000000e+00 : f32
    %178 = vector.broadcast %cst_60 : f32 to vector<16x512xf32>
    %179 = arith.maximumf %177, %178 : vector<16x512xf32>
    %180 = arith.truncf %179 : vector<16x512xf32> to vector<16x512xbf16>
    %c0_61 = arith.constant 0 : index
    %c0_62 = arith.constant 0 : index
    %181 = vector.load %arg11[%c0_61, %c0_62] : memref<512x128xbf16, #tpu.memory_space<vmem>>, vector<512x128xbf16>
    %cst_63 = arith.constant dense<0.000000e+00> : vector<16x128xf32>
    %182 = tpu.matmul %180, %181, %cst_63 {dimension_numbers = #tpu.dot_dimension_numbers<[1], [0], [0], [1], [0, 0, 1, 1], [], []>} : vector<16x512xbf16>, vector<512x128xbf16>, vector<16x128xf32> -> vector<16x128xf32>
    %c0_64 = arith.constant 0 : index
    %c0_65 = arith.constant 0 : index
    %183 = vector.load %arg12[%c0_64, %c0_65] : memref<1x128xf32, #tpu.memory_space<vmem>>, vector<1x128xf32>
    %184 = vector.broadcast %183 : vector<1x128xf32> to vector<16x128xf32>
    %185 = arith.addf %182, %184 : vector<16x128xf32>
    %c0_66 = arith.constant 0 : index
    %c0_67 = arith.constant 0 : index
    %186 = vector.load %arg13[%c0_66, %c0_67] : memref<16x128xf32, #tpu.memory_space<vmem>>, vector<16x128xf32>
    tpu.vector_store %arg13[%c0_66, %c0_67], %185 {strides = array<i32>} : memref<16x128xf32, #tpu.memory_space<vmem>>, vector<16x128xf32>,
    return
  }
  func.func @transform_0(%arg0: i32) -> (i32, i32, i32) {
    %c0_i32 = arith.constant 0 : i32
    %c0_i32_0 = arith.constant 0 : i32
    %c0_i32_1 = arith.constant 0 : i32
    return %c0_i32, %arg0, %c0_i32_0 : i32, i32, i32
  }
  func.func @transform_1(%arg0: i32) -> (i32, i32) {
    %c0_i32 = arith.constant 0 : i32
    %c0_i32_0 = arith.constant 0 : i32
    %c0_i32_1 = arith.constant 0 : i32
    return %c0_i32, %c0_i32_0 : i32, i32
  }
  func.func @transform_2(%arg0: i32) -> (i32, i32) {
    %c0_i32 = arith.constant 0 : i32
    %c0_i32_0 = arith.constant 0 : i32
    %c0_i32_1 = arith.constant 0 : i32
    return %c0_i32, %c0_i32_0 : i32, i32
  }
  func.func @transform_3(%arg0: i32) -> (i32, i32) {
    %c0_i32 = arith.constant 0 : i32
    %c0_i32_0 = arith.constant 0 : i32
    %c0_i32_1 = arith.constant 0 : i32
    return %c0_i32, %c0_i32_0 : i32, i32
  }
  func.func @transform_4(%arg0: i32) -> (i32, i32) {
    %c0_i32 = arith.constant 0 : i32
    %c0_i32_0 = arith.constant 0 : i32
    %c0_i32_1 = arith.constant 0 : i32
    return %c0_i32, %c0_i32_0 : i32, i32
  }
  func.func @transform_5(%arg0: i32) -> (i32, i32) {
    %c0_i32 = arith.constant 0 : i32
    %c0_i32_0 = arith.constant 0 : i32
    %c0_i32_1 = arith.constant 0 : i32
    return %c0_i32, %c0_i32_0 : i32, i32
  }
  func.func @transform_6(%arg0: i32) -> (i32, i32) {
    %c0_i32 = arith.constant 0 : i32
    %c0_i32_0 = arith.constant 0 : i32
    %c0_i32_1 = arith.constant 0 : i32
    return %c0_i32, %c0_i32_0 : i32, i32
  }
  func.func @transform_7(%arg0: i32) -> (i32, i32) {
    %c0_i32 = arith.constant 0 : i32
    %c0_i32_0 = arith.constant 0 : i32
    %c0_i32_1 = arith.constant 0 : i32
    return %c0_i32, %c0_i32_0 : i32, i32
  }
  func.func @transform_8(%arg0: i32) -> (i32, i32) {
    %c0_i32 = arith.constant 0 : i32
    %c0_i32_0 = arith.constant 0 : i32
    %c0_i32_1 = arith.constant 0 : i32
    return %c0_i32, %c0_i32_0 : i32, i32
  }
  func.func @transform_9(%arg0: i32) -> (i32, i32) {
    %c0_i32 = arith.constant 0 : i32
    %c0_i32_0 = arith.constant 0 : i32
    %c0_i32_1 = arith.constant 0 : i32
    return %c0_i32, %c0_i32_0 : i32, i32
  }
  func.func @transform_10(%arg0: i32) -> (i32, i32) {
    %c0_i32 = arith.constant 0 : i32
    %c0_i32_0 = arith.constant 0 : i32
    %c0_i32_1 = arith.constant 0 : i32
    return %c0_i32, %c0_i32_0 : i32, i32
  }
  func.func @transform_11(%arg0: i32) -> (i32, i32) {
    %c0_i32 = arith.constant 0 : i32
    %c0_i32_0 = arith.constant 0 : i32
    %c0_i32_1 = arith.constant 0 : i32
    return %c0_i32, %c0_i32_0 : i32, i32
  }
  func.func @transform_12(%arg0: i32) -> (i32, i32) {
    %c0_i32 = arith.constant 0 : i32
    %c0_i32_0 = arith.constant 0 : i32
    return %arg0, %c0_i32 : i32, i32
  }
}

</mosaic_0001>

<llo_original>
// kernel: net_c_mnist_forward.1
$region0: #{net_c_mnist_forward.1}
  #allocation0 [shape = 'u32[]', space=smem, size = 0x4, offset = 0x4, fixed_abs, tag = 'smem constant byte address 0x4 - core index']
  #allocation1 [shape = 'u32[144,128]{1,0:T(1,128)}', space=vmem, size = 0x12000, scoped, tag = 'internal scratch']
  %s0 = inlined_call_operand.vmem [shape: bf16[49,16,36], index: 0, kind: input, shape index: {}]
  %s1 = inlined_call_operand.vmem [shape: bf16[36,128], index: 1, kind: input, shape index: {}]
  %s2 = inlined_call_operand.vmem [shape: f32[1,128], index: 2, kind: input, shape index: {}]
  %s3 = inlined_call_operand.vmem [shape: f32[1,128], index: 3, kind: input, shape index: {}]
  %s4 = inlined_call_operand.vmem [shape: f32[1,128], index: 4, kind: input, shape index: {}]
  %s5 = inlined_call_operand.vmem [shape: bf16[288,64], index: 5, kind: input, shape index: {}]
  %s6 = inlined_call_operand.vmem [shape: f32[1,64], index: 6, kind: input, shape index: {}]
  %s7 = inlined_call_operand.vmem [shape: bf16[576,64], index: 7, kind: input, shape index: {}]
  %s8 = inlined_call_operand.vmem [shape: bf16[1024,512], index: 8, kind: input, shape index: {}]
  %s9 = inlined_call_operand.vmem [shape: f32[1,512], index: 9, kind: input, shape index: {}]
  %s10 = inlined_call_operand.vmem [shape: bf16[512,128], index: 10, kind: input, shape index: {}]
  %s11 = inlined_call_operand.vmem [shape: f32[1,128], index: 11, kind: input, shape index: {}]
  %s12 = inlined_call_operand.vmem [shape: f32[16,128], index: 12, kind: output, shape index: {}]
  %s13 = sld [smem:[#allocation0]]
  $region58: #{net_c_mnist_forward.1} parent=0
    _
  %s15 = ssub.s32 1, %s13
  %s16 = scalar_select 0, %s15, %s13
  // Predicated region
  $region2: #{net_c_mnist_forward.1} parent=0 // pred_check
    _
  $region3: #{net_c_mnist_forward.1} parent=0 // pred_check_branch
    %18 = sbr.rel (0) target = $region5
  $region4: #{net_c_mnist_forward.1} parent=0 // pred_region
    _
  $region5: #{net_c_mnist_forward.1} parent=0 // pred_fallthru
    _
  // Predicated region
  $region6: #{net_c_mnist_forward.1} parent=0 // pred_check
    _
  $region7: #{net_c_mnist_forward.1} parent=0 // pred_check_branch
    %20 = sbr.rel (0) target = $region9
  $region8: #{net_c_mnist_forward.1} parent=0 // pred_region
    _
  $region9: #{net_c_mnist_forward.1} parent=0 // pred_fallthru
    _
  // Predicated region
  $region10: #{net_c_mnist_forward.1} parent=0 // pred_check
    _
  $region11: #{net_c_mnist_forward.1} parent=0 // pred_check_branch
    %22 = sbr.rel (0) target = $region13
  $region12: #{net_c_mnist_forward.1} parent=0 // pred_region
    _
  $region13: #{net_c_mnist_forward.1} parent=0 // pred_fallthru
    _
  // Predicated region
  $region14: #{net_c_mnist_forward.1} parent=0 // pred_check
    _
  $region15: #{net_c_mnist_forward.1} parent=0 // pred_check_branch
    %24 = sbr.rel (0) target = $region17
  $region16: #{net_c_mnist_forward.1} parent=0 // pred_region
    _
  $region17: #{net_c_mnist_forward.1} parent=0 // pred_fallthru
    _
  // Predicated region
  $region18: #{net_c_mnist_forward.1} parent=0 // pred_check
    _
  $region19: #{net_c_mnist_forward.1} parent=0 // pred_check_branch
    %26 = sbr.rel (0) target = $region21
  $region20: #{net_c_mnist_forward.1} parent=0 // pred_region
    _
  $region21: #{net_c_mnist_forward.1} parent=0 // pred_fallthru
    _
  // Predicated region
  $region22: #{net_c_mnist_forward.1} parent=0 // pred_check
    _
  $region23: #{net_c_mnist_forward.1} parent=0 // pred_check_branch
    %28 = sbr.rel (0) target = $region25
  $region24: #{net_c_mnist_forward.1} parent=0 // pred_region
    _
  $region25: #{net_c_mnist_forward.1} parent=0 // pred_fallthru
    _
  // Predicated region
  $region26: #{net_c_mnist_forward.1} parent=0 // pred_check
    _
  $region27: #{net_c_mnist_forward.1} parent=0 // pred_check_branch
    %30 = sbr.rel (0) target = $region29
  $region28: #{net_c_mnist_forward.1} parent=0 // pred_region
    _
  $region29: #{net_c_mnist_forward.1} parent=0 // pred_fallthru
    _
  // Predicated region
  $region30: #{net_c_mnist_forward.1} parent=0 // pred_check
    _
  $region31: #{net_c_mnist_forward.1} parent=0 // pred_check_branch
    %32 = sbr.rel (0) target = $region33
  $region32: #{net_c_mnist_forward.1} parent=0 // pred_region
    _
  $region33: #{net_c_mnist_forward.1} parent=0 // pred_fallthru
    _
  // Predicated region
  $region34: #{net_c_mnist_forward.1} parent=0 // pred_check
    _
  $region35: #{net_c_mnist_forward.1} parent=0 // pred_check_branch
    %34 = sbr.rel (0) target = $region37
  $region36: #{net_c_mnist_forward.1} parent=0 // pred_region
    _
  $region37: #{net_c_mnist_forward.1} parent=0 // pred_fallthru
    _
  // Predicated region
  $region38: #{net_c_mnist_forward.1} parent=0 // pred_check
    _
  $region39: #{net_c_mnist_forward.1} parent=0 // pred_check_branch
    %36 = sbr.rel (0) target = $region41
  $region40: #{net_c_mnist_forward.1} parent=0 // pred_region
    _
  $region41: #{net_c_mnist_forward.1} parent=0 // pred_fallthru
    _
  // Predicated region
  $region42: #{net_c_mnist_forward.1} parent=0 // pred_check
    _
  $region43: #{net_c_mnist_forward.1} parent=0 // pred_check_branch
    %38 = sbr.rel (0) target = $region45
  $region44: #{net_c_mnist_forward.1} parent=0 // pred_region
    _
  $region45: #{net_c_mnist_forward.1} parent=0 // pred_fallthru
    _
  // Predicated region
  $region46: #{net_c_mnist_forward.1} parent=0 // pred_check
    _
  $region47: #{net_c_mnist_forward.1} parent=0 // pred_check_branch
    %40 = sbr.rel (0) target = $region49
  $region48: #{net_c_mnist_forward.1} parent=0 // pred_region
    _
  $region49: #{net_c_mnist_forward.1} parent=0 // pred_fallthru
    _
  %v42 = vld [vmem:[%s0] sm:$0xf]
  %v43 = vld [vmem:[%s0 + $0x4] sm:$0xf]
  %v44 = vld [vmem:[%s0 + $0x8] sm:$0xf]
  %v45 = vld [vmem:[%s0 + $0xc] sm:$0xf]
  %v46 = vld [vmem:[%s0 + $0x10] sm:$0xf]
  %v47 = vld [vmem:[%s0 + $0x14] sm:$0xf]
  %v48 = vld [vmem:[%s0 + $0x18] sm:$0xf]
  %v49 = vld [vmem:[%s0 + $0x1c] sm:$0xf]
  %v50 = vld [vmem:[%s0 + $0x20] sm:$0xf]
  %v51 = vld [vmem:[%s0 + $0x24] sm:$0xf]
  %v52 = vld [vmem:[%s0 + $0x28] sm:$0xf]
  %v53 = vld [vmem:[%s0 + $0x2c] sm:$0xf]
  %v54 = vld [vmem:[%s0 + $0x30] sm:$0xf]
  %v55 = vld [vmem:[%s0 + $0x34] sm:$0xf]
  %v56 = vld [vmem:[%s0 + $0x38] sm:$0xf]
  %v57 = vld [vmem:[%s0 + $0x3c] sm:$0xf]
  %v58 = vld [vmem:[%s0 + $0x40] sm:$0xf]
  %v59 = vld [vmem:[%s0 + $0x44] sm:$0xf]
  %v60 = vld [vmem:[%s0 + $0x48] sm:$0xf]
  %v61 = vld [vmem:[%s0 + $0x4c] sm:$0xf]
  %v62 = vld [vmem:[%s0 + $0x50] sm:$0xf]
  %v63 = vld [vmem:[%s0 + $0x54] sm:$0xf]
  %v64 = vld [vmem:[%s0 + $0x58] sm:$0xf]
  %v65 = vld [vmem:[%s0 + $0x5c] sm:$0xf]
  %v66 = vld [vmem:[%s0 + $0x60] sm:$0xf]
  %v67 = vld [vmem:[%s0 + $0x64] sm:$0xf]
  %v68 = vld [vmem:[%s0 + $0x68] sm:$0xf]
  %v69 = vld [vmem:[%s0 + $0x6c] sm:$0xf]
  %v70 = vld [vmem:[%s0 + $0x70] sm:$0xf]
  %v71 = vld [vmem:[%s0 + $0x74] sm:$0xf]
  %v72 = vld [vmem:[%s0 + $0x78] sm:$0xf]
  %v73 = vld [vmem:[%s0 + $0x7c] sm:$0xf]
  %v74 = vld [vmem:[%s0 + $0x80] sm:$0xf]
  %v75 = vld [vmem:[%s0 + $0x84] sm:$0xf]
  %v76 = vld [vmem:[%s0 + $0x88] sm:$0xf]
  %v77 = vld [vmem:[%s0 + $0x8c] sm:$0xf]
  %v78 = vld [vmem:[%s0 + $0x90] sm:$0xf]
  %v79 = vld [vmem:[%s0 + $0x94] sm:$0xf]
  %v80 = vld [vmem:[%s0 + $0x98] sm:$0xf]
  %v81 = vld [vmem:[%s0 + $0x9c] sm:$0xf]
  %v82 = vld [vmem:[%s0 + $0xa0] sm:$0xf]
  %v83 = vld [vmem:[%s0 + $0xa4] sm:$0xf]
  %v84 = vld [vmem:[%s0 + $0xa8] sm:$0xf]
  %v85 = vld [vmem:[%s0 + $0xac] sm:$0xf]
  %v86 = vld [vmem:[%s0 + $0xb0] sm:$0xf]
  %v87 = vld [vmem:[%s0 + $0xb4] sm:$0xf]
  %v88 = vld [vmem:[%s0 + $0xb8] sm:$0xf]
  %v89 = vld [vmem:[%s0 + $0xbc] sm:$0xf]
  %v90 = vld [vmem:[%s0 + $0xc0] sm:$0xf]
  %v91 = vld [vmem:[%s0 + $0xc4] sm:$0xf]
  %v92 = vld [vmem:[%s0 + $0xc8] sm:$0xf]
  %v93 = vld [vmem:[%s0 + $0xcc] sm:$0xf]
  %v94 = vld [vmem:[%s0 + $0xd0] sm:$0xf]
  %v95 = vld [vmem:[%s0 + $0xd4] sm:$0xf]
  %v96 = vld [vmem:[%s0 + $0xd8] sm:$0xf]
  %v97 = vld [vmem:[%s0 + $0xdc] sm:$0xf]
  %v98 = vld [vmem:[%s0 + $0xe0] sm:$0xf]
  %v99 = vld [vmem:[%s0 + $0xe4] sm:$0xf]
  %v100 = vld [vmem:[%s0 + $0xe8] sm:$0xf]
  %v101 = vld [vmem:[%s0 + $0xec] sm:$0xf]
  %v102 = vld [vmem:[%s0 + $0xf0] sm:$0xf]
  %v103 = vld [vmem:[%s0 + $0xf4] sm:$0xf]
  %v104 = vld [vmem:[%s0 + $0xf8] sm:$0xf]
  %v105 = vld [vmem:[%s0 + $0xfc] sm:$0xf]
  %v106 = vld [vmem:[%s0 + $0x100] sm:$0xf]
  %v107 = vld [vmem:[%s0 + $0x104] sm:$0xf]
  %v108 = vld [vmem:[%s0 + $0x108] sm:$0xf]
  %v109 = vld [vmem:[%s0 + $0x10c] sm:$0xf]
  %v110 = vld [vmem:[%s0 + $0x110] sm:$0xf]
  %v111 = vld [vmem:[%s0 + $0x114] sm:$0xf]
  %v112 = vld [vmem:[%s0 + $0x118] sm:$0xf]
  %v113 = vld [vmem:[%s0 + $0x11c] sm:$0xf]
  %v114 = vld [vmem:[%s0 + $0x120] sm:$0xf]
  %v115 = vld [vmem:[%s0 + $0x124] sm:$0xf]
  %v116 = vld [vmem:[%s0 + $0x128] sm:$0xf]
  %v117 = vld [vmem:[%s0 + $0x12c] sm:$0xf]
  %v118 = vld [vmem:[%s0 + $0x130] sm:$0xf]
  %v119 = vld [vmem:[%s0 + $0x134] sm:$0xf]
  %v120 = vld [vmem:[%s0 + $0x138] sm:$0xf]
  %v121 = vld [vmem:[%s0 + $0x13c] sm:$0xf]
  %v122 = vld [vmem:[%s0 + $0x140] sm:$0xf]
  %v123 = vld [vmem:[%s0 + $0x144] sm:$0xf]
  %v124 = vld [vmem:[%s0 + $0x148] sm:$0xf]
  %v125 = vld [vmem:[%s0 + $0x14c] sm:$0xf]
  %v126 = vld [vmem:[%s0 + $0x150] sm:$0xf]
  %v127 = vld [vmem:[%s0 + $0x154] sm:$0xf]
  %v128 = vld [vmem:[%s0 + $0x158] sm:$0xf]
  %v129 = vld [vmem:[%s0 + $0x15c] sm:$0xf]
  %v130 = vld [vmem:[%s0 + $0x160] sm:$0xf]
  %v131 = vld [vmem:[%s0 + $0x164] sm:$0xf]
  %v132 = vld [vmem:[%s0 + $0x168] sm:$0xf]
  %v133 = vld [vmem:[%s0 + $0x16c] sm:$0xf]
  %v134 = vld [vmem:[%s0 + $0x170] sm:$0xf]
  %v135 = vld [vmem:[%s0 + $0x174] sm:$0xf]
  %v136 = vld [vmem:[%s0 + $0x178] sm:$0xf]
  %v137 = vld [vmem:[%s0 + $0x17c] sm:$0xf]
  %v138 = vld [vmem:[%s0 + $0x180] sm:$0xf]
  %v139 = vld [vmem:[%s0 + $0x184] sm:$0xf]
  %v140 = vld [vmem:[%s1] sm:$0xf]
  %v141 = vld [vmem:[%s1 + $0x4] sm:$0xf]
  %v142 = vld [vmem:[%s1 + $0x8] sm:$0xf]
  %v143 = vld [vmem:[%s1 + $0xc] sm:$0xf]
  %v144 = vld [vmem:[%s1 + $0x10] sm:$0x3]
  %v145 = vld [vmem:[%s2] sm:$0x1]
  %v147 = vlaneseq
  %v148 = vshrl.u32 %v147, 7
  %v149 = vsub.s32 0, %v148
  %v150 = vrot.slane %v145, %v149
  %v250 = vunpack.c.l.b16 %v42
  %v251 = vunpack.c.l.b16 %v43
  %v252 = vunpack.c.l.b16 %v44
  %v253 = vunpack.c.l.b16 %v45
  %v254 = vunpack.c.l.b16 %v46
  %v255 = vunpack.c.l.b16 %v47
  %v256 = vunpack.c.l.b16 %v48
  %v257 = vunpack.c.l.b16 %v49
  %v258 = vunpack.c.l.b16 %v50
  %v259 = vunpack.c.l.b16 %v51
  %v260 = vunpack.c.l.b16 %v52
  %v261 = vunpack.c.l.b16 %v53
  %v262 = vunpack.c.l.b16 %v54
  %v263 = vunpack.c.l.b16 %v55
  %v264 = vunpack.c.l.b16 %v56
  %v265 = vunpack.c.l.b16 %v57
  %v266 = vunpack.c.l.b16 %v58
  %v267 = vunpack.c.l.b16 %v59
  %v268 = vunpack.c.l.b16 %v60
  %v269 = vunpack.c.l.b16 %v61
  %v270 = vunpack.c.l.b16 %v62
  %v271 = vunpack.c.l.b16 %v63
  %v272 = vunpack.c.l.b16 %v64
  %v273 = vunpack.c.l.b16 %v65
  %v274 = vunpack.c.l.b16 %v66
  %v275 = vunpack.c.l.b16 %v67
  %v276 = vunpack.c.l.b16 %v68
  %v277 = vunpack.c.l.b16 %v69
  %v278 = vunpack.c.l.b16 %v70
  %v279 = vunpack.c.l.b16 %v71
  %v280 = vunpack.c.l.b16 %v72
  %v281 = vunpack.c.l.b16 %v73
  %v282 = vunpack.c.l.b16 %v74
  %v283 = vunpack.c.l.b16 %v75
  %v284 = vunpack.c.l.b16 %v76
  %v285 = vunpack.c.l.b16 %v77
  %v286 = vunpack.c.l.b16 %v78
  %v287 = vunpack.c.l.b16 %v79
  %v288 = vunpack.c.l.b16 %v80
  %v289 = vunpack.c.l.b16 %v81
  %v290 = vunpack.c.l.b16 %v82
  %v291 = vunpack.c.l.b16 %v83
  %v292 = vunpack.c.l.b16 %v84
  %v293 = vunpack.c.l.b16 %v85
  %v294 = vunpack.c.l.b16 %v86
  %v295 = vunpack.c.l.b16 %v87
  %v296 = vunpack.c.l.b16 %v88
  %v297 = vunpack.c.l.b16 %v89
  %v298 = vunpack.c.l.b16 %v90
  %v299 = vunpack.c.l.b16 %v91
  %v300 = vunpack.c.l.b16 %v92
  %v301 = vunpack.c.l.b16 %v93
  %v302 = vunpack.c.l.b16 %v94
  %v303 = vunpack.c.l.b16 %v95
  %v304 = vunpack.c.l.b16 %v96
  %v305 = vunpack.c.l.b16 %v97
  %v306 = vunpack.c.l.b16 %v98
  %v307 = vunpack.c.l.b16 %v99
  %v308 = vunpack.c.l.b16 %v100
  %v309 = vunpack.c.l.b16 %v101
  %v310 = vunpack.c.l.b16 %v102
  %v311 = vunpack.c.l.b16 %v103
  %v312 = vunpack.c.l.b16 %v104
  %v313 = vunpack.c.l.b16 %v105
  %v314 = vunpack.c.l.b16 %v106
  %v315 = vunpack.c.l.b16 %v107
  %v316 = vunpack.c.l.b16 %v108
  %v317 = vunpack.c.l.b16 %v109
  %v318 = vunpack.c.l.b16 %v110
  %v319 = vunpack.c.l.b16 %v111
  %v320 = vunpack.c.l.b16 %v112
  %v321 = vunpack.c.l.b16 %v113
  %v322 = vunpack.c.l.b16 %v114
  %v323 = vunpack.c.l.b16 %v115
  %v324 = vunpack.c.l.b16 %v116
  %v325 = vunpack.c.l.b16 %v117
  %v326 = vunpack.c.l.b16 %v118
  %v327 = vunpack.c.l.b16 %v119
  %v328 = vunpack.c.l.b16 %v120
  %v329 = vunpack.c.l.b16 %v121
  %v330 = vunpack.c.l.b16 %v122
  %v331 = vunpack.c.l.b16 %v123
  %v332 = vunpack.c.l.b16 %v124
  %v333 = vunpack.c.l.b16 %v125
  %v334 = vunpack.c.l.b16 %v126
  %v335 = vunpack.c.l.b16 %v127
  %v336 = vunpack.c.l.b16 %v128
  %v337 = vunpack.c.l.b16 %v129
  %v338 = vunpack.c.l.b16 %v130
  %v339 = vunpack.c.l.b16 %v131
  %v340 = vunpack.c.l.b16 %v132
  %v341 = vunpack.c.l.b16 %v133
  %v342 = vunpack.c.l.b16 %v134
  %v343 = vunpack.c.l.b16 %v135
  %v344 = vunpack.c.l.b16 %v136
  %v345 = vunpack.c.l.b16 %v137
  %v346 = vunpack.c.l.b16 %v138
  %v347 = vunpack.c.l.b16 %v139
  %v348 = vpack.c.b16 %v251, %v250
  %v349 = vpack.c.b16 %v253, %v252
  %v350 = vpack.c.b16 %v255, %v254
  %v351 = vpack.c.b16 %v257, %v256
  %v352 = vpack.c.b16 %v259, %v258
  %v353 = vpack.c.b16 %v261, %v260
  %v354 = vpack.c.b16 %v263, %v262
  %v355 = vpack.c.b16 %v265, %v264
  %v356 = vpack.c.b16 %v267, %v266
  %v357 = vpack.c.b16 %v269, %v268
  %v358 = vpack.c.b16 %v271, %v270
  %v359 = vpack.c.b16 %v273, %v272
  %v360 = vpack.c.b16 %v275, %v274
  %v361 = vpack.c.b16 %v277, %v276
  %v362 = vpack.c.b16 %v279, %v278
  %v363 = vpack.c.b16 %v281, %v280
  %v364 = vpack.c.b16 %v283, %v282
  %v365 = vpack.c.b16 %v285, %v284
  %v366 = vpack.c.b16 %v287, %v286
  %v367 = vpack.c.b16 %v289, %v288
  %v368 = vpack.c.b16 %v291, %v290
  %v369 = vpack.c.b16 %v293, %v292
  %v370 = vpack.c.b16 %v295, %v294
  %v371 = vpack.c.b16 %v297, %v296
  %v372 = vpack.c.b16 %v299, %v298
  %v373 = vpack.c.b16 %v301, %v300
  %v374 = vpack.c.b16 %v303, %v302
  %v375 = vpack.c.b16 %v305, %v304
  %v376 = vpack.c.b16 %v307, %v306
  %v377 = vpack.c.b16 %v309, %v308
  %v378 = vpack.c.b16 %v311, %v310
  %v379 = vpack.c.b16 %v313, %v312
  %v380 = vpack.c.b16 %v315, %v314
  %v381 = vpack.c.b16 %v317, %v316
  %v382 = vpack.c.b16 %v319, %v318
  %v383 = vpack.c.b16 %v321, %v320
  %v384 = vpack.c.b16 %v323, %v322
  %v385 = vpack.c.b16 %v325, %v324
  %v386 = vpack.c.b16 %v327, %v326
  %v387 = vpack.c.b16 %v329, %v328
  %v388 = vpack.c.b16 %v331, %v330
  %v389 = vpack.c.b16 %v333, %v332
  %v390 = vpack.c.b16 %v335, %v334
  %v391 = vpack.c.b16 %v337, %v336
  %v392 = vpack.c.b16 %v339, %v338
  %v393 = vpack.c.b16 %v341, %v340
  %v394 = vpack.c.b16 %v343, %v342
  %v395 = vpack.c.b16 %v345, %v344
  %v396 = vpack.c.b16 %v347, %v346
  %v402 = vunpack.c.l.b16 %v140
  %v403 = vunpack.c.l.b16 %v141
  %v404 = vunpack.c.l.b16 %v142
  %v405 = vunpack.c.l.b16 %v143
  %v406 = vunpack.c.l.b16 %v144
  %v407 = vpack.c.b16 %v403, %v402
  %v408 = vpack.c.b16 %v405, %v404
  %v409 = vpack.c.b16 %v406, %v406
  %vm412 = vcmask 293888
  %v414 = vsel %vm412, %v348, 0
  %v417 = vsel %vm412, %v349, 0
  %v420 = vsel %vm412, %v350, 0
  %v423 = vsel %vm412, %v351, 0
  %v426 = vsel %vm412, %v352, 0
  %v429 = vsel %vm412, %v353, 0
  %v432 = vsel %vm412, %v354, 0
  %v435 = vsel %vm412, %v355, 0
  %v438 = vsel %vm412, %v356, 0
  %v441 = vsel %vm412, %v357, 0
  %v444 = vsel %vm412, %v358, 0
  %v447 = vsel %vm412, %v359, 0
  %v450 = vsel %vm412, %v360, 0
  %v453 = vsel %vm412, %v361, 0
  %v456 = vsel %vm412, %v362, 0
  %v459 = vsel %vm412, %v363, 0
  %v462 = vsel %vm412, %v364, 0
  %v465 = vsel %vm412, %v365, 0
  %v468 = vsel %vm412, %v366, 0
  %v471 = vsel %vm412, %v367, 0
  %v474 = vsel %vm412, %v368, 0
  %v477 = vsel %vm412, %v369, 0
  %v480 = vsel %vm412, %v370, 0
  %v483 = vsel %vm412, %v371, 0
  %v486 = vsel %vm412, %v372, 0
  %v489 = vsel %vm412, %v373, 0
  %v492 = vsel %vm412, %v374, 0
  %v495 = vsel %vm412, %v375, 0
  %v498 = vsel %vm412, %v376, 0
  %v501 = vsel %vm412, %v377, 0
  %v504 = vsel %vm412, %v378, 0
  %v507 = vsel %vm412, %v379, 0
  %v510 = vsel %vm412, %v380, 0
  %v513 = vsel %vm412, %v381, 0
  %v516 = vsel %vm412, %v382, 0
  %v519 = vsel %vm412, %v383, 0
  %v522 = vsel %vm412, %v384, 0
  %v525 = vsel %vm412, %v385, 0
  %v528 = vsel %vm412, %v386, 0
  %v531 = vsel %vm412, %v387, 0
  %v534 = vsel %vm412, %v388, 0
  %v537 = vsel %vm412, %v389, 0
  %v540 = vsel %vm412, %v390, 0
  %v543 = vsel %vm412, %v391, 0
  %v546 = vsel %vm412, %v392, 0
  %v549 = vsel %vm412, %v393, 0
  %v552 = vsel %vm412, %v394, 0
  %v555 = vsel %vm412, %v395, 0
  %v558 = vsel %vm412, %v396, 0
  %vm560 = vcmask 1041408
  %v562 = vsel %vm560, %v409, 0
  %564 = vmatprep.subr.bf16.mxu0 0
  %565 = vmatpush1.bf16.msra.mxu0 %v407
  %566 = vmatprep.subr.bf16.mxu0 0
  %567 = vmatpush1.bf16.msra.mxu0 %v408
  %568 = vmatprep.subr.bf16.mxu0 0
  %569 = vmatpush1.bf16.msra.mxu0 %v562
  %570 = vmatprep.subr.bf16.mxu0 0
  %571 = vmatpush1.bf16.msra.mxu0 0
  %572 = vmatprep.subr.bf16.mxu0 0
  %573 = vmatpush1.bf16.msra.mxu0 0
  %574 = vmatprep.subr.bf16.mxu0 0
  %575 = vmatpush1.bf16.msra.mxu0 0
  %576 = vmatprep.subr.bf16.mxu0 0
  %577 = vmatpush1.bf16.msra.mxu0 0
  %578 = vmatprep.subr.bf16.mxu0 0
  %579 = vmatpush1.bf16.msra.mxu0 0
  %580 = vmatprep.subr.bf16.mxu0 0
  %581 = vmatpush1.bf16.msra.mxu0 0
  %582 = vmatprep.subr.bf16.mxu0 0
  %583 = vmatpush1.bf16.msra.mxu0 0
  %584 = vmatprep.subr.bf16.mxu0 0
  %585 = vmatpush1.bf16.msra.mxu0 0
  %586 = vmatprep.subr.bf16.mxu0 0
  %587 = vmatpush1.bf16.msra.mxu0 0
  %588 = vmatprep.subr.bf16.mxu0 0
  %589 = vmatpush1.bf16.msra.mxu0 0
  %590 = vmatprep.subr.bf16.mxu0 0
  %591 = vmatpush1.bf16.msra.mxu0 0
  %592 = vmatprep.subr.bf16.mxu0 0
  %593 = vmatpush1.bf16.msra.mxu0 0
  %594 = vmatprep.subr.bf16.mxu0 0
  %595 = vmatpush1.bf16.msra.mxu0 0
  %596 = vmatprep.mubr.bf16.mxu0 0
  %597 = vmatmul.mubr.bf16.gmra.mrb[0].mxu0 %v414
  %v598 = vpop.f32.mrb[0].mxu0
  %v599 = vadd.f32 %v150, %v598
  %v600 = vpop.f32.mrb[0].mxu0
  %v601 = vpop.f32.mrb[0].mxu0
  %v602 = vadd.f32 %v150, %v601
  %v603 = vpop.f32.mrb[0].mxu0
  %604 = vmatprep.mubr.bf16.mxu0 0
  %605 = vmatmul.mubr.bf16.gmra.mrb[0].mxu0 %v417
  %v606 = vpop.f32.mrb[0].mxu0
  %v607 = vadd.f32 %v150, %v606
  %v608 = vpop.f32.mrb[0].mxu0
  %v609 = vpop.f32.mrb[0].mxu0
  %v610 = vadd.f32 %v150, %v609
  %v611 = vpop.f32.mrb[0].mxu0
  %612 = vmatprep.mubr.bf16.mxu0 0
  %613 = vmatmul.mubr.bf16.gmra.mrb[0].mxu0 %v420
  %v614 = vpop.f32.mrb[0].mxu0
  %v615 = vadd.f32 %v150, %v614
  %v616 = vpop.f32.mrb[0].mxu0
  %v617 = vpop.f32.mrb[0].mxu0
  %v618 = vadd.f32 %v150, %v617
  %v619 = vpop.f32.mrb[0].mxu0
  %620 = vmatprep.mubr.bf16.mxu0 0
  %621 = vmatmul.mubr.bf16.gmra.mrb[0].mxu0 %v423
  %v622 = vpop.f32.mrb[0].mxu0
  %v623 = vadd.f32 %v150, %v622
  %v624 = vpop.f32.mrb[0].mxu0
  %v625 = vpop.f32.mrb[0].mxu0
  %v626 = vadd.f32 %v150, %v625
  %v627 = vpop.f32.mrb[0].mxu0
  %628 = vmatprep.mubr.bf16.mxu0 0
  %629 = vmatmul.mubr.bf16.gmra.mrb[0].mxu0 %v426
  %v630 = vpop.f32.mrb[0].mxu0
  %v631 = vadd.f32 %v150, %v630
  %v632 = vpop.f32.mrb[0].mxu0
  %v633 = vpop.f32.mrb[0].mxu0
  %v634 = vadd.f32 %v150, %v633
  %v635 = vpop.f32.mrb[0].mxu0
  %636 = vmatprep.mubr.bf16.mxu0 0
  %637 = vmatmul.mubr.bf16.gmra.mrb[0].mxu0 %v429
  %v638 = vpop.f32.mrb[0].mxu0
  %v639 = vadd.f32 %v150, %v638
  %v640 = vpop.f32.mrb[0].mxu0
  %v641 = vpop.f32.mrb[0].mxu0
  %v642 = vadd.f32 %v150, %v641
  %v643 = vpop.f32.mrb[0].mxu0
  %644 = vmatprep.mubr.bf16.mxu0 0
  %645 = vmatmul.mubr.bf16.gmra.mrb[0].mxu0 %v432
  %v646 = vpop.f32.mrb[0].mxu0
  %v647 = vadd.f32 %v150, %v646
  %v648 = vpop.f32.mrb[0].mxu0
  %v649 = vpop.f32.mrb[0].mxu0
  %v650 = vadd.f32 %v150, %v649
  %v651 = vpop.f32.mrb[0].mxu0
  %652 = vmatprep.mubr.bf16.mxu0 0
  %653 = vmatmul.mubr.bf16.gmra.mrb[0].mxu0 %v435
  %v654 = vpop.f32.mrb[0].mxu0
  %v655 = vadd.f32 %v150, %v654
  %v656 = vpop.f32.mrb[0].mxu0
  %v657 = vpop.f32.mrb[0].mxu0
  %v658 = vadd.f32 %v150, %v657
  %v659 = vpop.f32.mrb[0].mxu0
  %660 = vmatprep.mubr.bf16.mxu0 0
  %661 = vmatmul.mubr.bf16.gmra.mrb[0].mxu0 %v438
  %v662 = vpop.f32.mrb[0].mxu0
  %v663 = vadd.f32 %v150, %v662
  %v664 = vpop.f32.mrb[0].mxu0
  %v665 = vpop.f32.mrb[0].mxu0
  %v666 = vadd.f32 %v150, %v665
  %v667 = vpop.f32.mrb[0].mxu0
  %668 = vmatprep.mubr.bf16.mxu0 0
  %669 = vmatmul.mubr.bf16.gmra.mrb[0].mxu0 %v441
  %v670 = vpop.f32.mrb[0].mxu0
  %v671 = vadd.f32 %v150, %v670
  %v672 = vpop.f32.mrb[0].mxu0
  %v673 = vpop.f32.mrb[0].mxu0
  %v674 = vadd.f32 %v150, %v673
  %v675 = vpop.f32.mrb[0].mxu0
  %676 = vmatprep.mubr.bf16.mxu0 0
  %677 = vmatmul.mubr.bf16.gmra.mrb[0].mxu0 %v444
  %v678 = vpop.f32.mrb[0].mxu0
  %v679 = vadd.f32 %v150, %v678
  %v680 = vpop.f32.mrb[0].mxu0
  %v681 = vpop.f32.mrb[0].mxu0
  %v682 = vadd.f32 %v150, %v681
  %v683 = vpop.f32.mrb[0].mxu0
  %684 = vmatprep.mubr.bf16.mxu0 0
  %685 = vmatmul.mubr.bf16.gmra.mrb[0].mxu0 %v447
  %v686 = vpop.f32.mrb[0].mxu0
  %v687 = vadd.f32 %v150, %v686
  %v688 = vpop.f32.mrb[0].mxu0
  %v689 = vpop.f32.mrb[0].mxu0
  %v690 = vadd.f32 %v150, %v689
  %v691 = vpop.f32.mrb[0].mxu0
  %692 = vmatprep.mubr.bf16.mxu0 0
  %693 = vmatmul.mubr.bf16.gmra.mrb[0].mxu0 %v450
  %v694 = vpop.f32.mrb[0].mxu0
  %v695 = vadd.f32 %v150, %v694
  %v696 = vpop.f32.mrb[0].mxu0
  %v697 = vpop.f32.mrb[0].mxu0
  %v698 = vadd.f32 %v150, %v697
  %v699 = vpop.f32.mrb[0].mxu0
  %700 = vmatprep.mubr.bf16.mxu0 0
  %701 = vmatmul.mubr.bf16.gmra.mrb[0].mxu0 %v453
  %v702 = vpop.f32.mrb[0].mxu0
  %v703 = vadd.f32 %v150, %v702
  %v704 = vpop.f32.mrb[0].mxu0
  %v705 = vpop.f32.mrb[0].mxu0
  %v706 = vadd.f32 %v150, %v705
  %v707 = vpop.f32.mrb[0].mxu0
  %708 = vmatprep.mubr.bf16.mxu0 0
  %709 = vmatmul.mubr.bf16.gmra.mrb[0].mxu0 %v456
  %v710 = vpop.f32.mrb[0].mxu0
  %v711 = vadd.f32 %v150, %v710
  %v712 = vpop.f32.mrb[0].mxu0
  %v713 = vpop.f32.mrb[0].mxu0
  %v714 = vadd.f32 %v150, %v713
  %v715 = vpop.f32.mrb[0].mxu0
  %716 = vmatprep.mubr.bf16.mxu0 0
  %717 = vmatmul.mubr.bf16.gmra.mrb[0].mxu0 %v459
  %v718 = vpop.f32.mrb[0].mxu0
  %v719 = vadd.f32 %v150, %v718
  %v720 = vpop.f32.mrb[0].mxu0
  %v721 = vpop.f32.mrb[0].mxu0
  %v722 = vadd.f32 %v150, %v721
  %v723 = vpop.f32.mrb[0].mxu0
  %724 = vmatprep.mubr.bf16.mxu0 0
  %725 = vmatmul.mubr.bf16.gmra.mrb[0].mxu0 %v462
  %v726 = vpop.f32.mrb[0].mxu0
  %v727 = vadd.f32 %v150, %v726
  %v728 = vpop.f32.mrb[0].mxu0
  %v729 = vpop.f32.mrb[0].mxu0
  %v730 = vadd.f32 %v150, %v729
  %v731 = vpop.f32.mrb[0].mxu0
  %732 = vmatprep.mubr.bf16.mxu0 0
  %733 = vmatmul.mubr.bf16.gmra.mrb[0].mxu0 %v465
  %v734 = vpop.f32.mrb[0].mxu0
  %v735 = vadd.f32 %v150, %v734
  %v736 = vpop.f32.mrb[0].mxu0
  %v737 = vpop.f32.mrb[0].mxu0
  %v738 = vadd.f32 %v150, %v737
  %v739 = vpop.f32.mrb[0].mxu0
  %740 = vmatprep.mubr.bf16.mxu0 0
  %741 = vmatmul.mubr.bf16.gmra.mrb[0].mxu0 %v468
  %v742 = vpop.f32.mrb[0].mxu0
  %v743 = vadd.f32 %v150, %v742
  %v744 = vpop.f32.mrb[0].mxu0
  %v745 = vpop.f32.mrb[0].mxu0
  %v746 = vadd.f32 %v150, %v745
  %v747 = vpop.f32.mrb[0].mxu0
  %748 = vmatprep.mubr.bf16.mxu0 0
  %749 = vmatmul.mubr.bf16.gmra.mrb[0].mxu0 %v471
  %v750 = vpop.f32.mrb[0].mxu0
  %v751 = vadd.f32 %v150, %v750
  %v752 = vpop.f32.mrb[0].mxu0
  %v753 = vpop.f32.mrb[0].mxu0
  %v754 = vadd.f32 %v150, %v753
  %v755 = vpop.f32.mrb[0].mxu0
  %756 = vmatprep.mubr.bf16.mxu0 0
  %757 = vmatmul.mubr.bf16.gmra.mrb[0].mxu0 %v474
  %v758 = vpop.f32.mrb[0].mxu0
  %v759 = vadd.f32 %v150, %v758
  %v760 = vpop.f32.mrb[0].mxu0
  %v761 = vpop.f32.mrb[0].mxu0
  %v762 = vadd.f32 %v150, %v761
  %v763 = vpop.f32.mrb[0].mxu0
  %764 = vmatprep.mubr.bf16.mxu0 0
  %765 = vmatmul.mubr.bf16.gmra.mrb[0].mxu0 %v477
  %v766 = vpop.f32.mrb[0].mxu0
  %v767 = vadd.f32 %v150, %v766
  %v768 = vpop.f32.mrb[0].mxu0
  %v769 = vpop.f32.mrb[0].mxu0
  %v770 = vadd.f32 %v150, %v769
  %v771 = vpop.f32.mrb[0].mxu0
  %772 = vmatprep.mubr.bf16.mxu0 0
  %773 = vmatmul.mubr.bf16.gmra.mrb[0].mxu0 %v480
  %v774 = vpop.f32.mrb[0].mxu0
  %v775 = vadd.f32 %v150, %v774
  %v776 = vpop.f32.mrb[0].mxu0
  %v777 = vpop.f32.mrb[0].mxu0
  %v778 = vadd.f32 %v150, %v777
  %v779 = vpop.f32.mrb[0].mxu0
  %780 = vmatprep.mubr.bf16.mxu0 0
  %781 = vmatmul.mubr.bf16.gmra.mrb[0].mxu0 %v483
  %v782 = vpop.f32.mrb[0].mxu0
  %v783 = vadd.f32 %v150, %v782
  %v784 = vpop.f32.mrb[0].mxu0
  %v785 = vpop.f32.mrb[0].mxu0
  %v786 = vadd.f32 %v150, %v785
  %v787 = vpop.f32.mrb[0].mxu0
  %788 = vmatprep.mubr.bf16.mxu0 0
  %789 = vmatmul.mubr.bf16.gmra.mrb[0].mxu0 %v486
  %v790 = vpop.f32.mrb[0].mxu0
  %v791 = vadd.f32 %v150, %v790
  %v792 = vpop.f32.mrb[0].mxu0
  %v793 = vpop.f32.mrb[0].mxu0
  %v794 = vadd.f32 %v150, %v793
  %v795 = vpop.f32.mrb[0].mxu0
  %796 = vmatprep.mubr.bf16.mxu0 0
  %797 = vmatmul.mubr.bf16.gmra.mrb[0].mxu0 %v489
  %v798 = vpop.f32.mrb[0].mxu0
  %v799 = vadd.f32 %v150, %v798
  %v800 = vpop.f32.mrb[0].mxu0
  %v801 = vpop.f32.mrb[0].mxu0
  %v802 = vadd.f32 %v150, %v801
  %v803 = vpop.f32.mrb[0].mxu0
  %804 = vmatprep.mubr.bf16.mxu0 0
  %805 = vmatmul.mubr.bf16.gmra.mrb[0].mxu0 %v492
  %v806 = vpop.f32.mrb[0].mxu0
  %v807 = vadd.f32 %v150, %v806
  %v808 = vpop.f32.mrb[0].mxu0
  %v809 = vpop.f32.mrb[0].mxu0
  %v810 = vadd.f32 %v150, %v809
  %v811 = vpop.f32.mrb[0].mxu0
  %812 = vmatprep.mubr.bf16.mxu0 0
  %813 = vmatmul.mubr.bf16.gmra.mrb[0].mxu0 %v495
  %v814 = vpop.f32.mrb[0].mxu0
  %v815 = vadd.f32 %v150, %v814
  %v816 = vpop.f32.mrb[0].mxu0
  %v817 = vpop.f32.mrb[0].mxu0
  %v818 = vadd.f32 %v150, %v817
  %v819 = vpop.f32.mrb[0].mxu0
  %820 = vmatprep.mubr.bf16.mxu0 0
  %821 = vmatmul.mubr.bf16.gmra.mrb[0].mxu0 %v498
  %v822 = vpop.f32.mrb[0].mxu0
  %v823 = vadd.f32 %v150, %v822
  %v824 = vpop.f32.mrb[0].mxu0
  %v825 = vpop.f32.mrb[0].mxu0
  %v826 = vadd.f32 %v150, %v825
  %v827 = vpop.f32.mrb[0].mxu0
  %828 = vmatprep.mubr.bf16.mxu0 0
  %829 = vmatmul.mubr.bf16.gmra.mrb[0].mxu0 %v501
  %v830 = vpop.f32.mrb[0].mxu0
  %v831 = vadd.f32 %v150, %v830
  %v832 = vpop.f32.mrb[0].mxu0
  %v833 = vpop.f32.mrb[0].mxu0
  %v834 = vadd.f32 %v150, %v833
  %v835 = vpop.f32.mrb[0].mxu0
  %836 = vmatprep.mubr.bf16.mxu0 0
  %837 = vmatmul.mubr.bf16.gmra.mrb[0].mxu0 %v504
  %v838 = vpop.f32.mrb[0].mxu0
  %v839 = vadd.f32 %v150, %v838
  %v840 = vpop.f32.mrb[0].mxu0
  %v841 = vpop.f32.mrb[0].mxu0
  %v842 = vadd.f32 %v150, %v841
  %v843 = vpop.f32.mrb[0].mxu0
  %844 = vmatprep.mubr.bf16.mxu0 0
  %845 = vmatmul.mubr.bf16.gmra.mrb[0].mxu0 %v507
  %v846 = vpop.f32.mrb[0].mxu0
  %v847 = vadd.f32 %v150, %v846
  %v848 = vpop.f32.mrb[0].mxu0
  %v849 = vpop.f32.mrb[0].mxu0
  %v850 = vadd.f32 %v150, %v849
  %v851 = vpop.f32.mrb[0].mxu0
  %852 = vmatprep.mubr.bf16.mxu0 0
  %853 = vmatmul.mubr.bf16.gmra.mrb[0].mxu0 %v510
  %v854 = vpop.f32.mrb[0].mxu0
  %v855 = vadd.f32 %v150, %v854
  %v856 = vpop.f32.mrb[0].mxu0
  %v857 = vpop.f32.mrb[0].mxu0
  %v858 = vadd.f32 %v150, %v857
  %v859 = vpop.f32.mrb[0].mxu0
  %860 = vmatprep.mubr.bf16.mxu0 0
  %861 = vmatmul.mubr.bf16.gmra.mrb[0].mxu0 %v513
  %v862 = vpop.f32.mrb[0].mxu0
  %v863 = vadd.f32 %v150, %v862
  %v864 = vpop.f32.mrb[0].mxu0
  %v865 = vpop.f32.mrb[0].mxu0
  %v866 = vadd.f32 %v150, %v865
  %v867 = vpop.f32.mrb[0].mxu0
  %868 = vmatprep.mubr.bf16.mxu0 0
  %869 = vmatmul.mubr.bf16.gmra.mrb[0].mxu0 %v516
  %v870 = vpop.f32.mrb[0].mxu0
  %v871 = vadd.f32 %v150, %v870
  %v872 = vpop.f32.mrb[0].mxu0
  %v873 = vpop.f32.mrb[0].mxu0
  %v874 = vadd.f32 %v150, %v873
  %v875 = vpop.f32.mrb[0].mxu0
  %876 = vmatprep.mubr.bf16.mxu0 0
  %877 = vmatmul.mubr.bf16.gmra.mrb[0].mxu0 %v519
  %v878 = vpop.f32.mrb[0].mxu0
  %v879 = vadd.f32 %v150, %v878
  %v880 = vpop.f32.mrb[0].mxu0
  %v881 = vpop.f32.mrb[0].mxu0
  %v882 = vadd.f32 %v150, %v881
  %v883 = vpop.f32.mrb[0].mxu0
  %884 = vmatprep.mubr.bf16.mxu0 0
  %885 = vmatmul.mubr.bf16.gmra.mrb[0].mxu0 %v522
  %v886 = vpop.f32.mrb[0].mxu0
  %v887 = vadd.f32 %v150, %v886
  %v888 = vpop.f32.mrb[0].mxu0
  %v889 = vpop.f32.mrb[0].mxu0
  %v890 = vadd.f32 %v150, %v889
  %v891 = vpop.f32.mrb[0].mxu0
  %892 = vmatprep.mubr.bf16.mxu0 0
  %893 = vmatmul.mubr.bf16.gmra.mrb[0].mxu0 %v525
  %v894 = vpop.f32.mrb[0].mxu0
  %v895 = vadd.f32 %v150, %v894
  %v896 = vpop.f32.mrb[0].mxu0
  %v897 = vpop.f32.mrb[0].mxu0
  %v898 = vadd.f32 %v150, %v897
  %v899 = vpop.f32.mrb[0].mxu0
  %900 = vmatprep.mubr.bf16.mxu0 0
  %901 = vmatmul.mubr.bf16.gmra.mrb[0].mxu0 %v528
  %v902 = vpop.f32.mrb[0].mxu0
  %v903 = vadd.f32 %v150, %v902
  %v904 = vpop.f32.mrb[0].mxu0
  %v905 = vpop.f32.mrb[0].mxu0
  %v906 = vadd.f32 %v150, %v905
  %v907 = vpop.f32.mrb[0].mxu0
  %908 = vmatprep.mubr.bf16.mxu0 0
  %909 = vmatmul.mubr.bf16.gmra.mrb[0].mxu0 %v531
  %v910 = vpop.f32.mrb[0].mxu0
  %v911 = vadd.f32 %v150, %v910
  %v912 = vpop.f32.mrb[0].mxu0
  %v913 = vpop.f32.mrb[0].mxu0
  %v914 = vadd.f32 %v150, %v913
  %v915 = vpop.f32.mrb[0].mxu0
  %916 = vmatprep.mubr.bf16.mxu0 0
  %917 = vmatmul.mubr.bf16.gmra.mrb[0].mxu0 %v534
  %v918 = vpop.f32.mrb[0].mxu0
  %v919 = vadd.f32 %v150, %v918
  %v920 = vpop.f32.mrb[0].mxu0
  %v921 = vpop.f32.mrb[0].mxu0
  %v922 = vadd.f32 %v150, %v921
  %v923 = vpop.f32.mrb[0].mxu0
  %924 = vmatprep.mubr.bf16.mxu0 0
  %925 = vmatmul.mubr.bf16.gmra.mrb[0].mxu0 %v537
  %v926 = vpop.f32.mrb[0].mxu0
  %v927 = vadd.f32 %v150, %v926
  %v928 = vpop.f32.mrb[0].mxu0
  %v929 = vpop.f32.mrb[0].mxu0
  %v930 = vadd.f32 %v150, %v929
  %v931 = vpop.f32.mrb[0].mxu0
  %932 = vmatprep.mubr.bf16.mxu0 0
  %933 = vmatmul.mubr.bf16.gmra.mrb[0].mxu0 %v540
  %v934 = vpop.f32.mrb[0].mxu0
  %v935 = vadd.f32 %v150, %v934
  %v936 = vpop.f32.mrb[0].mxu0
  %v937 = vpop.f32.mrb[0].mxu0
  %v938 = vadd.f32 %v150, %v937
  %v939 = vpop.f32.mrb[0].mxu0
  %940 = vmatprep.mubr.bf16.mxu0 0
  %941 = vmatmul.mubr.bf16.gmra.mrb[0].mxu0 %v543
  %v942 = vpop.f32.mrb[0].mxu0
  %v943 = vadd.f32 %v150, %v942
  %v944 = vpop.f32.mrb[0].mxu0
  %v945 = vpop.f32.mrb[0].mxu0
  %v946 = vadd.f32 %v150, %v945
  %v947 = vpop.f32.mrb[0].mxu0
  %948 = vmatprep.mubr.bf16.mxu0 0
  %949 = vmatmul.mubr.bf16.gmra.mrb[0].mxu0 %v546
  %v950 = vpop.f32.mrb[0].mxu0
  %v951 = vadd.f32 %v150, %v950
  %v952 = vpop.f32.mrb[0].mxu0
  %v953 = vpop.f32.mrb[0].mxu0
  %v954 = vadd.f32 %v150, %v953
  %v955 = vpop.f32.mrb[0].mxu0
  %956 = vmatprep.mubr.bf16.mxu0 0
  %957 = vmatmul.mubr.bf16.gmra.mrb[0].mxu0 %v549
  %v958 = vpop.f32.mrb[0].mxu0
  %v959 = vadd.f32 %v150, %v958
  %v960 = vpop.f32.mrb[0].mxu0
  %v961 = vpop.f32.mrb[0].mxu0
  %v962 = vadd.f32 %v150, %v961
  %v963 = vpop.f32.mrb[0].mxu0
  %964 = vmatprep.mubr.bf16.mxu0 0
  %965 = vmatmul.mubr.bf16.gmra.mrb[0].mxu0 %v552
  %v966 = vpop.f32.mrb[0].mxu0
  %v967 = vadd.f32 %v150, %v966
  %v968 = vpop.f32.mrb[0].mxu0
  %v969 = vpop.f32.mrb[0].mxu0
  %v970 = vadd.f32 %v150, %v969
  %v971 = vpop.f32.mrb[0].mxu0
  %972 = vmatprep.mubr.bf16.mxu0 0
  %973 = vmatmul.mubr.bf16.gmra.mrb[0].mxu0 %v555
  %v974 = vpop.f32.mrb[0].mxu0
  %v975 = vadd.f32 %v150, %v974
  %v976 = vpop.f32.mrb[0].mxu0
  %v977 = vpop.f32.mrb[0].mxu0
  %v978 = vadd.f32 %v150, %v977
  %v979 = vpop.f32.mrb[0].mxu0
  %980 = vmatprep.mubr.bf16.mxu0 0
  %981 = vmatmul.mubr.bf16.gmra.mrb[0].mxu0 %v558
  %v982 = vpop.f32.mrb[0].mxu0
  %v983 = vadd.f32 %v150, %v982
  %v984 = vpop.f32.mrb[0].mxu0
  %v985 = vpop.f32.mrb[0].mxu0
  %v986 = vadd.f32 %v150, %v985
  %v987 = vpop.f32.mrb[0].mxu0
  %988 = vdwg.mxu0
  %v989 = vmax.f32 %v599, 0.0
  %v990 = vmax.f32 %v602, 0.0
  %v991 = vmax.f32 %v607, 0.0
  %v992 = vmax.f32 %v610, 0.0
  %v993 = vmax.f32 %v615, 0.0
  %v994 = vmax.f32 %v618, 0.0
  %v995 = vmax.f32 %v623, 0.0
  %v996 = vmax.f32 %v626, 0.0
  %v997 = vmax.f32 %v631, 0.0
  %v998 = vmax.f32 %v634, 0.0
  %v999 = vmax.f32 %v639, 0.0
  %v1000 = vmax.f32 %v642, 0.0
  %v1001 = vmax.f32 %v647, 0.0
  %v1002 = vmax.f32 %v650, 0.0
  %v1003 = vmax.f32 %v655, 0.0
  %v1004 = vmax.f32 %v658, 0.0
  %v1005 = vmax.f32 %v663, 0.0
  %v1006 = vmax.f32 %v666, 0.0
  %v1007 = vmax.f32 %v671, 0.0
  %v1008 = vmax.f32 %v674, 0.0
  %v1009 = vmax.f32 %v679, 0.0
  %v1010 = vmax.f32 %v682, 0.0
  %v1011 = vmax.f32 %v687, 0.0
  %v1012 = vmax.f32 %v690, 0.0
  %v1013 = vmax.f32 %v695, 0.0
  %v1014 = vmax.f32 %v698, 0.0
  %v1015 = vmax.f32 %v703, 0.0
  %v1016 = vmax.f32 %v706, 0.0
  %v1017 = vmax.f32 %v711, 0.0
  %v1018 = vmax.f32 %v714, 0.0
  %v1019 = vmax.f32 %v719, 0.0
  %v1020 = vmax.f32 %v722, 0.0
  %v1021 = vmax.f32 %v727, 0.0
  %v1022 = vmax.f32 %v730, 0.0
  %v1023 = vmax.f32 %v735, 0.0
  %v1024 = vmax.f32 %v738, 0.0
  %v1025 = vmax.f32 %v743, 0.0
  %v1026 = vmax.f32 %v746, 0.0
  %v1027 = vmax.f32 %v751, 0.0
  %v1028 = vmax.f32 %v754, 0.0
  %v1029 = vmax.f32 %v759, 0.0
  %v1030 = vmax.f32 %v762, 0.0
  %v1031 = vmax.f32 %v767, 0.0
  %v1032 = vmax.f32 %v770, 0.0
  %v1033 = vmax.f32 %v775, 0.0
  %v1034 = vmax.f32 %v778, 0.0
  %v1035 = vmax.f32 %v783, 0.0
  %v1036 = vmax.f32 %v786, 0.0
  %v1037 = vmax.f32 %v791, 0.0
  %v1038 = vmax.f32 %v794, 0.0
  %v1039 = vmax.f32 %v799, 0.0
  %v1040 = vmax.f32 %v802, 0.0
  %v1041 = vmax.f32 %v807, 0.0
  %v1042 = vmax.f32 %v810, 0.0
  %v1043 = vmax.f32 %v815, 0.0
  %v1044 = vmax.f32 %v818, 0.0
  %v1045 = vmax.f32 %v823, 0.0
  %v1046 = vmax.f32 %v826, 0.0
  %v1047 = vmax.f32 %v831, 0.0
  %v1048 = vmax.f32 %v834, 0.0
  %v1049 = vmax.f32 %v839, 0.0
  %v1050 = vmax.f32 %v842, 0.0
  %v1051 = vmax.f32 %v847, 0.0
  %v1052 = vmax.f32 %v850, 0.0
  %v1053 = vmax.f32 %v855, 0.0
  %v1054 = vmax.f32 %v858, 0.0
  %v1055 = vmax.f32 %v863, 0.0
  %v1056 = vmax.f32 %v866, 0.0
  %v1057 = vmax.f32 %v871, 0.0
  %v1058 = vmax.f32 %v874, 0.0
  %v1059 = vmax.f32 %v879, 0.0
  %v1060 = vmax.f32 %v882, 0.0
  %v1061 = vmax.f32 %v887, 0.0
  %v1062 = vmax.f32 %v890, 0.0
  %v1063 = vmax.f32 %v895, 0.0
  %v1064 = vmax.f32 %v898, 0.0
  %v1065 = vmax.f32 %v903, 0.0
  %v1066 = vmax.f32 %v906, 0.0
  %v1067 = vmax.f32 %v911, 0.0
  %v1068 = vmax.f32 %v914, 0.0
  %v1069 = vmax.f32 %v919, 0.0
  %v1070 = vmax.f32 %v922, 0.0
  %v1071 = vmax.f32 %v927, 0.0
  %v1072 = vmax.f32 %v930, 0.0
  %v1073 = vmax.f32 %v935, 0.0
  %v1074 = vmax.f32 %v938, 0.0
  %v1075 = vmax.f32 %v943, 0.0
  %v1076 = vmax.f32 %v946, 0.0
  %v1077 = vmax.f32 %v951, 0.0
  %v1078 = vmax.f32 %v954, 0.0
  %v1079 = vmax.f32 %v959, 0.0
  %v1080 = vmax.f32 %v962, 0.0
  %v1081 = vmax.f32 %v967, 0.0
  %v1082 = vmax.f32 %v970, 0.0
  %v1083 = vmax.f32 %v975, 0.0
  %v1084 = vmax.f32 %v978, 0.0
  %v1085 = vmax.f32 %v983, 0.0
  %v1086 = vmax.f32 %v986, 0.0
  %v1087 = vld [vmem:[%s3] sm:$0x1]
  %v1089 = vlaneseq
  %v1090 = vshrl.u32 %v1089, 7
  %v1091 = vsub.s32 0, %v1090
  %v1092 = vrot.slane %v1087, %v1091
  %v1094 = vmul.f32 %v989, %v1092
  %v1095 = vmul.f32 %v990, %v1092
  %v1096 = vmul.f32 %v991, %v1092
  %v1097 = vmul.f32 %v992, %v1092
  %v1098 = vmul.f32 %v993, %v1092
  %v1099 = vmul.f32 %v994, %v1092
  %v1100 = vmul.f32 %v995, %v1092
  %v1101 = vmul.f32 %v996, %v1092
  %v1102 = vmul.f32 %v997, %v1092
  %v1103 = vmul.f32 %v998, %v1092
  %v1104 = vmul.f32 %v999, %v1092
  %v1105 = vmul.f32 %v1000, %v1092
  %v1106 = vmul.f32 %v1001, %v1092
  %v1107 = vmul.f32 %v1002, %v1092
  %v1108 = vmul.f32 %v1003, %v1092
  %v1109 = vmul.f32 %v1004, %v1092
  %v1110 = vmul.f32 %v1005, %v1092
  %v1111 = vmul.f32 %v1006, %v1092
  %v1112 = vmul.f32 %v1007, %v1092
  %v1113 = vmul.f32 %v1008, %v1092
  %v1114 = vmul.f32 %v1009, %v1092
  %v1115 = vmul.f32 %v1010, %v1092
  %v1116 = vmul.f32 %v1011, %v1092
  %v1117 = vmul.f32 %v1012, %v1092
  %v1118 = vmul.f32 %v1013, %v1092
  %v1119 = vmul.f32 %v1014, %v1092
  %v1120 = vmul.f32 %v1015, %v1092
  %v1121 = vmul.f32 %v1016, %v1092
  %v1122 = vmul.f32 %v1017, %v1092
  %v1123 = vmul.f32 %v1018, %v1092
  %v1124 = vmul.f32 %v1019, %v1092
  %v1125 = vmul.f32 %v1020, %v1092
  %v1126 = vmul.f32 %v1021, %v1092
  %v1127 = vmul.f32 %v1022, %v1092
  %v1128 = vmul.f32 %v1023, %v1092
  %v1129 = vmul.f32 %v1024, %v1092
  %v1130 = vmul.f32 %v1025, %v1092
  %v1131 = vmul.f32 %v1026, %v1092
  %v1132 = vmul.f32 %v1027, %v1092
  %v1133 = vmul.f32 %v1028, %v1092
  %v1134 = vmul.f32 %v1029, %v1092
  %v1135 = vmul.f32 %v1030, %v1092
  %v1136 = vmul.f32 %v1031, %v1092
  %v1137 = vmul.f32 %v1032, %v1092
  %v1138 = vmul.f32 %v1033, %v1092
  %v1139 = vmul.f32 %v1034, %v1092
  %v1140 = vmul.f32 %v1035, %v1092
  %v1141 = vmul.f32 %v1036, %v1092
  %v1142 = vmul.f32 %v1037, %v1092
  %v1143 = vmul.f32 %v1038, %v1092
  %v1144 = vmul.f32 %v1039, %v1092
  %v1145 = vmul.f32 %v1040, %v1092
  %v1146 = vmul.f32 %v1041, %v1092
  %v1147 = vmul.f32 %v1042, %v1092
  %v1148 = vmul.f32 %v1043, %v1092
  %v1149 = vmul.f32 %v1044, %v1092
  %v1150 = vmul.f32 %v1045, %v1092
  %v1151 = vmul.f32 %v1046, %v1092
  %v1152 = vmul.f32 %v1047, %v1092
  %v1153 = vmul.f32 %v1048, %v1092
  %v1154 = vmul.f32 %v1049, %v1092
  %v1155 = vmul.f32 %v1050, %v1092
  %v1156 = vmul.f32 %v1051, %v1092
  %v1157 = vmul.f32 %v1052, %v1092
  %v1158 = vmul.f32 %v1053, %v1092
  %v1159 = vmul.f32 %v1054, %v1092
  %v1160 = vmul.f32 %v1055, %v1092
  %v1161 = vmul.f32 %v1056, %v1092
  %v1162 = vmul.f32 %v1057, %v1092
  %v1163 = vmul.f32 %v1058, %v1092
  %v1164 = vmul.f32 %v1059, %v1092
  %v1165 = vmul.f32 %v1060, %v1092
  %v1166 = vmul.f32 %v1061, %v1092
  %v1167 = vmul.f32 %v1062, %v1092
  %v1168 = vmul.f32 %v1063, %v1092
  %v1169 = vmul.f32 %v1064, %v1092
  %v1170 = vmul.f32 %v1065, %v1092
  %v1171 = vmul.f32 %v1066, %v1092
  %v1172 = vmul.f32 %v1067, %v1092
  %v1173 = vmul.f32 %v1068, %v1092
  %v1174 = vmul.f32 %v1069, %v1092
  %v1175 = vmul.f32 %v1070, %v1092
  %v1176 = vmul.f32 %v1071, %v1092
  %v1177 = vmul.f32 %v1072, %v1092
  %v1178 = vmul.f32 %v1073, %v1092
  %v1179 = vmul.f32 %v1074, %v1092
  %v1180 = vmul.f32 %v1075, %v1092
  %v1181 = vmul.f32 %v1076, %v1092
  %v1182 = vmul.f32 %v1077, %v1092
  %v1183 = vmul.f32 %v1078, %v1092
  %v1184 = vmul.f32 %v1079, %v1092
  %v1185 = vmul.f32 %v1080, %v1092
  %v1186 = vmul.f32 %v1081, %v1092
  %v1187 = vmul.f32 %v1082, %v1092
  %v1188 = vmul.f32 %v1083, %v1092
  %v1189 = vmul.f32 %v1084, %v1092
  %v1190 = vmul.f32 %v1085, %v1092
  %v1191 = vmul.f32 %v1086, %v1092
  %v1192 = vld [vmem:[%s4] sm:$0x1]
  %v1194 = vlaneseq
  %v1195 = vshrl.u32 %v1194, 7
  %v1196 = vsub.s32 0, %v1195
  %v1197 = vrot.slane %v1192, %v1196
  %v1199 = vadd.f32 %v1094, %v1197
  %v1200 = vadd.f32 %v1095, %v1197
  %v1201 = vadd.f32 %v1096, %v1197
  %v1202 = vadd.f32 %v1097, %v1197
  %v1203 = vadd.f32 %v1098, %v1197
  %v1204 = vadd.f32 %v1099, %v1197
  %v1205 = vadd.f32 %v1100, %v1197
  %v1206 = vadd.f32 %v1101, %v1197
  %v1207 = vadd.f32 %v1102, %v1197
  %v1208 = vadd.f32 %v1103, %v1197
  %v1209 = vadd.f32 %v1104, %v1197
  %v1210 = vadd.f32 %v1105, %v1197
  %v1211 = vadd.f32 %v1106, %v1197
  %v1212 = vadd.f32 %v1107, %v1197
  %v1213 = vadd.f32 %v1108, %v1197
  %v1214 = vadd.f32 %v1109, %v1197
  %v1215 = vadd.f32 %v1110, %v1197
  %v1216 = vadd.f32 %v1111, %v1197
  %v1217 = vadd.f32 %v1112, %v1197
  %v1218 = vadd.f32 %v1113, %v1197
  %v1219 = vadd.f32 %v1114, %v1197
  %v1220 = vadd.f32 %v1115, %v1197
  %v1221 = vadd.f32 %v1116, %v1197
  %v1222 = vadd.f32 %v1117, %v1197
  %v1223 = vadd.f32 %v1118, %v1197
  %v1224 = vadd.f32 %v1119, %v1197
  %v1225 = vadd.f32 %v1120, %v1197
  %v1226 = vadd.f32 %v1121, %v1197
  %v1227 = vadd.f32 %v1122, %v1197
  %v1228 = vadd.f32 %v1123, %v1197
  %v1229 = vadd.f32 %v1124, %v1197
  %v1230 = vadd.f32 %v1125, %v1197
  %v1231 = vadd.f32 %v1126, %v1197
  %v1232 = vadd.f32 %v1127, %v1197
  %v1233 = vadd.f32 %v1128, %v1197
  %v1234 = vadd.f32 %v1129, %v1197
  %v1235 = vadd.f32 %v1130, %v1197
  %v1236 = vadd.f32 %v1131, %v1197
  %v1237 = vadd.f32 %v1132, %v1197
  %v1238 = vadd.f32 %v1133, %v1197
  %v1239 = vadd.f32 %v1134, %v1197
  %v1240 = vadd.f32 %v1135, %v1197
  %v1241 = vadd.f32 %v1136, %v1197
  %v1242 = vadd.f32 %v1137, %v1197
  %v1243 = vadd.f32 %v1138, %v1197
  %v1244 = vadd.f32 %v1139, %v1197
  %v1245 = vadd.f32 %v1140, %v1197
  %v1246 = vadd.f32 %v1141, %v1197
  %v1247 = vadd.f32 %v1142, %v1197
  %v1248 = vadd.f32 %v1143, %v1197
  %v1249 = vadd.f32 %v1144, %v1197
  %v1250 = vadd.f32 %v1145, %v1197
  %v1251 = vadd.f32 %v1146, %v1197
  %v1252 = vadd.f32 %v1147, %v1197
  %v1253 = vadd.f32 %v1148, %v1197
  %v1254 = vadd.f32 %v1149, %v1197
  %v1255 = vadd.f32 %v1150, %v1197
  %v1256 = vadd.f32 %v1151, %v1197
  %v1257 = vadd.f32 %v1152, %v1197
  %v1258 = vadd.f32 %v1153, %v1197
  %v1259 = vadd.f32 %v1154, %v1197
  %v1260 = vadd.f32 %v1155, %v1197
  %v1261 = vadd.f32 %v1156, %v1197
  %v1262 = vadd.f32 %v1157, %v1197
  %v1263 = vadd.f32 %v1158, %v1197
  %v1264 = vadd.f32 %v1159, %v1197
  %v1265 = vadd.f32 %v1160, %v1197
  %v1266 = vadd.f32 %v1161, %v1197
  %v1267 = vadd.f32 %v1162, %v1197
  %v1268 = vadd.f32 %v1163, %v1197
  %v1269 = vadd.f32 %v1164, %v1197
  %v1270 = vadd.f32 %v1165, %v1197
  %v1271 = vadd.f32 %v1166, %v1197
  %v1272 = vadd.f32 %v1167, %v1197
  %v1273 = vadd.f32 %v1168, %v1197
  %v1274 = vadd.f32 %v1169, %v1197
  %v1275 = vadd.f32 %v1170, %v1197
  %v1276 = vadd.f32 %v1171, %v1197
  %v1277 = vadd.f32 %v1172, %v1197
  %v1278 = vadd.f32 %v1173, %v1197
  %v1279 = vadd.f32 %v1174, %v1197
  %v1280 = vadd.f32 %v1175, %v1197
  %v1281 = vadd.f32 %v1176, %v1197
  %v1282 = vadd.f32 %v1177, %v1197
  %v1283 = vadd.f32 %v1178, %v1197
  %v1284 = vadd.f32 %v1179, %v1197
  %v1285 = vadd.f32 %v1180, %v1197
  %v1286 = vadd.f32 %v1181, %v1197
  %v1287 = vadd.f32 %v1182, %v1197
  %v1288 = vadd.f32 %v1183, %v1197
  %v1289 = vadd.f32 %v1184, %v1197
  %v1290 = vadd.f32 %v1185, %v1197
  %v1291 = vadd.f32 %v1186, %v1197
  %v1292 = vadd.f32 %v1187, %v1197
  %v1293 = vadd.f32 %v1188, %v1197
  %v1294 = vadd.f32 %v1189, %v1197
  %v1295 = vadd.f32 %v1190, %v1197
  %v1296 = vadd.f32 %v1191, %v1197
  %v1297 = vmax.f32 %v1199, 0.0
  %v1298 = vmax.f32 %v1200, 0.0
  %v1299 = vmax.f32 %v1201, 0.0
  %v1300 = vmax.f32 %v1202, 0.0
  %v1301 = vmax.f32 %v1203, 0.0
  %v1302 = vmax.f32 %v1204, 0.0
  %v1303 = vmax.f32 %v1205, 0.0
  %v1304 = vmax.f32 %v1206, 0.0
  %v1305 = vmax.f32 %v1207, 0.0
  %v1306 = vmax.f32 %v1208, 0.0
  %v1307 = vmax.f32 %v1209, 0.0
  %v1308 = vmax.f32 %v1210, 0.0
  %v1309 = vmax.f32 %v1211, 0.0
  %v1310 = vmax.f32 %v1212, 0.0
  %v1311 = vmax.f32 %v1213, 0.0
  %v1312 = vmax.f32 %v1214, 0.0
  %v1313 = vmax.f32 %v1215, 0.0
  %v1314 = vmax.f32 %v1216, 0.0
  %v1315 = vmax.f32 %v1217, 0.0
  %v1316 = vmax.f32 %v1218, 0.0
  %v1317 = vmax.f32 %v1219, 0.0
  %v1318 = vmax.f32 %v1220, 0.0
  %v1319 = vmax.f32 %v1221, 0.0
  %v1320 = vmax.f32 %v1222, 0.0
  %v1321 = vmax.f32 %v1223, 0.0
  %v1322 = vmax.f32 %v1224, 0.0
  %v1323 = vmax.f32 %v1225, 0.0
  %v1324 = vmax.f32 %v1226, 0.0
  %v1325 = vmax.f32 %v1227, 0.0
  %v1326 = vmax.f32 %v1228, 0.0
  %v1327 = vmax.f32 %v1229, 0.0
  %v1328 = vmax.f32 %v1230, 0.0
  %v1329 = vmax.f32 %v1231, 0.0
  %v1330 = vmax.f32 %v1232, 0.0
  %v1331 = vmax.f32 %v1233, 0.0
  %v1332 = vmax.f32 %v1234, 0.0
  %v1333 = vmax.f32 %v1235, 0.0
  %v1334 = vmax.f32 %v1236, 0.0
  %v1335 = vmax.f32 %v1237, 0.0
  %v1336 = vmax.f32 %v1238, 0.0
  %v1337 = vmax.f32 %v1239, 0.0
  %v1338 = vmax.f32 %v1240, 0.0
  %v1339 = vmax.f32 %v1241, 0.0
  %v1340 = vmax.f32 %v1242, 0.0
  %v1341 = vmax.f32 %v1243, 0.0
  %v1342 = vmax.f32 %v1244, 0.0
  %v1343 = vmax.f32 %v1245, 0.0
  %v1344 = vmax.f32 %v1246, 0.0
  %v1345 = vmax.f32 %v1247, 0.0
  %v1346 = vmax.f32 %v1248, 0.0
  %v1347 = vmax.f32 %v1249, 0.0
  %v1348 = vmax.f32 %v1250, 0.0
  %v1349 = vmax.f32 %v1251, 0.0
  %v1350 = vmax.f32 %v1252, 0.0
  %v1351 = vmax.f32 %v1253, 0.0
  %v1352 = vmax.f32 %v1254, 0.0
  %v1353 = vmax.f32 %v1255, 0.0
  %v1354 = vmax.f32 %v1256, 0.0
  %v1355 = vmax.f32 %v1257, 0.0
  %v1356 = vmax.f32 %v1258, 0.0
  %v1357 = vmax.f32 %v1259, 0.0
  %v1358 = vmax.f32 %v1260, 0.0
  %v1359 = vmax.f32 %v1261, 0.0
  %v1360 = vmax.f32 %v1262, 0.0
  %v1361 = vmax.f32 %v1263, 0.0
  %v1362 = vmax.f32 %v1264, 0.0
  %v1363 = vmax.f32 %v1265, 0.0
  %v1364 = vmax.f32 %v1266, 0.0
  %v1365 = vmax.f32 %v1267, 0.0
  %v1366 = vmax.f32 %v1268, 0.0
  %v1367 = vmax.f32 %v1269, 0.0
  %v1368 = vmax.f32 %v1270, 0.0
  %v1369 = vmax.f32 %v1271, 0.0
  %v1370 = vmax.f32 %v1272, 0.0
  %v1371 = vmax.f32 %v1273, 0.0
  %v1372 = vmax.f32 %v1274, 0.0
  %v1373 = vmax.f32 %v1275, 0.0
  %v1374 = vmax.f32 %v1276, 0.0
  %v1375 = vmax.f32 %v1277, 0.0
  %v1376 = vmax.f32 %v1278, 0.0
  %v1377 = vmax.f32 %v1279, 0.0
  %v1378 = vmax.f32 %v1280, 0.0
  %v1379 = vmax.f32 %v1281, 0.0
  %v1380 = vmax.f32 %v1282, 0.0
  %v1381 = vmax.f32 %v1283, 0.0
  %v1382 = vmax.f32 %v1284, 0.0
  %v1383 = vmax.f32 %v1285, 0.0
  %v1384 = vmax.f32 %v1286, 0.0
  %v1385 = vmax.f32 %v1287, 0.0
  %v1386 = vmax.f32 %v1288, 0.0
  %v1387 = vmax.f32 %v1289, 0.0
  %v1388 = vmax.f32 %v1290, 0.0
  %v1389 = vmax.f32 %v1291, 0.0
  %v1390 = vmax.f32 %v1292, 0.0
  %v1391 = vmax.f32 %v1293, 0.0
  %v1392 = vmax.f32 %v1294, 0.0
  %v1393 = vmax.f32 %v1295, 0.0
  %v1394 = vmax.f32 %v1296, 0.0
  %v1395 = vpack.c.bf16 %v1298, %v1297
  %v1396 = vpack.c.bf16 %v1300, %v1299
  %v1397 = vpack.c.bf16 %v1302, %v1301
  %v1398 = vpack.c.bf16 %v1304, %v1303
  %v1399 = vpack.c.bf16 %v1306, %v1305
  %v1400 = vpack.c.bf16 %v1308, %v1307
  %v1401 = vpack.c.bf16 %v1310, %v1309
  %v1402 = vpack.c.bf16 %v1312, %v1311
  %v1403 = vpack.c.bf16 %v1314, %v1313
  %v1404 = vpack.c.bf16 %v1316, %v1315
  %v1405 = vpack.c.bf16 %v1318, %v1317
  %v1406 = vpack.c.bf16 %v1320, %v1319
  %v1407 = vpack.c.bf16 %v1322, %v1321
  %v1408 = vpack.c.bf16 %v1324, %v1323
  %v1409 = vpack.c.bf16 %v1326, %v1325
  %v1410 = vpack.c.bf16 %v1328, %v1327
  %v1411 = vpack.c.bf16 %v1330, %v1329
  %v1412 = vpack.c.bf16 %v1332, %v1331
  %v1413 = vpack.c.bf16 %v1334, %v1333
  %v1414 = vpack.c.bf16 %v1336, %v1335
  %v1415 = vpack.c.bf16 %v1338, %v1337
  %v1416 = vpack.c.bf16 %v1340, %v1339
  %v1417 = vpack.c.bf16 %v1342, %v1341
  %v1418 = vpack.c.bf16 %v1344, %v1343
  %v1419 = vpack.c.bf16 %v1346, %v1345
  %v1420 = vpack.c.bf16 %v1348, %v1347
  %v1421 = vpack.c.bf16 %v1350, %v1349
  %v1422 = vpack.c.bf16 %v1352, %v1351
  %v1423 = vpack.c.bf16 %v1354, %v1353
  %v1424 = vpack.c.bf16 %v1356, %v1355
  %v1425 = vpack.c.bf16 %v1358, %v1357
  %v1426 = vpack.c.bf16 %v1360, %v1359
  %v1427 = vpack.c.bf16 %v1362, %v1361
  %v1428 = vpack.c.bf16 %v1364, %v1363
  %v1429 = vpack.c.bf16 %v1366, %v1365
  %v1430 = vpack.c.bf16 %v1368, %v1367
  %v1431 = vpack.c.bf16 %v1370, %v1369
  %v1432 = vpack.c.bf16 %v1372, %v1371
  %v1433 = vpack.c.bf16 %v1374, %v1373
  %v1434 = vpack.c.bf16 %v1376, %v1375
  %v1435 = vpack.c.bf16 %v1378, %v1377
  %v1436 = vpack.c.bf16 %v1380, %v1379
  %v1437 = vpack.c.bf16 %v1382, %v1381
  %v1438 = vpack.c.bf16 %v1384, %v1383
  %v1439 = vpack.c.bf16 %v1386, %v1385
  %v1440 = vpack.c.bf16 %v1388, %v1387
  %v1441 = vpack.c.bf16 %v1390, %v1389
  %v1442 = vpack.c.bf16 %v1392, %v1391
  %v1443 = vpack.c.bf16 %v1394, %v1393
  %1481 = vrot.lane.b32.xlu0 0, 32
  %v1482 = vpop.permute.xlu0 %1481
  %1483 = vrot.lane.b32.xlu0 %v1395, 32
  %v1484 = vpop.permute.xlu0 %1483
  %1485 = vrot.lane.b32.xlu0 %v1396, 32
  %v1486 = vpop.permute.xlu0 %1485
  %1487 = vrot.lane.b32.xlu0 %v1397, 32
  %v1488 = vpop.permute.xlu0 %1487
  %1489 = vrot.lane.b32.xlu0 %v1398, 32
  %v1490 = vpop.permute.xlu0 %1489
  %1491 = vrot.lane.b32.xlu0 %v1399, 32
  %v1492 = vpop.permute.xlu0 %1491
  %1493 = vrot.lane.b32.xlu0 %v1400, 32
  %v1494 = vpop.permute.xlu0 %1493
  %1495 = vrot.lane.b32.xlu0 %v1402, 32
  %v1496 = vpop.permute.xlu0 %1495
  %1497 = vrot.lane.b32.xlu0 %v1403, 32
  %v1498 = vpop.permute.xlu0 %1497
  %1499 = vrot.lane.b32.xlu0 %v1404, 32
  %v1500 = vpop.permute.xlu0 %1499
  %1501 = vrot.lane.b32.xlu0 %v1405, 32
  %v1502 = vpop.permute.xlu0 %1501
  %1503 = vrot.lane.b32.xlu0 %v1406, 32
  %v1504 = vpop.permute.xlu0 %1503
  %1505 = vrot.lane.b32.xlu0 %v1407, 32
  %v1506 = vpop.permute.xlu0 %1505
  %1507 = vrot.lane.b32.xlu0 %v1409, 32
  %v1508 = vpop.permute.xlu0 %1507
  %1509 = vrot.lane.b32.xlu0 %v1410, 32
  %v1510 = vpop.permute.xlu0 %1509
  %1511 = vrot.lane.b32.xlu0 %v1411, 32
  %v1512 = vpop.permute.xlu0 %1511
  %1513 = vrot.lane.b32.xlu0 %v1412, 32
  %v1514 = vpop.permute.xlu0 %1513
  %1515 = vrot.lane.b32.xlu0 %v1413, 32
  %v1516 = vpop.permute.xlu0 %1515
  %1517 = vrot.lane.b32.xlu0 %v1414, 32
  %v1518 = vpop.permute.xlu0 %1517
  %1519 = vrot.lane.b32.xlu0 %v1416, 32
  %v1520 = vpop.permute.xlu0 %1519
  %1521 = vrot.lane.b32.xlu0 %v1417, 32
  %v1522 = vpop.permute.xlu0 %1521
  %1523 = vrot.lane.b32.xlu0 %v1418, 32
  %v1524 = vpop.permute.xlu0 %1523
  %1525 = vrot.lane.b32.xlu0 %v1419, 32
  %v1526 = vpop.permute.xlu0 %1525
  %1527 = vrot.lane.b32.xlu0 %v1420, 32
  %v1528 = vpop.permute.xlu0 %1527
  %1529 = vrot.lane.b32.xlu0 %v1421, 32
  %v1530 = vpop.permute.xlu0 %1529
  %1531 = vrot.lane.b32.xlu0 %v1423, 32
  %v1532 = vpop.permute.xlu0 %1531
  %1533 = vrot.lane.b32.xlu0 %v1424, 32
  %v1534 = vpop.permute.xlu0 %1533
  %1535 = vrot.lane.b32.xlu0 %v1425, 32
  %v1536 = vpop.permute.xlu0 %1535
  %1537 = vrot.lane.b32.xlu0 %v1426, 32
  %v1538 = vpop.permute.xlu0 %1537
  %1539 = vrot.lane.b32.xlu0 %v1427, 32
  %v1540 = vpop.permute.xlu0 %1539
  %1541 = vrot.lane.b32.xlu0 %v1428, 32
  %v1542 = vpop.permute.xlu0 %1541
  %1543 = vrot.lane.b32.xlu0 %v1430, 32
  %v1544 = vpop.permute.xlu0 %1543
  %1545 = vrot.lane.b32.xlu0 %v1431, 32
  %v1546 = vpop.permute.xlu0 %1545
  %1547 = vrot.lane.b32.xlu0 %v1432, 32
  %v1548 = vpop.permute.xlu0 %1547
  %1549 = vrot.lane.b32.xlu0 %v1433, 32
  %v1550 = vpop.permute.xlu0 %1549
  %1551 = vrot.lane.b32.xlu0 %v1434, 32
  %v1552 = vpop.permute.xlu0 %1551
  %1553 = vrot.lane.b32.xlu0 %v1435, 32
  %v1554 = vpop.permute.xlu0 %1553
  %1561 = vrot.lane.b32.xlu0 0, 96
  %v1562 = vpop.permute.xlu0 %1561
  %1563 = vrot.lane.b32.xlu0 %v1395, 96
  %v1564 = vpop.permute.xlu0 %1563
  %1565 = vrot.lane.b32.xlu0 %v1396, 96
  %v1566 = vpop.permute.xlu0 %1565
  %1567 = vrot.lane.b32.xlu0 %v1397, 96
  %v1568 = vpop.permute.xlu0 %1567
  %1569 = vrot.lane.b32.xlu0 %v1398, 96
  %v1570 = vpop.permute.xlu0 %1569
  %1571 = vrot.lane.b32.xlu0 %v1399, 96
  %v1572 = vpop.permute.xlu0 %1571
  %1573 = vrot.lane.b32.xlu0 %v1400, 96
  %v1574 = vpop.permute.xlu0 %1573
  %1575 = vrot.lane.b32.xlu0 %v1401, 96
  %v1576 = vpop.permute.xlu0 %1575
  %1577 = vrot.lane.b32.xlu0 %v1402, 96
  %v1578 = vpop.permute.xlu0 %1577
  %1579 = vrot.lane.b32.xlu0 %v1403, 96
  %v1580 = vpop.permute.xlu0 %1579
  %1581 = vrot.lane.b32.xlu0 %v1404, 96
  %v1582 = vpop.permute.xlu0 %1581
  %1583 = vrot.lane.b32.xlu0 %v1405, 96
  %v1584 = vpop.permute.xlu0 %1583
  %1585 = vrot.lane.b32.xlu0 %v1406, 96
  %v1586 = vpop.permute.xlu0 %1585
  %1587 = vrot.lane.b32.xlu0 %v1407, 96
  %v1588 = vpop.permute.xlu0 %1587
  %1589 = vrot.lane.b32.xlu0 %v1408, 96
  %v1590 = vpop.permute.xlu0 %1589
  %1591 = vrot.lane.b32.xlu0 %v1409, 96
  %v1592 = vpop.permute.xlu0 %1591
  %1593 = vrot.lane.b32.xlu0 %v1410, 96
  %v1594 = vpop.permute.xlu0 %1593
  %1595 = vrot.lane.b32.xlu0 %v1411, 96
  %v1596 = vpop.permute.xlu0 %1595
  %1597 = vrot.lane.b32.xlu0 %v1412, 96
  %v1598 = vpop.permute.xlu0 %1597
  %1599 = vrot.lane.b32.xlu0 %v1413, 96
  %v1600 = vpop.permute.xlu0 %1599
  %1601 = vrot.lane.b32.xlu0 %v1414, 96
  %v1602 = vpop.permute.xlu0 %1601
  %1603 = vrot.lane.b32.xlu0 %v1415, 96
  %v1604 = vpop.permute.xlu0 %1603
  %1605 = vrot.lane.b32.xlu0 %v1416, 96
  %v1606 = vpop.permute.xlu0 %1605
  %1607 = vrot.lane.b32.xlu0 %v1417, 96
  %v1608 = vpop.permute.xlu0 %1607
  %1609 = vrot.lane.b32.xlu0 %v1418, 96
  %v1610 = vpop.permute.xlu0 %1609
  %1611 = vrot.lane.b32.xlu0 %v1419, 96
  %v1612 = vpop.permute.xlu0 %1611
  %1613 = vrot.lane.b32.xlu0 %v1420, 96
  %v1614 = vpop.permute.xlu0 %1613
  %1615 = vrot.lane.b32.xlu0 %v1421, 96
  %v1616 = vpop.permute.xlu0 %1615
  %1617 = vrot.lane.b32.xlu0 %v1422, 96
  %v1618 = vpop.permute.xlu0 %1617
  %1619 = vrot.lane.b32.xlu0 %v1423, 96
  %v1620 = vpop.permute.xlu0 %1619
  %1621 = vrot.lane.b32.xlu0 %v1424, 96
  %v1622 = vpop.permute.xlu0 %1621
  %1623 = vrot.lane.b32.xlu0 %v1425, 96
  %v1624 = vpop.permute.xlu0 %1623
  %1625 = vrot.lane.b32.xlu0 %v1426, 96
  %v1626 = vpop.permute.xlu0 %1625
  %1627 = vrot.lane.b32.xlu0 %v1427, 96
  %v1628 = vpop.permute.xlu0 %1627
  %1629 = vrot.lane.b32.xlu0 %v1428, 96
  %v1630 = vpop.permute.xlu0 %1629
  %1631 = vrot.lane.b32.xlu0 %v1429, 96
  %v1632 = vpop.permute.xlu0 %1631
  %1633 = vrot.lane.b32.xlu0 %v1430, 96
  %v1634 = vpop.permute.xlu0 %1633
  %1635 = vrot.lane.b32.xlu0 %v1431, 96
  %v1636 = vpop.permute.xlu0 %1635
  %1637 = vrot.lane.b32.xlu0 %v1432, 96
  %v1638 = vpop.permute.xlu0 %1637
  %1639 = vrot.lane.b32.xlu0 %v1433, 96
  %v1640 = vpop.permute.xlu0 %1639
  %1641 = vrot.lane.b32.xlu0 %v1434, 96
  %v1642 = vpop.permute.xlu0 %1641
  %1643 = vrot.lane.b32.xlu0 %v1435, 96
  %v1644 = vpop.permute.xlu0 %1643
  %1645 = vrot.lane.b32.xlu0 %v1436, 96
  %v1646 = vpop.permute.xlu0 %1645
  %1653 = vrot.lane.b32.xlu0 0, 64
  %v1654 = vpop.permute.xlu0 %1653
  %1655 = vrot.lane.b32.xlu0 %v1395, 64
  %v1656 = vpop.permute.xlu0 %1655
  %1657 = vrot.lane.b32.xlu0 %v1396, 64
  %v1658 = vpop.permute.xlu0 %1657
  %1659 = vrot.lane.b32.xlu0 %v1397, 64
  %v1660 = vpop.permute.xlu0 %1659
  %1661 = vrot.lane.b32.xlu0 %v1398, 64
  %v1662 = vpop.permute.xlu0 %1661
  %1663 = vrot.lane.b32.xlu0 %v1399, 64
  %v1664 = vpop.permute.xlu0 %1663
  %1665 = vrot.lane.b32.xlu0 %v1400, 64
  %v1666 = vpop.permute.xlu0 %1665
  %1667 = vrot.lane.b32.xlu0 %v1402, 64
  %v1668 = vpop.permute.xlu0 %1667
  %1669 = vrot.lane.b32.xlu0 %v1403, 64
  %v1670 = vpop.permute.xlu0 %1669
  %1671 = vrot.lane.b32.xlu0 %v1404, 64
  %v1672 = vpop.permute.xlu0 %1671
  %1673 = vrot.lane.b32.xlu0 %v1405, 64
  %v1674 = vpop.permute.xlu0 %1673
  %1675 = vrot.lane.b32.xlu0 %v1406, 64
  %v1676 = vpop.permute.xlu0 %1675
  %1677 = vrot.lane.b32.xlu0 %v1407, 64
  %v1678 = vpop.permute.xlu0 %1677
  %1679 = vrot.lane.b32.xlu0 %v1409, 64
  %v1680 = vpop.permute.xlu0 %1679
  %1681 = vrot.lane.b32.xlu0 %v1410, 64
  %v1682 = vpop.permute.xlu0 %1681
  %1683 = vrot.lane.b32.xlu0 %v1411, 64
  %v1684 = vpop.permute.xlu0 %1683
  %1685 = vrot.lane.b32.xlu0 %v1412, 64
  %v1686 = vpop.permute.xlu0 %1685
  %1687 = vrot.lane.b32.xlu0 %v1413, 64
  %v1688 = vpop.permute.xlu0 %1687
  %1689 = vrot.lane.b32.xlu0 %v1414, 64
  %v1690 = vpop.permute.xlu0 %1689
  %1691 = vrot.lane.b32.xlu0 %v1416, 64
  %v1692 = vpop.permute.xlu0 %1691
  %1693 = vrot.lane.b32.xlu0 %v1417, 64
  %v1694 = vpop.permute.xlu0 %1693
  %1695 = vrot.lane.b32.xlu0 %v1418, 64
  %v1696 = vpop.permute.xlu0 %1695
  %1697 = vrot.lane.b32.xlu0 %v1419, 64
  %v1698 = vpop.permute.xlu0 %1697
  %1699 = vrot.lane.b32.xlu0 %v1420, 64
  %v1700 = vpop.permute.xlu0 %1699
  %1701 = vrot.lane.b32.xlu0 %v1421, 64
  %v1702 = vpop.permute.xlu0 %1701
  %1703 = vrot.lane.b32.xlu0 %v1423, 64
  %v1704 = vpop.permute.xlu0 %1703
  %1705 = vrot.lane.b32.xlu0 %v1424, 64
  %v1706 = vpop.permute.xlu0 %1705
  %1707 = vrot.lane.b32.xlu0 %v1425, 64
  %v1708 = vpop.permute.xlu0 %1707
  %1709 = vrot.lane.b32.xlu0 %v1426, 64
  %v1710 = vpop.permute.xlu0 %1709
  %1711 = vrot.lane.b32.xlu0 %v1427, 64
  %v1712 = vpop.permute.xlu0 %1711
  %1713 = vrot.lane.b32.xlu0 %v1428, 64
  %v1714 = vpop.permute.xlu0 %1713
  %1715 = vrot.lane.b32.xlu0 %v1430, 64
  %v1716 = vpop.permute.xlu0 %1715
  %1717 = vrot.lane.b32.xlu0 %v1431, 64
  %v1718 = vpop.permute.xlu0 %1717
  %1719 = vrot.lane.b32.xlu0 %v1432, 64
  %v1720 = vpop.permute.xlu0 %1719
  %1721 = vrot.lane.b32.xlu0 %v1433, 64
  %v1722 = vpop.permute.xlu0 %1721
  %1723 = vrot.lane.b32.xlu0 %v1434, 64
  %v1724 = vpop.permute.xlu0 %1723
  %1725 = vrot.lane.b32.xlu0 %v1435, 64
  %v1726 = vpop.permute.xlu0 %1725
  %1727 = vrot.lane.b32.xlu0 %v1437, 64
  %v1728 = vpop.permute.xlu0 %1727
  %1729 = vrot.lane.b32.xlu0 %v1438, 64
  %v1730 = vpop.permute.xlu0 %1729
  %1731 = vrot.lane.b32.xlu0 %v1439, 64
  %v1732 = vpop.permute.xlu0 %1731
  %1733 = vrot.lane.b32.xlu0 %v1440, 64
  %v1734 = vpop.permute.xlu0 %1733
  %1735 = vrot.lane.b32.xlu0 %v1441, 64
  %v1736 = vpop.permute.xlu0 %1735
  %1737 = vrot.lane.b32.xlu0 %v1442, 64
  %v1738 = vpop.permute.xlu0 %1737
  %1739 = vrot.lane.b32.xlu0 %v1437, 96
  %v1740 = vpop.permute.xlu0 %1739
  %1741 = vrot.lane.b32.xlu0 %v1438, 96
  %v1742 = vpop.permute.xlu0 %1741
  %1743 = vrot.lane.b32.xlu0 %v1439, 96
  %v1744 = vpop.permute.xlu0 %1743
  %1745 = vrot.lane.b32.xlu0 %v1440, 96
  %v1746 = vpop.permute.xlu0 %1745
  %1747 = vrot.lane.b32.xlu0 %v1441, 96
  %v1748 = vpop.permute.xlu0 %1747
  %1749 = vrot.lane.b32.xlu0 %v1442, 96
  %v1750 = vpop.permute.xlu0 %1749
  %1752 = vrot.lane.b32.xlu0 %v1401, 32
  %v1753 = vpop.permute.xlu0 %1752
  %1754 = vrot.lane.b32.xlu0 %v1408, 32
  %v1755 = vpop.permute.xlu0 %1754
  %1756 = vrot.lane.b32.xlu0 %v1415, 32
  %v1757 = vpop.permute.xlu0 %1756
  %1758 = vrot.lane.b32.xlu0 %v1422, 32
  %v1759 = vpop.permute.xlu0 %1758
  %1760 = vrot.lane.b32.xlu0 %v1429, 32
  %v1761 = vpop.permute.xlu0 %1760
  %1762 = vrot.lane.b32.xlu0 %v1436, 32
  %v1763 = vpop.permute.xlu0 %1762
  %1764 = vrot.lane.b32.xlu0 %v1437, 32
  %v1765 = vpop.permute.xlu0 %1764
  %1766 = vrot.lane.b32.xlu0 %v1438, 32
  %v1767 = vpop.permute.xlu0 %1766
  %1768 = vrot.lane.b32.xlu0 %v1439, 32
  %v1769 = vpop.permute.xlu0 %1768
  %1770 = vrot.lane.b32.xlu0 %v1440, 32
  %v1771 = vpop.permute.xlu0 %1770
  %1772 = vrot.lane.b32.xlu0 %v1441, 32
  %v1773 = vpop.permute.xlu0 %1772
  %1774 = vrot.lane.b32.xlu0 %v1442, 32
  %v1775 = vpop.permute.xlu0 %1774
  %1776 = vrot.lane.b32.xlu0 %v1443, 32
  %v1777 = vpop.permute.xlu0 %1776
  %vm1778 = vcmask 261120
  %v1781 = vsel %vm1778, %v1482, %v1562
  %v1783 = vsel %vm1778, %v1482, %v1564
  %v1786 = vsel %vm1778, %v1484, %v1566
  %v1789 = vsel %vm1778, %v1486, %v1568
  %v1792 = vsel %vm1778, %v1488, %v1570
  %v1795 = vsel %vm1778, %v1490, %v1572
  %v1798 = vsel %vm1778, %v1492, %v1574
  %v1801 = vsel %vm1778, %v1494, %v1576
  %v1803 = vsel %vm1778, %v1482, %v1578
  %v1806 = vsel %vm1778, %v1496, %v1580
  %v1809 = vsel %vm1778, %v1498, %v1582
  %v1812 = vsel %vm1778, %v1500, %v1584
  %v1815 = vsel %vm1778, %v1502, %v1586
  %v1818 = vsel %vm1778, %v1504, %v1588
  %v1821 = vsel %vm1778, %v1506, %v1590
  %v1823 = vsel %vm1778, %v1482, %v1592
  %v1826 = vsel %vm1778, %v1508, %v1594
  %v1829 = vsel %vm1778, %v1510, %v1596
  %v1832 = vsel %vm1778, %v1512, %v1598
  %v1835 = vsel %vm1778, %v1514, %v1600
  %v1838 = vsel %vm1778, %v1516, %v1602
  %v1841 = vsel %vm1778, %v1518, %v1604
  %v1843 = vsel %vm1778, %v1482, %v1606
  %v1846 = vsel %vm1778, %v1520, %v1608
  %v1849 = vsel %vm1778, %v1522, %v1610
  %v1852 = vsel %vm1778, %v1524, %v1612
  %v1855 = vsel %vm1778, %v1526, %v1614
  %v1858 = vsel %vm1778, %v1528, %v1616
  %v1861 = vsel %vm1778, %v1530, %v1618
  %v1863 = vsel %vm1778, %v1482, %v1620
  %v1866 = vsel %vm1778, %v1532, %v1622
  %v1869 = vsel %vm1778, %v1534, %v1624
  %v1872 = vsel %vm1778, %v1536, %v1626
  %v1875 = vsel %vm1778, %v1538, %v1628
  %v1878 = vsel %vm1778, %v1540, %v1630
  %v1881 = vsel %vm1778, %v1542, %v1632
  %v1883 = vsel %vm1778, %v1482, %v1634
  %v1886 = vsel %vm1778, %v1544, %v1636
  %v1889 = vsel %vm1778, %v1546, %v1638
  %v1892 = vsel %vm1778, %v1548, %v1640
  %v1895 = vsel %vm1778, %v1550, %v1642
  %v1898 = vsel %vm1778, %v1552, %v1644
  %v1901 = vsel %vm1778, %v1554, %v1646
  %vm1902 = vcmask 523264
  %v1903 = vsel %vm1902, %v1781, %v1562
  %v1904 = vsel %vm1902, %v1783, %v1564
  %v1905 = vsel %vm1902, %v1786, %v1566
  %v1906 = vsel %vm1902, %v1789, %v1568
  %v1907 = vsel %vm1902, %v1792, %v1570
  %v1908 = vsel %vm1902, %v1795, %v1572
  %v1909 = vsel %vm1902, %v1798, %v1574
  %v1910 = vsel %vm1902, %v1801, %v1576
  %v1911 = vsel %vm1902, %v1803, %v1578
  %v1912 = vsel %vm1902, %v1806, %v1580
  %v1913 = vsel %vm1902, %v1809, %v1582
  %v1914 = vsel %vm1902, %v1812, %v1584
  %v1915 = vsel %vm1902, %v1815, %v1586
  %v1916 = vsel %vm1902, %v1818, %v1588
  %v1917 = vsel %vm1902, %v1821, %v1590
  %v1918 = vsel %vm1902, %v1823, %v1592
  %v1919 = vsel %vm1902, %v1826, %v1594
  %v1920 = vsel %vm1902, %v1829, %v1596
  %v1921 = vsel %vm1902, %v1832, %v1598
  %v1922 = vsel %vm1902, %v1835, %v1600
  %v1923 = vsel %vm1902, %v1838, %v1602
  %v1924 = vsel %vm1902, %v1841, %v1604
  %v1925 = vsel %vm1902, %v1843, %v1606
  %v1926 = vsel %vm1902, %v1846, %v1608
  %v1927 = vsel %vm1902, %v1849, %v1610
  %v1928 = vsel %vm1902, %v1852, %v1612
  %v1929 = vsel %vm1902, %v1855, %v1614
  %v1930 = vsel %vm1902, %v1858, %v1616
  %v1931 = vsel %vm1902, %v1861, %v1618
  %v1932 = vsel %vm1902, %v1863, %v1620
  %v1933 = vsel %vm1902, %v1866, %v1622
  %v1934 = vsel %vm1902, %v1869, %v1624
  %v1935 = vsel %vm1902, %v1872, %v1626
  %v1936 = vsel %vm1902, %v1875, %v1628
  %v1937 = vsel %vm1902, %v1878, %v1630
  %v1938 = vsel %vm1902, %v1881, %v1632
  %v1939 = vsel %vm1902, %v1883, %v1634
  %v1940 = vsel %vm1902, %v1886, %v1636
  %v1941 = vsel %vm1902, %v1889, %v1638
  %v1942 = vsel %vm1902, %v1892, %v1640
  %v1943 = vsel %vm1902, %v1895, %v1642
  %v1944 = vsel %vm1902, %v1898, %v1644
  %v1945 = vsel %vm1902, %v1901, %v1646
  %vm1946 = vcmask 785408
  %v1948 = vsel %vm1946, %v1903, %v1654
  %v1951 = vsel %vm1946, %v1903, %v1656
  %v1954 = vsel %vm1946, %v1903, %v1658
  %v1957 = vsel %vm1946, %v1903, %v1660
  %v1960 = vsel %vm1946, %v1903, %v1662
  %v1963 = vsel %vm1946, %v1903, %v1664
  %v1966 = vsel %vm1946, %v1903, %v1666
  %v1968 = vsel %vm1946, %v1904, %v1654
  %v1971 = vsel %vm1946, %v1905, %v1668
  %v1974 = vsel %vm1946, %v1906, %v1670
  %v1977 = vsel %vm1946, %v1907, %v1672
  %v1980 = vsel %vm1946, %v1908, %v1674
  %v1983 = vsel %vm1946, %v1909, %v1676
  %v1986 = vsel %vm1946, %v1910, %v1678
  %v1988 = vsel %vm1946, %v1911, %v1654
  %v1991 = vsel %vm1946, %v1912, %v1680
  %v1994 = vsel %vm1946, %v1913, %v1682
  %v1997 = vsel %vm1946, %v1914, %v1684
  %v2000 = vsel %vm1946, %v1915, %v1686
  %v2003 = vsel %vm1946, %v1916, %v1688
  %v2006 = vsel %vm1946, %v1917, %v1690
  %v2008 = vsel %vm1946, %v1918, %v1654
  %v2011 = vsel %vm1946, %v1919, %v1692
  %v2014 = vsel %vm1946, %v1920, %v1694
  %v2017 = vsel %vm1946, %v1921, %v1696
  %v2020 = vsel %vm1946, %v1922, %v1698
  %v2023 = vsel %vm1946, %v1923, %v1700
  %v2026 = vsel %vm1946, %v1924, %v1702
  %v2028 = vsel %vm1946, %v1925, %v1654
  %v2031 = vsel %vm1946, %v1926, %v1704
  %v2034 = vsel %vm1946, %v1927, %v1706
  %v2037 = vsel %vm1946, %v1928, %v1708
  %v2040 = vsel %vm1946, %v1929, %v1710
  %v2043 = vsel %vm1946, %v1930, %v1712
  %v2046 = vsel %vm1946, %v1931, %v1714
  %v2048 = vsel %vm1946, %v1932, %v1654
  %v2051 = vsel %vm1946, %v1933, %v1716
  %v2054 = vsel %vm1946, %v1934, %v1718
  %v2057 = vsel %vm1946, %v1935, %v1720
  %v2060 = vsel %vm1946, %v1936, %v1722
  %v2063 = vsel %vm1946, %v1937, %v1724
  %v2066 = vsel %vm1946, %v1938, %v1726
  %v2068 = vsel %vm1946, %v1939, %v1654
  %v2071 = vsel %vm1946, %v1940, %v1728
  %v2074 = vsel %vm1946, %v1941, %v1730
  %v2077 = vsel %vm1946, %v1942, %v1732
  %v2080 = vsel %vm1946, %v1943, %v1734
  %v2083 = vsel %vm1946, %v1944, %v1736
  %v2086 = vsel %vm1946, %v1945, %v1738
  %v2137 = vsel %vm1902, %v1395, %v1562
  %v2138 = vsel %vm1902, %v1396, %v1564
  %v2139 = vsel %vm1902, %v1397, %v1566
  %v2140 = vsel %vm1902, %v1398, %v1568
  %v2141 = vsel %vm1902, %v1399, %v1570
  %v2142 = vsel %vm1902, %v1400, %v1572
  %v2143 = vsel %vm1902, %v1401, %v1574
  %v2144 = vsel %vm1902, %v1402, %v1562
  %v2145 = vsel %vm1902, %v1403, %v1578
  %v2146 = vsel %vm1902, %v1404, %v1580
  %v2147 = vsel %vm1902, %v1405, %v1582
  %v2148 = vsel %vm1902, %v1406, %v1584
  %v2149 = vsel %vm1902, %v1407, %v1586
  %v2150 = vsel %vm1902, %v1408, %v1588
  %v2151 = vsel %vm1902, %v1409, %v1562
  %v2152 = vsel %vm1902, %v1410, %v1592
  %v2153 = vsel %vm1902, %v1411, %v1594
  %v2154 = vsel %vm1902, %v1412, %v1596
  %v2155 = vsel %vm1902, %v1413, %v1598
  %v2156 = vsel %vm1902, %v1414, %v1600
  %v2157 = vsel %vm1902, %v1415, %v1602
  %v2158 = vsel %vm1902, %v1416, %v1562
  %v2159 = vsel %vm1902, %v1417, %v1606
  %v2160 = vsel %vm1902, %v1418, %v1608
  %v2161 = vsel %vm1902, %v1419, %v1610
  %v2162 = vsel %vm1902, %v1420, %v1612
  %v2163 = vsel %vm1902, %v1421, %v1614
  %v2164 = vsel %vm1902, %v1422, %v1616
  %v2165 = vsel %vm1902, %v1423, %v1562
  %v2166 = vsel %vm1902, %v1424, %v1620
  %v2167 = vsel %vm1902, %v1425, %v1622
  %v2168 = vsel %vm1902, %v1426, %v1624
  %v2169 = vsel %vm1902, %v1427, %v1626
  %v2170 = vsel %vm1902, %v1428, %v1628
  %v2171 = vsel %vm1902, %v1429, %v1630
  %v2172 = vsel %vm1902, %v1430, %v1562
  %v2173 = vsel %vm1902, %v1431, %v1634
  %v2174 = vsel %vm1902, %v1432, %v1636
  %v2175 = vsel %vm1902, %v1433, %v1638
  %v2176 = vsel %vm1902, %v1434, %v1640
  %v2177 = vsel %vm1902, %v1435, %v1642
  %v2178 = vsel %vm1902, %v1436, %v1644
  %v2179 = vsel %vm1902, %v1437, %v1562
  %v2181 = vsel %vm1902, %v1438, %v1740
  %v2183 = vsel %vm1902, %v1439, %v1742
  %v2185 = vsel %vm1902, %v1440, %v1744
  %v2187 = vsel %vm1902, %v1441, %v1746
  %v2189 = vsel %vm1902, %v1442, %v1748
  %v2191 = vsel %vm1902, %v1443, %v1750
  %v2192 = vsel %vm1946, %v2137, %v1484
  %v2194 = vsel %vm1946, %v2138, %v1486
  %v2196 = vsel %vm1946, %v2139, %v1488
  %v2198 = vsel %vm1946, %v2140, %v1490
  %v2200 = vsel %vm1946, %v2141, %v1492
  %v2202 = vsel %vm1946, %v2142, %v1494
  %v2205 = vsel %vm1946, %v2143, %v1753
  %v2207 = vsel %vm1946, %v2144, %v1496
  %v2209 = vsel %vm1946, %v2145, %v1498
  %v2211 = vsel %vm1946, %v2146, %v1500
  %v2213 = vsel %vm1946, %v2147, %v1502
  %v2215 = vsel %vm1946, %v2148, %v1504
  %v2217 = vsel %vm1946, %v2149, %v1506
  %v2220 = vsel %vm1946, %v2150, %v1755
  %v2222 = vsel %vm1946, %v2151, %v1508
  %v2224 = vsel %vm1946, %v2152, %v1510
  %v2226 = vsel %vm1946, %v2153, %v1512
  %v2228 = vsel %vm1946, %v2154, %v1514
  %v2230 = vsel %vm1946, %v2155, %v1516
  %v2232 = vsel %vm1946, %v2156, %v1518
  %v2235 = vsel %vm1946, %v2157, %v1757
  %v2237 = vsel %vm1946, %v2158, %v1520
  %v2239 = vsel %vm1946, %v2159, %v1522
  %v2241 = vsel %vm1946, %v2160, %v1524
  %v2243 = vsel %vm1946, %v2161, %v1526
  %v2245 = vsel %vm1946, %v2162, %v1528
  %v2247 = vsel %vm1946, %v2163, %v1530
  %v2250 = vsel %vm1946, %v2164, %v1759
  %v2252 = vsel %vm1946, %v2165, %v1532
  %v2254 = vsel %vm1946, %v2166, %v1534
  %v2256 = vsel %vm1946, %v2167, %v1536
  %v2258 = vsel %vm1946, %v2168, %v1538
  %v2260 = vsel %vm1946, %v2169, %v1540
  %v2262 = vsel %vm1946, %v2170, %v1542
  %v2265 = vsel %vm1946, %v2171, %v1761
  %v2267 = vsel %vm1946, %v2172, %v1544
  %v2269 = vsel %vm1946, %v2173, %v1546
  %v2271 = vsel %vm1946, %v2174, %v1548
  %v2273 = vsel %vm1946, %v2175, %v1550
  %v2275 = vsel %vm1946, %v2176, %v1552
  %v2277 = vsel %vm1946, %v2177, %v1554
  %v2280 = vsel %vm1946, %v2178, %v1763
  %v2283 = vsel %vm1946, %v2179, %v1765
  %v2286 = vsel %vm1946, %v2181, %v1767
  %v2289 = vsel %vm1946, %v2183, %v1769
  %v2292 = vsel %vm1946, %v2185, %v1771
  %v2295 = vsel %vm1946, %v2187, %v1773
  %v2298 = vsel %vm1946, %v2189, %v1775
  %v2301 = vsel %vm1946, %v2191, %v1777
  %v2303 = vld [vmem:[%s5] sm:$0xf]
  %v2304 = vld [vmem:[%s5 + $0x4] sm:$0xf]
  %v2305 = vld [vmem:[%s5 + $0x8] sm:$0xf]
  %v2306 = vld [vmem:[%s5 + $0xc] sm:$0xf]
  %v2307 = vld [vmem:[%s5 + $0x10] sm:$0xf]
  %v2308 = vld [vmem:[%s5 + $0x14] sm:$0xf]
  %v2309 = vld [vmem:[%s5 + $0x18] sm:$0xf]
  %v2310 = vld [vmem:[%s5 + $0x1c] sm:$0xf]
  %v2311 = vld [vmem:[%s5 + $0x20] sm:$0xf]
  %v2312 = vld [vmem:[%s5 + $0x24] sm:$0xf]
  %v2313 = vld [vmem:[%s5 + $0x28] sm:$0xf]
  %v2314 = vld [vmem:[%s5 + $0x2c] sm:$0xf]
  %v2315 = vld [vmem:[%s5 + $0x30] sm:$0xf]
  %v2316 = vld [vmem:[%s5 + $0x34] sm:$0xf]
  %v2317 = vld [vmem:[%s5 + $0x38] sm:$0xf]
  %v2318 = vld [vmem:[%s5 + $0x3c] sm:$0xf]
  %v2319 = vld [vmem:[%s5 + $0x40] sm:$0xf]
  %v2320 = vld [vmem:[%s5 + $0x44] sm:$0xf]
  %v2321 = vld [vmem:[%s5 + $0x48] sm:$0xf]
  %v2322 = vld [vmem:[%s5 + $0x4c] sm:$0xf]
  %v2323 = vld [vmem:[%s5 + $0x50] sm:$0xf]
  %v2324 = vld [vmem:[%s5 + $0x54] sm:$0xf]
  %v2325 = vld [vmem:[%s5 + $0x58] sm:$0xf]
  %v2326 = vld [vmem:[%s5 + $0x5c] sm:$0xf]
  %v2327 = vld [vmem:[%s5 + $0x60] sm:$0xf]
  %v2328 = vld [vmem:[%s5 + $0x64] sm:$0xf]
  %v2329 = vld [vmem:[%s5 + $0x68] sm:$0xf]
  %v2330 = vld [vmem:[%s5 + $0x6c] sm:$0xf]
  %v2331 = vld [vmem:[%s5 + $0x70] sm:$0xf]
  %v2332 = vld [vmem:[%s5 + $0x74] sm:$0xf]
  %v2333 = vld [vmem:[%s5 + $0x78] sm:$0xf]
  %v2334 = vld [vmem:[%s5 + $0x7c] sm:$0xf]
  %v2335 = vld [vmem:[%s5 + $0x80] sm:$0xf]
  %v2336 = vld [vmem:[%s5 + $0x84] sm:$0xf]
  %v2337 = vld [vmem:[%s5 + $0x88] sm:$0xf]
  %v2338 = vld [vmem:[%s5 + $0x8c] sm:$0xf]
  %v2339 = vld [vmem:[%s6] sm:$0x1]
  %v2341 = vlaneseq
  %v2342 = vshrl.u32 %v2341, 7
  %v2343 = vsub.s32 0, %v2342
  %v2344 = vrot.slane %v2339, %v2343
  %v2382 = vunpack.c.l.b16 %v2303
  %v2383 = vunpack.c.l.b16 %v2304
  %v2384 = vunpack.c.l.b16 %v2305
  %v2385 = vunpack.c.l.b16 %v2306
  %v2386 = vunpack.c.l.b16 %v2307
  %v2387 = vunpack.c.l.b16 %v2308
  %v2388 = vunpack.c.l.b16 %v2309
  %v2389 = vunpack.c.l.b16 %v2310
  %v2390 = vunpack.c.l.b16 %v2311
  %v2391 = vunpack.c.l.b16 %v2312
  %v2392 = vunpack.c.l.b16 %v2313
  %v2393 = vunpack.c.l.b16 %v2314
  %v2394 = vunpack.c.l.b16 %v2315
  %v2395 = vunpack.c.l.b16 %v2316
  %v2396 = vunpack.c.l.b16 %v2317
  %v2397 = vunpack.c.l.b16 %v2318
  %v2398 = vunpack.c.l.b16 %v2319
  %v2399 = vunpack.c.l.b16 %v2320
  %v2400 = vunpack.c.l.b16 %v2321
  %v2401 = vunpack.c.l.b16 %v2322
  %v2402 = vunpack.c.l.b16 %v2323
  %v2403 = vunpack.c.l.b16 %v2324
  %v2404 = vunpack.c.l.b16 %v2325
  %v2405 = vunpack.c.l.b16 %v2326
  %v2406 = vunpack.c.l.b16 %v2327
  %v2407 = vunpack.c.l.b16 %v2328
  %v2408 = vunpack.c.l.b16 %v2329
  %v2409 = vunpack.c.l.b16 %v2330
  %v2410 = vunpack.c.l.b16 %v2331
  %v2411 = vunpack.c.l.b16 %v2332
  %v2412 = vunpack.c.l.b16 %v2333
  %v2413 = vunpack.c.l.b16 %v2334
  %v2414 = vunpack.c.l.b16 %v2335
  %v2415 = vunpack.c.l.b16 %v2336
  %v2416 = vunpack.c.l.b16 %v2337
  %v2417 = vunpack.c.l.b16 %v2338
  %v2418 = vpack.c.b16 %v2383, %v2382
  %v2419 = vpack.c.b16 %v2385, %v2384
  %v2420 = vpack.c.b16 %v2387, %v2386
  %v2421 = vpack.c.b16 %v2389, %v2388
  %v2422 = vpack.c.b16 %v2391, %v2390
  %v2423 = vpack.c.b16 %v2393, %v2392
  %v2424 = vpack.c.b16 %v2395, %v2394
  %v2425 = vpack.c.b16 %v2397, %v2396
  %v2426 = vpack.c.b16 %v2399, %v2398
  %v2427 = vpack.c.b16 %v2401, %v2400
  %v2428 = vpack.c.b16 %v2403, %v2402
  %v2429 = vpack.c.b16 %v2405, %v2404
  %v2430 = vpack.c.b16 %v2407, %v2406
  %v2431 = vpack.c.b16 %v2409, %v2408
  %v2432 = vpack.c.b16 %v2411, %v2410
  %v2433 = vpack.c.b16 %v2413, %v2412
  %v2434 = vpack.c.b16 %v2415, %v2414
  %v2435 = vpack.c.b16 %v2417, %v2416
  %v2454 = vsel %vm1778, %v1484, 0
  %v2456 = vsel %vm1778, %v1486, 0
  %v2458 = vsel %vm1778, %v1488, 0
  %v2460 = vsel %vm1778, %v1490, 0
  %v2462 = vsel %vm1778, %v1492, 0
  %v2464 = vsel %vm1778, %v1494, 0
  %v2466 = vsel %vm1778, %v1753, 0
  %v2468 = vsel %vm1778, %v1496, 0
  %v2470 = vsel %vm1778, %v1498, 0
  %v2472 = vsel %vm1778, %v1500, 0
  %v2474 = vsel %vm1778, %v1502, 0
  %v2476 = vsel %vm1778, %v1504, 0
  %v2478 = vsel %vm1778, %v1506, 0
  %v2480 = vsel %vm1778, %v1755, 0
  %v2482 = vsel %vm1778, %v1508, 0
  %v2484 = vsel %vm1778, %v1510, 0
  %v2486 = vsel %vm1778, %v1512, 0
  %v2488 = vsel %vm1778, %v1514, 0
  %v2490 = vsel %vm1778, %v1516, 0
  %v2492 = vsel %vm1778, %v1518, 0
  %v2494 = vsel %vm1778, %v1757, 0
  %v2496 = vsel %vm1778, %v1520, 0
  %v2498 = vsel %vm1778, %v1522, 0
  %v2500 = vsel %vm1778, %v1524, 0
  %v2502 = vsel %vm1778, %v1526, 0
  %v2504 = vsel %vm1778, %v1528, 0
  %v2506 = vsel %vm1778, %v1530, 0
  %v2508 = vsel %vm1778, %v1759, 0
  %v2510 = vsel %vm1778, %v1532, 0
  %v2512 = vsel %vm1778, %v1534, 0
  %v2514 = vsel %vm1778, %v1536, 0
  %v2516 = vsel %vm1778, %v1538, 0
  %v2518 = vsel %vm1778, %v1540, 0
  %v2520 = vsel %vm1778, %v1542, 0
  %v2522 = vsel %vm1778, %v1761, 0
  %v2524 = vsel %vm1778, %v1544, 0
  %v2526 = vsel %vm1778, %v1546, 0
  %v2528 = vsel %vm1778, %v1548, 0
  %v2530 = vsel %vm1778, %v1550, 0
  %v2532 = vsel %vm1778, %v1552, 0
  %v2534 = vsel %vm1778, %v1554, 0
  %v2536 = vsel %vm1778, %v1763, 0
  %v2538 = vsel %vm1778, %v1765, 0
  %v2540 = vsel %vm1778, %v1767, 0
  %v2542 = vsel %vm1778, %v1769, 0
  %v2544 = vsel %vm1778, %v1771, 0
  %v2546 = vsel %vm1778, %v1773, 0
  %v2548 = vsel %vm1778, %v1775, 0
  %v2550 = vsel %vm1778, %v1777, 0
  %2552 = vmatprep.subr.bf16.mxu0 0
  %2553 = vmatpush1.bf16.msra.mxu0 %v2418
  %2554 = vmatprep.subr.bf16.mxu0 0
  %2555 = vmatpush1.bf16.msra.mxu0 %v2419
  %2556 = vmatprep.subr.bf16.mxu0 0
  %2557 = vmatpush1.bf16.msra.mxu0 %v2420
  %2558 = vmatprep.subr.bf16.mxu0 0
  %2559 = vmatpush1.bf16.msra.mxu0 %v2421
  %2560 = vmatprep.subr.bf16.mxu0 0
  %2561 = vmatpush1.bf16.msra.mxu0 %v2422
  %2562 = vmatprep.subr.bf16.mxu0 0
  %2563 = vmatpush1.bf16.msra.mxu0 %v2423
  %2564 = vmatprep.subr.bf16.mxu0 0
  %2565 = vmatpush1.bf16.msra.mxu0 %v2424
  %2566 = vmatprep.subr.bf16.mxu0 0
  %2567 = vmatpush1.bf16.msra.mxu0 %v2425
  %2568 = vmatprep.subr.bf16.mxu0 0
  %2569 = vmatpush1.bf16.msra.mxu0 %v2426
  %2570 = vmatprep.subr.bf16.mxu0 0
  %2571 = vmatpush1.bf16.msra.mxu0 %v2427
  %2572 = vmatprep.subr.bf16.mxu0 0
  %2573 = vmatpush1.bf16.msra.mxu0 %v2428
  %2574 = vmatprep.subr.bf16.mxu0 0
  %2575 = vmatpush1.bf16.msra.mxu0 %v2429
  %2576 = vmatprep.subr.bf16.mxu0 0
  %2577 = vmatpush1.bf16.msra.mxu0 %v2430
  %2578 = vmatprep.subr.bf16.mxu0 0
  %2579 = vmatpush1.bf16.msra.mxu0 %v2431
  %2580 = vmatprep.subr.bf16.mxu0 0
  %2581 = vmatpush1.bf16.msra.mxu0 %v2432
  %2582 = vmatprep.subr.bf16.mxu0 0
  %2583 = vmatpush1.bf16.msra.mxu0 %v2433
  %2584 = vmatprep.mubr.bf16.mxu0 %v2192
  %2585 = vmatmul.mubr.bf16.gmra.mrb[0].mxu0 %v1948
  %v2586 = vpop.f32.mrb[0].mxu0
  %v2587 = vadd.f32 %v2344, %v2586
  %v2588 = vpop.f32.mrb[0].mxu0
  %v2589 = vpop.f32.mrb[0].mxu0
  %v2590 = vadd.f32 %v2344, %v2589
  %v2591 = vpop.f32.mrb[0].mxu0
  %2592 = vmatprep.mubr.bf16.mxu0 %v2194
  %2593 = vmatmul.mubr.bf16.gmra.mrb[0].mxu0 %v1951
  %v2594 = vpop.f32.mrb[0].mxu0
  %v2595 = vadd.f32 %v2344, %v2594
  %v2596 = vpop.f32.mrb[0].mxu0
  %v2597 = vpop.f32.mrb[0].mxu0
  %v2598 = vadd.f32 %v2344, %v2597
  %v2599 = vpop.f32.mrb[0].mxu0
  %2600 = vmatprep.mubr.bf16.mxu0 %v2196
  %2601 = vmatmul.mubr.bf16.gmra.mrb[0].mxu0 %v1954
  %v2602 = vpop.f32.mrb[0].mxu0
  %v2603 = vadd.f32 %v2344, %v2602
  %v2604 = vpop.f32.mrb[0].mxu0
  %v2605 = vpop.f32.mrb[0].mxu0
  %v2606 = vadd.f32 %v2344, %v2605
  %v2607 = vpop.f32.mrb[0].mxu0
  %2608 = vmatprep.mubr.bf16.mxu0 %v2198
  %2609 = vmatmul.mubr.bf16.gmra.mrb[0].mxu0 %v1957
  %v2610 = vpop.f32.mrb[0].mxu0
  %v2611 = vadd.f32 %v2344, %v2610
  %v2612 = vpop.f32.mrb[0].mxu0
  %v2613 = vpop.f32.mrb[0].mxu0
  %v2614 = vadd.f32 %v2344, %v2613
  %v2615 = vpop.f32.mrb[0].mxu0
  %2616 = vmatprep.mubr.bf16.mxu0 %v2200
  %2617 = vmatmul.mubr.bf16.gmra.mrb[0].mxu0 %v1960
  %v2618 = vpop.f32.mrb[0].mxu0
  %v2619 = vadd.f32 %v2344, %v2618
  %v2620 = vpop.f32.mrb[0].mxu0
  %v2621 = vpop.f32.mrb[0].mxu0
  %v2622 = vadd.f32 %v2344, %v2621
  %v2623 = vpop.f32.mrb[0].mxu0
  %2624 = vmatprep.mubr.bf16.mxu0 %v2202
  %2625 = vmatmul.mubr.bf16.gmra.mrb[0].mxu0 %v1963
  %v2626 = vpop.f32.mrb[0].mxu0
  %v2627 = vadd.f32 %v2344, %v2626
  %v2628 = vpop.f32.mrb[0].mxu0
  %v2629 = vpop.f32.mrb[0].mxu0
  %v2630 = vadd.f32 %v2344, %v2629
  %v2631 = vpop.f32.mrb[0].mxu0
  %2632 = vmatprep.mubr.bf16.mxu0 %v2205
  %2633 = vmatmul.mubr.bf16.gmra.mrb[0].mxu0 %v1966
  %v2634 = vpop.f32.mrb[0].mxu0
  %v2635 = vadd.f32 %v2344, %v2634
  %v2636 = vpop.f32.mrb[0].mxu0
  %v2637 = vpop.f32.mrb[0].mxu0
  %v2638 = vadd.f32 %v2344, %v2637
  %v2639 = vpop.f32.mrb[0].mxu0
  %2640 = vmatprep.mubr.bf16.mxu0 %v2207
  %2641 = vmatmul.mubr.bf16.gmra.mrb[0].mxu0 %v1968
  %v2642 = vpop.f32.mrb[0].mxu0
  %v2643 = vadd.f32 %v2344, %v2642
  %v2644 = vpop.f32.mrb[0].mxu0
  %v2645 = vpop.f32.mrb[0].mxu0
  %v2646 = vadd.f32 %v2344, %v2645
  %v2647 = vpop.f32.mrb[0].mxu0
  %2648 = vmatprep.mubr.bf16.mxu0 %v2209
  %2649 = vmatmul.mubr.bf16.gmra.mrb[0].mxu0 %v1971
  %v2650 = vpop.f32.mrb[0].mxu0
  %v2651 = vadd.f32 %v2344, %v2650
  %v2652 = vpop.f32.mrb[0].mxu0
  %v2653 = vpop.f32.mrb[0].mxu0
  %v2654 = vadd.f32 %v2344, %v2653
  %v2655 = vpop.f32.mrb[0].mxu0
  %2656 = vmatprep.mubr.bf16.mxu0 %v2211
  %2657 = vmatmul.mubr.bf16.gmra.mrb[0].mxu0 %v1974
  %v2658 = vpop.f32.mrb[0].mxu0
  %v2659 = vadd.f32 %v2344, %v2658
  %v2660 = vpop.f32.mrb[0].mxu0
  %v2661 = vpop.f32.mrb[0].mxu0
  %v2662 = vadd.f32 %v2344, %v2661
  %v2663 = vpop.f32.mrb[0].mxu0
  %2664 = vmatprep.mubr.bf16.mxu0 %v2213
  %2665 = vmatmul.mubr.bf16.gmra.mrb[0].mxu0 %v1977
  %v2666 = vpop.f32.mrb[0].mxu0
  %v2667 = vadd.f32 %v2344, %v2666
  %v2668 = vpop.f32.mrb[0].mxu0
  %v2669 = vpop.f32.mrb[0].mxu0
  %v2670 = vadd.f32 %v2344, %v2669
  %v2671 = vpop.f32.mrb[0].mxu0
  %2672 = vmatprep.mubr.bf16.mxu0 %v2215
  %2673 = vmatmul.mubr.bf16.gmra.mrb[0].mxu0 %v1980
  %v2674 = vpop.f32.mrb[0].mxu0
  %v2675 = vadd.f32 %v2344, %v2674
  %v2676 = vpop.f32.mrb[0].mxu0
  %v2677 = vpop.f32.mrb[0].mxu0
  %v2678 = vadd.f32 %v2344, %v2677
  %v2679 = vpop.f32.mrb[0].mxu0
  %2680 = vmatprep.mubr.bf16.mxu0 %v2217
  %2681 = vmatmul.mubr.bf16.gmra.mrb[0].mxu0 %v1983
  %v2682 = vpop.f32.mrb[0].mxu0
  %v2683 = vadd.f32 %v2344, %v2682
  %v2684 = vpop.f32.mrb[0].mxu0
  %v2685 = vpop.f32.mrb[0].mxu0
  %v2686 = vadd.f32 %v2344, %v2685
  %v2687 = vpop.f32.mrb[0].mxu0
  %2688 = vmatprep.mubr.bf16.mxu0 %v2220
  %2689 = vmatmul.mubr.bf16.gmra.mrb[0].mxu0 %v1986
  %v2690 = vpop.f32.mrb[0].mxu0
  %v2691 = vadd.f32 %v2344, %v2690
  %v2692 = vpop.f32.mrb[0].mxu0
  %v2693 = vpop.f32.mrb[0].mxu0
  %v2694 = vadd.f32 %v2344, %v2693
  %v2695 = vpop.f32.mrb[0].mxu0
  %2696 = vmatprep.mubr.bf16.mxu0 %v2222
  %2697 = vmatmul.mubr.bf16.gmra.mrb[0].mxu0 %v1988
  %v2698 = vpop.f32.mrb[0].mxu0
  %v2699 = vadd.f32 %v2344, %v2698
  %v2700 = vpop.f32.mrb[0].mxu0
  %v2701 = vpop.f32.mrb[0].mxu0
  %v2702 = vadd.f32 %v2344, %v2701
  %v2703 = vpop.f32.mrb[0].mxu0
  %2704 = vmatprep.mubr.bf16.mxu0 %v2224
  %2705 = vmatmul.mubr.bf16.gmra.mrb[0].mxu0 %v1991
  %v2706 = vpop.f32.mrb[0].mxu0
  %v2707 = vadd.f32 %v2344, %v2706
  %v2708 = vpop.f32.mrb[0].mxu0
  %v2709 = vpop.f32.mrb[0].mxu0
  %v2710 = vadd.f32 %v2344, %v2709
  %v2711 = vpop.f32.mrb[0].mxu0
  %2712 = vmatprep.mubr.bf16.mxu0 %v2226
  %2713 = vmatmul.mubr.bf16.gmra.mrb[0].mxu0 %v1994
  %v2714 = vpop.f32.mrb[0].mxu0
  %v2715 = vadd.f32 %v2344, %v2714
  %v2716 = vpop.f32.mrb[0].mxu0
  %v2717 = vpop.f32.mrb[0].mxu0
  %v2718 = vadd.f32 %v2344, %v2717
  %v2719 = vpop.f32.mrb[0].mxu0
  %2720 = vmatprep.mubr.bf16.mxu0 %v2228
  %2721 = vmatmul.mubr.bf16.gmra.mrb[0].mxu0 %v1997
  %v2722 = vpop.f32.mrb[0].mxu0
  %v2723 = vadd.f32 %v2344, %v2722
  %v2724 = vpop.f32.mrb[0].mxu0
  %v2725 = vpop.f32.mrb[0].mxu0
  %v2726 = vadd.f32 %v2344, %v2725
  %v2727 = vpop.f32.mrb[0].mxu0
  %2728 = vmatprep.mubr.bf16.mxu0 %v2230
  %2729 = vmatmul.mubr.bf16.gmra.mrb[0].mxu0 %v2000
  %v2730 = vpop.f32.mrb[0].mxu0
  %v2731 = vadd.f32 %v2344, %v2730
  %v2732 = vpop.f32.mrb[0].mxu0
  %v2733 = vpop.f32.mrb[0].mxu0
  %v2734 = vadd.f32 %v2344, %v2733
  %v2735 = vpop.f32.mrb[0].mxu0
  %2736 = vmatprep.mubr.bf16.mxu0 %v2232
  %2737 = vmatmul.mubr.bf16.gmra.mrb[0].mxu0 %v2003
  %v2738 = vpop.f32.mrb[0].mxu0
  %v2739 = vadd.f32 %v2344, %v2738
  %v2740 = vpop.f32.mrb[0].mxu0
  %v2741 = vpop.f32.mrb[0].mxu0
  %v2742 = vadd.f32 %v2344, %v2741
  %v2743 = vpop.f32.mrb[0].mxu0
  %2744 = vmatprep.mubr.bf16.mxu0 %v2235
  %2745 = vmatmul.mubr.bf16.gmra.mrb[0].mxu0 %v2006
  %v2746 = vpop.f32.mrb[0].mxu0
  %v2747 = vadd.f32 %v2344, %v2746
  %v2748 = vpop.f32.mrb[0].mxu0
  %v2749 = vpop.f32.mrb[0].mxu0
  %v2750 = vadd.f32 %v2344, %v2749
  %v2751 = vpop.f32.mrb[0].mxu0
  %2752 = vmatprep.mubr.bf16.mxu0 %v2237
  %2753 = vmatmul.mubr.bf16.gmra.mrb[0].mxu0 %v2008
  %v2754 = vpop.f32.mrb[0].mxu0
  %v2755 = vadd.f32 %v2344, %v2754
  %v2756 = vpop.f32.mrb[0].mxu0
  %v2757 = vpop.f32.mrb[0].mxu0
  %v2758 = vadd.f32 %v2344, %v2757
  %v2759 = vpop.f32.mrb[0].mxu0
  %2760 = vmatprep.mubr.bf16.mxu0 %v2239
  %2761 = vmatmul.mubr.bf16.gmra.mrb[0].mxu0 %v2011
  %v2762 = vpop.f32.mrb[0].mxu0
  %v2763 = vadd.f32 %v2344, %v2762
  %v2764 = vpop.f32.mrb[0].mxu0
  %v2765 = vpop.f32.mrb[0].mxu0
  %v2766 = vadd.f32 %v2344, %v2765
  %v2767 = vpop.f32.mrb[0].mxu0
  %2768 = vmatprep.mubr.bf16.mxu0 %v2241
  %2769 = vmatmul.mubr.bf16.gmra.mrb[0].mxu0 %v2014
  %v2770 = vpop.f32.mrb[0].mxu0
  %v2771 = vadd.f32 %v2344, %v2770
  %v2772 = vpop.f32.mrb[0].mxu0
  %v2773 = vpop.f32.mrb[0].mxu0
  %v2774 = vadd.f32 %v2344, %v2773
  %v2775 = vpop.f32.mrb[0].mxu0
  %2776 = vmatprep.mubr.bf16.mxu0 %v2243
  %2777 = vmatmul.mubr.bf16.gmra.mrb[0].mxu0 %v2017
  %v2778 = vpop.f32.mrb[0].mxu0
  %v2779 = vadd.f32 %v2344, %v2778
  %v2780 = vpop.f32.mrb[0].mxu0
  %v2781 = vpop.f32.mrb[0].mxu0
  %v2782 = vadd.f32 %v2344, %v2781
  %v2783 = vpop.f32.mrb[0].mxu0
  %2784 = vmatprep.mubr.bf16.mxu0 %v2245
  %2785 = vmatmul.mubr.bf16.gmra.mrb[0].mxu0 %v2020
  %v2786 = vpop.f32.mrb[0].mxu0
  %v2787 = vadd.f32 %v2344, %v2786
  %v2788 = vpop.f32.mrb[0].mxu0
  %v2789 = vpop.f32.mrb[0].mxu0
  %v2790 = vadd.f32 %v2344, %v2789
  %v2791 = vpop.f32.mrb[0].mxu0
  %2792 = vmatprep.mubr.bf16.mxu0 %v2247
  %2793 = vmatmul.mubr.bf16.gmra.mrb[0].mxu0 %v2023
  %v2794 = vpop.f32.mrb[0].mxu0
  %v2795 = vadd.f32 %v2344, %v2794
  %v2796 = vpop.f32.mrb[0].mxu0
  %v2797 = vpop.f32.mrb[0].mxu0
  %v2798 = vadd.f32 %v2344, %v2797
  %v2799 = vpop.f32.mrb[0].mxu0
  %2800 = vmatprep.mubr.bf16.mxu0 %v2250
  %2801 = vmatmul.mubr.bf16.gmra.mrb[0].mxu0 %v2026
  %v2802 = vpop.f32.mrb[0].mxu0
  %v2803 = vadd.f32 %v2344, %v2802
  %v2804 = vpop.f32.mrb[0].mxu0
  %v2805 = vpop.f32.mrb[0].mxu0
  %v2806 = vadd.f32 %v2344, %v2805
  %v2807 = vpop.f32.mrb[0].mxu0
  %2808 = vmatprep.mubr.bf16.mxu0 %v2252
  %2809 = vmatmul.mubr.bf16.gmra.mrb[0].mxu0 %v2028
  %v2810 = vpop.f32.mrb[0].mxu0
  %v2811 = vadd.f32 %v2344, %v2810
  %v2812 = vpop.f32.mrb[0].mxu0
  %v2813 = vpop.f32.mrb[0].mxu0
  %v2814 = vadd.f32 %v2344, %v2813
  %v2815 = vpop.f32.mrb[0].mxu0
  %2816 = vmatprep.mubr.bf16.mxu0 %v2254
  %2817 = vmatmul.mubr.bf16.gmra.mrb[0].mxu0 %v2031
  %v2818 = vpop.f32.mrb[0].mxu0
  %v2819 = vadd.f32 %v2344, %v2818
  %v2820 = vpop.f32.mrb[0].mxu0
  %v2821 = vpop.f32.mrb[0].mxu0
  %v2822 = vadd.f32 %v2344, %v2821
  %v2823 = vpop.f32.mrb[0].mxu0
  %2824 = vmatprep.mubr.bf16.mxu0 %v2256
  %2825 = vmatmul.mubr.bf16.gmra.mrb[0].mxu0 %v2034
  %v2826 = vpop.f32.mrb[0].mxu0
  %v2827 = vadd.f32 %v2344, %v2826
  %v2828 = vpop.f32.mrb[0].mxu0
  %v2829 = vpop.f32.mrb[0].mxu0
  %v2830 = vadd.f32 %v2344, %v2829
  %v2831 = vpop.f32.mrb[0].mxu0
  %2832 = vmatprep.mubr.bf16.mxu0 %v2258
  %2833 = vmatmul.mubr.bf16.gmra.mrb[0].mxu0 %v2037
  %v2834 = vpop.f32.mrb[0].mxu0
  %v2835 = vadd.f32 %v2344, %v2834
  %v2836 = vpop.f32.mrb[0].mxu0
  %v2837 = vpop.f32.mrb[0].mxu0
  %v2838 = vadd.f32 %v2344, %v2837
  %v2839 = vpop.f32.mrb[0].mxu0
  %2840 = vmatprep.mubr.bf16.mxu0 %v2260
  %2841 = vmatmul.mubr.bf16.gmra.mrb[0].mxu0 %v2040
  %v2842 = vpop.f32.mrb[0].mxu0
  %v2843 = vadd.f32 %v2344, %v2842
  %v2844 = vpop.f32.mrb[0].mxu0
  %v2845 = vpop.f32.mrb[0].mxu0
  %v2846 = vadd.f32 %v2344, %v2845
  %v2847 = vpop.f32.mrb[0].mxu0
  %2848 = vmatprep.mubr.bf16.mxu0 %v2262
  %2849 = vmatmul.mubr.bf16.gmra.mrb[0].mxu0 %v2043
  %v2850 = vpop.f32.mrb[0].mxu0
  %v2851 = vadd.f32 %v2344, %v2850
  %v2852 = vpop.f32.mrb[0].mxu0
  %v2853 = vpop.f32.mrb[0].mxu0
  %v2854 = vadd.f32 %v2344, %v2853
  %v2855 = vpop.f32.mrb[0].mxu0
  %2856 = vmatprep.mubr.bf16.mxu0 %v2265
  %2857 = vmatmul.mubr.bf16.gmra.mrb[0].mxu0 %v2046
  %v2858 = vpop.f32.mrb[0].mxu0
  %v2859 = vadd.f32 %v2344, %v2858
  %v2860 = vpop.f32.mrb[0].mxu0
  %v2861 = vpop.f32.mrb[0].mxu0
  %v2862 = vadd.f32 %v2344, %v2861
  %v2863 = vpop.f32.mrb[0].mxu0
  %2864 = vmatprep.mubr.bf16.mxu0 %v2267
  %2865 = vmatmul.mubr.bf16.gmra.mrb[0].mxu0 %v2048
  %v2866 = vpop.f32.mrb[0].mxu0
  %v2867 = vadd.f32 %v2344, %v2866
  %v2868 = vpop.f32.mrb[0].mxu0
  %v2869 = vpop.f32.mrb[0].mxu0
  %v2870 = vadd.f32 %v2344, %v2869
  %v2871 = vpop.f32.mrb[0].mxu0
  %2872 = vmatprep.mubr.bf16.mxu0 %v2269
  %2873 = vmatmul.mubr.bf16.gmra.mrb[0].mxu0 %v2051
  %v2874 = vpop.f32.mrb[0].mxu0
  %v2875 = vadd.f32 %v2344, %v2874
  %v2876 = vpop.f32.mrb[0].mxu0
  %v2877 = vpop.f32.mrb[0].mxu0
  %v2878 = vadd.f32 %v2344, %v2877
  %v2879 = vpop.f32.mrb[0].mxu0
  %2880 = vmatprep.mubr.bf16.mxu0 %v2271
  %2881 = vmatmul.mubr.bf16.gmra.mrb[0].mxu0 %v2054
  %v2882 = vpop.f32.mrb[0].mxu0
  %v2883 = vadd.f32 %v2344, %v2882
  %v2884 = vpop.f32.mrb[0].mxu0
  %v2885 = vpop.f32.mrb[0].mxu0
  %v2886 = vadd.f32 %v2344, %v2885
  %v2887 = vpop.f32.mrb[0].mxu0
  %2888 = vmatprep.mubr.bf16.mxu0 %v2273
  %2889 = vmatmul.mubr.bf16.gmra.mrb[0].mxu0 %v2057
  %v2890 = vpop.f32.mrb[0].mxu0
  %v2891 = vadd.f32 %v2344, %v2890
  %v2892 = vpop.f32.mrb[0].mxu0
  %v2893 = vpop.f32.mrb[0].mxu0
  %v2894 = vadd.f32 %v2344, %v2893
  %v2895 = vpop.f32.mrb[0].mxu0
  %2896 = vmatprep.mubr.bf16.mxu0 %v2275
  %2897 = vmatmul.mubr.bf16.gmra.mrb[0].mxu0 %v2060
  %v2898 = vpop.f32.mrb[0].mxu0
  %v2899 = vadd.f32 %v2344, %v2898
  %v2900 = vpop.f32.mrb[0].mxu0
  %v2901 = vpop.f32.mrb[0].mxu0
  %v2902 = vadd.f32 %v2344, %v2901
  %v2903 = vpop.f32.mrb[0].mxu0
  %2904 = vmatprep.mubr.bf16.mxu0 %v2277
  %2905 = vmatmul.mubr.bf16.gmra.mrb[0].mxu0 %v2063
  %v2906 = vpop.f32.mrb[0].mxu0
  %v2907 = vadd.f32 %v2344, %v2906
  %v2908 = vpop.f32.mrb[0].mxu0
  %v2909 = vpop.f32.mrb[0].mxu0
  %v2910 = vadd.f32 %v2344, %v2909
  %v2911 = vpop.f32.mrb[0].mxu0
  %2912 = vmatprep.mubr.bf16.mxu0 %v2280
  %2913 = vmatmul.mubr.bf16.gmra.mrb[0].mxu0 %v2066
  %v2914 = vpop.f32.mrb[0].mxu0
  %v2915 = vadd.f32 %v2344, %v2914
  %v2916 = vpop.f32.mrb[0].mxu0
  %v2917 = vpop.f32.mrb[0].mxu0
  %v2918 = vadd.f32 %v2344, %v2917
  %v2919 = vpop.f32.mrb[0].mxu0
  %2920 = vmatprep.mubr.bf16.mxu0 %v2283
  %2921 = vmatmul.mubr.bf16.gmra.mrb[0].mxu0 %v2068
  %v2922 = vpop.f32.mrb[0].mxu0
  %v2923 = vadd.f32 %v2344, %v2922
  %v2924 = vpop.f32.mrb[0].mxu0
  %v2925 = vpop.f32.mrb[0].mxu0
  %v2926 = vadd.f32 %v2344, %v2925
  %v2927 = vpop.f32.mrb[0].mxu0
  %2928 = vmatprep.mubr.bf16.mxu0 %v2286
  %2929 = vmatmul.mubr.bf16.gmra.mrb[0].mxu0 %v2071
  %v2930 = vpop.f32.mrb[0].mxu0
  %v2931 = vadd.f32 %v2344, %v2930
  %v2932 = vpop.f32.mrb[0].mxu0
  %v2933 = vpop.f32.mrb[0].mxu0
  %v2934 = vadd.f32 %v2344, %v2933
  %v2935 = vpop.f32.mrb[0].mxu0
  %2936 = vmatprep.mubr.bf16.mxu0 %v2289
  %2937 = vmatmul.mubr.bf16.gmra.mrb[0].mxu0 %v2074
  %v2938 = vpop.f32.mrb[0].mxu0
  %v2939 = vadd.f32 %v2344, %v2938
  %v2940 = vpop.f32.mrb[0].mxu0
  %v2941 = vpop.f32.mrb[0].mxu0
  %v2942 = vadd.f32 %v2344, %v2941
  %v2943 = vpop.f32.mrb[0].mxu0
  %2944 = vmatprep.mubr.bf16.mxu0 %v2292
  %2945 = vmatmul.mubr.bf16.gmra.mrb[0].mxu0 %v2077
  %v2946 = vpop.f32.mrb[0].mxu0
  %v2947 = vadd.f32 %v2344, %v2946
  %v2948 = vpop.f32.mrb[0].mxu0
  %v2949 = vpop.f32.mrb[0].mxu0
  %v2950 = vadd.f32 %v2344, %v2949
  %v2951 = vpop.f32.mrb[0].mxu0
  %2952 = vmatprep.mubr.bf16.mxu0 %v2295
  %2953 = vmatmul.mubr.bf16.gmra.mrb[0].mxu0 %v2080
  %v2954 = vpop.f32.mrb[0].mxu0
  %v2955 = vadd.f32 %v2344, %v2954
  %v2956 = vpop.f32.mrb[0].mxu0
  %v2957 = vpop.f32.mrb[0].mxu0
  %v2958 = vadd.f32 %v2344, %v2957
  %v2959 = vpop.f32.mrb[0].mxu0
  %2960 = vmatprep.mubr.bf16.mxu0 %v2298
  %2961 = vmatmul.mubr.bf16.gmra.mrb[0].mxu0 %v2083
  %v2962 = vpop.f32.mrb[0].mxu0
  %v2963 = vadd.f32 %v2344, %v2962
  %v2964 = vpop.f32.mrb[0].mxu0
  %v2965 = vpop.f32.mrb[0].mxu0
  %v2966 = vadd.f32 %v2344, %v2965
  %v2967 = vpop.f32.mrb[0].mxu0
  %2968 = vmatprep.mubr.bf16.mxu0 %v2301
  %2969 = vmatmul.mubr.bf16.gmra.mrb[0].mxu0 %v2086
  %v2970 = vpop.f32.mrb[0].mxu0
  %v2971 = vadd.f32 %v2344, %v2970
  %v2972 = vpop.f32.mrb[0].mxu0
  %v2973 = vpop.f32.mrb[0].mxu0
  %v2974 = vadd.f32 %v2344, %v2973
  %v2975 = vpop.f32.mrb[0].mxu0
  %2976 = vdwg.mxu0
  %2977 = vmatprep.subr.bf16.mxu0 0
  %2978 = vmatpush1.bf16.msra.mxu0 %v2434
  %2979 = vmatprep.subr.bf16.mxu0 0
  %2980 = vmatpush1.bf16.msra.mxu0 %v2435
  %2981 = vmatprep.subr.bf16.mxu0 0
  %2982 = vmatpush1.bf16.msra.mxu0 0
  %2983 = vmatprep.subr.bf16.mxu0 0
  %2984 = vmatpush1.bf16.msra.mxu0 0
  %2985 = vmatprep.subr.bf16.mxu0 0
  %2986 = vmatpush1.bf16.msra.mxu0 0
  %2987 = vmatprep.subr.bf16.mxu0 0
  %2988 = vmatpush1.bf16.msra.mxu0 0
  %2989 = vmatprep.subr.bf16.mxu0 0
  %2990 = vmatpush1.bf16.msra.mxu0 0
  %2991 = vmatprep.subr.bf16.mxu0 0
  %2992 = vmatpush1.bf16.msra.mxu0 0
  %2993 = vmatprep.subr.bf16.mxu0 0
  %2994 = vmatpush1.bf16.msra.mxu0 0
  %2995 = vmatprep.subr.bf16.mxu0 0
  %2996 = vmatpush1.bf16.msra.mxu0 0
  %2997 = vmatprep.subr.bf16.mxu0 0
  %2998 = vmatpush1.bf16.msra.mxu0 0
  %2999 = vmatprep.subr.bf16.mxu0 0
  %3000 = vmatpush1.bf16.msra.mxu0 0
  %3001 = vmatprep.subr.bf16.mxu0 0
  %3002 = vmatpush1.bf16.msra.mxu0 0
  %3003 = vmatprep.subr.bf16.mxu0 0
  %3004 = vmatpush1.bf16.msra.mxu0 0
  %3005 = vmatprep.subr.bf16.mxu0 0
  %3006 = vmatpush1.bf16.msra.mxu0 0
  %3007 = vmatprep.subr.bf16.mxu0 0
  %3008 = vmatpush1.bf16.msra.mxu0 0
  %3009 = vmatprep.mubr.bf16.mxu0 0
  %3010 = vmatmul.mubr.bf16.gmra.mrb[0].mxu0 %v2454
  %v3011 = vpop.f32.mrb[0].mxu0
  %v3012 = vadd.f32 %v2587, %v3011
  %v3013 = vpop.f32.mrb[0].mxu0
  %v3014 = vpop.f32.mrb[0].mxu0
  %v3015 = vadd.f32 %v2590, %v3014
  %v3016 = vpop.f32.mrb[0].mxu0
  %3017 = vmatprep.mubr.bf16.mxu0 0
  %3018 = vmatmul.mubr.bf16.gmra.mrb[0].mxu0 %v2456
  %v3019 = vpop.f32.mrb[0].mxu0
  %v3020 = vadd.f32 %v2595, %v3019
  %v3021 = vpop.f32.mrb[0].mxu0
  %v3022 = vpop.f32.mrb[0].mxu0
  %v3023 = vadd.f32 %v2598, %v3022
  %v3024 = vpop.f32.mrb[0].mxu0
  %3025 = vmatprep.mubr.bf16.mxu0 0
  %3026 = vmatmul.mubr.bf16.gmra.mrb[0].mxu0 %v2458
  %v3027 = vpop.f32.mrb[0].mxu0
  %v3028 = vadd.f32 %v2603, %v3027
  %v3029 = vpop.f32.mrb[0].mxu0
  %v3030 = vpop.f32.mrb[0].mxu0
  %v3031 = vadd.f32 %v2606, %v3030
  %v3032 = vpop.f32.mrb[0].mxu0
  %3033 = vmatprep.mubr.bf16.mxu0 0
  %3034 = vmatmul.mubr.bf16.gmra.mrb[0].mxu0 %v2460
  %v3035 = vpop.f32.mrb[0].mxu0
  %v3036 = vadd.f32 %v2611, %v3035
  %v3037 = vpop.f32.mrb[0].mxu0
  %v3038 = vpop.f32.mrb[0].mxu0
  %v3039 = vadd.f32 %v2614, %v3038
  %v3040 = vpop.f32.mrb[0].mxu0
  %3041 = vmatprep.mubr.bf16.mxu0 0
  %3042 = vmatmul.mubr.bf16.gmra.mrb[0].mxu0 %v2462
  %v3043 = vpop.f32.mrb[0].mxu0
  %v3044 = vadd.f32 %v2619, %v3043
  %v3045 = vpop.f32.mrb[0].mxu0
  %v3046 = vpop.f32.mrb[0].mxu0
  %v3047 = vadd.f32 %v2622, %v3046
  %v3048 = vpop.f32.mrb[0].mxu0
  %3049 = vmatprep.mubr.bf16.mxu0 0
  %3050 = vmatmul.mubr.bf16.gmra.mrb[0].mxu0 %v2464
  %v3051 = vpop.f32.mrb[0].mxu0
  %v3052 = vadd.f32 %v2627, %v3051
  %v3053 = vpop.f32.mrb[0].mxu0
  %v3054 = vpop.f32.mrb[0].mxu0
  %v3055 = vadd.f32 %v2630, %v3054
  %v3056 = vpop.f32.mrb[0].mxu0
  %3057 = vmatprep.mubr.bf16.mxu0 0
  %3058 = vmatmul.mubr.bf16.gmra.mrb[0].mxu0 %v2466
  %v3059 = vpop.f32.mrb[0].mxu0
  %v3060 = vadd.f32 %v2635, %v3059
  %v3061 = vpop.f32.mrb[0].mxu0
  %v3062 = vpop.f32.mrb[0].mxu0
  %v3063 = vadd.f32 %v2638, %v3062
  %v3064 = vpop.f32.mrb[0].mxu0
  %3065 = vmatprep.mubr.bf16.mxu0 0
  %3066 = vmatmul.mubr.bf16.gmra.mrb[0].mxu0 %v2468
  %v3067 = vpop.f32.mrb[0].mxu0
  %v3068 = vadd.f32 %v2643, %v3067
  %v3069 = vpop.f32.mrb[0].mxu0
  %v3070 = vpop.f32.mrb[0].mxu0
  %v3071 = vadd.f32 %v2646, %v3070
  %v3072 = vpop.f32.mrb[0].mxu0
  %3073 = vmatprep.mubr.bf16.mxu0 0
  %3074 = vmatmul.mubr.bf16.gmra.mrb[0].mxu0 %v2470
  %v3075 = vpop.f32.mrb[0].mxu0
  %v3076 = vadd.f32 %v2651, %v3075
  %v3077 = vpop.f32.mrb[0].mxu0
  %v3078 = vpop.f32.mrb[0].mxu0
  %v3079 = vadd.f32 %v2654, %v3078
  %v3080 = vpop.f32.mrb[0].mxu0
  %3081 = vmatprep.mubr.bf16.mxu0 0
  %3082 = vmatmul.mubr.bf16.gmra.mrb[0].mxu0 %v2472
  %v3083 = vpop.f32.mrb[0].mxu0
  %v3084 = vadd.f32 %v2659, %v3083
  %v3085 = vpop.f32.mrb[0].mxu0
  %v3086 = vpop.f32.mrb[0].mxu0
  %v3087 = vadd.f32 %v2662, %v3086
  %v3088 = vpop.f32.mrb[0].mxu0
  %3089 = vmatprep.mubr.bf16.mxu0 0
  %3090 = vmatmul.mubr.bf16.gmra.mrb[0].mxu0 %v2474
  %v3091 = vpop.f32.mrb[0].mxu0
  %v3092 = vadd.f32 %v2667, %v3091
  %v3093 = vpop.f32.mrb[0].mxu0
  %v3094 = vpop.f32.mrb[0].mxu0
  %v3095 = vadd.f32 %v2670, %v3094
  %v3096 = vpop.f32.mrb[0].mxu0
  %3097 = vmatprep.mubr.bf16.mxu0 0
  %3098 = vmatmul.mubr.bf16.gmra.mrb[0].mxu0 %v2476
  %v3099 = vpop.f32.mrb[0].mxu0
  %v3100 = vadd.f32 %v2675, %v3099
  %v3101 = vpop.f32.mrb[0].mxu0
  %v3102 = vpop.f32.mrb[0].mxu0
  %v3103 = vadd.f32 %v2678, %v3102
  %v3104 = vpop.f32.mrb[0].mxu0
  %3105 = vmatprep.mubr.bf16.mxu0 0
  %3106 = vmatmul.mubr.bf16.gmra.mrb[0].mxu0 %v2478
  %v3107 = vpop.f32.mrb[0].mxu0
  %v3108 = vadd.f32 %v2683, %v3107
  %v3109 = vpop.f32.mrb[0].mxu0
  %v3110 = vpop.f32.mrb[0].mxu0
  %v3111 = vadd.f32 %v2686, %v3110
  %v3112 = vpop.f32.mrb[0].mxu0
  %3113 = vmatprep.mubr.bf16.mxu0 0
  %3114 = vmatmul.mubr.bf16.gmra.mrb[0].mxu0 %v2480
  %v3115 = vpop.f32.mrb[0].mxu0
  %v3116 = vadd.f32 %v2691, %v3115
  %v3117 = vpop.f32.mrb[0].mxu0
  %v3118 = vpop.f32.mrb[0].mxu0
  %v3119 = vadd.f32 %v2694, %v3118
  %v3120 = vpop.f32.mrb[0].mxu0
  %3121 = vmatprep.mubr.bf16.mxu0 0
  %3122 = vmatmul.mubr.bf16.gmra.mrb[0].mxu0 %v2482
  %v3123 = vpop.f32.mrb[0].mxu0
  %v3124 = vadd.f32 %v2699, %v3123
  %v3125 = vpop.f32.mrb[0].mxu0
  %v3126 = vpop.f32.mrb[0].mxu0
  %v3127 = vadd.f32 %v2702, %v3126
  %v3128 = vpop.f32.mrb[0].mxu0
  %3129 = vmatprep.mubr.bf16.mxu0 0
  %3130 = vmatmul.mubr.bf16.gmra.mrb[0].mxu0 %v2484
  %v3131 = vpop.f32.mrb[0].mxu0
  %v3132 = vadd.f32 %v2707, %v3131
  %v3133 = vpop.f32.mrb[0].mxu0
  %v3134 = vpop.f32.mrb[0].mxu0
  %v3135 = vadd.f32 %v2710, %v3134
  %v3136 = vpop.f32.mrb[0].mxu0
  %3137 = vmatprep.mubr.bf16.mxu0 0
  %3138 = vmatmul.mubr.bf16.gmra.mrb[0].mxu0 %v2486
  %v3139 = vpop.f32.mrb[0].mxu0
  %v3140 = vadd.f32 %v2715, %v3139
  %v3141 = vpop.f32.mrb[0].mxu0
  %v3142 = vpop.f32.mrb[0].mxu0
  %v3143 = vadd.f32 %v2718, %v3142
  %v3144 = vpop.f32.mrb[0].mxu0
  %3145 = vmatprep.mubr.bf16.mxu0 0
  %3146 = vmatmul.mubr.bf16.gmra.mrb[0].mxu0 %v2488
  %v3147 = vpop.f32.mrb[0].mxu0
  %v3148 = vadd.f32 %v2723, %v3147
  %v3149 = vpop.f32.mrb[0].mxu0
  %v3150 = vpop.f32.mrb[0].mxu0
  %v3151 = vadd.f32 %v2726, %v3150
  %v3152 = vpop.f32.mrb[0].mxu0
  %3153 = vmatprep.mubr.bf16.mxu0 0
  %3154 = vmatmul.mubr.bf16.gmra.mrb[0].mxu0 %v2490
  %v3155 = vpop.f32.mrb[0].mxu0
  %v3156 = vadd.f32 %v2731, %v3155
  %v3157 = vpop.f32.mrb[0].mxu0
  %v3158 = vpop.f32.mrb[0].mxu0
  %v3159 = vadd.f32 %v2734, %v3158
  %v3160 = vpop.f32.mrb[0].mxu0
  %3161 = vmatprep.mubr.bf16.mxu0 0
  %3162 = vmatmul.mubr.bf16.gmra.mrb[0].mxu0 %v2492
  %v3163 = vpop.f32.mrb[0].mxu0
  %v3164 = vadd.f32 %v2739, %v3163
  %v3165 = vpop.f32.mrb[0].mxu0
  %v3166 = vpop.f32.mrb[0].mxu0
  %v3167 = vadd.f32 %v2742, %v3166
  %v3168 = vpop.f32.mrb[0].mxu0
  %3169 = vmatprep.mubr.bf16.mxu0 0
  %3170 = vmatmul.mubr.bf16.gmra.mrb[0].mxu0 %v2494
  %v3171 = vpop.f32.mrb[0].mxu0
  %v3172 = vadd.f32 %v2747, %v3171
  %v3173 = vpop.f32.mrb[0].mxu0
  %v3174 = vpop.f32.mrb[0].mxu0
  %v3175 = vadd.f32 %v2750, %v3174
  %v3176 = vpop.f32.mrb[0].mxu0
  %3177 = vmatprep.mubr.bf16.mxu0 0
  %3178 = vmatmul.mubr.bf16.gmra.mrb[0].mxu0 %v2496
  %v3179 = vpop.f32.mrb[0].mxu0
  %v3180 = vadd.f32 %v2755, %v3179
  %v3181 = vpop.f32.mrb[0].mxu0
  %v3182 = vpop.f32.mrb[0].mxu0
  %v3183 = vadd.f32 %v2758, %v3182
  %v3184 = vpop.f32.mrb[0].mxu0
  %3185 = vmatprep.mubr.bf16.mxu0 0
  %3186 = vmatmul.mubr.bf16.gmra.mrb[0].mxu0 %v2498
  %v3187 = vpop.f32.mrb[0].mxu0
  %v3188 = vadd.f32 %v2763, %v3187
  %v3189 = vpop.f32.mrb[0].mxu0
  %v3190 = vpop.f32.mrb[0].mxu0
  %v3191 = vadd.f32 %v2766, %v3190
  %v3192 = vpop.f32.mrb[0].mxu0
  %3193 = vmatprep.mubr.bf16.mxu0 0
  %3194 = vmatmul.mubr.bf16.gmra.mrb[0].mxu0 %v2500
  %v3195 = vpop.f32.mrb[0].mxu0
  %v3196 = vadd.f32 %v2771, %v3195
  %v3197 = vpop.f32.mrb[0].mxu0
  %v3198 = vpop.f32.mrb[0].mxu0
  %v3199 = vadd.f32 %v2774, %v3198
  %v3200 = vpop.f32.mrb[0].mxu0
  %3201 = vmatprep.mubr.bf16.mxu0 0
  %3202 = vmatmul.mubr.bf16.gmra.mrb[0].mxu0 %v2502
  %v3203 = vpop.f32.mrb[0].mxu0
  %v3204 = vadd.f32 %v2779, %v3203
  %v3205 = vpop.f32.mrb[0].mxu0
  %v3206 = vpop.f32.mrb[0].mxu0
  %v3207 = vadd.f32 %v2782, %v3206
  %v3208 = vpop.f32.mrb[0].mxu0
  %3209 = vmatprep.mubr.bf16.mxu0 0
  %3210 = vmatmul.mubr.bf16.gmra.mrb[0].mxu0 %v2504
  %v3211 = vpop.f32.mrb[0].mxu0
  %v3212 = vadd.f32 %v2787, %v3211
  %v3213 = vpop.f32.mrb[0].mxu0
  %v3214 = vpop.f32.mrb[0].mxu0
  %v3215 = vadd.f32 %v2790, %v3214
  %v3216 = vpop.f32.mrb[0].mxu0
  %3217 = vmatprep.mubr.bf16.mxu0 0
  %3218 = vmatmul.mubr.bf16.gmra.mrb[0].mxu0 %v2506
  %v3219 = vpop.f32.mrb[0].mxu0
  %v3220 = vadd.f32 %v2795, %v3219
  %v3221 = vpop.f32.mrb[0].mxu0
  %v3222 = vpop.f32.mrb[0].mxu0
  %v3223 = vadd.f32 %v2798, %v3222
  %v3224 = vpop.f32.mrb[0].mxu0
  %3225 = vmatprep.mubr.bf16.mxu0 0
  %3226 = vmatmul.mubr.bf16.gmra.mrb[0].mxu0 %v2508
  %v3227 = vpop.f32.mrb[0].mxu0
  %v3228 = vadd.f32 %v2803, %v3227
  %v3229 = vpop.f32.mrb[0].mxu0
  %v3230 = vpop.f32.mrb[0].mxu0
  %v3231 = vadd.f32 %v2806, %v3230
  %v3232 = vpop.f32.mrb[0].mxu0
  %3233 = vmatprep.mubr.bf16.mxu0 0
  %3234 = vmatmul.mubr.bf16.gmra.mrb[0].mxu0 %v2510
  %v3235 = vpop.f32.mrb[0].mxu0
  %v3236 = vadd.f32 %v2811, %v3235
  %v3237 = vpop.f32.mrb[0].mxu0
  %v3238 = vpop.f32.mrb[0].mxu0
  %v3239 = vadd.f32 %v2814, %v3238
  %v3240 = vpop.f32.mrb[0].mxu0
  %3241 = vmatprep.mubr.bf16.mxu0 0
  %3242 = vmatmul.mubr.bf16.gmra.mrb[0].mxu0 %v2512
  %v3243 = vpop.f32.mrb[0].mxu0
  %v3244 = vadd.f32 %v2819, %v3243
  %v3245 = vpop.f32.mrb[0].mxu0
  %v3246 = vpop.f32.mrb[0].mxu0
  %v3247 = vadd.f32 %v2822, %v3246
  %v3248 = vpop.f32.mrb[0].mxu0
  %3249 = vmatprep.mubr.bf16.mxu0 0
  %3250 = vmatmul.mubr.bf16.gmra.mrb[0].mxu0 %v2514
  %v3251 = vpop.f32.mrb[0].mxu0
  %v3252 = vadd.f32 %v2827, %v3251
  %v3253 = vpop.f32.mrb[0].mxu0
  %v3254 = vpop.f32.mrb[0].mxu0
  %v3255 = vadd.f32 %v2830, %v3254
  %v3256 = vpop.f32.mrb[0].mxu0
  %3257 = vmatprep.mubr.bf16.mxu0 0
  %3258 = vmatmul.mubr.bf16.gmra.mrb[0].mxu0 %v2516
  %v3259 = vpop.f32.mrb[0].mxu0
  %v3260 = vadd.f32 %v2835, %v3259
  %v3261 = vpop.f32.mrb[0].mxu0
  %v3262 = vpop.f32.mrb[0].mxu0
  %v3263 = vadd.f32 %v2838, %v3262
  %v3264 = vpop.f32.mrb[0].mxu0
  %3265 = vmatprep.mubr.bf16.mxu0 0
  %3266 = vmatmul.mubr.bf16.gmra.mrb[0].mxu0 %v2518
  %v3267 = vpop.f32.mrb[0].mxu0
  %v3268 = vadd.f32 %v2843, %v3267
  %v3269 = vpop.f32.mrb[0].mxu0
  %v3270 = vpop.f32.mrb[0].mxu0
  %v3271 = vadd.f32 %v2846, %v3270
  %v3272 = vpop.f32.mrb[0].mxu0
  %3273 = vmatprep.mubr.bf16.mxu0 0
  %3274 = vmatmul.mubr.bf16.gmra.mrb[0].mxu0 %v2520
  %v3275 = vpop.f32.mrb[0].mxu0
  %v3276 = vadd.f32 %v2851, %v3275
  %v3277 = vpop.f32.mrb[0].mxu0
  %v3278 = vpop.f32.mrb[0].mxu0
  %v3279 = vadd.f32 %v2854, %v3278
  %v3280 = vpop.f32.mrb[0].mxu0
  %3281 = vmatprep.mubr.bf16.mxu0 0
  %3282 = vmatmul.mubr.bf16.gmra.mrb[0].mxu0 %v2522
  %v3283 = vpop.f32.mrb[0].mxu0
  %v3284 = vadd.f32 %v2859, %v3283
  %v3285 = vpop.f32.mrb[0].mxu0
  %v3286 = vpop.f32.mrb[0].mxu0
  %v3287 = vadd.f32 %v2862, %v3286
  %v3288 = vpop.f32.mrb[0].mxu0
  %3289 = vmatprep.mubr.bf16.mxu0 0
  %3290 = vmatmul.mubr.bf16.gmra.mrb[0].mxu0 %v2524
  %v3291 = vpop.f32.mrb[0].mxu0
  %v3292 = vadd.f32 %v2867, %v3291
  %v3293 = vpop.f32.mrb[0].mxu0
  %v3294 = vpop.f32.mrb[0].mxu0
  %v3295 = vadd.f32 %v2870, %v3294
  %v3296 = vpop.f32.mrb[0].mxu0
  %3297 = vmatprep.mubr.bf16.mxu0 0
  %3298 = vmatmul.mubr.bf16.gmra.mrb[0].mxu0 %v2526
  %v3299 = vpop.f32.mrb[0].mxu0
  %v3300 = vadd.f32 %v2875, %v3299
  %v3301 = vpop.f32.mrb[0].mxu0
  %v3302 = vpop.f32.mrb[0].mxu0
  %v3303 = vadd.f32 %v2878, %v3302
  %v3304 = vpop.f32.mrb[0].mxu0
  %3305 = vmatprep.mubr.bf16.mxu0 0
  %3306 = vmatmul.mubr.bf16.gmra.mrb[0].mxu0 %v2528
  %v3307 = vpop.f32.mrb[0].mxu0
  %v3308 = vadd.f32 %v2883, %v3307
  %v3309 = vpop.f32.mrb[0].mxu0
  %v3310 = vpop.f32.mrb[0].mxu0
  %v3311 = vadd.f32 %v2886, %v3310
  %v3312 = vpop.f32.mrb[0].mxu0
  %3313 = vmatprep.mubr.bf16.mxu0 0
  %3314 = vmatmul.mubr.bf16.gmra.mrb[0].mxu0 %v2530
  %v3315 = vpop.f32.mrb[0].mxu0
  %v3316 = vadd.f32 %v2891, %v3315
  %v3317 = vpop.f32.mrb[0].mxu0
  %v3318 = vpop.f32.mrb[0].mxu0
  %v3319 = vadd.f32 %v2894, %v3318
  %v3320 = vpop.f32.mrb[0].mxu0
  %3321 = vmatprep.mubr.bf16.mxu0 0
  %3322 = vmatmul.mubr.bf16.gmra.mrb[0].mxu0 %v2532
  %v3323 = vpop.f32.mrb[0].mxu0
  %v3324 = vadd.f32 %v2899, %v3323
  %v3325 = vpop.f32.mrb[0].mxu0
  %v3326 = vpop.f32.mrb[0].mxu0
  %v3327 = vadd.f32 %v2902, %v3326
  %v3328 = vpop.f32.mrb[0].mxu0
  %3329 = vmatprep.mubr.bf16.mxu0 0
  %3330 = vmatmul.mubr.bf16.gmra.mrb[0].mxu0 %v2534
  %v3331 = vpop.f32.mrb[0].mxu0
  %v3332 = vadd.f32 %v2907, %v3331
  %v3333 = vpop.f32.mrb[0].mxu0
  %v3334 = vpop.f32.mrb[0].mxu0
  %v3335 = vadd.f32 %v2910, %v3334
  %v3336 = vpop.f32.mrb[0].mxu0
  %3337 = vmatprep.mubr.bf16.mxu0 0
  %3338 = vmatmul.mubr.bf16.gmra.mrb[0].mxu0 %v2536
  %v3339 = vpop.f32.mrb[0].mxu0
  %v3340 = vadd.f32 %v2915, %v3339
  %v3341 = vpop.f32.mrb[0].mxu0
  %v3342 = vpop.f32.mrb[0].mxu0
  %v3343 = vadd.f32 %v2918, %v3342
  %v3344 = vpop.f32.mrb[0].mxu0
  %3345 = vmatprep.mubr.bf16.mxu0 0
  %3346 = vmatmul.mubr.bf16.gmra.mrb[0].mxu0 %v2538
  %v3347 = vpop.f32.mrb[0].mxu0
  %v3348 = vadd.f32 %v2923, %v3347
  %v3349 = vpop.f32.mrb[0].mxu0
  %v3350 = vpop.f32.mrb[0].mxu0
  %v3351 = vadd.f32 %v2926, %v3350
  %v3352 = vpop.f32.mrb[0].mxu0
  %3353 = vmatprep.mubr.bf16.mxu0 0
  %3354 = vmatmul.mubr.bf16.gmra.mrb[0].mxu0 %v2540
  %v3355 = vpop.f32.mrb[0].mxu0
  %v3356 = vadd.f32 %v2931, %v3355
  %v3357 = vpop.f32.mrb[0].mxu0
  %v3358 = vpop.f32.mrb[0].mxu0
  %v3359 = vadd.f32 %v2934, %v3358
  %v3360 = vpop.f32.mrb[0].mxu0
  %3361 = vmatprep.mubr.bf16.mxu0 0
  %3362 = vmatmul.mubr.bf16.gmra.mrb[0].mxu0 %v2542
  %v3363 = vpop.f32.mrb[0].mxu0
  %v3364 = vadd.f32 %v2939, %v3363
  %v3365 = vpop.f32.mrb[0].mxu0
  %v3366 = vpop.f32.mrb[0].mxu0
  %v3367 = vadd.f32 %v2942, %v3366
  %v3368 = vpop.f32.mrb[0].mxu0
  %3369 = vmatprep.mubr.bf16.mxu0 0
  %3370 = vmatmul.mubr.bf16.gmra.mrb[0].mxu0 %v2544
  %v3371 = vpop.f32.mrb[0].mxu0
  %v3372 = vadd.f32 %v2947, %v3371
  %v3373 = vpop.f32.mrb[0].mxu0
  %v3374 = vpop.f32.mrb[0].mxu0
  %v3375 = vadd.f32 %v2950, %v3374
  %v3376 = vpop.f32.mrb[0].mxu0
  %3377 = vmatprep.mubr.bf16.mxu0 0
  %3378 = vmatmul.mubr.bf16.gmra.mrb[0].mxu0 %v2546
  %v3379 = vpop.f32.mrb[0].mxu0
  %v3380 = vadd.f32 %v2955, %v3379
  %v3381 = vpop.f32.mrb[0].mxu0
  %v3382 = vpop.f32.mrb[0].mxu0
  %v3383 = vadd.f32 %v2958, %v3382
  %v3384 = vpop.f32.mrb[0].mxu0
  %3385 = vmatprep.mubr.bf16.mxu0 0
  %3386 = vmatmul.mubr.bf16.gmra.mrb[0].mxu0 %v2548
  %v3387 = vpop.f32.mrb[0].mxu0
  %v3388 = vadd.f32 %v2963, %v3387
  %v3389 = vpop.f32.mrb[0].mxu0
  %v3390 = vpop.f32.mrb[0].mxu0
  %v3391 = vadd.f32 %v2966, %v3390
  %v3392 = vpop.f32.mrb[0].mxu0
  %3393 = vmatprep.mubr.bf16.mxu0 0
  %3394 = vmatmul.mubr.bf16.gmra.mrb[0].mxu0 %v2550
  %v3395 = vpop.f32.mrb[0].mxu0
  %v3396 = vadd.f32 %v2971, %v3395
  %v3397 = vpop.f32.mrb[0].mxu0
  %v3398 = vpop.f32.mrb[0].mxu0
  %v3399 = vadd.f32 %v2974, %v3398
  %v3400 = vpop.f32.mrb[0].mxu0
  %3401 = vdwg.mxu0
  %v3402 = vmax.f32 %v3012, 0.0
  %v3403 = vmax.f32 %v3015, 0.0
  %v3404 = vmax.f32 %v3020, 0.0
  %v3405 = vmax.f32 %v3023, 0.0
  %v3406 = vmax.f32 %v3028, 0.0
  %v3407 = vmax.f32 %v3031, 0.0
  %v3408 = vmax.f32 %v3036, 0.0
  %v3409 = vmax.f32 %v3039, 0.0
  %v3410 = vmax.f32 %v3044, 0.0
  %v3411 = vmax.f32 %v3047, 0.0
  %v3412 = vmax.f32 %v3052, 0.0
  %v3413 = vmax.f32 %v3055, 0.0
  %v3414 = vmax.f32 %v3060, 0.0
  %v3415 = vmax.f32 %v3063, 0.0
  %v3416 = vmax.f32 %v3068, 0.0
  %v3417 = vmax.f32 %v3071, 0.0
  %v3418 = vmax.f32 %v3076, 0.0
  %v3419 = vmax.f32 %v3079, 0.0
  %v3420 = vmax.f32 %v3084, 0.0
  %v3421 = vmax.f32 %v3087, 0.0
  %v3422 = vmax.f32 %v3092, 0.0
  %v3423 = vmax.f32 %v3095, 0.0
  %v3424 = vmax.f32 %v3100, 0.0
  %v3425 = vmax.f32 %v3103, 0.0
  %v3426 = vmax.f32 %v3108, 0.0
  %v3427 = vmax.f32 %v3111, 0.0
  %v3428 = vmax.f32 %v3116, 0.0
  %v3429 = vmax.f32 %v3119, 0.0
  %v3430 = vmax.f32 %v3124, 0.0
  %v3431 = vmax.f32 %v3127, 0.0
  %v3432 = vmax.f32 %v3132, 0.0
  %v3433 = vmax.f32 %v3135, 0.0
  %v3434 = vmax.f32 %v3140, 0.0
  %v3435 = vmax.f32 %v3143, 0.0
  %v3436 = vmax.f32 %v3148, 0.0
  %v3437 = vmax.f32 %v3151, 0.0
  %v3438 = vmax.f32 %v3156, 0.0
  %v3439 = vmax.f32 %v3159, 0.0
  %v3440 = vmax.f32 %v3164, 0.0
  %v3441 = vmax.f32 %v3167, 0.0
  %v3442 = vmax.f32 %v3172, 0.0
  %v3443 = vmax.f32 %v3175, 0.0
  %v3444 = vmax.f32 %v3180, 0.0
  %v3445 = vmax.f32 %v3183, 0.0
  %v3446 = vmax.f32 %v3188, 0.0
  %v3447 = vmax.f32 %v3191, 0.0
  %v3448 = vmax.f32 %v3196, 0.0
  %v3449 = vmax.f32 %v3199, 0.0
  %v3450 = vmax.f32 %v3204, 0.0
  %v3451 = vmax.f32 %v3207, 0.0
  %v3452 = vmax.f32 %v3212, 0.0
  %v3453 = vmax.f32 %v3215, 0.0
  %v3454 = vmax.f32 %v3220, 0.0
  %v3455 = vmax.f32 %v3223, 0.0
  %v3456 = vmax.f32 %v3228, 0.0
  %v3457 = vmax.f32 %v3231, 0.0
  %v3458 = vmax.f32 %v3236, 0.0
  %v3459 = vmax.f32 %v3239, 0.0
  %v3460 = vmax.f32 %v3244, 0.0
  %v3461 = vmax.f32 %v3247, 0.0
  %v3462 = vmax.f32 %v3252, 0.0
  %v3463 = vmax.f32 %v3255, 0.0
  %v3464 = vmax.f32 %v3260, 0.0
  %v3465 = vmax.f32 %v3263, 0.0
  %v3466 = vmax.f32 %v3268, 0.0
  %v3467 = vmax.f32 %v3271, 0.0
  %v3468 = vmax.f32 %v3276, 0.0
  %v3469 = vmax.f32 %v3279, 0.0
  %v3470 = vmax.f32 %v3284, 0.0
  %v3471 = vmax.f32 %v3287, 0.0
  %v3472 = vmax.f32 %v3292, 0.0
  %v3473 = vmax.f32 %v3295, 0.0
  %v3474 = vmax.f32 %v3300, 0.0
  %v3475 = vmax.f32 %v3303, 0.0
  %v3476 = vmax.f32 %v3308, 0.0
  %v3477 = vmax.f32 %v3311, 0.0
  %v3478 = vmax.f32 %v3316, 0.0
  %v3479 = vmax.f32 %v3319, 0.0
  %v3480 = vmax.f32 %v3324, 0.0
  %v3481 = vmax.f32 %v3327, 0.0
  %v3482 = vmax.f32 %v3332, 0.0
  %v3483 = vmax.f32 %v3335, 0.0
  %v3484 = vmax.f32 %v3340, 0.0
  %v3485 = vmax.f32 %v3343, 0.0
  %v3486 = vmax.f32 %v3348, 0.0
  %v3487 = vmax.f32 %v3351, 0.0
  %v3488 = vmax.f32 %v3356, 0.0
  %v3489 = vmax.f32 %v3359, 0.0
  %v3490 = vmax.f32 %v3364, 0.0
  %v3491 = vmax.f32 %v3367, 0.0
  %v3492 = vmax.f32 %v3372, 0.0
  %v3493 = vmax.f32 %v3375, 0.0
  %v3494 = vmax.f32 %v3380, 0.0
  %v3495 = vmax.f32 %v3383, 0.0
  %v3496 = vmax.f32 %v3388, 0.0
  %v3497 = vmax.f32 %v3391, 0.0
  %v3498 = vmax.f32 %v3396, 0.0
  %v3499 = vmax.f32 %v3399, 0.0
  %v3500 = vpack.c.bf16 %v3403, %v3402
  %v3501 = vpack.c.bf16 %v3405, %v3404
  %v3502 = vpack.c.bf16 %v3407, %v3406
  %v3503 = vpack.c.bf16 %v3409, %v3408
  %v3504 = vpack.c.bf16 %v3411, %v3410
  %v3505 = vpack.c.bf16 %v3413, %v3412
  %v3506 = vpack.c.bf16 %v3415, %v3414
  %v3507 = vpack.c.bf16 %v3417, %v3416
  %v3508 = vpack.c.bf16 %v3419, %v3418
  %v3509 = vpack.c.bf16 %v3421, %v3420
  %v3510 = vpack.c.bf16 %v3423, %v3422
  %v3511 = vpack.c.bf16 %v3425, %v3424
  %v3512 = vpack.c.bf16 %v3427, %v3426
  %v3513 = vpack.c.bf16 %v3429, %v3428
  %v3514 = vpack.c.bf16 %v3431, %v3430
  %v3515 = vpack.c.bf16 %v3433, %v3432
  %v3516 = vpack.c.bf16 %v3435, %v3434
  %v3517 = vpack.c.bf16 %v3437, %v3436
  %v3518 = vpack.c.bf16 %v3439, %v3438
  %v3519 = vpack.c.bf16 %v3441, %v3440
  %v3520 = vpack.c.bf16 %v3443, %v3442
  %v3521 = vpack.c.bf16 %v3445, %v3444
  %v3522 = vpack.c.bf16 %v3447, %v3446
  %v3523 = vpack.c.bf16 %v3449, %v3448
  %v3524 = vpack.c.bf16 %v3451, %v3450
  %v3525 = vpack.c.bf16 %v3453, %v3452
  %v3526 = vpack.c.bf16 %v3455, %v3454
  %v3527 = vpack.c.bf16 %v3457, %v3456
  %v3528 = vpack.c.bf16 %v3459, %v3458
  %v3529 = vpack.c.bf16 %v3461, %v3460
  %v3530 = vpack.c.bf16 %v3463, %v3462
  %v3531 = vpack.c.bf16 %v3465, %v3464
  %v3532 = vpack.c.bf16 %v3467, %v3466
  %v3533 = vpack.c.bf16 %v3469, %v3468
  %v3534 = vpack.c.bf16 %v3471, %v3470
  %v3535 = vpack.c.bf16 %v3473, %v3472
  %v3536 = vpack.c.bf16 %v3475, %v3474
  %v3537 = vpack.c.bf16 %v3477, %v3476
  %v3538 = vpack.c.bf16 %v3479, %v3478
  %v3539 = vpack.c.bf16 %v3481, %v3480
  %v3540 = vpack.c.bf16 %v3483, %v3482
  %v3541 = vpack.c.bf16 %v3485, %v3484
  %v3542 = vpack.c.bf16 %v3487, %v3486
  %v3543 = vpack.c.bf16 %v3489, %v3488
  %v3544 = vpack.c.bf16 %v3491, %v3490
  %v3545 = vpack.c.bf16 %v3493, %v3492
  %v3546 = vpack.c.bf16 %v3495, %v3494
  %v3547 = vpack.c.bf16 %v3497, %v3496
  %v3548 = vpack.c.bf16 %v3499, %v3498
  %3561 = vrot.lane.b32.xlu0 %v3507, 64
  %v3562 = vpop.permute.xlu0 %3561
  %3563 = vrot.lane.b32.xlu0 %v3509, 64
  %v3564 = vpop.permute.xlu0 %3563
  %3565 = vrot.lane.b32.xlu0 %v3511, 64
  %v3566 = vpop.permute.xlu0 %3565
  %3567 = vrot.lane.b32.xlu0 %v3513, 64
  %v3568 = vpop.permute.xlu0 %3567
  %3569 = vrot.lane.b32.xlu0 %v3521, 64
  %v3570 = vpop.permute.xlu0 %3569
  %3571 = vrot.lane.b32.xlu0 %v3523, 64
  %v3572 = vpop.permute.xlu0 %3571
  %3573 = vrot.lane.b32.xlu0 %v3525, 64
  %v3574 = vpop.permute.xlu0 %3573
  %3575 = vrot.lane.b32.xlu0 %v3527, 64
  %v3576 = vpop.permute.xlu0 %3575
  %3577 = vrot.lane.b32.xlu0 %v3535, 64
  %v3578 = vpop.permute.xlu0 %3577
  %3579 = vrot.lane.b32.xlu0 %v3537, 64
  %v3580 = vpop.permute.xlu0 %3579
  %3581 = vrot.lane.b32.xlu0 %v3539, 64
  %v3582 = vpop.permute.xlu0 %3581
  %3583 = vrot.lane.b32.xlu0 %v3541, 64
  %v3584 = vpop.permute.xlu0 %3583
  %3597 = vrot.lane.b32.xlu0 %v3501, 64
  %v3598 = vpop.permute.xlu0 %3597
  %3599 = vrot.lane.b32.xlu0 %v3503, 64
  %v3600 = vpop.permute.xlu0 %3599
  %3601 = vrot.lane.b32.xlu0 %v3505, 64
  %v3602 = vpop.permute.xlu0 %3601
  %3603 = vrot.lane.b32.xlu0 %v3515, 64
  %v3604 = vpop.permute.xlu0 %3603
  %3605 = vrot.lane.b32.xlu0 %v3517, 64
  %v3606 = vpop.permute.xlu0 %3605
  %3607 = vrot.lane.b32.xlu0 %v3519, 64
  %v3608 = vpop.permute.xlu0 %3607
  %3609 = vrot.lane.b32.xlu0 %v3529, 64
  %v3610 = vpop.permute.xlu0 %3609
  %3611 = vrot.lane.b32.xlu0 %v3531, 64
  %v3612 = vpop.permute.xlu0 %3611
  %3613 = vrot.lane.b32.xlu0 %v3533, 64
  %v3614 = vpop.permute.xlu0 %3613
  %3615 = vrot.lane.b32.xlu0 %v3543, 64
  %v3616 = vpop.permute.xlu0 %3615
  %3617 = vrot.lane.b32.xlu0 %v3545, 64
  %v3618 = vpop.permute.xlu0 %3617
  %3619 = vrot.lane.b32.xlu0 %v3547, 64
  %v3620 = vpop.permute.xlu0 %3619
  %v3622 = vsel %vm1902, 0, %v1654
  %v3625 = vsel %vm1902, 0, %v3562
  %v3629 = vsel %vm1902, %v3508, %v3564
  %v3633 = vsel %vm1902, %v3510, %v3566
  %v3637 = vsel %vm1902, %v3512, %v3568
  %v3640 = vsel %vm1902, 0, %v3570
  %v3644 = vsel %vm1902, %v3522, %v3572
  %v3648 = vsel %vm1902, %v3524, %v3574
  %v3652 = vsel %vm1902, %v3526, %v3576
  %v3655 = vsel %vm1902, 0, %v3578
  %v3659 = vsel %vm1902, %v3536, %v3580
  %v3663 = vsel %vm1902, %v3538, %v3582
  %v3667 = vsel %vm1902, %v3540, %v3584
  %v3670 = vsel %vm1902, 0, %v3598
  %v3673 = vsel %vm1902, 0, %v3600
  %v3676 = vsel %vm1902, 0, %v3602
  %v3678 = vsel %vm1902, %v3508, %v1654
  %v3681 = vsel %vm1902, %v3510, %v3604
  %v3684 = vsel %vm1902, %v3512, %v3606
  %v3687 = vsel %vm1902, 0, %v3608
  %v3689 = vsel %vm1902, %v3522, %v1654
  %v3692 = vsel %vm1902, %v3524, %v3610
  %v3695 = vsel %vm1902, %v3526, %v3612
  %v3698 = vsel %vm1902, 0, %v3614
  %v3700 = vsel %vm1902, %v3536, %v1654
  %v3703 = vsel %vm1902, %v3538, %v3616
  %v3706 = vsel %vm1902, %v3540, %v3618
  %v3709 = vsel %vm1902, 0, %v3620
  %v3712 = vsel %vm1902, %v3500, %v3598
  %v3715 = vsel %vm1902, %v3502, %v3600
  %v3718 = vsel %vm1902, %v3504, %v3602
  %v3721 = vsel %vm1902, %v3506, %v1654
  %v3724 = vsel %vm1902, %v3514, %v3604
  %v3727 = vsel %vm1902, %v3516, %v3606
  %v3730 = vsel %vm1902, %v3518, %v3608
  %v3733 = vsel %vm1902, %v3520, %v1654
  %v3736 = vsel %vm1902, %v3528, %v3610
  %v3739 = vsel %vm1902, %v3530, %v3612
  %v3742 = vsel %vm1902, %v3532, %v3614
  %v3745 = vsel %vm1902, %v3534, %v1654
  %v3748 = vsel %vm1902, %v3542, %v3616
  %v3751 = vsel %vm1902, %v3544, %v3618
  %v3754 = vsel %vm1902, %v3546, %v3620
  %v3757 = vsel %vm1902, %v3548, %v1654
  %v3759 = vld [vmem:[%s7] sm:$0xf]
  %v3760 = vld [vmem:[%s7 + $0x4] sm:$0xf]
  %v3761 = vld [vmem:[%s7 + $0x8] sm:$0xf]
  %v3762 = vld [vmem:[%s7 + $0xc] sm:$0xf]
  %v3763 = vld [vmem:[%s7 + $0x10] sm:$0xf]
  %v3764 = vld [vmem:[%s7 + $0x14] sm:$0xf]
  %v3765 = vld [vmem:[%s7 + $0x18] sm:$0xf]
  %v3766 = vld [vmem:[%s7 + $0x1c] sm:$0xf]
  %v3767 = vld [vmem:[%s7 + $0x20] sm:$0xf]
  %v3768 = vld [vmem:[%s7 + $0x24] sm:$0xf]
  %v3769 = vld [vmem:[%s7 + $0x28] sm:$0xf]
  %v3770 = vld [vmem:[%s7 + $0x2c] sm:$0xf]
  %v3771 = vld [vmem:[%s7 + $0x30] sm:$0xf]
  %v3772 = vld [vmem:[%s7 + $0x34] sm:$0xf]
  %v3773 = vld [vmem:[%s7 + $0x38] sm:$0xf]
  %v3774 = vld [vmem:[%s7 + $0x3c] sm:$0xf]
  %v3775 = vld [vmem:[%s7 + $0x40] sm:$0xf]
  %v3776 = vld [vmem:[%s7 + $0x44] sm:$0xf]
  %v3777 = vld [vmem:[%s7 + $0x48] sm:$0xf]
  %v3778 = vld [vmem:[%s7 + $0x4c] sm:$0xf]
  %v3779 = vld [vmem:[%s7 + $0x50] sm:$0xf]
  %v3780 = vld [vmem:[%s7 + $0x54] sm:$0xf]
  %v3781 = vld [vmem:[%s7 + $0x58] sm:$0xf]
  %v3782 = vld [vmem:[%s7 + $0x5c] sm:$0xf]
  %v3783 = vld [vmem:[%s7 + $0x60] sm:$0xf]
  %v3784 = vld [vmem:[%s7 + $0x64] sm:$0xf]
  %v3785 = vld [vmem:[%s7 + $0x68] sm:$0xf]
  %v3786 = vld [vmem:[%s7 + $0x6c] sm:$0xf]
  %v3787 = vld [vmem:[%s7 + $0x70] sm:$0xf]
  %v3788 = vld [vmem:[%s7 + $0x74] sm:$0xf]
  %v3789 = vld [vmem:[%s7 + $0x78] sm:$0xf]
  %v3790 = vld [vmem:[%s7 + $0x7c] sm:$0xf]
  %v3791 = vld [vmem:[%s7 + $0x80] sm:$0xf]
  %v3792 = vld [vmem:[%s7 + $0x84] sm:$0xf]
  %v3793 = vld [vmem:[%s7 + $0x88] sm:$0xf]
  %v3794 = vld [vmem:[%s7 + $0x8c] sm:$0xf]
  %v3795 = vld [vmem:[%s7 + $0x90] sm:$0xf]
  %v3796 = vld [vmem:[%s7 + $0x94] sm:$0xf]
  %v3797 = vld [vmem:[%s7 + $0x98] sm:$0xf]
  %v3798 = vld [vmem:[%s7 + $0x9c] sm:$0xf]
  %v3799 = vld [vmem:[%s7 + $0xa0] sm:$0xf]
  %v3800 = vld [vmem:[%s7 + $0xa4] sm:$0xf]
  %v3801 = vld [vmem:[%s7 + $0xa8] sm:$0xf]
  %v3802 = vld [vmem:[%s7 + $0xac] sm:$0xf]
  %v3803 = vld [vmem:[%s7 + $0xb0] sm:$0xf]
  %v3804 = vld [vmem:[%s7 + $0xb4] sm:$0xf]
  %v3805 = vld [vmem:[%s7 + $0xb8] sm:$0xf]
  %v3806 = vld [vmem:[%s7 + $0xbc] sm:$0xf]
  %v3807 = vld [vmem:[%s7 + $0xc0] sm:$0xf]
  %v3808 = vld [vmem:[%s7 + $0xc4] sm:$0xf]
  %v3809 = vld [vmem:[%s7 + $0xc8] sm:$0xf]
  %v3810 = vld [vmem:[%s7 + $0xcc] sm:$0xf]
  %v3811 = vld [vmem:[%s7 + $0xd0] sm:$0xf]
  %v3812 = vld [vmem:[%s7 + $0xd4] sm:$0xf]
  %v3813 = vld [vmem:[%s7 + $0xd8] sm:$0xf]
  %v3814 = vld [vmem:[%s7 + $0xdc] sm:$0xf]
  %v3815 = vld [vmem:[%s7 + $0xe0] sm:$0xf]
  %v3816 = vld [vmem:[%s7 + $0xe4] sm:$0xf]
  %v3817 = vld [vmem:[%s7 + $0xe8] sm:$0xf]
  %v3818 = vld [vmem:[%s7 + $0xec] sm:$0xf]
  %v3819 = vld [vmem:[%s7 + $0xf0] sm:$0xf]
  %v3820 = vld [vmem:[%s7 + $0xf4] sm:$0xf]
  %v3821 = vld [vmem:[%s7 + $0xf8] sm:$0xf]
  %v3822 = vld [vmem:[%s7 + $0xfc] sm:$0xf]
  %v3823 = vld [vmem:[%s7 + $0x100] sm:$0xf]
  %v3824 = vld [vmem:[%s7 + $0x104] sm:$0xf]
  %v3825 = vld [vmem:[%s7 + $0x108] sm:$0xf]
  %v3826 = vld [vmem:[%s7 + $0x10c] sm:$0xf]
  %v3827 = vld [vmem:[%s7 + $0x110] sm:$0xf]
  %v3828 = vld [vmem:[%s7 + $0x114] sm:$0xf]
  %v3829 = vld [vmem:[%s7 + $0x118] sm:$0xf]
  %v3830 = vld [vmem:[%s7 + $0x11c] sm:$0xf]
  %v3903 = vunpack.c.l.b16 %v3759
  %v3904 = vunpack.c.l.b16 %v3760
  %v3905 = vunpack.c.l.b16 %v3761
  %v3906 = vunpack.c.l.b16 %v3762
  %v3907 = vunpack.c.l.b16 %v3763
  %v3908 = vunpack.c.l.b16 %v3764
  %v3909 = vunpack.c.l.b16 %v3765
  %v3910 = vunpack.c.l.b16 %v3766
  %v3911 = vunpack.c.l.b16 %v3767
  %v3912 = vunpack.c.l.b16 %v3768
  %v3913 = vunpack.c.l.b16 %v3769
  %v3914 = vunpack.c.l.b16 %v3770
  %v3915 = vunpack.c.l.b16 %v3771
  %v3916 = vunpack.c.l.b16 %v3772
  %v3917 = vunpack.c.l.b16 %v3773
  %v3918 = vunpack.c.l.b16 %v3774
  %v3919 = vunpack.c.l.b16 %v3775
  %v3920 = vunpack.c.l.b16 %v3776
  %v3921 = vunpack.c.l.b16 %v3777
  %v3922 = vunpack.c.l.b16 %v3778
  %v3923 = vunpack.c.l.b16 %v3779
  %v3924 = vunpack.c.l.b16 %v3780
  %v3925 = vunpack.c.l.b16 %v3781
  %v3926 = vunpack.c.l.b16 %v3782
  %v3927 = vunpack.c.l.b16 %v3783
  %v3928 = vunpack.c.l.b16 %v3784
  %v3929 = vunpack.c.l.b16 %v3785
  %v3930 = vunpack.c.l.b16 %v3786
  %v3931 = vunpack.c.l.b16 %v3787
  %v3932 = vunpack.c.l.b16 %v3788
  %v3933 = vunpack.c.l.b16 %v3789
  %v3934 = vunpack.c.l.b16 %v3790
  %v3935 = vunpack.c.l.b16 %v3791
  %v3936 = vunpack.c.l.b16 %v3792
  %v3937 = vunpack.c.l.b16 %v3793
  %v3938 = vunpack.c.l.b16 %v3794
  %v3939 = vunpack.c.l.b16 %v3795
  %v3940 = vunpack.c.l.b16 %v3796
  %v3941 = vunpack.c.l.b16 %v3797
  %v3942 = vunpack.c.l.b16 %v3798
  %v3943 = vunpack.c.l.b16 %v3799
  %v3944 = vunpack.c.l.b16 %v3800
  %v3945 = vunpack.c.l.b16 %v3801
  %v3946 = vunpack.c.l.b16 %v3802
  %v3947 = vunpack.c.l.b16 %v3803
  %v3948 = vunpack.c.l.b16 %v3804
  %v3949 = vunpack.c.l.b16 %v3805
  %v3950 = vunpack.c.l.b16 %v3806
  %v3951 = vunpack.c.l.b16 %v3807
  %v3952 = vunpack.c.l.b16 %v3808
  %v3953 = vunpack.c.l.b16 %v3809
  %v3954 = vunpack.c.l.b16 %v3810
  %v3955 = vunpack.c.l.b16 %v3811
  %v3956 = vunpack.c.l.b16 %v3812
  %v3957 = vunpack.c.l.b16 %v3813
  %v3958 = vunpack.c.l.b16 %v3814
  %v3959 = vunpack.c.l.b16 %v3815
  %v3960 = vunpack.c.l.b16 %v3816
  %v3961 = vunpack.c.l.b16 %v3817
  %v3962 = vunpack.c.l.b16 %v3818
  %v3963 = vunpack.c.l.b16 %v3819
  %v3964 = vunpack.c.l.b16 %v3820
  %v3965 = vunpack.c.l.b16 %v3821
  %v3966 = vunpack.c.l.b16 %v3822
  %v3967 = vunpack.c.l.b16 %v3823
  %v3968 = vunpack.c.l.b16 %v3824
  %v3969 = vunpack.c.l.b16 %v3825
  %v3970 = vunpack.c.l.b16 %v3826
  %v3971 = vunpack.c.l.b16 %v3827
  %v3972 = vunpack.c.l.b16 %v3828
  %v3973 = vunpack.c.l.b16 %v3829
  %v3974 = vunpack.c.l.b16 %v3830
  %v3975 = vpack.c.b16 %v3904, %v3903
  %v3976 = vpack.c.b16 %v3906, %v3905
  %v3977 = vpack.c.b16 %v3908, %v3907
  %v3978 = vpack.c.b16 %v3910, %v3909
  %v3979 = vpack.c.b16 %v3912, %v3911
  %v3980 = vpack.c.b16 %v3914, %v3913
  %v3981 = vpack.c.b16 %v3916, %v3915
  %v3982 = vpack.c.b16 %v3918, %v3917
  %v3983 = vpack.c.b16 %v3920, %v3919
  %v3984 = vpack.c.b16 %v3922, %v3921
  %v3985 = vpack.c.b16 %v3924, %v3923
  %v3986 = vpack.c.b16 %v3926, %v3925
  %v3987 = vpack.c.b16 %v3928, %v3927
  %v3988 = vpack.c.b16 %v3930, %v3929
  %v3989 = vpack.c.b16 %v3932, %v3931
  %v3990 = vpack.c.b16 %v3934, %v3933
  %v3991 = vpack.c.b16 %v3936, %v3935
  %v3992 = vpack.c.b16 %v3938, %v3937
  %v3993 = vpack.c.b16 %v3940, %v3939
  %v3994 = vpack.c.b16 %v3942, %v3941
  %v3995 = vpack.c.b16 %v3944, %v3943
  %v3996 = vpack.c.b16 %v3946, %v3945
  %v3997 = vpack.c.b16 %v3948, %v3947
  %v3998 = vpack.c.b16 %v3950, %v3949
  %v3999 = vpack.c.b16 %v3952, %v3951
  %v4000 = vpack.c.b16 %v3954, %v3953
  %v4001 = vpack.c.b16 %v3956, %v3955
  %v4002 = vpack.c.b16 %v3958, %v3957
  %v4003 = vpack.c.b16 %v3960, %v3959
  %v4004 = vpack.c.b16 %v3962, %v3961
  %v4005 = vpack.c.b16 %v3964, %v3963
  %v4006 = vpack.c.b16 %v3966, %v3965
  %v4007 = vpack.c.b16 %v3968, %v3967
  %v4008 = vpack.c.b16 %v3970, %v3969
  %v4009 = vpack.c.b16 %v3972, %v3971
  %v4010 = vpack.c.b16 %v3974, %v3973
  %v4047 = vsel %vm1902, %v3508, 0
  %v4049 = vsel %vm1902, %v3510, 0
  %v4051 = vsel %vm1902, %v3512, 0
  %v4053 = vsel %vm1902, 0, 0
  %v4055 = vsel %vm1902, %v3522, 0
  %v4057 = vsel %vm1902, %v3524, 0
  %v4059 = vsel %vm1902, %v3526, 0
  %v4061 = vsel %vm1902, %v3536, 0
  %v4063 = vsel %vm1902, %v3538, 0
  %v4065 = vsel %vm1902, %v3540, 0
  %4067 = vmatprep.subr.bf16.mxu0 0
  %4068 = vmatpush1.bf16.msra.mxu0 %v3975
  %4069 = vmatprep.subr.bf16.mxu0 0
  %4070 = vmatpush1.bf16.msra.mxu0 %v3976
  %4071 = vmatprep.subr.bf16.mxu0 0
  %4072 = vmatpush1.bf16.msra.mxu0 %v3977
  %4073 = vmatprep.subr.bf16.mxu0 0
  %4074 = vmatpush1.bf16.msra.mxu0 %v3978
  %4075 = vmatprep.subr.bf16.mxu0 0
  %4076 = vmatpush1.bf16.msra.mxu0 %v3979
  %4077 = vmatprep.subr.bf16.mxu0 0
  %4078 = vmatpush1.bf16.msra.mxu0 %v3980
  %4079 = vmatprep.subr.bf16.mxu0 0
  %4080 = vmatpush1.bf16.msra.mxu0 %v3981
  %4081 = vmatprep.subr.bf16.mxu0 0
  %4082 = vmatpush1.bf16.msra.mxu0 %v3982
  %4083 = vmatprep.subr.bf16.mxu0 0
  %4084 = vmatpush1.bf16.msra.mxu0 %v3983
  %4085 = vmatprep.subr.bf16.mxu0 0
  %4086 = vmatpush1.bf16.msra.mxu0 %v3984
  %4087 = vmatprep.subr.bf16.mxu0 0
  %4088 = vmatpush1.bf16.msra.mxu0 %v3985
  %4089 = vmatprep.subr.bf16.mxu0 0
  %4090 = vmatpush1.bf16.msra.mxu0 %v3986
  %4091 = vmatprep.subr.bf16.mxu0 0
  %4092 = vmatpush1.bf16.msra.mxu0 %v3987
  %4093 = vmatprep.subr.bf16.mxu0 0
  %4094 = vmatpush1.bf16.msra.mxu0 %v3988
  %4095 = vmatprep.subr.bf16.mxu0 0
  %4096 = vmatpush1.bf16.msra.mxu0 %v3989
  %4097 = vmatprep.subr.bf16.mxu0 0
  %4098 = vmatpush1.bf16.msra.mxu0 %v3990
  %4099 = vmatprep.mubr.bf16.mxu0 %v3622
  %4100 = vmatmul.mubr.bf16.gmra.mrb[0].mxu0 %v3622
  %v4101 = vpop.f32.mrb[0].mxu0
  %v4102 = vadd.f32 0.0, %v4101
  %v4103 = vpop.f32.mrb[0].mxu0
  %v4104 = vpop.f32.mrb[0].mxu0
  %v4105 = vadd.f32 0.0, %v4104
  %v4106 = vpop.f32.mrb[0].mxu0
  %4107 = vmatprep.mubr.bf16.mxu0 %v3670
  %4108 = vmatmul.mubr.bf16.gmra.mrb[0].mxu0 %v3622
  %v4109 = vpop.f32.mrb[0].mxu0
  %v4110 = vadd.f32 0.0, %v4109
  %v4111 = vpop.f32.mrb[0].mxu0
  %v4112 = vpop.f32.mrb[0].mxu0
  %v4113 = vadd.f32 0.0, %v4112
  %v4114 = vpop.f32.mrb[0].mxu0
  %4115 = vmatprep.mubr.bf16.mxu0 %v3673
  %4116 = vmatmul.mubr.bf16.gmra.mrb[0].mxu0 %v3622
  %v4117 = vpop.f32.mrb[0].mxu0
  %v4118 = vadd.f32 0.0, %v4117
  %v4119 = vpop.f32.mrb[0].mxu0
  %v4120 = vpop.f32.mrb[0].mxu0
  %v4121 = vadd.f32 0.0, %v4120
  %v4122 = vpop.f32.mrb[0].mxu0
  %4123 = vmatprep.mubr.bf16.mxu0 %v3676
  %4124 = vmatmul.mubr.bf16.gmra.mrb[0].mxu0 %v3622
  %v4125 = vpop.f32.mrb[0].mxu0
  %v4126 = vadd.f32 0.0, %v4125
  %v4127 = vpop.f32.mrb[0].mxu0
  %v4128 = vpop.f32.mrb[0].mxu0
  %v4129 = vadd.f32 0.0, %v4128
  %v4130 = vpop.f32.mrb[0].mxu0
  %4131 = vmatprep.mubr.bf16.mxu0 %v3678
  %4132 = vmatmul.mubr.bf16.gmra.mrb[0].mxu0 %v3625
  %v4133 = vpop.f32.mrb[0].mxu0
  %v4134 = vadd.f32 0.0, %v4133
  %v4135 = vpop.f32.mrb[0].mxu0
  %v4136 = vpop.f32.mrb[0].mxu0
  %v4137 = vadd.f32 0.0, %v4136
  %v4138 = vpop.f32.mrb[0].mxu0
  %4139 = vmatprep.mubr.bf16.mxu0 %v3681
  %4140 = vmatmul.mubr.bf16.gmra.mrb[0].mxu0 %v3629
  %v4141 = vpop.f32.mrb[0].mxu0
  %v4142 = vadd.f32 0.0, %v4141
  %v4143 = vpop.f32.mrb[0].mxu0
  %v4144 = vpop.f32.mrb[0].mxu0
  %v4145 = vadd.f32 0.0, %v4144
  %v4146 = vpop.f32.mrb[0].mxu0
  %4147 = vmatprep.mubr.bf16.mxu0 %v3684
  %4148 = vmatmul.mubr.bf16.gmra.mrb[0].mxu0 %v3633
  %v4149 = vpop.f32.mrb[0].mxu0
  %v4150 = vadd.f32 0.0, %v4149
  %v4151 = vpop.f32.mrb[0].mxu0
  %v4152 = vpop.f32.mrb[0].mxu0
  %v4153 = vadd.f32 0.0, %v4152
  %v4154 = vpop.f32.mrb[0].mxu0
  %4155 = vmatprep.mubr.bf16.mxu0 %v3687
  %4156 = vmatmul.mubr.bf16.gmra.mrb[0].mxu0 %v3637
  %v4157 = vpop.f32.mrb[0].mxu0
  %v4158 = vadd.f32 0.0, %v4157
  %v4159 = vpop.f32.mrb[0].mxu0
  %v4160 = vpop.f32.mrb[0].mxu0
  %v4161 = vadd.f32 0.0, %v4160
  %v4162 = vpop.f32.mrb[0].mxu0
  %4163 = vmatprep.mubr.bf16.mxu0 %v3689
  %4164 = vmatmul.mubr.bf16.gmra.mrb[0].mxu0 %v3640
  %v4165 = vpop.f32.mrb[0].mxu0
  %v4166 = vadd.f32 0.0, %v4165
  %v4167 = vpop.f32.mrb[0].mxu0
  %v4168 = vpop.f32.mrb[0].mxu0
  %v4169 = vadd.f32 0.0, %v4168
  %v4170 = vpop.f32.mrb[0].mxu0
  %4171 = vmatprep.mubr.bf16.mxu0 %v3692
  %4172 = vmatmul.mubr.bf16.gmra.mrb[0].mxu0 %v3644
  %v4173 = vpop.f32.mrb[0].mxu0
  %v4174 = vadd.f32 0.0, %v4173
  %v4175 = vpop.f32.mrb[0].mxu0
  %v4176 = vpop.f32.mrb[0].mxu0
  %v4177 = vadd.f32 0.0, %v4176
  %v4178 = vpop.f32.mrb[0].mxu0
  %4179 = vmatprep.mubr.bf16.mxu0 %v3695
  %4180 = vmatmul.mubr.bf16.gmra.mrb[0].mxu0 %v3648
  %v4181 = vpop.f32.mrb[0].mxu0
  %v4182 = vadd.f32 0.0, %v4181
  %v4183 = vpop.f32.mrb[0].mxu0
  %v4184 = vpop.f32.mrb[0].mxu0
  %v4185 = vadd.f32 0.0, %v4184
  %v4186 = vpop.f32.mrb[0].mxu0
  %4187 = vmatprep.mubr.bf16.mxu0 %v3698
  %4188 = vmatmul.mubr.bf16.gmra.mrb[0].mxu0 %v3652
  %v4189 = vpop.f32.mrb[0].mxu0
  %v4190 = vadd.f32 0.0, %v4189
  %v4191 = vpop.f32.mrb[0].mxu0
  %v4192 = vpop.f32.mrb[0].mxu0
  %v4193 = vadd.f32 0.0, %v4192
  %v4194 = vpop.f32.mrb[0].mxu0
  %4195 = vmatprep.mubr.bf16.mxu0 %v3700
  %4196 = vmatmul.mubr.bf16.gmra.mrb[0].mxu0 %v3655
  %v4197 = vpop.f32.mrb[0].mxu0
  %v4198 = vadd.f32 0.0, %v4197
  %v4199 = vpop.f32.mrb[0].mxu0
  %v4200 = vpop.f32.mrb[0].mxu0
  %v4201 = vadd.f32 0.0, %v4200
  %v4202 = vpop.f32.mrb[0].mxu0
  %4203 = vmatprep.mubr.bf16.mxu0 %v3703
  %4204 = vmatmul.mubr.bf16.gmra.mrb[0].mxu0 %v3659
  %v4205 = vpop.f32.mrb[0].mxu0
  %v4206 = vadd.f32 0.0, %v4205
  %v4207 = vpop.f32.mrb[0].mxu0
  %v4208 = vpop.f32.mrb[0].mxu0
  %v4209 = vadd.f32 0.0, %v4208
  %v4210 = vpop.f32.mrb[0].mxu0
  %4211 = vmatprep.mubr.bf16.mxu0 %v3706
  %4212 = vmatmul.mubr.bf16.gmra.mrb[0].mxu0 %v3663
  %v4213 = vpop.f32.mrb[0].mxu0
  %v4214 = vadd.f32 0.0, %v4213
  %v4215 = vpop.f32.mrb[0].mxu0
  %v4216 = vpop.f32.mrb[0].mxu0
  %v4217 = vadd.f32 0.0, %v4216
  %v4218 = vpop.f32.mrb[0].mxu0
  %4219 = vmatprep.mubr.bf16.mxu0 %v3709
  %4220 = vmatmul.mubr.bf16.gmra.mrb[0].mxu0 %v3667
  %v4221 = vpop.f32.mrb[0].mxu0
  %v4222 = vadd.f32 0.0, %v4221
  %v4223 = vpop.f32.mrb[0].mxu0
  %v4224 = vpop.f32.mrb[0].mxu0
  %v4225 = vadd.f32 0.0, %v4224
  %v4226 = vpop.f32.mrb[0].mxu0
  %4227 = vdwg.mxu0
  %4228 = vmatprep.subr.bf16.mxu0 0
  %4229 = vmatpush1.bf16.msra.mxu0 %v3991
  %4230 = vmatprep.subr.bf16.mxu0 0
  %4231 = vmatpush1.bf16.msra.mxu0 %v3992
  %4232 = vmatprep.subr.bf16.mxu0 0
  %4233 = vmatpush1.bf16.msra.mxu0 %v3993
  %4234 = vmatprep.subr.bf16.mxu0 0
  %4235 = vmatpush1.bf16.msra.mxu0 %v3994
  %4236 = vmatprep.subr.bf16.mxu0 0
  %4237 = vmatpush1.bf16.msra.mxu0 %v3995
  %4238 = vmatprep.subr.bf16.mxu0 0
  %4239 = vmatpush1.bf16.msra.mxu0 %v3996
  %4240 = vmatprep.subr.bf16.mxu0 0
  %4241 = vmatpush1.bf16.msra.mxu0 %v3997
  %4242 = vmatprep.subr.bf16.mxu0 0
  %4243 = vmatpush1.bf16.msra.mxu0 %v3998
  %4244 = vmatprep.subr.bf16.mxu0 0
  %4245 = vmatpush1.bf16.msra.mxu0 %v3999
  %4246 = vmatprep.subr.bf16.mxu0 0
  %4247 = vmatpush1.bf16.msra.mxu0 %v4000
  %4248 = vmatprep.subr.bf16.mxu0 0
  %4249 = vmatpush1.bf16.msra.mxu0 %v4001
  %4250 = vmatprep.subr.bf16.mxu0 0
  %4251 = vmatpush1.bf16.msra.mxu0 %v4002
  %4252 = vmatprep.subr.bf16.mxu0 0
  %4253 = vmatpush1.bf16.msra.mxu0 %v4003
  %4254 = vmatprep.subr.bf16.mxu0 0
  %4255 = vmatpush1.bf16.msra.mxu0 %v4004
  %4256 = vmatprep.subr.bf16.mxu0 0
  %4257 = vmatpush1.bf16.msra.mxu0 %v4005
  %4258 = vmatprep.subr.bf16.mxu0 0
  %4259 = vmatpush1.bf16.msra.mxu0 %v4006
  %4260 = vmatprep.mubr.bf16.mxu0 %v3625
  %4261 = vmatmul.mubr.bf16.gmra.mrb[0].mxu0 %v3712
  %v4262 = vpop.f32.mrb[0].mxu0
  %v4263 = vadd.f32 %v4102, %v4262
  %v4264 = vpop.f32.mrb[0].mxu0
  %v4265 = vpop.f32.mrb[0].mxu0
  %v4266 = vadd.f32 %v4105, %v4265
  %v4267 = vpop.f32.mrb[0].mxu0
  %4268 = vmatprep.mubr.bf16.mxu0 %v3629
  %4269 = vmatmul.mubr.bf16.gmra.mrb[0].mxu0 %v3715
  %v4270 = vpop.f32.mrb[0].mxu0
  %v4271 = vadd.f32 %v4110, %v4270
  %v4272 = vpop.f32.mrb[0].mxu0
  %v4273 = vpop.f32.mrb[0].mxu0
  %v4274 = vadd.f32 %v4113, %v4273
  %v4275 = vpop.f32.mrb[0].mxu0
  %4276 = vmatprep.mubr.bf16.mxu0 %v3633
  %4277 = vmatmul.mubr.bf16.gmra.mrb[0].mxu0 %v3718
  %v4278 = vpop.f32.mrb[0].mxu0
  %v4279 = vadd.f32 %v4118, %v4278
  %v4280 = vpop.f32.mrb[0].mxu0
  %v4281 = vpop.f32.mrb[0].mxu0
  %v4282 = vadd.f32 %v4121, %v4281
  %v4283 = vpop.f32.mrb[0].mxu0
  %4284 = vmatprep.mubr.bf16.mxu0 %v3637
  %4285 = vmatmul.mubr.bf16.gmra.mrb[0].mxu0 %v3721
  %v4286 = vpop.f32.mrb[0].mxu0
  %v4287 = vadd.f32 %v4126, %v4286
  %v4288 = vpop.f32.mrb[0].mxu0
  %v4289 = vpop.f32.mrb[0].mxu0
  %v4290 = vadd.f32 %v4129, %v4289
  %v4291 = vpop.f32.mrb[0].mxu0
  %4292 = vmatprep.mubr.bf16.mxu0 %v3640
  %4293 = vmatmul.mubr.bf16.gmra.mrb[0].mxu0 %v3724
  %v4294 = vpop.f32.mrb[0].mxu0
  %v4295 = vadd.f32 %v4134, %v4294
  %v4296 = vpop.f32.mrb[0].mxu0
  %v4297 = vpop.f32.mrb[0].mxu0
  %v4298 = vadd.f32 %v4137, %v4297
  %v4299 = vpop.f32.mrb[0].mxu0
  %4300 = vmatprep.mubr.bf16.mxu0 %v3644
  %4301 = vmatmul.mubr.bf16.gmra.mrb[0].mxu0 %v3727
  %v4302 = vpop.f32.mrb[0].mxu0
  %v4303 = vadd.f32 %v4142, %v4302
  %v4304 = vpop.f32.mrb[0].mxu0
  %v4305 = vpop.f32.mrb[0].mxu0
  %v4306 = vadd.f32 %v4145, %v4305
  %v4307 = vpop.f32.mrb[0].mxu0
  %4308 = vmatprep.mubr.bf16.mxu0 %v3648
  %4309 = vmatmul.mubr.bf16.gmra.mrb[0].mxu0 %v3730
  %v4310 = vpop.f32.mrb[0].mxu0
  %v4311 = vadd.f32 %v4150, %v4310
  %v4312 = vpop.f32.mrb[0].mxu0
  %v4313 = vpop.f32.mrb[0].mxu0
  %v4314 = vadd.f32 %v4153, %v4313
  %v4315 = vpop.f32.mrb[0].mxu0
  %4316 = vmatprep.mubr.bf16.mxu0 %v3652
  %4317 = vmatmul.mubr.bf16.gmra.mrb[0].mxu0 %v3733
  %v4318 = vpop.f32.mrb[0].mxu0
  %v4319 = vadd.f32 %v4158, %v4318
  %v4320 = vpop.f32.mrb[0].mxu0
  %v4321 = vpop.f32.mrb[0].mxu0
  %v4322 = vadd.f32 %v4161, %v4321
  %v4323 = vpop.f32.mrb[0].mxu0
  %4324 = vmatprep.mubr.bf16.mxu0 %v3655
  %4325 = vmatmul.mubr.bf16.gmra.mrb[0].mxu0 %v3736
  %v4326 = vpop.f32.mrb[0].mxu0
  %v4327 = vadd.f32 %v4166, %v4326
  %v4328 = vpop.f32.mrb[0].mxu0
  %v4329 = vpop.f32.mrb[0].mxu0
  %v4330 = vadd.f32 %v4169, %v4329
  %v4331 = vpop.f32.mrb[0].mxu0
  %4332 = vmatprep.mubr.bf16.mxu0 %v3659
  %4333 = vmatmul.mubr.bf16.gmra.mrb[0].mxu0 %v3739
  %v4334 = vpop.f32.mrb[0].mxu0
  %v4335 = vadd.f32 %v4174, %v4334
  %v4336 = vpop.f32.mrb[0].mxu0
  %v4337 = vpop.f32.mrb[0].mxu0
  %v4338 = vadd.f32 %v4177, %v4337
  %v4339 = vpop.f32.mrb[0].mxu0
  %4340 = vmatprep.mubr.bf16.mxu0 %v3663
  %4341 = vmatmul.mubr.bf16.gmra.mrb[0].mxu0 %v3742
  %v4342 = vpop.f32.mrb[0].mxu0
  %v4343 = vadd.f32 %v4182, %v4342
  %v4344 = vpop.f32.mrb[0].mxu0
  %v4345 = vpop.f32.mrb[0].mxu0
  %v4346 = vadd.f32 %v4185, %v4345
  %v4347 = vpop.f32.mrb[0].mxu0
  %4348 = vmatprep.mubr.bf16.mxu0 %v3667
  %4349 = vmatmul.mubr.bf16.gmra.mrb[0].mxu0 %v3745
  %v4350 = vpop.f32.mrb[0].mxu0
  %v4351 = vadd.f32 %v4190, %v4350
  %v4352 = vpop.f32.mrb[0].mxu0
  %v4353 = vpop.f32.mrb[0].mxu0
  %v4354 = vadd.f32 %v4193, %v4353
  %v4355 = vpop.f32.mrb[0].mxu0
  %4356 = vmatprep.mubr.bf16.mxu0 %v3622
  %4357 = vmatmul.mubr.bf16.gmra.mrb[0].mxu0 %v3748
  %v4358 = vpop.f32.mrb[0].mxu0
  %v4359 = vadd.f32 %v4198, %v4358
  %v4360 = vpop.f32.mrb[0].mxu0
  %v4361 = vpop.f32.mrb[0].mxu0
  %v4362 = vadd.f32 %v4201, %v4361
  %v4363 = vpop.f32.mrb[0].mxu0
  %4364 = vmatprep.mubr.bf16.mxu0 %v3622
  %4365 = vmatmul.mubr.bf16.gmra.mrb[0].mxu0 %v3751
  %v4366 = vpop.f32.mrb[0].mxu0
  %v4367 = vadd.f32 %v4206, %v4366
  %v4368 = vpop.f32.mrb[0].mxu0
  %v4369 = vpop.f32.mrb[0].mxu0
  %v4370 = vadd.f32 %v4209, %v4369
  %v4371 = vpop.f32.mrb[0].mxu0
  %4372 = vmatprep.mubr.bf16.mxu0 %v3622
  %4373 = vmatmul.mubr.bf16.gmra.mrb[0].mxu0 %v3754
  %v4374 = vpop.f32.mrb[0].mxu0
  %v4375 = vadd.f32 %v4214, %v4374
  %v4376 = vpop.f32.mrb[0].mxu0
  %v4377 = vpop.f32.mrb[0].mxu0
  %v4378 = vadd.f32 %v4217, %v4377
  %v4379 = vpop.f32.mrb[0].mxu0
  %4380 = vmatprep.mubr.bf16.mxu0 %v3622
  %4381 = vmatmul.mubr.bf16.gmra.mrb[0].mxu0 %v3757
  %v4382 = vpop.f32.mrb[0].mxu0
  %v4383 = vadd.f32 %v4222, %v4382
  %v4384 = vpop.f32.mrb[0].mxu0
  %v4385 = vpop.f32.mrb[0].mxu0
  %v4386 = vadd.f32 %v4225, %v4385
  %v4387 = vpop.f32.mrb[0].mxu0
  %4388 = vdwg.mxu0
  %4389 = vmatprep.subr.bf16.mxu0 0
  %4390 = vmatpush1.bf16.msra.mxu0 %v4007
  %4391 = vmatprep.subr.bf16.mxu0 0
  %4392 = vmatpush1.bf16.msra.mxu0 %v4008
  %4393 = vmatprep.subr.bf16.mxu0 0
  %4394 = vmatpush1.bf16.msra.mxu0 %v4009
  %4395 = vmatprep.subr.bf16.mxu0 0
  %4396 = vmatpush1.bf16.msra.mxu0 %v4010
  %4397 = vmatprep.subr.bf16.mxu0 0
  %4398 = vmatpush1.bf16.msra.mxu0 0
  %4399 = vmatprep.subr.bf16.mxu0 0
  %4400 = vmatpush1.bf16.msra.mxu0 0
  %4401 = vmatprep.subr.bf16.mxu0 0
  %4402 = vmatpush1.bf16.msra.mxu0 0
  %4403 = vmatprep.subr.bf16.mxu0 0
  %4404 = vmatpush1.bf16.msra.mxu0 0
  %4405 = vmatprep.subr.bf16.mxu0 0
  %4406 = vmatpush1.bf16.msra.mxu0 0
  %4407 = vmatprep.subr.bf16.mxu0 0
  %4408 = vmatpush1.bf16.msra.mxu0 0
  %4409 = vmatprep.subr.bf16.mxu0 0
  %4410 = vmatpush1.bf16.msra.mxu0 0
  %4411 = vmatprep.subr.bf16.mxu0 0
  %4412 = vmatpush1.bf16.msra.mxu0 0
  %4413 = vmatprep.subr.bf16.mxu0 0
  %4414 = vmatpush1.bf16.msra.mxu0 0
  %4415 = vmatprep.subr.bf16.mxu0 0
  %4416 = vmatpush1.bf16.msra.mxu0 0
  %4417 = vmatprep.subr.bf16.mxu0 0
  %4418 = vmatpush1.bf16.msra.mxu0 0
  %4419 = vmatprep.subr.bf16.mxu0 0
  %4420 = vmatpush1.bf16.msra.mxu0 0
  %4421 = vmatprep.mubr.bf16.mxu0 0
  %4422 = vmatmul.mubr.bf16.gmra.mrb[0].mxu0 %v4047
  %v4423 = vpop.f32.mrb[0].mxu0
  %v4424 = vadd.f32 %v4263, %v4423
  %v4425 = vpop.f32.mrb[0].mxu0
  %v4426 = vpop.f32.mrb[0].mxu0
  %v4427 = vadd.f32 %v4266, %v4426
  %v4428 = vpop.f32.mrb[0].mxu0
  %4429 = vmatprep.mubr.bf16.mxu0 0
  %4430 = vmatmul.mubr.bf16.gmra.mrb[0].mxu0 %v4049
  %v4431 = vpop.f32.mrb[0].mxu0
  %v4432 = vadd.f32 %v4271, %v4431
  %v4433 = vpop.f32.mrb[0].mxu0
  %v4434 = vpop.f32.mrb[0].mxu0
  %v4435 = vadd.f32 %v4274, %v4434
  %v4436 = vpop.f32.mrb[0].mxu0
  %4437 = vmatprep.mubr.bf16.mxu0 0
  %4438 = vmatmul.mubr.bf16.gmra.mrb[0].mxu0 %v4051
  %v4439 = vpop.f32.mrb[0].mxu0
  %v4440 = vadd.f32 %v4279, %v4439
  %v4441 = vpop.f32.mrb[0].mxu0
  %v4442 = vpop.f32.mrb[0].mxu0
  %v4443 = vadd.f32 %v4282, %v4442
  %v4444 = vpop.f32.mrb[0].mxu0
  %4445 = vmatprep.mubr.bf16.mxu0 0
  %4446 = vmatmul.mubr.bf16.gmra.mrb[0].mxu0 %v4053
  %v4447 = vpop.f32.mrb[0].mxu0
  %v4448 = vadd.f32 %v4287, %v4447
  %v4449 = vpop.f32.mrb[0].mxu0
  %v4450 = vpop.f32.mrb[0].mxu0
  %v4451 = vadd.f32 %v4290, %v4450
  %v4452 = vpop.f32.mrb[0].mxu0
  %4453 = vmatprep.mubr.bf16.mxu0 0
  %4454 = vmatmul.mubr.bf16.gmra.mrb[0].mxu0 %v4055
  %v4455 = vpop.f32.mrb[0].mxu0
  %v4456 = vadd.f32 %v4295, %v4455
  %v4457 = vpop.f32.mrb[0].mxu0
  %v4458 = vpop.f32.mrb[0].mxu0
  %v4459 = vadd.f32 %v4298, %v4458
  %v4460 = vpop.f32.mrb[0].mxu0
  %4461 = vmatprep.mubr.bf16.mxu0 0
  %4462 = vmatmul.mubr.bf16.gmra.mrb[0].mxu0 %v4057
  %v4463 = vpop.f32.mrb[0].mxu0
  %v4464 = vadd.f32 %v4303, %v4463
  %v4465 = vpop.f32.mrb[0].mxu0
  %v4466 = vpop.f32.mrb[0].mxu0
  %v4467 = vadd.f32 %v4306, %v4466
  %v4468 = vpop.f32.mrb[0].mxu0
  %4469 = vmatprep.mubr.bf16.mxu0 0
  %4470 = vmatmul.mubr.bf16.gmra.mrb[0].mxu0 %v4059
  %v4471 = vpop.f32.mrb[0].mxu0
  %v4472 = vadd.f32 %v4311, %v4471
  %v4473 = vpop.f32.mrb[0].mxu0
  %v4474 = vpop.f32.mrb[0].mxu0
  %v4475 = vadd.f32 %v4314, %v4474
  %v4476 = vpop.f32.mrb[0].mxu0
  %4477 = vmatprep.mubr.bf16.mxu0 0
  %4478 = vmatmul.mubr.bf16.gmra.mrb[0].mxu0 %v4053
  %v4479 = vpop.f32.mrb[0].mxu0
  %v4480 = vadd.f32 %v4319, %v4479
  %v4481 = vpop.f32.mrb[0].mxu0
  %v4482 = vpop.f32.mrb[0].mxu0
  %v4483 = vadd.f32 %v4322, %v4482
  %v4484 = vpop.f32.mrb[0].mxu0
  %4485 = vmatprep.mubr.bf16.mxu0 0
  %4486 = vmatmul.mubr.bf16.gmra.mrb[0].mxu0 %v4061
  %v4487 = vpop.f32.mrb[0].mxu0
  %v4488 = vadd.f32 %v4327, %v4487
  %v4489 = vpop.f32.mrb[0].mxu0
  %v4490 = vpop.f32.mrb[0].mxu0
  %v4491 = vadd.f32 %v4330, %v4490
  %v4492 = vpop.f32.mrb[0].mxu0
  %4493 = vmatprep.mubr.bf16.mxu0 0
  %4494 = vmatmul.mubr.bf16.gmra.mrb[0].mxu0 %v4063
  %v4495 = vpop.f32.mrb[0].mxu0
  %v4496 = vadd.f32 %v4335, %v4495
  %v4497 = vpop.f32.mrb[0].mxu0
  %v4498 = vpop.f32.mrb[0].mxu0
  %v4499 = vadd.f32 %v4338, %v4498
  %v4500 = vpop.f32.mrb[0].mxu0
  %4501 = vmatprep.mubr.bf16.mxu0 0
  %4502 = vmatmul.mubr.bf16.gmra.mrb[0].mxu0 %v4065
  %v4503 = vpop.f32.mrb[0].mxu0
  %v4504 = vadd.f32 %v4343, %v4503
  %v4505 = vpop.f32.mrb[0].mxu0
  %v4506 = vpop.f32.mrb[0].mxu0
  %v4507 = vadd.f32 %v4346, %v4506
  %v4508 = vpop.f32.mrb[0].mxu0
  %4509 = vmatprep.mubr.bf16.mxu0 0
  %4510 = vmatmul.mubr.bf16.gmra.mrb[0].mxu0 %v4053
  %v4511 = vpop.f32.mrb[0].mxu0
  %v4512 = vadd.f32 %v4351, %v4511
  %v4513 = vpop.f32.mrb[0].mxu0
  %v4514 = vpop.f32.mrb[0].mxu0
  %v4515 = vadd.f32 %v4354, %v4514
  %v4516 = vpop.f32.mrb[0].mxu0
  %4517 = vmatprep.mubr.bf16.mxu0 0
  %4518 = vmatmul.mubr.bf16.gmra.mrb[0].mxu0 %v4053
  %v4519 = vpop.f32.mrb[0].mxu0
  %v4520 = vadd.f32 %v4359, %v4519
  %v4521 = vpop.f32.mrb[0].mxu0
  %v4522 = vpop.f32.mrb[0].mxu0
  %v4523 = vadd.f32 %v4362, %v4522
  %v4524 = vpop.f32.mrb[0].mxu0
  %4525 = vmatprep.mubr.bf16.mxu0 0
  %4526 = vmatmul.mubr.bf16.gmra.mrb[0].mxu0 %v4053
  %v4527 = vpop.f32.mrb[0].mxu0
  %v4528 = vadd.f32 %v4367, %v4527
  %v4529 = vpop.f32.mrb[0].mxu0
  %v4530 = vpop.f32.mrb[0].mxu0
  %v4531 = vadd.f32 %v4370, %v4530
  %v4532 = vpop.f32.mrb[0].mxu0
  %4533 = vmatprep.mubr.bf16.mxu0 0
  %4534 = vmatmul.mubr.bf16.gmra.mrb[0].mxu0 %v4053
  %v4535 = vpop.f32.mrb[0].mxu0
  %v4536 = vadd.f32 %v4375, %v4535
  %v4537 = vpop.f32.mrb[0].mxu0
  %v4538 = vpop.f32.mrb[0].mxu0
  %v4539 = vadd.f32 %v4378, %v4538
  %v4540 = vpop.f32.mrb[0].mxu0
  %4541 = vmatprep.mubr.bf16.mxu0 0
  %4542 = vmatmul.mubr.bf16.gmra.mrb[0].mxu0 %v4053
  %v4543 = vpop.f32.mrb[0].mxu0
  %v4544 = vadd.f32 %v4383, %v4543
  %v4545 = vpop.f32.mrb[0].mxu0
  %v4546 = vpop.f32.mrb[0].mxu0
  %v4547 = vadd.f32 %v4386, %v4546
  %v4548 = vpop.f32.mrb[0].mxu0
  %4549 = vdwg.mxu0
  %v4550 = vpack.c.bf16 %v4427, %v4424
  %v4551 = vpack.c.bf16 %v4435, %v4432
  %v4552 = vpack.c.bf16 %v4443, %v4440
  %v4553 = vpack.c.bf16 %v4451, %v4448
  %v4554 = vpack.c.bf16 %v4459, %v4456
  %v4555 = vpack.c.bf16 %v4467, %v4464
  %v4556 = vpack.c.bf16 %v4475, %v4472
  %v4557 = vpack.c.bf16 %v4483, %v4480
  %v4558 = vpack.c.bf16 %v4491, %v4488
  %v4559 = vpack.c.bf16 %v4499, %v4496
  %v4560 = vpack.c.bf16 %v4507, %v4504
  %v4561 = vpack.c.bf16 %v4515, %v4512
  %v4562 = vpack.c.bf16 %v4523, %v4520
  %v4563 = vpack.c.bf16 %v4531, %v4528
  %v4564 = vpack.c.bf16 %v4539, %v4536
  %v4565 = vpack.c.bf16 %v4547, %v4544
  %v4566 = vld [vmem:[%s8] sm:$0xff]
  %v4567 = vld [vmem:[%s8 + $0x8] sm:$0xff]
  %v4568 = vld [vmem:[%s8 + $0x10] sm:$0xff]
  %v4569 = vld [vmem:[%s8 + $0x18] sm:$0xff]
  %v4570 = vld [vmem:[%s8 + $0x20] sm:$0xff]
  %v4571 = vld [vmem:[%s8 + $0x28] sm:$0xff]
  %v4572 = vld [vmem:[%s8 + $0x30] sm:$0xff]
  %v4573 = vld [vmem:[%s8 + $0x38] sm:$0xff]
  %v4574 = vld [vmem:[%s8 + $0x40] sm:$0xff]
  %v4575 = vld [vmem:[%s8 + $0x48] sm:$0xff]
  %v4576 = vld [vmem:[%s8 + $0x50] sm:$0xff]
  %v4577 = vld [vmem:[%s8 + $0x58] sm:$0xff]
  %v4578 = vld [vmem:[%s8 + $0x60] sm:$0xff]
  %v4579 = vld [vmem:[%s8 + $0x68] sm:$0xff]
  %v4580 = vld [vmem:[%s8 + $0x70] sm:$0xff]
  %v4581 = vld [vmem:[%s8 + $0x78] sm:$0xff]
  %v4582 = vld [vmem:[%s8 + $0x80] sm:$0xff]
  %v4583 = vld [vmem:[%s8 + $0x88] sm:$0xff]
  %v4584 = vld [vmem:[%s8 + $0x90] sm:$0xff]
  %v4585 = vld [vmem:[%s8 + $0x98] sm:$0xff]
  %v4586 = vld [vmem:[%s8 + $0xa0] sm:$0xff]
  %v4587 = vld [vmem:[%s8 + $0xa8] sm:$0xff]
  %v4588 = vld [vmem:[%s8 + $0xb0] sm:$0xff]
  %v4589 = vld [vmem:[%s8 + $0xb8] sm:$0xff]
  %v4590 = vld [vmem:[%s8 + $0xc0] sm:$0xff]
  %v4591 = vld [vmem:[%s8 + $0xc8] sm:$0xff]
  %v4592 = vld [vmem:[%s8 + $0xd0] sm:$0xff]
  %v4593 = vld [vmem:[%s8 + $0xd8] sm:$0xff]
  %v4594 = vld [vmem:[%s8 + $0xe0] sm:$0xff]
  %v4595 = vld [vmem:[%s8 + $0xe8] sm:$0xff]
  %v4596 = vld [vmem:[%s8 + $0xf0] sm:$0xff]
  %v4597 = vld [vmem:[%s8 + $0xf8] sm:$0xff]
  %v4614 = vunpack.c.l.b16 %v4582
  %v4615 = vunpack.c.h.b16 %v4582
  %v4616 = vunpack.c.l.b16 %v4583
  %v4617 = vunpack.c.h.b16 %v4583
  %v4618 = vunpack.c.l.b16 %v4584
  %v4619 = vunpack.c.h.b16 %v4584
  %v4620 = vunpack.c.l.b16 %v4585
  %v4621 = vunpack.c.h.b16 %v4585
  %v4622 = vunpack.c.l.b16 %v4586
  %v4623 = vunpack.c.h.b16 %v4586
  %v4624 = vunpack.c.l.b16 %v4587
  %v4625 = vunpack.c.h.b16 %v4587
  %v4626 = vunpack.c.l.b16 %v4588
  %v4627 = vunpack.c.h.b16 %v4588
  %v4628 = vunpack.c.l.b16 %v4589
  %v4629 = vunpack.c.h.b16 %v4589
  %v4630 = vunpack.c.l.b16 %v4590
  %v4631 = vunpack.c.h.b16 %v4590
  %v4632 = vunpack.c.l.b16 %v4591
  %v4633 = vunpack.c.h.b16 %v4591
  %v4634 = vunpack.c.l.b16 %v4592
  %v4635 = vunpack.c.h.b16 %v4592
  %v4636 = vunpack.c.l.b16 %v4593
  %v4637 = vunpack.c.h.b16 %v4593
  %v4638 = vunpack.c.l.b16 %v4594
  %v4639 = vunpack.c.h.b16 %v4594
  %v4640 = vunpack.c.l.b16 %v4595
  %v4641 = vunpack.c.h.b16 %v4595
  %v4642 = vunpack.c.l.b16 %v4596
  %v4643 = vunpack.c.h.b16 %v4596
  %v4644 = vunpack.c.l.b16 %v4597
  %v4645 = vunpack.c.h.b16 %v4597
  %v4646 = vpack.c.b16 %v4618, %v4614
  %v4647 = vpack.c.b16 %v4619, %v4615
  %v4648 = vpack.c.b16 %v4620, %v4616
  %v4649 = vpack.c.b16 %v4621, %v4617
  %v4650 = vpack.c.b16 %v4626, %v4622
  %v4651 = vpack.c.b16 %v4627, %v4623
  %v4652 = vpack.c.b16 %v4628, %v4624
  %v4653 = vpack.c.b16 %v4629, %v4625
  %v4654 = vpack.c.b16 %v4634, %v4630
  %v4655 = vpack.c.b16 %v4635, %v4631
  %v4656 = vpack.c.b16 %v4636, %v4632
  %v4657 = vpack.c.b16 %v4637, %v4633
  %v4658 = vpack.c.b16 %v4642, %v4638
  %v4659 = vpack.c.b16 %v4643, %v4639
  %v4660 = vpack.c.b16 %v4644, %v4640
  %v4661 = vpack.c.b16 %v4645, %v4641
  %v4679 = vsel %vm1902, %v4551, 0
  %4681 = vmatprep.subr.bf16.mxu0 %v4647
  %4682 = vmatpush1.bf16.msra.mxu0 %v4646
  %4683 = vmatprep.subr.bf16.mxu0 %v4651
  %4684 = vmatpush1.bf16.msra.mxu0 %v4650
  %4685 = vmatprep.subr.bf16.mxu0 %v4655
  %4686 = vmatpush1.bf16.msra.mxu0 %v4654
  %4687 = vmatprep.subr.bf16.mxu0 %v4659
  %4688 = vmatpush1.bf16.msra.mxu0 %v4658
  %4689 = vmatprep.subr.bf16.mxu0 0
  %4690 = vmatpush1.bf16.msra.mxu0 0
  %4691 = vmatprep.subr.bf16.mxu0 0
  %4692 = vmatpush1.bf16.msra.mxu0 0
  %4693 = vmatprep.subr.bf16.mxu0 0
  %4694 = vmatpush1.bf16.msra.mxu0 0
  %4695 = vmatprep.subr.bf16.mxu0 0
  %4696 = vmatpush1.bf16.msra.mxu0 0
  %4697 = vmatprep.subr.bf16.mxu0 0
  %4698 = vmatpush1.bf16.msra.mxu0 0
  %4699 = vmatprep.subr.bf16.mxu0 0
  %4700 = vmatpush1.bf16.msra.mxu0 0
  %4701 = vmatprep.subr.bf16.mxu0 0
  %4702 = vmatpush1.bf16.msra.mxu0 0
  %4703 = vmatprep.subr.bf16.mxu0 0
  %4704 = vmatpush1.bf16.msra.mxu0 0
  %4705 = vmatprep.subr.bf16.mxu0 0
  %4706 = vmatpush1.bf16.msra.mxu0 0
  %4707 = vmatprep.subr.bf16.mxu0 0
  %4708 = vmatpush1.bf16.msra.mxu0 0
  %4709 = vmatprep.subr.bf16.mxu0 0
  %4710 = vmatpush1.bf16.msra.mxu0 0
  %4711 = vmatprep.subr.bf16.mxu0 0
  %4712 = vmatpush1.bf16.msra.mxu0 0
  %4713 = vmatprep.mubr.bf16.mxu0 0
  %4714 = vmatmul.mubr.bf16.gmra.mrb[0].mxu0 %v4679
  %v4715 = vpop.f32.mrb[0].mxu0
  %v4716 = vadd.f32 0.0, %v4715
  %v4717 = vpop.f32.mrb[0].mxu0
  %v4718 = vadd.f32 0.0, %v4717
  %v4719 = vpop.f32.mrb[0].mxu0
  %v4720 = vadd.f32 0.0, %v4719
  %v4721 = vpop.f32.mrb[0].mxu0
  %v4722 = vadd.f32 0.0, %v4721
  %4723 = vdwg.mxu0
  %4724 = vmatprep.subr.bf16.mxu0 %v4649
  %4725 = vmatpush1.bf16.msra.mxu0 %v4648
  %4726 = vmatprep.subr.bf16.mxu0 %v4653
  %4727 = vmatpush1.bf16.msra.mxu0 %v4652
  %4728 = vmatprep.subr.bf16.mxu0 %v4657
  %4729 = vmatpush1.bf16.msra.mxu0 %v4656
  %4730 = vmatprep.subr.bf16.mxu0 %v4661
  %4731 = vmatpush1.bf16.msra.mxu0 %v4660
  %4732 = vmatprep.subr.bf16.mxu0 0
  %4733 = vmatpush1.bf16.msra.mxu0 0
  %4734 = vmatprep.subr.bf16.mxu0 0
  %4735 = vmatpush1.bf16.msra.mxu0 0
  %4736 = vmatprep.subr.bf16.mxu0 0
  %4737 = vmatpush1.bf16.msra.mxu0 0
  %4738 = vmatprep.subr.bf16.mxu0 0
  %4739 = vmatpush1.bf16.msra.mxu0 0
  %4740 = vmatprep.subr.bf16.mxu0 0
  %4741 = vmatpush1.bf16.msra.mxu0 0
  %4742 = vmatprep.subr.bf16.mxu0 0
  %4743 = vmatpush1.bf16.msra.mxu0 0
  %4744 = vmatprep.subr.bf16.mxu0 0
  %4745 = vmatpush1.bf16.msra.mxu0 0
  %4746 = vmatprep.subr.bf16.mxu0 0
  %4747 = vmatpush1.bf16.msra.mxu0 0
  %4748 = vmatprep.subr.bf16.mxu0 0
  %4749 = vmatpush1.bf16.msra.mxu0 0
  %4750 = vmatprep.subr.bf16.mxu0 0
  %4751 = vmatpush1.bf16.msra.mxu0 0
  %4752 = vmatprep.subr.bf16.mxu0 0
  %4753 = vmatpush1.bf16.msra.mxu0 0
  %4754 = vmatprep.subr.bf16.mxu0 0
  %4755 = vmatpush1.bf16.msra.mxu0 0
  %4756 = vmatprep.mubr.bf16.mxu0 0
  %4757 = vmatmul.mubr.bf16.gmra.mrb[0].mxu0 %v4679
  %v4758 = vpop.f32.mrb[0].mxu0
  %v4759 = vadd.f32 0.0, %v4758
  %v4760 = vpop.f32.mrb[0].mxu0
  %v4761 = vadd.f32 0.0, %v4760
  %v4762 = vpop.f32.mrb[0].mxu0
  %v4763 = vadd.f32 0.0, %v4762
  %v4764 = vpop.f32.mrb[0].mxu0
  %v4765 = vadd.f32 0.0, %v4764
  %4766 = vdwg.mxu0
  %v4783 = vunpack.c.l.b16 %v4566
  %v4784 = vunpack.c.h.b16 %v4566
  %v4785 = vunpack.c.l.b16 %v4567
  %v4786 = vunpack.c.h.b16 %v4567
  %v4787 = vunpack.c.l.b16 %v4568
  %v4788 = vunpack.c.h.b16 %v4568
  %v4789 = vunpack.c.l.b16 %v4569
  %v4790 = vunpack.c.h.b16 %v4569
  %v4791 = vunpack.c.l.b16 %v4570
  %v4792 = vunpack.c.h.b16 %v4570
  %v4793 = vunpack.c.l.b16 %v4571
  %v4794 = vunpack.c.h.b16 %v4571
  %v4795 = vunpack.c.l.b16 %v4572
  %v4796 = vunpack.c.h.b16 %v4572
  %v4797 = vunpack.c.l.b16 %v4573
  %v4798 = vunpack.c.h.b16 %v4573
  %v4799 = vunpack.c.l.b16 %v4574
  %v4800 = vunpack.c.h.b16 %v4574
  %v4801 = vunpack.c.l.b16 %v4575
  %v4802 = vunpack.c.h.b16 %v4575
  %v4803 = vunpack.c.l.b16 %v4576
  %v4804 = vunpack.c.h.b16 %v4576
  %v4805 = vunpack.c.l.b16 %v4577
  %v4806 = vunpack.c.h.b16 %v4577
  %v4807 = vunpack.c.l.b16 %v4578
  %v4808 = vunpack.c.h.b16 %v4578
  %v4809 = vunpack.c.l.b16 %v4579
  %v4810 = vunpack.c.h.b16 %v4579
  %v4811 = vunpack.c.l.b16 %v4580
  %v4812 = vunpack.c.h.b16 %v4580
  %v4813 = vunpack.c.l.b16 %v4581
  %v4814 = vunpack.c.h.b16 %v4581
  %v4815 = vpack.c.b16 %v4787, %v4783
  %v4816 = vpack.c.b16 %v4788, %v4784
  %v4817 = vpack.c.b16 %v4789, %v4785
  %v4818 = vpack.c.b16 %v4790, %v4786
  %v4819 = vpack.c.b16 %v4795, %v4791
  %v4820 = vpack.c.b16 %v4796, %v4792
  %v4821 = vpack.c.b16 %v4797, %v4793
  %v4822 = vpack.c.b16 %v4798, %v4794
  %v4823 = vpack.c.b16 %v4803, %v4799
  %v4824 = vpack.c.b16 %v4804, %v4800
  %v4825 = vpack.c.b16 %v4805, %v4801
  %v4826 = vpack.c.b16 %v4806, %v4802
  %v4827 = vpack.c.b16 %v4811, %v4807
  %v4828 = vpack.c.b16 %v4812, %v4808
  %v4829 = vpack.c.b16 %v4813, %v4809
  %v4830 = vpack.c.b16 %v4814, %v4810
  %v4848 = vsel %vm1902, %v4550, 0
  %4850 = vmatprep.subr.bf16.mxu0 %v4816
  %4851 = vmatpush1.bf16.msra.mxu0 %v4815
  %4852 = vmatprep.subr.bf16.mxu0 %v4820
  %4853 = vmatpush1.bf16.msra.mxu0 %v4819
  %4854 = vmatprep.subr.bf16.mxu0 %v4824
  %4855 = vmatpush1.bf16.msra.mxu0 %v4823
  %4856 = vmatprep.subr.bf16.mxu0 %v4828
  %4857 = vmatpush1.bf16.msra.mxu0 %v4827
  %4858 = vmatprep.subr.bf16.mxu0 0
  %4859 = vmatpush1.bf16.msra.mxu0 0
  %4860 = vmatprep.subr.bf16.mxu0 0
  %4861 = vmatpush1.bf16.msra.mxu0 0
  %4862 = vmatprep.subr.bf16.mxu0 0
  %4863 = vmatpush1.bf16.msra.mxu0 0
  %4864 = vmatprep.subr.bf16.mxu0 0
  %4865 = vmatpush1.bf16.msra.mxu0 0
  %4866 = vmatprep.subr.bf16.mxu0 0
  %4867 = vmatpush1.bf16.msra.mxu0 0
  %4868 = vmatprep.subr.bf16.mxu0 0
  %4869 = vmatpush1.bf16.msra.mxu0 0
  %4870 = vmatprep.subr.bf16.mxu0 0
  %4871 = vmatpush1.bf16.msra.mxu0 0
  %4872 = vmatprep.subr.bf16.mxu0 0
  %4873 = vmatpush1.bf16.msra.mxu0 0
  %4874 = vmatprep.subr.bf16.mxu0 0
  %4875 = vmatpush1.bf16.msra.mxu0 0
  %4876 = vmatprep.subr.bf16.mxu0 0
  %4877 = vmatpush1.bf16.msra.mxu0 0
  %4878 = vmatprep.subr.bf16.mxu0 0
  %4879 = vmatpush1.bf16.msra.mxu0 0
  %4880 = vmatprep.subr.bf16.mxu0 0
  %4881 = vmatpush1.bf16.msra.mxu0 0
  %4882 = vmatprep.mubr.bf16.mxu0 0
  %4883 = vmatmul.mubr.bf16.gmra.mrb[0].mxu0 %v4848
  %v4884 = vpop.f32.mrb[0].mxu0
  %v4885 = vadd.f32 %v4716, %v4884
  %v4886 = vpop.f32.mrb[0].mxu0
  %v4887 = vadd.f32 %v4718, %v4886
  %v4888 = vpop.f32.mrb[0].mxu0
  %v4889 = vadd.f32 %v4720, %v4888
  %v4890 = vpop.f32.mrb[0].mxu0
  %v4891 = vadd.f32 %v4722, %v4890
  %4892 = vdwg.mxu0
  %4893 = vmatprep.subr.bf16.mxu0 %v4818
  %4894 = vmatpush1.bf16.msra.mxu0 %v4817
  %4895 = vmatprep.subr.bf16.mxu0 %v4822
  %4896 = vmatpush1.bf16.msra.mxu0 %v4821
  %4897 = vmatprep.subr.bf16.mxu0 %v4826
  %4898 = vmatpush1.bf16.msra.mxu0 %v4825
  %4899 = vmatprep.subr.bf16.mxu0 %v4830
  %4900 = vmatpush1.bf16.msra.mxu0 %v4829
  %4901 = vmatprep.subr.bf16.mxu0 0
  %4902 = vmatpush1.bf16.msra.mxu0 0
  %4903 = vmatprep.subr.bf16.mxu0 0
  %4904 = vmatpush1.bf16.msra.mxu0 0
  %4905 = vmatprep.subr.bf16.mxu0 0
  %4906 = vmatpush1.bf16.msra.mxu0 0
  %4907 = vmatprep.subr.bf16.mxu0 0
  %4908 = vmatpush1.bf16.msra.mxu0 0
  %4909 = vmatprep.subr.bf16.mxu0 0
  %4910 = vmatpush1.bf16.msra.mxu0 0
  %4911 = vmatprep.subr.bf16.mxu0 0
  %4912 = vmatpush1.bf16.msra.mxu0 0
  %4913 = vmatprep.subr.bf16.mxu0 0
  %4914 = vmatpush1.bf16.msra.mxu0 0
  %4915 = vmatprep.subr.bf16.mxu0 0
  %4916 = vmatpush1.bf16.msra.mxu0 0
  %4917 = vmatprep.subr.bf16.mxu0 0
  %4918 = vmatpush1.bf16.msra.mxu0 0
  %4919 = vmatprep.subr.bf16.mxu0 0
  %4920 = vmatpush1.bf16.msra.mxu0 0
  %4921 = vmatprep.subr.bf16.mxu0 0
  %4922 = vmatpush1.bf16.msra.mxu0 0
  %4923 = vmatprep.subr.bf16.mxu0 0
  %4924 = vmatpush1.bf16.msra.mxu0 0
  %4925 = vmatprep.mubr.bf16.mxu0 0
  %4926 = vmatmul.mubr.bf16.gmra.mrb[0].mxu0 %v4848
  %v4927 = vpop.f32.mrb[0].mxu0
  %v4928 = vadd.f32 %v4759, %v4927
  %v4929 = vpop.f32.mrb[0].mxu0
  %v4930 = vadd.f32 %v4761, %v4929
  %v4931 = vpop.f32.mrb[0].mxu0
  %v4932 = vadd.f32 %v4763, %v4931
  %v4933 = vpop.f32.mrb[0].mxu0
  %v4934 = vadd.f32 %v4765, %v4933
  %4935 = vdwg.mxu0
  %v4936 = vld [vmem:[%s8 + $0x100] sm:$0xff]
  %v4937 = vld [vmem:[%s8 + $0x108] sm:$0xff]
  %v4938 = vld [vmem:[%s8 + $0x110] sm:$0xff]
  %v4939 = vld [vmem:[%s8 + $0x118] sm:$0xff]
  %v4940 = vld [vmem:[%s8 + $0x120] sm:$0xff]
  %v4941 = vld [vmem:[%s8 + $0x128] sm:$0xff]
  %v4942 = vld [vmem:[%s8 + $0x130] sm:$0xff]
  %v4943 = vld [vmem:[%s8 + $0x138] sm:$0xff]
  %v4944 = vld [vmem:[%s8 + $0x140] sm:$0xff]
  %v4945 = vld [vmem:[%s8 + $0x148] sm:$0xff]
  %v4946 = vld [vmem:[%s8 + $0x150] sm:$0xff]
  %v4947 = vld [vmem:[%s8 + $0x158] sm:$0xff]
  %v4948 = vld [vmem:[%s8 + $0x160] sm:$0xff]
  %v4949 = vld [vmem:[%s8 + $0x168] sm:$0xff]
  %v4950 = vld [vmem:[%s8 + $0x170] sm:$0xff]
  %v4951 = vld [vmem:[%s8 + $0x178] sm:$0xff]
  %v4968 = vunpack.c.l.b16 %v4936
  %v4969 = vunpack.c.h.b16 %v4936
  %v4970 = vunpack.c.l.b16 %v4937
  %v4971 = vunpack.c.h.b16 %v4937
  %v4972 = vunpack.c.l.b16 %v4938
  %v4973 = vunpack.c.h.b16 %v4938
  %v4974 = vunpack.c.l.b16 %v4939
  %v4975 = vunpack.c.h.b16 %v4939
  %v4976 = vunpack.c.l.b16 %v4940
  %v4977 = vunpack.c.h.b16 %v4940
  %v4978 = vunpack.c.l.b16 %v4941
  %v4979 = vunpack.c.h.b16 %v4941
  %v4980 = vunpack.c.l.b16 %v4942
  %v4981 = vunpack.c.h.b16 %v4942
  %v4982 = vunpack.c.l.b16 %v4943
  %v4983 = vunpack.c.h.b16 %v4943
  %v4984 = vunpack.c.l.b16 %v4944
  %v4985 = vunpack.c.h.b16 %v4944
  %v4986 = vunpack.c.l.b16 %v4945
  %v4987 = vunpack.c.h.b16 %v4945
  %v4988 = vunpack.c.l.b16 %v4946
  %v4989 = vunpack.c.h.b16 %v4946
  %v4990 = vunpack.c.l.b16 %v4947
  %v4991 = vunpack.c.h.b16 %v4947
  %v4992 = vunpack.c.l.b16 %v4948
  %v4993 = vunpack.c.h.b16 %v4948
  %v4994 = vunpack.c.l.b16 %v4949
  %v4995 = vunpack.c.h.b16 %v4949
  %v4996 = vunpack.c.l.b16 %v4950
  %v4997 = vunpack.c.h.b16 %v4950
  %v4998 = vunpack.c.l.b16 %v4951
  %v4999 = vunpack.c.h.b16 %v4951
  %v5000 = vpack.c.b16 %v4972, %v4968
  %v5001 = vpack.c.b16 %v4973, %v4969
  %v5002 = vpack.c.b16 %v4974, %v4970
  %v5003 = vpack.c.b16 %v4975, %v4971
  %v5004 = vpack.c.b16 %v4980, %v4976
  %v5005 = vpack.c.b16 %v4981, %v4977
  %v5006 = vpack.c.b16 %v4982, %v4978
  %v5007 = vpack.c.b16 %v4983, %v4979
  %v5008 = vpack.c.b16 %v4988, %v4984
  %v5009 = vpack.c.b16 %v4989, %v4985
  %v5010 = vpack.c.b16 %v4990, %v4986
  %v5011 = vpack.c.b16 %v4991, %v4987
  %v5012 = vpack.c.b16 %v4996, %v4992
  %v5013 = vpack.c.b16 %v4997, %v4993
  %v5014 = vpack.c.b16 %v4998, %v4994
  %v5015 = vpack.c.b16 %v4999, %v4995
  %v5033 = vsel %vm1902, %v4552, 0
  %5035 = vmatprep.subr.bf16.mxu0 %v5001
  %5036 = vmatpush1.bf16.msra.mxu0 %v5000
  %5037 = vmatprep.subr.bf16.mxu0 %v5005
  %5038 = vmatpush1.bf16.msra.mxu0 %v5004
  %5039 = vmatprep.subr.bf16.mxu0 %v5009
  %5040 = vmatpush1.bf16.msra.mxu0 %v5008
  %5041 = vmatprep.subr.bf16.mxu0 %v5013
  %5042 = vmatpush1.bf16.msra.mxu0 %v5012
  %5043 = vmatprep.subr.bf16.mxu0 0
  %5044 = vmatpush1.bf16.msra.mxu0 0
  %5045 = vmatprep.subr.bf16.mxu0 0
  %5046 = vmatpush1.bf16.msra.mxu0 0
  %5047 = vmatprep.subr.bf16.mxu0 0
  %5048 = vmatpush1.bf16.msra.mxu0 0
  %5049 = vmatprep.subr.bf16.mxu0 0
  %5050 = vmatpush1.bf16.msra.mxu0 0
  %5051 = vmatprep.subr.bf16.mxu0 0
  %5052 = vmatpush1.bf16.msra.mxu0 0
  %5053 = vmatprep.subr.bf16.mxu0 0
  %5054 = vmatpush1.bf16.msra.mxu0 0
  %5055 = vmatprep.subr.bf16.mxu0 0
  %5056 = vmatpush1.bf16.msra.mxu0 0
  %5057 = vmatprep.subr.bf16.mxu0 0
  %5058 = vmatpush1.bf16.msra.mxu0 0
  %5059 = vmatprep.subr.bf16.mxu0 0
  %5060 = vmatpush1.bf16.msra.mxu0 0
  %5061 = vmatprep.subr.bf16.mxu0 0
  %5062 = vmatpush1.bf16.msra.mxu0 0
  %5063 = vmatprep.subr.bf16.mxu0 0
  %5064 = vmatpush1.bf16.msra.mxu0 0
  %5065 = vmatprep.subr.bf16.mxu0 0
  %5066 = vmatpush1.bf16.msra.mxu0 0
  %5067 = vmatprep.mubr.bf16.mxu0 0
  %5068 = vmatmul.mubr.bf16.gmra.mrb[0].mxu0 %v5033
  %v5069 = vpop.f32.mrb[0].mxu0
  %v5070 = vadd.f32 0.0, %v5069
  %v5071 = vpop.f32.mrb[0].mxu0
  %v5072 = vadd.f32 0.0, %v5071
  %v5073 = vpop.f32.mrb[0].mxu0
  %v5074 = vadd.f32 0.0, %v5073
  %v5075 = vpop.f32.mrb[0].mxu0
  %v5076 = vadd.f32 0.0, %v5075
  %5077 = vdwg.mxu0
  %5078 = vmatprep.subr.bf16.mxu0 %v5003
  %5079 = vmatpush1.bf16.msra.mxu0 %v5002
  %5080 = vmatprep.subr.bf16.mxu0 %v5007
  %5081 = vmatpush1.bf16.msra.mxu0 %v5006
  %5082 = vmatprep.subr.bf16.mxu0 %v5011
  %5083 = vmatpush1.bf16.msra.mxu0 %v5010
  %5084 = vmatprep.subr.bf16.mxu0 %v5015
  %5085 = vmatpush1.bf16.msra.mxu0 %v5014
  %5086 = vmatprep.subr.bf16.mxu0 0
  %5087 = vmatpush1.bf16.msra.mxu0 0
  %5088 = vmatprep.subr.bf16.mxu0 0
  %5089 = vmatpush1.bf16.msra.mxu0 0
  %5090 = vmatprep.subr.bf16.mxu0 0
  %5091 = vmatpush1.bf16.msra.mxu0 0
  %5092 = vmatprep.subr.bf16.mxu0 0
  %5093 = vmatpush1.bf16.msra.mxu0 0
  %5094 = vmatprep.subr.bf16.mxu0 0
  %5095 = vmatpush1.bf16.msra.mxu0 0
  %5096 = vmatprep.subr.bf16.mxu0 0
  %5097 = vmatpush1.bf16.msra.mxu0 0
  %5098 = vmatprep.subr.bf16.mxu0 0
  %5099 = vmatpush1.bf16.msra.mxu0 0
  %5100 = vmatprep.subr.bf16.mxu0 0
  %5101 = vmatpush1.bf16.msra.mxu0 0
  %5102 = vmatprep.subr.bf16.mxu0 0
  %5103 = vmatpush1.bf16.msra.mxu0 0
  %5104 = vmatprep.subr.bf16.mxu0 0
  %5105 = vmatpush1.bf16.msra.mxu0 0
  %5106 = vmatprep.subr.bf16.mxu0 0
  %5107 = vmatpush1.bf16.msra.mxu0 0
  %5108 = vmatprep.subr.bf16.mxu0 0
  %5109 = vmatpush1.bf16.msra.mxu0 0
  %5110 = vmatprep.mubr.bf16.mxu0 0
  %5111 = vmatmul.mubr.bf16.gmra.mrb[0].mxu0 %v5033
  %v5112 = vpop.f32.mrb[0].mxu0
  %v5113 = vadd.f32 0.0, %v5112
  %v5114 = vpop.f32.mrb[0].mxu0
  %v5115 = vadd.f32 0.0, %v5114
  %v5116 = vpop.f32.mrb[0].mxu0
  %v5117 = vadd.f32 0.0, %v5116
  %v5118 = vpop.f32.mrb[0].mxu0
  %v5119 = vadd.f32 0.0, %v5118
  %5120 = vdwg.mxu0
  %v5121 = vadd.f32 %v4885, %v5070
  %v5122 = vadd.f32 %v4887, %v5072
  %v5123 = vadd.f32 %v4928, %v5113
  %v5124 = vadd.f32 %v4930, %v5115
  %v5125 = vadd.f32 %v4889, %v5074
  %v5126 = vadd.f32 %v4891, %v5076
  %v5127 = vadd.f32 %v4932, %v5117
  %v5128 = vadd.f32 %v4934, %v5119
  %v5129 = vld [vmem:[%s8 + $0x180] sm:$0xff]
  %v5130 = vld [vmem:[%s8 + $0x188] sm:$0xff]
  %v5131 = vld [vmem:[%s8 + $0x190] sm:$0xff]
  %v5132 = vld [vmem:[%s8 + $0x198] sm:$0xff]
  %v5133 = vld [vmem:[%s8 + $0x1a0] sm:$0xff]
  %v5134 = vld [vmem:[%s8 + $0x1a8] sm:$0xff]
  %v5135 = vld [vmem:[%s8 + $0x1b0] sm:$0xff]
  %v5136 = vld [vmem:[%s8 + $0x1b8] sm:$0xff]
  %v5137 = vld [vmem:[%s8 + $0x1c0] sm:$0xff]
  %v5138 = vld [vmem:[%s8 + $0x1c8] sm:$0xff]
  %v5139 = vld [vmem:[%s8 + $0x1d0] sm:$0xff]
  %v5140 = vld [vmem:[%s8 + $0x1d8] sm:$0xff]
  %v5141 = vld [vmem:[%s8 + $0x1e0] sm:$0xff]
  %v5142 = vld [vmem:[%s8 + $0x1e8] sm:$0xff]
  %v5143 = vld [vmem:[%s8 + $0x1f0] sm:$0xff]
  %v5144 = vld [vmem:[%s8 + $0x1f8] sm:$0xff]
  %v5161 = vunpack.c.l.b16 %v5129
  %v5162 = vunpack.c.h.b16 %v5129
  %v5163 = vunpack.c.l.b16 %v5130
  %v5164 = vunpack.c.h.b16 %v5130
  %v5165 = vunpack.c.l.b16 %v5131
  %v5166 = vunpack.c.h.b16 %v5131
  %v5167 = vunpack.c.l.b16 %v5132
  %v5168 = vunpack.c.h.b16 %v5132
  %v5169 = vunpack.c.l.b16 %v5133
  %v5170 = vunpack.c.h.b16 %v5133
  %v5171 = vunpack.c.l.b16 %v5134
  %v5172 = vunpack.c.h.b16 %v5134
  %v5173 = vunpack.c.l.b16 %v5135
  %v5174 = vunpack.c.h.b16 %v5135
  %v5175 = vunpack.c.l.b16 %v5136
  %v5176 = vunpack.c.h.b16 %v5136
  %v5177 = vunpack.c.l.b16 %v5137
  %v5178 = vunpack.c.h.b16 %v5137
  %v5179 = vunpack.c.l.b16 %v5138
  %v5180 = vunpack.c.h.b16 %v5138
  %v5181 = vunpack.c.l.b16 %v5139
  %v5182 = vunpack.c.h.b16 %v5139
  %v5183 = vunpack.c.l.b16 %v5140
  %v5184 = vunpack.c.h.b16 %v5140
  %v5185 = vunpack.c.l.b16 %v5141
  %v5186 = vunpack.c.h.b16 %v5141
  %v5187 = vunpack.c.l.b16 %v5142
  %v5188 = vunpack.c.h.b16 %v5142
  %v5189 = vunpack.c.l.b16 %v5143
  %v5190 = vunpack.c.h.b16 %v5143
  %v5191 = vunpack.c.l.b16 %v5144
  %v5192 = vunpack.c.h.b16 %v5144
  %v5193 = vpack.c.b16 %v5165, %v5161
  %v5194 = vpack.c.b16 %v5166, %v5162
  %v5195 = vpack.c.b16 %v5167, %v5163
  %v5196 = vpack.c.b16 %v5168, %v5164
  %v5197 = vpack.c.b16 %v5173, %v5169
  %v5198 = vpack.c.b16 %v5174, %v5170
  %v5199 = vpack.c.b16 %v5175, %v5171
  %v5200 = vpack.c.b16 %v5176, %v5172
  %v5201 = vpack.c.b16 %v5181, %v5177
  %v5202 = vpack.c.b16 %v5182, %v5178
  %v5203 = vpack.c.b16 %v5183, %v5179
  %v5204 = vpack.c.b16 %v5184, %v5180
  %v5205 = vpack.c.b16 %v5189, %v5185
  %v5206 = vpack.c.b16 %v5190, %v5186
  %v5207 = vpack.c.b16 %v5191, %v5187
  %v5208 = vpack.c.b16 %v5192, %v5188
  %v5226 = vsel %vm1902, %v4553, 0
  %5228 = vmatprep.subr.bf16.mxu0 %v5194
  %5229 = vmatpush1.bf16.msra.mxu0 %v5193
  %5230 = vmatprep.subr.bf16.mxu0 %v5198
  %5231 = vmatpush1.bf16.msra.mxu0 %v5197
  %5232 = vmatprep.subr.bf16.mxu0 %v5202
  %5233 = vmatpush1.bf16.msra.mxu0 %v5201
  %5234 = vmatprep.subr.bf16.mxu0 %v5206
  %5235 = vmatpush1.bf16.msra.mxu0 %v5205
  %5236 = vmatprep.subr.bf16.mxu0 0
  %5237 = vmatpush1.bf16.msra.mxu0 0
  %5238 = vmatprep.subr.bf16.mxu0 0
  %5239 = vmatpush1.bf16.msra.mxu0 0
  %5240 = vmatprep.subr.bf16.mxu0 0
  %5241 = vmatpush1.bf16.msra.mxu0 0
  %5242 = vmatprep.subr.bf16.mxu0 0
  %5243 = vmatpush1.bf16.msra.mxu0 0
  %5244 = vmatprep.subr.bf16.mxu0 0
  %5245 = vmatpush1.bf16.msra.mxu0 0
  %5246 = vmatprep.subr.bf16.mxu0 0
  %5247 = vmatpush1.bf16.msra.mxu0 0
  %5248 = vmatprep.subr.bf16.mxu0 0
  %5249 = vmatpush1.bf16.msra.mxu0 0
  %5250 = vmatprep.subr.bf16.mxu0 0
  %5251 = vmatpush1.bf16.msra.mxu0 0
  %5252 = vmatprep.subr.bf16.mxu0 0
  %5253 = vmatpush1.bf16.msra.mxu0 0
  %5254 = vmatprep.subr.bf16.mxu0 0
  %5255 = vmatpush1.bf16.msra.mxu0 0
  %5256 = vmatprep.subr.bf16.mxu0 0
  %5257 = vmatpush1.bf16.msra.mxu0 0
  %5258 = vmatprep.subr.bf16.mxu0 0
  %5259 = vmatpush1.bf16.msra.mxu0 0
  %5260 = vmatprep.mubr.bf16.mxu0 0
  %5261 = vmatmul.mubr.bf16.gmra.mrb[0].mxu0 %v5226
  %v5262 = vpop.f32.mrb[0].mxu0
  %v5263 = vadd.f32 0.0, %v5262
  %v5264 = vpop.f32.mrb[0].mxu0
  %v5265 = vadd.f32 0.0, %v5264
  %v5266 = vpop.f32.mrb[0].mxu0
  %v5267 = vadd.f32 0.0, %v5266
  %v5268 = vpop.f32.mrb[0].mxu0
  %v5269 = vadd.f32 0.0, %v5268
  %5270 = vdwg.mxu0
  %5271 = vmatprep.subr.bf16.mxu0 %v5196
  %5272 = vmatpush1.bf16.msra.mxu0 %v5195
  %5273 = vmatprep.subr.bf16.mxu0 %v5200
  %5274 = vmatpush1.bf16.msra.mxu0 %v5199
  %5275 = vmatprep.subr.bf16.mxu0 %v5204
  %5276 = vmatpush1.bf16.msra.mxu0 %v5203
  %5277 = vmatprep.subr.bf16.mxu0 %v5208
  %5278 = vmatpush1.bf16.msra.mxu0 %v5207
  %5279 = vmatprep.subr.bf16.mxu0 0
  %5280 = vmatpush1.bf16.msra.mxu0 0
  %5281 = vmatprep.subr.bf16.mxu0 0
  %5282 = vmatpush1.bf16.msra.mxu0 0
  %5283 = vmatprep.subr.bf16.mxu0 0
  %5284 = vmatpush1.bf16.msra.mxu0 0
  %5285 = vmatprep.subr.bf16.mxu0 0
  %5286 = vmatpush1.bf16.msra.mxu0 0
  %5287 = vmatprep.subr.bf16.mxu0 0
  %5288 = vmatpush1.bf16.msra.mxu0 0
  %5289 = vmatprep.subr.bf16.mxu0 0
  %5290 = vmatpush1.bf16.msra.mxu0 0
  %5291 = vmatprep.subr.bf16.mxu0 0
  %5292 = vmatpush1.bf16.msra.mxu0 0
  %5293 = vmatprep.subr.bf16.mxu0 0
  %5294 = vmatpush1.bf16.msra.mxu0 0
  %5295 = vmatprep.subr.bf16.mxu0 0
  %5296 = vmatpush1.bf16.msra.mxu0 0
  %5297 = vmatprep.subr.bf16.mxu0 0
  %5298 = vmatpush1.bf16.msra.mxu0 0
  %5299 = vmatprep.subr.bf16.mxu0 0
  %5300 = vmatpush1.bf16.msra.mxu0 0
  %5301 = vmatprep.subr.bf16.mxu0 0
  %5302 = vmatpush1.bf16.msra.mxu0 0
  %5303 = vmatprep.mubr.bf16.mxu0 0
  %5304 = vmatmul.mubr.bf16.gmra.mrb[0].mxu0 %v5226
  %v5305 = vpop.f32.mrb[0].mxu0
  %v5306 = vadd.f32 0.0, %v5305
  %v5307 = vpop.f32.mrb[0].mxu0
  %v5308 = vadd.f32 0.0, %v5307
  %v5309 = vpop.f32.mrb[0].mxu0
  %v5310 = vadd.f32 0.0, %v5309
  %v5311 = vpop.f32.mrb[0].mxu0
  %v5312 = vadd.f32 0.0, %v5311
  %5313 = vdwg.mxu0
  %v5314 = vadd.f32 %v5121, %v5263
  %v5315 = vadd.f32 %v5122, %v5265
  %v5316 = vadd.f32 %v5123, %v5306
  %v5317 = vadd.f32 %v5124, %v5308
  %v5318 = vadd.f32 %v5125, %v5267
  %v5319 = vadd.f32 %v5126, %v5269
  %v5320 = vadd.f32 %v5127, %v5310
  %v5321 = vadd.f32 %v5128, %v5312
  %v5322 = vld [vmem:[%s8 + $0x200] sm:$0xff]
  %v5323 = vld [vmem:[%s8 + $0x208] sm:$0xff]
  %v5324 = vld [vmem:[%s8 + $0x210] sm:$0xff]
  %v5325 = vld [vmem:[%s8 + $0x218] sm:$0xff]
  %v5326 = vld [vmem:[%s8 + $0x220] sm:$0xff]
  %v5327 = vld [vmem:[%s8 + $0x228] sm:$0xff]
  %v5328 = vld [vmem:[%s8 + $0x230] sm:$0xff]
  %v5329 = vld [vmem:[%s8 + $0x238] sm:$0xff]
  %v5330 = vld [vmem:[%s8 + $0x240] sm:$0xff]
  %v5331 = vld [vmem:[%s8 + $0x248] sm:$0xff]
  %v5332 = vld [vmem:[%s8 + $0x250] sm:$0xff]
  %v5333 = vld [vmem:[%s8 + $0x258] sm:$0xff]
  %v5334 = vld [vmem:[%s8 + $0x260] sm:$0xff]
  %v5335 = vld [vmem:[%s8 + $0x268] sm:$0xff]
  %v5336 = vld [vmem:[%s8 + $0x270] sm:$0xff]
  %v5337 = vld [vmem:[%s8 + $0x278] sm:$0xff]
  %v5354 = vunpack.c.l.b16 %v5322
  %v5355 = vunpack.c.h.b16 %v5322
  %v5356 = vunpack.c.l.b16 %v5323
  %v5357 = vunpack.c.h.b16 %v5323
  %v5358 = vunpack.c.l.b16 %v5324
  %v5359 = vunpack.c.h.b16 %v5324
  %v5360 = vunpack.c.l.b16 %v5325
  %v5361 = vunpack.c.h.b16 %v5325
  %v5362 = vunpack.c.l.b16 %v5326
  %v5363 = vunpack.c.h.b16 %v5326
  %v5364 = vunpack.c.l.b16 %v5327
  %v5365 = vunpack.c.h.b16 %v5327
  %v5366 = vunpack.c.l.b16 %v5328
  %v5367 = vunpack.c.h.b16 %v5328
  %v5368 = vunpack.c.l.b16 %v5329
  %v5369 = vunpack.c.h.b16 %v5329
  %v5370 = vunpack.c.l.b16 %v5330
  %v5371 = vunpack.c.h.b16 %v5330
  %v5372 = vunpack.c.l.b16 %v5331
  %v5373 = vunpack.c.h.b16 %v5331
  %v5374 = vunpack.c.l.b16 %v5332
  %v5375 = vunpack.c.h.b16 %v5332
  %v5376 = vunpack.c.l.b16 %v5333
  %v5377 = vunpack.c.h.b16 %v5333
  %v5378 = vunpack.c.l.b16 %v5334
  %v5379 = vunpack.c.h.b16 %v5334
  %v5380 = vunpack.c.l.b16 %v5335
  %v5381 = vunpack.c.h.b16 %v5335
  %v5382 = vunpack.c.l.b16 %v5336
  %v5383 = vunpack.c.h.b16 %v5336
  %v5384 = vunpack.c.l.b16 %v5337
  %v5385 = vunpack.c.h.b16 %v5337
  %v5386 = vpack.c.b16 %v5358, %v5354
  %v5387 = vpack.c.b16 %v5359, %v5355
  %v5388 = vpack.c.b16 %v5360, %v5356
  %v5389 = vpack.c.b16 %v5361, %v5357
  %v5390 = vpack.c.b16 %v5366, %v5362
  %v5391 = vpack.c.b16 %v5367, %v5363
  %v5392 = vpack.c.b16 %v5368, %v5364
  %v5393 = vpack.c.b16 %v5369, %v5365
  %v5394 = vpack.c.b16 %v5374, %v5370
  %v5395 = vpack.c.b16 %v5375, %v5371
  %v5396 = vpack.c.b16 %v5376, %v5372
  %v5397 = vpack.c.b16 %v5377, %v5373
  %v5398 = vpack.c.b16 %v5382, %v5378
  %v5399 = vpack.c.b16 %v5383, %v5379
  %v5400 = vpack.c.b16 %v5384, %v5380
  %v5401 = vpack.c.b16 %v5385, %v5381
  %v5419 = vsel %vm1902, %v4554, 0
  %5421 = vmatprep.subr.bf16.mxu0 %v5387
  %5422 = vmatpush1.bf16.msra.mxu0 %v5386
  %5423 = vmatprep.subr.bf16.mxu0 %v5391
  %5424 = vmatpush1.bf16.msra.mxu0 %v5390
  %5425 = vmatprep.subr.bf16.mxu0 %v5395
  %5426 = vmatpush1.bf16.msra.mxu0 %v5394
  %5427 = vmatprep.subr.bf16.mxu0 %v5399
  %5428 = vmatpush1.bf16.msra.mxu0 %v5398
  %5429 = vmatprep.subr.bf16.mxu0 0
  %5430 = vmatpush1.bf16.msra.mxu0 0
  %5431 = vmatprep.subr.bf16.mxu0 0
  %5432 = vmatpush1.bf16.msra.mxu0 0
  %5433 = vmatprep.subr.bf16.mxu0 0
  %5434 = vmatpush1.bf16.msra.mxu0 0
  %5435 = vmatprep.subr.bf16.mxu0 0
  %5436 = vmatpush1.bf16.msra.mxu0 0
  %5437 = vmatprep.subr.bf16.mxu0 0
  %5438 = vmatpush1.bf16.msra.mxu0 0
  %5439 = vmatprep.subr.bf16.mxu0 0
  %5440 = vmatpush1.bf16.msra.mxu0 0
  %5441 = vmatprep.subr.bf16.mxu0 0
  %5442 = vmatpush1.bf16.msra.mxu0 0
  %5443 = vmatprep.subr.bf16.mxu0 0
  %5444 = vmatpush1.bf16.msra.mxu0 0
  %5445 = vmatprep.subr.bf16.mxu0 0
  %5446 = vmatpush1.bf16.msra.mxu0 0
  %5447 = vmatprep.subr.bf16.mxu0 0
  %5448 = vmatpush1.bf16.msra.mxu0 0
  %5449 = vmatprep.subr.bf16.mxu0 0
  %5450 = vmatpush1.bf16.msra.mxu0 0
  %5451 = vmatprep.subr.bf16.mxu0 0
  %5452 = vmatpush1.bf16.msra.mxu0 0
  %5453 = vmatprep.mubr.bf16.mxu0 0
  %5454 = vmatmul.mubr.bf16.gmra.mrb[0].mxu0 %v5419
  %v5455 = vpop.f32.mrb[0].mxu0
  %v5456 = vadd.f32 0.0, %v5455
  %v5457 = vpop.f32.mrb[0].mxu0
  %v5458 = vadd.f32 0.0, %v5457
  %v5459 = vpop.f32.mrb[0].mxu0
  %v5460 = vadd.f32 0.0, %v5459
  %v5461 = vpop.f32.mrb[0].mxu0
  %v5462 = vadd.f32 0.0, %v5461
  %5463 = vdwg.mxu0
  %5464 = vmatprep.subr.bf16.mxu0 %v5389
  %5465 = vmatpush1.bf16.msra.mxu0 %v5388
  %5466 = vmatprep.subr.bf16.mxu0 %v5393
  %5467 = vmatpush1.bf16.msra.mxu0 %v5392
  %5468 = vmatprep.subr.bf16.mxu0 %v5397
  %5469 = vmatpush1.bf16.msra.mxu0 %v5396
  %5470 = vmatprep.subr.bf16.mxu0 %v5401
  %5471 = vmatpush1.bf16.msra.mxu0 %v5400
  %5472 = vmatprep.subr.bf16.mxu0 0
  %5473 = vmatpush1.bf16.msra.mxu0 0
  %5474 = vmatprep.subr.bf16.mxu0 0
  %5475 = vmatpush1.bf16.msra.mxu0 0
  %5476 = vmatprep.subr.bf16.mxu0 0
  %5477 = vmatpush1.bf16.msra.mxu0 0
  %5478 = vmatprep.subr.bf16.mxu0 0
  %5479 = vmatpush1.bf16.msra.mxu0 0
  %5480 = vmatprep.subr.bf16.mxu0 0
  %5481 = vmatpush1.bf16.msra.mxu0 0
  %5482 = vmatprep.subr.bf16.mxu0 0
  %5483 = vmatpush1.bf16.msra.mxu0 0
  %5484 = vmatprep.subr.bf16.mxu0 0
  %5485 = vmatpush1.bf16.msra.mxu0 0
  %5486 = vmatprep.subr.bf16.mxu0 0
  %5487 = vmatpush1.bf16.msra.mxu0 0
  %5488 = vmatprep.subr.bf16.mxu0 0
  %5489 = vmatpush1.bf16.msra.mxu0 0
  %5490 = vmatprep.subr.bf16.mxu0 0
  %5491 = vmatpush1.bf16.msra.mxu0 0
  %5492 = vmatprep.subr.bf16.mxu0 0
  %5493 = vmatpush1.bf16.msra.mxu0 0
  %5494 = vmatprep.subr.bf16.mxu0 0
  %5495 = vmatpush1.bf16.msra.mxu0 0
  %5496 = vmatprep.mubr.bf16.mxu0 0
  %5497 = vmatmul.mubr.bf16.gmra.mrb[0].mxu0 %v5419
  %v5498 = vpop.f32.mrb[0].mxu0
  %v5499 = vadd.f32 0.0, %v5498
  %v5500 = vpop.f32.mrb[0].mxu0
  %v5501 = vadd.f32 0.0, %v5500
  %v5502 = vpop.f32.mrb[0].mxu0
  %v5503 = vadd.f32 0.0, %v5502
  %v5504 = vpop.f32.mrb[0].mxu0
  %v5505 = vadd.f32 0.0, %v5504
  %5506 = vdwg.mxu0
  %v5507 = vadd.f32 %v5314, %v5456
  %v5508 = vadd.f32 %v5315, %v5458
  %v5509 = vadd.f32 %v5316, %v5499
  %v5510 = vadd.f32 %v5317, %v5501
  %v5511 = vadd.f32 %v5318, %v5460
  %v5512 = vadd.f32 %v5319, %v5462
  %v5513 = vadd.f32 %v5320, %v5503
  %v5514 = vadd.f32 %v5321, %v5505
  %v5515 = vld [vmem:[%s8 + $0x280] sm:$0xff]
  %v5516 = vld [vmem:[%s8 + $0x288] sm:$0xff]
  %v5517 = vld [vmem:[%s8 + $0x290] sm:$0xff]
  %v5518 = vld [vmem:[%s8 + $0x298] sm:$0xff]
  %v5519 = vld [vmem:[%s8 + $0x2a0] sm:$0xff]
  %v5520 = vld [vmem:[%s8 + $0x2a8] sm:$0xff]
  %v5521 = vld [vmem:[%s8 + $0x2b0] sm:$0xff]
  %v5522 = vld [vmem:[%s8 + $0x2b8] sm:$0xff]
  %v5523 = vld [vmem:[%s8 + $0x2c0] sm:$0xff]
  %v5524 = vld [vmem:[%s8 + $0x2c8] sm:$0xff]
  %v5525 = vld [vmem:[%s8 + $0x2d0] sm:$0xff]
  %v5526 = vld [vmem:[%s8 + $0x2d8] sm:$0xff]
  %v5527 = vld [vmem:[%s8 + $0x2e0] sm:$0xff]
  %v5528 = vld [vmem:[%s8 + $0x2e8] sm:$0xff]
  %v5529 = vld [vmem:[%s8 + $0x2f0] sm:$0xff]
  %v5530 = vld [vmem:[%s8 + $0x2f8] sm:$0xff]
  %v5547 = vunpack.c.l.b16 %v5515
  %v5548 = vunpack.c.h.b16 %v5515
  %v5549 = vunpack.c.l.b16 %v5516
  %v5550 = vunpack.c.h.b16 %v5516
  %v5551 = vunpack.c.l.b16 %v5517
  %v5552 = vunpack.c.h.b16 %v5517
  %v5553 = vunpack.c.l.b16 %v5518
  %v5554 = vunpack.c.h.b16 %v5518
  %v5555 = vunpack.c.l.b16 %v5519
  %v5556 = vunpack.c.h.b16 %v5519
  %v5557 = vunpack.c.l.b16 %v5520
  %v5558 = vunpack.c.h.b16 %v5520
  %v5559 = vunpack.c.l.b16 %v5521
  %v5560 = vunpack.c.h.b16 %v5521
  %v5561 = vunpack.c.l.b16 %v5522
  %v5562 = vunpack.c.h.b16 %v5522
  %v5563 = vunpack.c.l.b16 %v5523
  %v5564 = vunpack.c.h.b16 %v5523
  %v5565 = vunpack.c.l.b16 %v5524
  %v5566 = vunpack.c.h.b16 %v5524
  %v5567 = vunpack.c.l.b16 %v5525
  %v5568 = vunpack.c.h.b16 %v5525
  %v5569 = vunpack.c.l.b16 %v5526
  %v5570 = vunpack.c.h.b16 %v5526
  %v5571 = vunpack.c.l.b16 %v5527
  %v5572 = vunpack.c.h.b16 %v5527
  %v5573 = vunpack.c.l.b16 %v5528
  %v5574 = vunpack.c.h.b16 %v5528
  %v5575 = vunpack.c.l.b16 %v5529
  %v5576 = vunpack.c.h.b16 %v5529
  %v5577 = vunpack.c.l.b16 %v5530
  %v5578 = vunpack.c.h.b16 %v5530
  %v5579 = vpack.c.b16 %v5551, %v5547
  %v5580 = vpack.c.b16 %v5552, %v5548
  %v5581 = vpack.c.b16 %v5553, %v5549
  %v5582 = vpack.c.b16 %v5554, %v5550
  %v5583 = vpack.c.b16 %v5559, %v5555
  %v5584 = vpack.c.b16 %v5560, %v5556
  %v5585 = vpack.c.b16 %v5561, %v5557
  %v5586 = vpack.c.b16 %v5562, %v5558
  %v5587 = vpack.c.b16 %v5567, %v5563
  %v5588 = vpack.c.b16 %v5568, %v5564
  %v5589 = vpack.c.b16 %v5569, %v5565
  %v5590 = vpack.c.b16 %v5570, %v5566
  %v5591 = vpack.c.b16 %v5575, %v5571
  %v5592 = vpack.c.b16 %v5576, %v5572
  %v5593 = vpack.c.b16 %v5577, %v5573
  %v5594 = vpack.c.b16 %v5578, %v5574
  %v5612 = vsel %vm1902, %v4555, 0
  %5614 = vmatprep.subr.bf16.mxu0 %v5580
  %5615 = vmatpush1.bf16.msra.mxu0 %v5579
  %5616 = vmatprep.subr.bf16.mxu0 %v5584
  %5617 = vmatpush1.bf16.msra.mxu0 %v5583
  %5618 = vmatprep.subr.bf16.mxu0 %v5588
  %5619 = vmatpush1.bf16.msra.mxu0 %v5587
  %5620 = vmatprep.subr.bf16.mxu0 %v5592
  %5621 = vmatpush1.bf16.msra.mxu0 %v5591
  %5622 = vmatprep.subr.bf16.mxu0 0
  %5623 = vmatpush1.bf16.msra.mxu0 0
  %5624 = vmatprep.subr.bf16.mxu0 0
  %5625 = vmatpush1.bf16.msra.mxu0 0
  %5626 = vmatprep.subr.bf16.mxu0 0
  %5627 = vmatpush1.bf16.msra.mxu0 0
  %5628 = vmatprep.subr.bf16.mxu0 0
  %5629 = vmatpush1.bf16.msra.mxu0 0
  %5630 = vmatprep.subr.bf16.mxu0 0
  %5631 = vmatpush1.bf16.msra.mxu0 0
  %5632 = vmatprep.subr.bf16.mxu0 0
  %5633 = vmatpush1.bf16.msra.mxu0 0
  %5634 = vmatprep.subr.bf16.mxu0 0
  %5635 = vmatpush1.bf16.msra.mxu0 0
  %5636 = vmatprep.subr.bf16.mxu0 0
  %5637 = vmatpush1.bf16.msra.mxu0 0
  %5638 = vmatprep.subr.bf16.mxu0 0
  %5639 = vmatpush1.bf16.msra.mxu0 0
  %5640 = vmatprep.subr.bf16.mxu0 0
  %5641 = vmatpush1.bf16.msra.mxu0 0
  %5642 = vmatprep.subr.bf16.mxu0 0
  %5643 = vmatpush1.bf16.msra.mxu0 0
  %5644 = vmatprep.subr.bf16.mxu0 0
  %5645 = vmatpush1.bf16.msra.mxu0 0
  %5646 = vmatprep.mubr.bf16.mxu0 0
  %5647 = vmatmul.mubr.bf16.gmra.mrb[0].mxu0 %v5612
  %v5648 = vpop.f32.mrb[0].mxu0
  %v5649 = vadd.f32 0.0, %v5648
  %v5650 = vpop.f32.mrb[0].mxu0
  %v5651 = vadd.f32 0.0, %v5650
  %v5652 = vpop.f32.mrb[0].mxu0
  %v5653 = vadd.f32 0.0, %v5652
  %v5654 = vpop.f32.mrb[0].mxu0
  %v5655 = vadd.f32 0.0, %v5654
  %5656 = vdwg.mxu0
  %5657 = vmatprep.subr.bf16.mxu0 %v5582
  %5658 = vmatpush1.bf16.msra.mxu0 %v5581
  %5659 = vmatprep.subr.bf16.mxu0 %v5586
  %5660 = vmatpush1.bf16.msra.mxu0 %v5585
  %5661 = vmatprep.subr.bf16.mxu0 %v5590
  %5662 = vmatpush1.bf16.msra.mxu0 %v5589
  %5663 = vmatprep.subr.bf16.mxu0 %v5594
  %5664 = vmatpush1.bf16.msra.mxu0 %v5593
  %5665 = vmatprep.subr.bf16.mxu0 0
  %5666 = vmatpush1.bf16.msra.mxu0 0
  %5667 = vmatprep.subr.bf16.mxu0 0
  %5668 = vmatpush1.bf16.msra.mxu0 0
  %5669 = vmatprep.subr.bf16.mxu0 0
  %5670 = vmatpush1.bf16.msra.mxu0 0
  %5671 = vmatprep.subr.bf16.mxu0 0
  %5672 = vmatpush1.bf16.msra.mxu0 0
  %5673 = vmatprep.subr.bf16.mxu0 0
  %5674 = vmatpush1.bf16.msra.mxu0 0
  %5675 = vmatprep.subr.bf16.mxu0 0
  %5676 = vmatpush1.bf16.msra.mxu0 0
  %5677 = vmatprep.subr.bf16.mxu0 0
  %5678 = vmatpush1.bf16.msra.mxu0 0
  %5679 = vmatprep.subr.bf16.mxu0 0
  %5680 = vmatpush1.bf16.msra.mxu0 0
  %5681 = vmatprep.subr.bf16.mxu0 0
  %5682 = vmatpush1.bf16.msra.mxu0 0
  %5683 = vmatprep.subr.bf16.mxu0 0
  %5684 = vmatpush1.bf16.msra.mxu0 0
  %5685 = vmatprep.subr.bf16.mxu0 0
  %5686 = vmatpush1.bf16.msra.mxu0 0
  %5687 = vmatprep.subr.bf16.mxu0 0
  %5688 = vmatpush1.bf16.msra.mxu0 0
  %5689 = vmatprep.mubr.bf16.mxu0 0
  %5690 = vmatmul.mubr.bf16.gmra.mrb[0].mxu0 %v5612
  %v5691 = vpop.f32.mrb[0].mxu0
  %v5692 = vadd.f32 0.0, %v5691
  %v5693 = vpop.f32.mrb[0].mxu0
  %v5694 = vadd.f32 0.0, %v5693
  %v5695 = vpop.f32.mrb[0].mxu0
  %v5696 = vadd.f32 0.0, %v5695
  %v5697 = vpop.f32.mrb[0].mxu0
  %v5698 = vadd.f32 0.0, %v5697
  %5699 = vdwg.mxu0
  %v5700 = vadd.f32 %v5507, %v5649
  %v5701 = vadd.f32 %v5508, %v5651
  %v5702 = vadd.f32 %v5509, %v5692
  %v5703 = vadd.f32 %v5510, %v5694
  %v5704 = vadd.f32 %v5511, %v5653
  %v5705 = vadd.f32 %v5512, %v5655
  %v5706 = vadd.f32 %v5513, %v5696
  %v5707 = vadd.f32 %v5514, %v5698
  %v5708 = vld [vmem:[%s8 + $0x300] sm:$0xff]
  %v5709 = vld [vmem:[%s8 + $0x308] sm:$0xff]
  %v5710 = vld [vmem:[%s8 + $0x310] sm:$0xff]
  %v5711 = vld [vmem:[%s8 + $0x318] sm:$0xff]
  %v5712 = vld [vmem:[%s8 + $0x320] sm:$0xff]
  %v5713 = vld [vmem:[%s8 + $0x328] sm:$0xff]
  %v5714 = vld [vmem:[%s8 + $0x330] sm:$0xff]
  %v5715 = vld [vmem:[%s8 + $0x338] sm:$0xff]
  %v5716 = vld [vmem:[%s8 + $0x340] sm:$0xff]
  %v5717 = vld [vmem:[%s8 + $0x348] sm:$0xff]
  %v5718 = vld [vmem:[%s8 + $0x350] sm:$0xff]
  %v5719 = vld [vmem:[%s8 + $0x358] sm:$0xff]
  %v5720 = vld [vmem:[%s8 + $0x360] sm:$0xff]
  %v5721 = vld [vmem:[%s8 + $0x368] sm:$0xff]
  %v5722 = vld [vmem:[%s8 + $0x370] sm:$0xff]
  %v5723 = vld [vmem:[%s8 + $0x378] sm:$0xff]
  %v5740 = vunpack.c.l.b16 %v5708
  %v5741 = vunpack.c.h.b16 %v5708
  %v5742 = vunpack.c.l.b16 %v5709
  %v5743 = vunpack.c.h.b16 %v5709
  %v5744 = vunpack.c.l.b16 %v5710
  %v5745 = vunpack.c.h.b16 %v5710
  %v5746 = vunpack.c.l.b16 %v5711
  %v5747 = vunpack.c.h.b16 %v5711
  %v5748 = vunpack.c.l.b16 %v5712
  %v5749 = vunpack.c.h.b16 %v5712
  %v5750 = vunpack.c.l.b16 %v5713
  %v5751 = vunpack.c.h.b16 %v5713
  %v5752 = vunpack.c.l.b16 %v5714
  %v5753 = vunpack.c.h.b16 %v5714
  %v5754 = vunpack.c.l.b16 %v5715
  %v5755 = vunpack.c.h.b16 %v5715
  %v5756 = vunpack.c.l.b16 %v5716
  %v5757 = vunpack.c.h.b16 %v5716
  %v5758 = vunpack.c.l.b16 %v5717
  %v5759 = vunpack.c.h.b16 %v5717
  %v5760 = vunpack.c.l.b16 %v5718
  %v5761 = vunpack.c.h.b16 %v5718
  %v5762 = vunpack.c.l.b16 %v5719
  %v5763 = vunpack.c.h.b16 %v5719
  %v5764 = vunpack.c.l.b16 %v5720
  %v5765 = vunpack.c.h.b16 %v5720
  %v5766 = vunpack.c.l.b16 %v5721
  %v5767 = vunpack.c.h.b16 %v5721
  %v5768 = vunpack.c.l.b16 %v5722
  %v5769 = vunpack.c.h.b16 %v5722
  %v5770 = vunpack.c.l.b16 %v5723
  %v5771 = vunpack.c.h.b16 %v5723
  %v5772 = vpack.c.b16 %v5744, %v5740
  %v5773 = vpack.c.b16 %v5745, %v5741
  %v5774 = vpack.c.b16 %v5746, %v5742
  %v5775 = vpack.c.b16 %v5747, %v5743
  %v5776 = vpack.c.b16 %v5752, %v5748
  %v5777 = vpack.c.b16 %v5753, %v5749
  %v5778 = vpack.c.b16 %v5754, %v5750
  %v5779 = vpack.c.b16 %v5755, %v5751
  %v5780 = vpack.c.b16 %v5760, %v5756
  %v5781 = vpack.c.b16 %v5761, %v5757
  %v5782 = vpack.c.b16 %v5762, %v5758
  %v5783 = vpack.c.b16 %v5763, %v5759
  %v5784 = vpack.c.b16 %v5768, %v5764
  %v5785 = vpack.c.b16 %v5769, %v5765
  %v5786 = vpack.c.b16 %v5770, %v5766
  %v5787 = vpack.c.b16 %v5771, %v5767
  %v5805 = vsel %vm1902, %v4556, 0
  %5807 = vmatprep.subr.bf16.mxu0 %v5773
  %5808 = vmatpush1.bf16.msra.mxu0 %v5772
  %5809 = vmatprep.subr.bf16.mxu0 %v5777
  %5810 = vmatpush1.bf16.msra.mxu0 %v5776
  %5811 = vmatprep.subr.bf16.mxu0 %v5781
  %5812 = vmatpush1.bf16.msra.mxu0 %v5780
  %5813 = vmatprep.subr.bf16.mxu0 %v5785
  %5814 = vmatpush1.bf16.msra.mxu0 %v5784
  %5815 = vmatprep.subr.bf16.mxu0 0
  %5816 = vmatpush1.bf16.msra.mxu0 0
  %5817 = vmatprep.subr.bf16.mxu0 0
  %5818 = vmatpush1.bf16.msra.mxu0 0
  %5819 = vmatprep.subr.bf16.mxu0 0
  %5820 = vmatpush1.bf16.msra.mxu0 0
  %5821 = vmatprep.subr.bf16.mxu0 0
  %5822 = vmatpush1.bf16.msra.mxu0 0
  %5823 = vmatprep.subr.bf16.mxu0 0
  %5824 = vmatpush1.bf16.msra.mxu0 0
  %5825 = vmatprep.subr.bf16.mxu0 0
  %5826 = vmatpush1.bf16.msra.mxu0 0
  %5827 = vmatprep.subr.bf16.mxu0 0
  %5828 = vmatpush1.bf16.msra.mxu0 0
  %5829 = vmatprep.subr.bf16.mxu0 0
  %5830 = vmatpush1.bf16.msra.mxu0 0
  %5831 = vmatprep.subr.bf16.mxu0 0
  %5832 = vmatpush1.bf16.msra.mxu0 0
  %5833 = vmatprep.subr.bf16.mxu0 0
  %5834 = vmatpush1.bf16.msra.mxu0 0
  %5835 = vmatprep.subr.bf16.mxu0 0
  %5836 = vmatpush1.bf16.msra.mxu0 0
  %5837 = vmatprep.subr.bf16.mxu0 0
  %5838 = vmatpush1.bf16.msra.mxu0 0
  %5839 = vmatprep.mubr.bf16.mxu0 0
  %5840 = vmatmul.mubr.bf16.gmra.mrb[0].mxu0 %v5805
  %v5841 = vpop.f32.mrb[0].mxu0
  %v5842 = vadd.f32 0.0, %v5841
  %v5843 = vpop.f32.mrb[0].mxu0
  %v5844 = vadd.f32 0.0, %v5843
  %v5845 = vpop.f32.mrb[0].mxu0
  %v5846 = vadd.f32 0.0, %v5845
  %v5847 = vpop.f32.mrb[0].mxu0
  %v5848 = vadd.f32 0.0, %v5847
  %5849 = vdwg.mxu0
  %5850 = vmatprep.subr.bf16.mxu0 %v5775
  %5851 = vmatpush1.bf16.msra.mxu0 %v5774
  %5852 = vmatprep.subr.bf16.mxu0 %v5779
  %5853 = vmatpush1.bf16.msra.mxu0 %v5778
  %5854 = vmatprep.subr.bf16.mxu0 %v5783
  %5855 = vmatpush1.bf16.msra.mxu0 %v5782
  %5856 = vmatprep.subr.bf16.mxu0 %v5787
  %5857 = vmatpush1.bf16.msra.mxu0 %v5786
  %5858 = vmatprep.subr.bf16.mxu0 0
  %5859 = vmatpush1.bf16.msra.mxu0 0
  %5860 = vmatprep.subr.bf16.mxu0 0
  %5861 = vmatpush1.bf16.msra.mxu0 0
  %5862 = vmatprep.subr.bf16.mxu0 0
  %5863 = vmatpush1.bf16.msra.mxu0 0
  %5864 = vmatprep.subr.bf16.mxu0 0
  %5865 = vmatpush1.bf16.msra.mxu0 0
  %5866 = vmatprep.subr.bf16.mxu0 0
  %5867 = vmatpush1.bf16.msra.mxu0 0
  %5868 = vmatprep.subr.bf16.mxu0 0
  %5869 = vmatpush1.bf16.msra.mxu0 0
  %5870 = vmatprep.subr.bf16.mxu0 0
  %5871 = vmatpush1.bf16.msra.mxu0 0
  %5872 = vmatprep.subr.bf16.mxu0 0
  %5873 = vmatpush1.bf16.msra.mxu0 0
  %5874 = vmatprep.subr.bf16.mxu0 0
  %5875 = vmatpush1.bf16.msra.mxu0 0
  %5876 = vmatprep.subr.bf16.mxu0 0
  %5877 = vmatpush1.bf16.msra.mxu0 0
  %5878 = vmatprep.subr.bf16.mxu0 0
  %5879 = vmatpush1.bf16.msra.mxu0 0
  %5880 = vmatprep.subr.bf16.mxu0 0
  %5881 = vmatpush1.bf16.msra.mxu0 0
  %5882 = vmatprep.mubr.bf16.mxu0 0
  %5883 = vmatmul.mubr.bf16.gmra.mrb[0].mxu0 %v5805
  %v5884 = vpop.f32.mrb[0].mxu0
  %v5885 = vadd.f32 0.0, %v5884
  %v5886 = vpop.f32.mrb[0].mxu0
  %v5887 = vadd.f32 0.0, %v5886
  %v5888 = vpop.f32.mrb[0].mxu0
  %v5889 = vadd.f32 0.0, %v5888
  %v5890 = vpop.f32.mrb[0].mxu0
  %v5891 = vadd.f32 0.0, %v5890
  %5892 = vdwg.mxu0
  %v5893 = vadd.f32 %v5700, %v5842
  %v5894 = vadd.f32 %v5701, %v5844
  %v5895 = vadd.f32 %v5702, %v5885
  %v5896 = vadd.f32 %v5703, %v5887
  %v5897 = vadd.f32 %v5704, %v5846
  %v5898 = vadd.f32 %v5705, %v5848
  %v5899 = vadd.f32 %v5706, %v5889
  %v5900 = vadd.f32 %v5707, %v5891
  %v5901 = vld [vmem:[%s8 + $0x380] sm:$0xff]
  %v5902 = vld [vmem:[%s8 + $0x388] sm:$0xff]
  %v5903 = vld [vmem:[%s8 + $0x390] sm:$0xff]
  %v5904 = vld [vmem:[%s8 + $0x398] sm:$0xff]
  %v5905 = vld [vmem:[%s8 + $0x3a0] sm:$0xff]
  %v5906 = vld [vmem:[%s8 + $0x3a8] sm:$0xff]
  %v5907 = vld [vmem:[%s8 + $0x3b0] sm:$0xff]
  %v5908 = vld [vmem:[%s8 + $0x3b8] sm:$0xff]
  %v5909 = vld [vmem:[%s8 + $0x3c0] sm:$0xff]
  %v5910 = vld [vmem:[%s8 + $0x3c8] sm:$0xff]
  %v5911 = vld [vmem:[%s8 + $0x3d0] sm:$0xff]
  %v5912 = vld [vmem:[%s8 + $0x3d8] sm:$0xff]
  %v5913 = vld [vmem:[%s8 + $0x3e0] sm:$0xff]
  %v5914 = vld [vmem:[%s8 + $0x3e8] sm:$0xff]
  %v5915 = vld [vmem:[%s8 + $0x3f0] sm:$0xff]
  %v5916 = vld [vmem:[%s8 + $0x3f8] sm:$0xff]
  %v5933 = vunpack.c.l.b16 %v5901
  %v5934 = vunpack.c.h.b16 %v5901
  %v5935 = vunpack.c.l.b16 %v5902
  %v5936 = vunpack.c.h.b16 %v5902
  %v5937 = vunpack.c.l.b16 %v5903
  %v5938 = vunpack.c.h.b16 %v5903
  %v5939 = vunpack.c.l.b16 %v5904
  %v5940 = vunpack.c.h.b16 %v5904
  %v5941 = vunpack.c.l.b16 %v5905
  %v5942 = vunpack.c.h.b16 %v5905
  %v5943 = vunpack.c.l.b16 %v5906
  %v5944 = vunpack.c.h.b16 %v5906
  %v5945 = vunpack.c.l.b16 %v5907
  %v5946 = vunpack.c.h.b16 %v5907
  %v5947 = vunpack.c.l.b16 %v5908
  %v5948 = vunpack.c.h.b16 %v5908
  %v5949 = vunpack.c.l.b16 %v5909
  %v5950 = vunpack.c.h.b16 %v5909
  %v5951 = vunpack.c.l.b16 %v5910
  %v5952 = vunpack.c.h.b16 %v5910
  %v5953 = vunpack.c.l.b16 %v5911
  %v5954 = vunpack.c.h.b16 %v5911
  %v5955 = vunpack.c.l.b16 %v5912
  %v5956 = vunpack.c.h.b16 %v5912
  %v5957 = vunpack.c.l.b16 %v5913
  %v5958 = vunpack.c.h.b16 %v5913
  %v5959 = vunpack.c.l.b16 %v5914
  %v5960 = vunpack.c.h.b16 %v5914
  %v5961 = vunpack.c.l.b16 %v5915
  %v5962 = vunpack.c.h.b16 %v5915
  %v5963 = vunpack.c.l.b16 %v5916
  %v5964 = vunpack.c.h.b16 %v5916
  %v5965 = vpack.c.b16 %v5937, %v5933
  %v5966 = vpack.c.b16 %v5938, %v5934
  %v5967 = vpack.c.b16 %v5939, %v5935
  %v5968 = vpack.c.b16 %v5940, %v5936
  %v5969 = vpack.c.b16 %v5945, %v5941
  %v5970 = vpack.c.b16 %v5946, %v5942
  %v5971 = vpack.c.b16 %v5947, %v5943
  %v5972 = vpack.c.b16 %v5948, %v5944
  %v5973 = vpack.c.b16 %v5953, %v5949
  %v5974 = vpack.c.b16 %v5954, %v5950
  %v5975 = vpack.c.b16 %v5955, %v5951
  %v5976 = vpack.c.b16 %v5956, %v5952
  %v5977 = vpack.c.b16 %v5961, %v5957
  %v5978 = vpack.c.b16 %v5962, %v5958
  %v5979 = vpack.c.b16 %v5963, %v5959
  %v5980 = vpack.c.b16 %v5964, %v5960
  %v5998 = vsel %vm1902, %v4557, 0
  %6000 = vmatprep.subr.bf16.mxu0 %v5966
  %6001 = vmatpush1.bf16.msra.mxu0 %v5965
  %6002 = vmatprep.subr.bf16.mxu0 %v5970
  %6003 = vmatpush1.bf16.msra.mxu0 %v5969
  %6004 = vmatprep.subr.bf16.mxu0 %v5974
  %6005 = vmatpush1.bf16.msra.mxu0 %v5973
  %6006 = vmatprep.subr.bf16.mxu0 %v5978
  %6007 = vmatpush1.bf16.msra.mxu0 %v5977
  %6008 = vmatprep.subr.bf16.mxu0 0
  %6009 = vmatpush1.bf16.msra.mxu0 0
  %6010 = vmatprep.subr.bf16.mxu0 0
  %6011 = vmatpush1.bf16.msra.mxu0 0
  %6012 = vmatprep.subr.bf16.mxu0 0
  %6013 = vmatpush1.bf16.msra.mxu0 0
  %6014 = vmatprep.subr.bf16.mxu0 0
  %6015 = vmatpush1.bf16.msra.mxu0 0
  %6016 = vmatprep.subr.bf16.mxu0 0
  %6017 = vmatpush1.bf16.msra.mxu0 0
  %6018 = vmatprep.subr.bf16.mxu0 0
  %6019 = vmatpush1.bf16.msra.mxu0 0
  %6020 = vmatprep.subr.bf16.mxu0 0
  %6021 = vmatpush1.bf16.msra.mxu0 0
  %6022 = vmatprep.subr.bf16.mxu0 0
  %6023 = vmatpush1.bf16.msra.mxu0 0
  %6024 = vmatprep.subr.bf16.mxu0 0
  %6025 = vmatpush1.bf16.msra.mxu0 0
  %6026 = vmatprep.subr.bf16.mxu0 0
  %6027 = vmatpush1.bf16.msra.mxu0 0
  %6028 = vmatprep.subr.bf16.mxu0 0
  %6029 = vmatpush1.bf16.msra.mxu0 0
  %6030 = vmatprep.subr.bf16.mxu0 0
  %6031 = vmatpush1.bf16.msra.mxu0 0
  %6032 = vmatprep.mubr.bf16.mxu0 0
  %6033 = vmatmul.mubr.bf16.gmra.mrb[0].mxu0 %v5998
  %v6034 = vpop.f32.mrb[0].mxu0
  %v6035 = vadd.f32 0.0, %v6034
  %v6036 = vpop.f32.mrb[0].mxu0
  %v6037 = vadd.f32 0.0, %v6036
  %v6038 = vpop.f32.mrb[0].mxu0
  %v6039 = vadd.f32 0.0, %v6038
  %v6040 = vpop.f32.mrb[0].mxu0
  %v6041 = vadd.f32 0.0, %v6040
  %6042 = vdwg.mxu0
  %6043 = vmatprep.subr.bf16.mxu0 %v5968
  %6044 = vmatpush1.bf16.msra.mxu0 %v5967
  %6045 = vmatprep.subr.bf16.mxu0 %v5972
  %6046 = vmatpush1.bf16.msra.mxu0 %v5971
  %6047 = vmatprep.subr.bf16.mxu0 %v5976
  %6048 = vmatpush1.bf16.msra.mxu0 %v5975
  %6049 = vmatprep.subr.bf16.mxu0 %v5980
  %6050 = vmatpush1.bf16.msra.mxu0 %v5979
  %6051 = vmatprep.subr.bf16.mxu0 0
  %6052 = vmatpush1.bf16.msra.mxu0 0
  %6053 = vmatprep.subr.bf16.mxu0 0
  %6054 = vmatpush1.bf16.msra.mxu0 0
  %6055 = vmatprep.subr.bf16.mxu0 0
  %6056 = vmatpush1.bf16.msra.mxu0 0
  %6057 = vmatprep.subr.bf16.mxu0 0
  %6058 = vmatpush1.bf16.msra.mxu0 0
  %6059 = vmatprep.subr.bf16.mxu0 0
  %6060 = vmatpush1.bf16.msra.mxu0 0
  %6061 = vmatprep.subr.bf16.mxu0 0
  %6062 = vmatpush1.bf16.msra.mxu0 0
  %6063 = vmatprep.subr.bf16.mxu0 0
  %6064 = vmatpush1.bf16.msra.mxu0 0
  %6065 = vmatprep.subr.bf16.mxu0 0
  %6066 = vmatpush1.bf16.msra.mxu0 0
  %6067 = vmatprep.subr.bf16.mxu0 0
  %6068 = vmatpush1.bf16.msra.mxu0 0
  %6069 = vmatprep.subr.bf16.mxu0 0
  %6070 = vmatpush1.bf16.msra.mxu0 0
  %6071 = vmatprep.subr.bf16.mxu0 0
  %6072 = vmatpush1.bf16.msra.mxu0 0
  %6073 = vmatprep.subr.bf16.mxu0 0
  %6074 = vmatpush1.bf16.msra.mxu0 0
  %6075 = vmatprep.mubr.bf16.mxu0 0
  %6076 = vmatmul.mubr.bf16.gmra.mrb[0].mxu0 %v5998
  %v6077 = vpop.f32.mrb[0].mxu0
  %v6078 = vadd.f32 0.0, %v6077
  %v6079 = vpop.f32.mrb[0].mxu0
  %v6080 = vadd.f32 0.0, %v6079
  %v6081 = vpop.f32.mrb[0].mxu0
  %v6082 = vadd.f32 0.0, %v6081
  %v6083 = vpop.f32.mrb[0].mxu0
  %v6084 = vadd.f32 0.0, %v6083
  %6085 = vdwg.mxu0
  %v6086 = vadd.f32 %v5893, %v6035
  %v6087 = vadd.f32 %v5894, %v6037
  %v6088 = vadd.f32 %v5895, %v6078
  %v6089 = vadd.f32 %v5896, %v6080
  %v6090 = vadd.f32 %v5897, %v6039
  %v6091 = vadd.f32 %v5898, %v6041
  %v6092 = vadd.f32 %v5899, %v6082
  %v6093 = vadd.f32 %v5900, %v6084
  %v6094 = vld [vmem:[%s8 + $0x400] sm:$0xff]
  %v6095 = vld [vmem:[%s8 + $0x408] sm:$0xff]
  %v6096 = vld [vmem:[%s8 + $0x410] sm:$0xff]
  %v6097 = vld [vmem:[%s8 + $0x418] sm:$0xff]
  %v6098 = vld [vmem:[%s8 + $0x420] sm:$0xff]
  %v6099 = vld [vmem:[%s8 + $0x428] sm:$0xff]
  %v6100 = vld [vmem:[%s8 + $0x430] sm:$0xff]
  %v6101 = vld [vmem:[%s8 + $0x438] sm:$0xff]
  %v6102 = vld [vmem:[%s8 + $0x440] sm:$0xff]
  %v6103 = vld [vmem:[%s8 + $0x448] sm:$0xff]
  %v6104 = vld [vmem:[%s8 + $0x450] sm:$0xff]
  %v6105 = vld [vmem:[%s8 + $0x458] sm:$0xff]
  %v6106 = vld [vmem:[%s8 + $0x460] sm:$0xff]
  %v6107 = vld [vmem:[%s8 + $0x468] sm:$0xff]
  %v6108 = vld [vmem:[%s8 + $0x470] sm:$0xff]
  %v6109 = vld [vmem:[%s8 + $0x478] sm:$0xff]
  %v6126 = vunpack.c.l.b16 %v6094
  %v6127 = vunpack.c.h.b16 %v6094
  %v6128 = vunpack.c.l.b16 %v6095
  %v6129 = vunpack.c.h.b16 %v6095
  %v6130 = vunpack.c.l.b16 %v6096
  %v6131 = vunpack.c.h.b16 %v6096
  %v6132 = vunpack.c.l.b16 %v6097
  %v6133 = vunpack.c.h.b16 %v6097
  %v6134 = vunpack.c.l.b16 %v6098
  %v6135 = vunpack.c.h.b16 %v6098
  %v6136 = vunpack.c.l.b16 %v6099
  %v6137 = vunpack.c.h.b16 %v6099
  %v6138 = vunpack.c.l.b16 %v6100
  %v6139 = vunpack.c.h.b16 %v6100
  %v6140 = vunpack.c.l.b16 %v6101
  %v6141 = vunpack.c.h.b16 %v6101
  %v6142 = vunpack.c.l.b16 %v6102
  %v6143 = vunpack.c.h.b16 %v6102
  %v6144 = vunpack.c.l.b16 %v6103
  %v6145 = vunpack.c.h.b16 %v6103
  %v6146 = vunpack.c.l.b16 %v6104
  %v6147 = vunpack.c.h.b16 %v6104
  %v6148 = vunpack.c.l.b16 %v6105
  %v6149 = vunpack.c.h.b16 %v6105
  %v6150 = vunpack.c.l.b16 %v6106
  %v6151 = vunpack.c.h.b16 %v6106
  %v6152 = vunpack.c.l.b16 %v6107
  %v6153 = vunpack.c.h.b16 %v6107
  %v6154 = vunpack.c.l.b16 %v6108
  %v6155 = vunpack.c.h.b16 %v6108
  %v6156 = vunpack.c.l.b16 %v6109
  %v6157 = vunpack.c.h.b16 %v6109
  %v6158 = vpack.c.b16 %v6130, %v6126
  %v6159 = vpack.c.b16 %v6131, %v6127
  %v6160 = vpack.c.b16 %v6132, %v6128
  %v6161 = vpack.c.b16 %v6133, %v6129
  %v6162 = vpack.c.b16 %v6138, %v6134
  %v6163 = vpack.c.b16 %v6139, %v6135
  %v6164 = vpack.c.b16 %v6140, %v6136
  %v6165 = vpack.c.b16 %v6141, %v6137
  %v6166 = vpack.c.b16 %v6146, %v6142
  %v6167 = vpack.c.b16 %v6147, %v6143
  %v6168 = vpack.c.b16 %v6148, %v6144
  %v6169 = vpack.c.b16 %v6149, %v6145
  %v6170 = vpack.c.b16 %v6154, %v6150
  %v6171 = vpack.c.b16 %v6155, %v6151
  %v6172 = vpack.c.b16 %v6156, %v6152
  %v6173 = vpack.c.b16 %v6157, %v6153
  %v6191 = vsel %vm1902, %v4558, 0
  %6193 = vmatprep.subr.bf16.mxu0 %v6159
  %6194 = vmatpush1.bf16.msra.mxu0 %v6158
  %6195 = vmatprep.subr.bf16.mxu0 %v6163
  %6196 = vmatpush1.bf16.msra.mxu0 %v6162
  %6197 = vmatprep.subr.bf16.mxu0 %v6167
  %6198 = vmatpush1.bf16.msra.mxu0 %v6166
  %6199 = vmatprep.subr.bf16.mxu0 %v6171
  %6200 = vmatpush1.bf16.msra.mxu0 %v6170
  %6201 = vmatprep.subr.bf16.mxu0 0
  %6202 = vmatpush1.bf16.msra.mxu0 0
  %6203 = vmatprep.subr.bf16.mxu0 0
  %6204 = vmatpush1.bf16.msra.mxu0 0
  %6205 = vmatprep.subr.bf16.mxu0 0
  %6206 = vmatpush1.bf16.msra.mxu0 0
  %6207 = vmatprep.subr.bf16.mxu0 0
  %6208 = vmatpush1.bf16.msra.mxu0 0
  %6209 = vmatprep.subr.bf16.mxu0 0
  %6210 = vmatpush1.bf16.msra.mxu0 0
  %6211 = vmatprep.subr.bf16.mxu0 0
  %6212 = vmatpush1.bf16.msra.mxu0 0
  %6213 = vmatprep.subr.bf16.mxu0 0
  %6214 = vmatpush1.bf16.msra.mxu0 0
  %6215 = vmatprep.subr.bf16.mxu0 0
  %6216 = vmatpush1.bf16.msra.mxu0 0
  %6217 = vmatprep.subr.bf16.mxu0 0
  %6218 = vmatpush1.bf16.msra.mxu0 0
  %6219 = vmatprep.subr.bf16.mxu0 0
  %6220 = vmatpush1.bf16.msra.mxu0 0
  %6221 = vmatprep.subr.bf16.mxu0 0
  %6222 = vmatpush1.bf16.msra.mxu0 0
  %6223 = vmatprep.subr.bf16.mxu0 0
  %6224 = vmatpush1.bf16.msra.mxu0 0
  %6225 = vmatprep.mubr.bf16.mxu0 0
  %6226 = vmatmul.mubr.bf16.gmra.mrb[0].mxu0 %v6191
  %v6227 = vpop.f32.mrb[0].mxu0
  %v6228 = vadd.f32 0.0, %v6227
  %v6229 = vpop.f32.mrb[0].mxu0
  %v6230 = vadd.f32 0.0, %v6229
  %v6231 = vpop.f32.mrb[0].mxu0
  %v6232 = vadd.f32 0.0, %v6231
  %v6233 = vpop.f32.mrb[0].mxu0
  %v6234 = vadd.f32 0.0, %v6233
  %6235 = vdwg.mxu0
  %6236 = vmatprep.subr.bf16.mxu0 %v6161
  %6237 = vmatpush1.bf16.msra.mxu0 %v6160
  %6238 = vmatprep.subr.bf16.mxu0 %v6165
  %6239 = vmatpush1.bf16.msra.mxu0 %v6164
  %6240 = vmatprep.subr.bf16.mxu0 %v6169
  %6241 = vmatpush1.bf16.msra.mxu0 %v6168
  %6242 = vmatprep.subr.bf16.mxu0 %v6173
  %6243 = vmatpush1.bf16.msra.mxu0 %v6172
  %6244 = vmatprep.subr.bf16.mxu0 0
  %6245 = vmatpush1.bf16.msra.mxu0 0
  %6246 = vmatprep.subr.bf16.mxu0 0
  %6247 = vmatpush1.bf16.msra.mxu0 0
  %6248 = vmatprep.subr.bf16.mxu0 0
  %6249 = vmatpush1.bf16.msra.mxu0 0
  %6250 = vmatprep.subr.bf16.mxu0 0
  %6251 = vmatpush1.bf16.msra.mxu0 0
  %6252 = vmatprep.subr.bf16.mxu0 0
  %6253 = vmatpush1.bf16.msra.mxu0 0
  %6254 = vmatprep.subr.bf16.mxu0 0
  %6255 = vmatpush1.bf16.msra.mxu0 0
  %6256 = vmatprep.subr.bf16.mxu0 0
  %6257 = vmatpush1.bf16.msra.mxu0 0
  %6258 = vmatprep.subr.bf16.mxu0 0
  %6259 = vmatpush1.bf16.msra.mxu0 0
  %6260 = vmatprep.subr.bf16.mxu0 0
  %6261 = vmatpush1.bf16.msra.mxu0 0
  %6262 = vmatprep.subr.bf16.mxu0 0
  %6263 = vmatpush1.bf16.msra.mxu0 0
  %6264 = vmatprep.subr.bf16.mxu0 0
  %6265 = vmatpush1.bf16.msra.mxu0 0
  %6266 = vmatprep.subr.bf16.mxu0 0
  %6267 = vmatpush1.bf16.msra.mxu0 0
  %6268 = vmatprep.mubr.bf16.mxu0 0
  %6269 = vmatmul.mubr.bf16.gmra.mrb[0].mxu0 %v6191
  %v6270 = vpop.f32.mrb[0].mxu0
  %v6271 = vadd.f32 0.0, %v6270
  %v6272 = vpop.f32.mrb[0].mxu0
  %v6273 = vadd.f32 0.0, %v6272
  %v6274 = vpop.f32.mrb[0].mxu0
  %v6275 = vadd.f32 0.0, %v6274
  %v6276 = vpop.f32.mrb[0].mxu0
  %v6277 = vadd.f32 0.0, %v6276
  %6278 = vdwg.mxu0
  %v6279 = vadd.f32 %v6086, %v6228
  %v6280 = vadd.f32 %v6087, %v6230
  %v6281 = vadd.f32 %v6088, %v6271
  %v6282 = vadd.f32 %v6089, %v6273
  %v6283 = vadd.f32 %v6090, %v6232
  %v6284 = vadd.f32 %v6091, %v6234
  %v6285 = vadd.f32 %v6092, %v6275
  %v6286 = vadd.f32 %v6093, %v6277
  %v6287 = vld [vmem:[%s8 + $0x480] sm:$0xff]
  %v6288 = vld [vmem:[%s8 + $0x488] sm:$0xff]
  %v6289 = vld [vmem:[%s8 + $0x490] sm:$0xff]
  %v6290 = vld [vmem:[%s8 + $0x498] sm:$0xff]
  %v6291 = vld [vmem:[%s8 + $0x4a0] sm:$0xff]
  %v6292 = vld [vmem:[%s8 + $0x4a8] sm:$0xff]
  %v6293 = vld [vmem:[%s8 + $0x4b0] sm:$0xff]
  %v6294 = vld [vmem:[%s8 + $0x4b8] sm:$0xff]
  %v6295 = vld [vmem:[%s8 + $0x4c0] sm:$0xff]
  %v6296 = vld [vmem:[%s8 + $0x4c8] sm:$0xff]
  %v6297 = vld [vmem:[%s8 + $0x4d0] sm:$0xff]
  %v6298 = vld [vmem:[%s8 + $0x4d8] sm:$0xff]
  %v6299 = vld [vmem:[%s8 + $0x4e0] sm:$0xff]
  %v6300 = vld [vmem:[%s8 + $0x4e8] sm:$0xff]
  %v6301 = vld [vmem:[%s8 + $0x4f0] sm:$0xff]
  %v6302 = vld [vmem:[%s8 + $0x4f8] sm:$0xff]
  %v6319 = vunpack.c.l.b16 %v6287
  %v6320 = vunpack.c.h.b16 %v6287
  %v6321 = vunpack.c.l.b16 %v6288
  %v6322 = vunpack.c.h.b16 %v6288
  %v6323 = vunpack.c.l.b16 %v6289
  %v6324 = vunpack.c.h.b16 %v6289
  %v6325 = vunpack.c.l.b16 %v6290
  %v6326 = vunpack.c.h.b16 %v6290
  %v6327 = vunpack.c.l.b16 %v6291
  %v6328 = vunpack.c.h.b16 %v6291
  %v6329 = vunpack.c.l.b16 %v6292
  %v6330 = vunpack.c.h.b16 %v6292
  %v6331 = vunpack.c.l.b16 %v6293
  %v6332 = vunpack.c.h.b16 %v6293
  %v6333 = vunpack.c.l.b16 %v6294
  %v6334 = vunpack.c.h.b16 %v6294
  %v6335 = vunpack.c.l.b16 %v6295
  %v6336 = vunpack.c.h.b16 %v6295
  %v6337 = vunpack.c.l.b16 %v6296
  %v6338 = vunpack.c.h.b16 %v6296
  %v6339 = vunpack.c.l.b16 %v6297
  %v6340 = vunpack.c.h.b16 %v6297
  %v6341 = vunpack.c.l.b16 %v6298
  %v6342 = vunpack.c.h.b16 %v6298
  %v6343 = vunpack.c.l.b16 %v6299
  %v6344 = vunpack.c.h.b16 %v6299
  %v6345 = vunpack.c.l.b16 %v6300
  %v6346 = vunpack.c.h.b16 %v6300
  %v6347 = vunpack.c.l.b16 %v6301
  %v6348 = vunpack.c.h.b16 %v6301
  %v6349 = vunpack.c.l.b16 %v6302
  %v6350 = vunpack.c.h.b16 %v6302
  %v6351 = vpack.c.b16 %v6323, %v6319
  %v6352 = vpack.c.b16 %v6324, %v6320
  %v6353 = vpack.c.b16 %v6325, %v6321
  %v6354 = vpack.c.b16 %v6326, %v6322
  %v6355 = vpack.c.b16 %v6331, %v6327
  %v6356 = vpack.c.b16 %v6332, %v6328
  %v6357 = vpack.c.b16 %v6333, %v6329
  %v6358 = vpack.c.b16 %v6334, %v6330
  %v6359 = vpack.c.b16 %v6339, %v6335
  %v6360 = vpack.c.b16 %v6340, %v6336
  %v6361 = vpack.c.b16 %v6341, %v6337
  %v6362 = vpack.c.b16 %v6342, %v6338
  %v6363 = vpack.c.b16 %v6347, %v6343
  %v6364 = vpack.c.b16 %v6348, %v6344
  %v6365 = vpack.c.b16 %v6349, %v6345
  %v6366 = vpack.c.b16 %v6350, %v6346
  %v6384 = vsel %vm1902, %v4559, 0
  %6386 = vmatprep.subr.bf16.mxu0 %v6352
  %6387 = vmatpush1.bf16.msra.mxu0 %v6351
  %6388 = vmatprep.subr.bf16.mxu0 %v6356
  %6389 = vmatpush1.bf16.msra.mxu0 %v6355
  %6390 = vmatprep.subr.bf16.mxu0 %v6360
  %6391 = vmatpush1.bf16.msra.mxu0 %v6359
  %6392 = vmatprep.subr.bf16.mxu0 %v6364
  %6393 = vmatpush1.bf16.msra.mxu0 %v6363
  %6394 = vmatprep.subr.bf16.mxu0 0
  %6395 = vmatpush1.bf16.msra.mxu0 0
  %6396 = vmatprep.subr.bf16.mxu0 0
  %6397 = vmatpush1.bf16.msra.mxu0 0
  %6398 = vmatprep.subr.bf16.mxu0 0
  %6399 = vmatpush1.bf16.msra.mxu0 0
  %6400 = vmatprep.subr.bf16.mxu0 0
  %6401 = vmatpush1.bf16.msra.mxu0 0
  %6402 = vmatprep.subr.bf16.mxu0 0
  %6403 = vmatpush1.bf16.msra.mxu0 0
  %6404 = vmatprep.subr.bf16.mxu0 0
  %6405 = vmatpush1.bf16.msra.mxu0 0
  %6406 = vmatprep.subr.bf16.mxu0 0
  %6407 = vmatpush1.bf16.msra.mxu0 0
  %6408 = vmatprep.subr.bf16.mxu0 0
  %6409 = vmatpush1.bf16.msra.mxu0 0
  %6410 = vmatprep.subr.bf16.mxu0 0
  %6411 = vmatpush1.bf16.msra.mxu0 0
  %6412 = vmatprep.subr.bf16.mxu0 0
  %6413 = vmatpush1.bf16.msra.mxu0 0
  %6414 = vmatprep.subr.bf16.mxu0 0
  %6415 = vmatpush1.bf16.msra.mxu0 0
  %6416 = vmatprep.subr.bf16.mxu0 0
  %6417 = vmatpush1.bf16.msra.mxu0 0
  %6418 = vmatprep.mubr.bf16.mxu0 0
  %6419 = vmatmul.mubr.bf16.gmra.mrb[0].mxu0 %v6384
  %v6420 = vpop.f32.mrb[0].mxu0
  %v6421 = vadd.f32 0.0, %v6420
  %v6422 = vpop.f32.mrb[0].mxu0
  %v6423 = vadd.f32 0.0, %v6422
  %v6424 = vpop.f32.mrb[0].mxu0
  %v6425 = vadd.f32 0.0, %v6424
  %v6426 = vpop.f32.mrb[0].mxu0
  %v6427 = vadd.f32 0.0, %v6426
  %6428 = vdwg.mxu0
  %6429 = vmatprep.subr.bf16.mxu0 %v6354
  %6430 = vmatpush1.bf16.msra.mxu0 %v6353
  %6431 = vmatprep.subr.bf16.mxu0 %v6358
  %6432 = vmatpush1.bf16.msra.mxu0 %v6357
  %6433 = vmatprep.subr.bf16.mxu0 %v6362
  %6434 = vmatpush1.bf16.msra.mxu0 %v6361
  %6435 = vmatprep.subr.bf16.mxu0 %v6366
  %6436 = vmatpush1.bf16.msra.mxu0 %v6365
  %6437 = vmatprep.subr.bf16.mxu0 0
  %6438 = vmatpush1.bf16.msra.mxu0 0
  %6439 = vmatprep.subr.bf16.mxu0 0
  %6440 = vmatpush1.bf16.msra.mxu0 0
  %6441 = vmatprep.subr.bf16.mxu0 0
  %6442 = vmatpush1.bf16.msra.mxu0 0
  %6443 = vmatprep.subr.bf16.mxu0 0
  %6444 = vmatpush1.bf16.msra.mxu0 0
  %6445 = vmatprep.subr.bf16.mxu0 0
  %6446 = vmatpush1.bf16.msra.mxu0 0
  %6447 = vmatprep.subr.bf16.mxu0 0
  %6448 = vmatpush1.bf16.msra.mxu0 0
  %6449 = vmatprep.subr.bf16.mxu0 0
  %6450 = vmatpush1.bf16.msra.mxu0 0
  %6451 = vmatprep.subr.bf16.mxu0 0
  %6452 = vmatpush1.bf16.msra.mxu0 0
  %6453 = vmatprep.subr.bf16.mxu0 0
  %6454 = vmatpush1.bf16.msra.mxu0 0
  %6455 = vmatprep.subr.bf16.mxu0 0
  %6456 = vmatpush1.bf16.msra.mxu0 0
  %6457 = vmatprep.subr.bf16.mxu0 0
  %6458 = vmatpush1.bf16.msra.mxu0 0
  %6459 = vmatprep.subr.bf16.mxu0 0
  %6460 = vmatpush1.bf16.msra.mxu0 0
  %6461 = vmatprep.mubr.bf16.mxu0 0
  %6462 = vmatmul.mubr.bf16.gmra.mrb[0].mxu0 %v6384
  %v6463 = vpop.f32.mrb[0].mxu0
  %v6464 = vadd.f32 0.0, %v6463
  %v6465 = vpop.f32.mrb[0].mxu0
  %v6466 = vadd.f32 0.0, %v6465
  %v6467 = vpop.f32.mrb[0].mxu0
  %v6468 = vadd.f32 0.0, %v6467
  %v6469 = vpop.f32.mrb[0].mxu0
  %v6470 = vadd.f32 0.0, %v6469
  %6471 = vdwg.mxu0
  %v6472 = vadd.f32 %v6279, %v6421
  %v6473 = vadd.f32 %v6280, %v6423
  %v6474 = vadd.f32 %v6281, %v6464
  %v6475 = vadd.f32 %v6282, %v6466
  %v6476 = vadd.f32 %v6283, %v6425
  %v6477 = vadd.f32 %v6284, %v6427
  %v6478 = vadd.f32 %v6285, %v6468
  %v6479 = vadd.f32 %v6286, %v6470
  %v6480 = vld [vmem:[%s8 + $0x500] sm:$0xff]
  %v6481 = vld [vmem:[%s8 + $0x508] sm:$0xff]
  %v6482 = vld [vmem:[%s8 + $0x510] sm:$0xff]
  %v6483 = vld [vmem:[%s8 + $0x518] sm:$0xff]
  %v6484 = vld [vmem:[%s8 + $0x520] sm:$0xff]
  %v6485 = vld [vmem:[%s8 + $0x528] sm:$0xff]
  %v6486 = vld [vmem:[%s8 + $0x530] sm:$0xff]
  %v6487 = vld [vmem:[%s8 + $0x538] sm:$0xff]
  %v6488 = vld [vmem:[%s8 + $0x540] sm:$0xff]
  %v6489 = vld [vmem:[%s8 + $0x548] sm:$0xff]
  %v6490 = vld [vmem:[%s8 + $0x550] sm:$0xff]
  %v6491 = vld [vmem:[%s8 + $0x558] sm:$0xff]
  %v6492 = vld [vmem:[%s8 + $0x560] sm:$0xff]
  %v6493 = vld [vmem:[%s8 + $0x568] sm:$0xff]
  %v6494 = vld [vmem:[%s8 + $0x570] sm:$0xff]
  %v6495 = vld [vmem:[%s8 + $0x578] sm:$0xff]
  %v6512 = vunpack.c.l.b16 %v6480
  %v6513 = vunpack.c.h.b16 %v6480
  %v6514 = vunpack.c.l.b16 %v6481
  %v6515 = vunpack.c.h.b16 %v6481
  %v6516 = vunpack.c.l.b16 %v6482
  %v6517 = vunpack.c.h.b16 %v6482
  %v6518 = vunpack.c.l.b16 %v6483
  %v6519 = vunpack.c.h.b16 %v6483
  %v6520 = vunpack.c.l.b16 %v6484
  %v6521 = vunpack.c.h.b16 %v6484
  %v6522 = vunpack.c.l.b16 %v6485
  %v6523 = vunpack.c.h.b16 %v6485
  %v6524 = vunpack.c.l.b16 %v6486
  %v6525 = vunpack.c.h.b16 %v6486
  %v6526 = vunpack.c.l.b16 %v6487
  %v6527 = vunpack.c.h.b16 %v6487
  %v6528 = vunpack.c.l.b16 %v6488
  %v6529 = vunpack.c.h.b16 %v6488
  %v6530 = vunpack.c.l.b16 %v6489
  %v6531 = vunpack.c.h.b16 %v6489
  %v6532 = vunpack.c.l.b16 %v6490
  %v6533 = vunpack.c.h.b16 %v6490
  %v6534 = vunpack.c.l.b16 %v6491
  %v6535 = vunpack.c.h.b16 %v6491
  %v6536 = vunpack.c.l.b16 %v6492
  %v6537 = vunpack.c.h.b16 %v6492
  %v6538 = vunpack.c.l.b16 %v6493
  %v6539 = vunpack.c.h.b16 %v6493
  %v6540 = vunpack.c.l.b16 %v6494
  %v6541 = vunpack.c.h.b16 %v6494
  %v6542 = vunpack.c.l.b16 %v6495
  %v6543 = vunpack.c.h.b16 %v6495
  %v6544 = vpack.c.b16 %v6516, %v6512
  %v6545 = vpack.c.b16 %v6517, %v6513
  %v6546 = vpack.c.b16 %v6518, %v6514
  %v6547 = vpack.c.b16 %v6519, %v6515
  %v6548 = vpack.c.b16 %v6524, %v6520
  %v6549 = vpack.c.b16 %v6525, %v6521
  %v6550 = vpack.c.b16 %v6526, %v6522
  %v6551 = vpack.c.b16 %v6527, %v6523
  %v6552 = vpack.c.b16 %v6532, %v6528
  %v6553 = vpack.c.b16 %v6533, %v6529
  %v6554 = vpack.c.b16 %v6534, %v6530
  %v6555 = vpack.c.b16 %v6535, %v6531
  %v6556 = vpack.c.b16 %v6540, %v6536
  %v6557 = vpack.c.b16 %v6541, %v6537
  %v6558 = vpack.c.b16 %v6542, %v6538
  %v6559 = vpack.c.b16 %v6543, %v6539
  %v6577 = vsel %vm1902, %v4560, 0
  %6579 = vmatprep.subr.bf16.mxu0 %v6545
  %6580 = vmatpush1.bf16.msra.mxu0 %v6544
  %6581 = vmatprep.subr.bf16.mxu0 %v6549
  %6582 = vmatpush1.bf16.msra.mxu0 %v6548
  %6583 = vmatprep.subr.bf16.mxu0 %v6553
  %6584 = vmatpush1.bf16.msra.mxu0 %v6552
  %6585 = vmatprep.subr.bf16.mxu0 %v6557
  %6586 = vmatpush1.bf16.msra.mxu0 %v6556
  %6587 = vmatprep.subr.bf16.mxu0 0
  %6588 = vmatpush1.bf16.msra.mxu0 0
  %6589 = vmatprep.subr.bf16.mxu0 0
  %6590 = vmatpush1.bf16.msra.mxu0 0
  %6591 = vmatprep.subr.bf16.mxu0 0
  %6592 = vmatpush1.bf16.msra.mxu0 0
  %6593 = vmatprep.subr.bf16.mxu0 0
  %6594 = vmatpush1.bf16.msra.mxu0 0
  %6595 = vmatprep.subr.bf16.mxu0 0
  %6596 = vmatpush1.bf16.msra.mxu0 0
  %6597 = vmatprep.subr.bf16.mxu0 0
  %6598 = vmatpush1.bf16.msra.mxu0 0
  %6599 = vmatprep.subr.bf16.mxu0 0
  %6600 = vmatpush1.bf16.msra.mxu0 0
  %6601 = vmatprep.subr.bf16.mxu0 0
  %6602 = vmatpush1.bf16.msra.mxu0 0
  %6603 = vmatprep.subr.bf16.mxu0 0
  %6604 = vmatpush1.bf16.msra.mxu0 0
  %6605 = vmatprep.subr.bf16.mxu0 0
  %6606 = vmatpush1.bf16.msra.mxu0 0
  %6607 = vmatprep.subr.bf16.mxu0 0
  %6608 = vmatpush1.bf16.msra.mxu0 0
  %6609 = vmatprep.subr.bf16.mxu0 0
  %6610 = vmatpush1.bf16.msra.mxu0 0
  %6611 = vmatprep.mubr.bf16.mxu0 0
  %6612 = vmatmul.mubr.bf16.gmra.mrb[0].mxu0 %v6577
  %v6613 = vpop.f32.mrb[0].mxu0
  %v6614 = vadd.f32 0.0, %v6613
  %v6615 = vpop.f32.mrb[0].mxu0
  %v6616 = vadd.f32 0.0, %v6615
  %v6617 = vpop.f32.mrb[0].mxu0
  %v6618 = vadd.f32 0.0, %v6617
  %v6619 = vpop.f32.mrb[0].mxu0
  %v6620 = vadd.f32 0.0, %v6619
  %6621 = vdwg.mxu0
  %6622 = vmatprep.subr.bf16.mxu0 %v6547
  %6623 = vmatpush1.bf16.msra.mxu0 %v6546
  %6624 = vmatprep.subr.bf16.mxu0 %v6551
  %6625 = vmatpush1.bf16.msra.mxu0 %v6550
  %6626 = vmatprep.subr.bf16.mxu0 %v6555
  %6627 = vmatpush1.bf16.msra.mxu0 %v6554
  %6628 = vmatprep.subr.bf16.mxu0 %v6559
  %6629 = vmatpush1.bf16.msra.mxu0 %v6558
  %6630 = vmatprep.subr.bf16.mxu0 0
  %6631 = vmatpush1.bf16.msra.mxu0 0
  %6632 = vmatprep.subr.bf16.mxu0 0
  %6633 = vmatpush1.bf16.msra.mxu0 0
  %6634 = vmatprep.subr.bf16.mxu0 0
  %6635 = vmatpush1.bf16.msra.mxu0 0
  %6636 = vmatprep.subr.bf16.mxu0 0
  %6637 = vmatpush1.bf16.msra.mxu0 0
  %6638 = vmatprep.subr.bf16.mxu0 0
  %6639 = vmatpush1.bf16.msra.mxu0 0
  %6640 = vmatprep.subr.bf16.mxu0 0
  %6641 = vmatpush1.bf16.msra.mxu0 0
  %6642 = vmatprep.subr.bf16.mxu0 0
  %6643 = vmatpush1.bf16.msra.mxu0 0
  %6644 = vmatprep.subr.bf16.mxu0 0
  %6645 = vmatpush1.bf16.msra.mxu0 0
  %6646 = vmatprep.subr.bf16.mxu0 0
  %6647 = vmatpush1.bf16.msra.mxu0 0
  %6648 = vmatprep.subr.bf16.mxu0 0
  %6649 = vmatpush1.bf16.msra.mxu0 0
  %6650 = vmatprep.subr.bf16.mxu0 0
  %6651 = vmatpush1.bf16.msra.mxu0 0
  %6652 = vmatprep.subr.bf16.mxu0 0
  %6653 = vmatpush1.bf16.msra.mxu0 0
  %6654 = vmatprep.mubr.bf16.mxu0 0
  %6655 = vmatmul.mubr.bf16.gmra.mrb[0].mxu0 %v6577
  %v6656 = vpop.f32.mrb[0].mxu0
  %v6657 = vadd.f32 0.0, %v6656
  %v6658 = vpop.f32.mrb[0].mxu0
  %v6659 = vadd.f32 0.0, %v6658
  %v6660 = vpop.f32.mrb[0].mxu0
  %v6661 = vadd.f32 0.0, %v6660
  %v6662 = vpop.f32.mrb[0].mxu0
  %v6663 = vadd.f32 0.0, %v6662
  %6664 = vdwg.mxu0
  %v6665 = vadd.f32 %v6472, %v6614
  %v6666 = vadd.f32 %v6473, %v6616
  %v6667 = vadd.f32 %v6474, %v6657
  %v6668 = vadd.f32 %v6475, %v6659
  %v6669 = vadd.f32 %v6476, %v6618
  %v6670 = vadd.f32 %v6477, %v6620
  %v6671 = vadd.f32 %v6478, %v6661
  %v6672 = vadd.f32 %v6479, %v6663
  %v6673 = vld [vmem:[%s8 + $0x580] sm:$0xff]
  %v6674 = vld [vmem:[%s8 + $0x588] sm:$0xff]
  %v6675 = vld [vmem:[%s8 + $0x590] sm:$0xff]
  %v6676 = vld [vmem:[%s8 + $0x598] sm:$0xff]
  %v6677 = vld [vmem:[%s8 + $0x5a0] sm:$0xff]
  %v6678 = vld [vmem:[%s8 + $0x5a8] sm:$0xff]
  %v6679 = vld [vmem:[%s8 + $0x5b0] sm:$0xff]
  %v6680 = vld [vmem:[%s8 + $0x5b8] sm:$0xff]
  %v6681 = vld [vmem:[%s8 + $0x5c0] sm:$0xff]
  %v6682 = vld [vmem:[%s8 + $0x5c8] sm:$0xff]
  %v6683 = vld [vmem:[%s8 + $0x5d0] sm:$0xff]
  %v6684 = vld [vmem:[%s8 + $0x5d8] sm:$0xff]
  %v6685 = vld [vmem:[%s8 + $0x5e0] sm:$0xff]
  %v6686 = vld [vmem:[%s8 + $0x5e8] sm:$0xff]
  %v6687 = vld [vmem:[%s8 + $0x5f0] sm:$0xff]
  %v6688 = vld [vmem:[%s8 + $0x5f8] sm:$0xff]
  %v6705 = vunpack.c.l.b16 %v6673
  %v6706 = vunpack.c.h.b16 %v6673
  %v6707 = vunpack.c.l.b16 %v6674
  %v6708 = vunpack.c.h.b16 %v6674
  %v6709 = vunpack.c.l.b16 %v6675
  %v6710 = vunpack.c.h.b16 %v6675
  %v6711 = vunpack.c.l.b16 %v6676
  %v6712 = vunpack.c.h.b16 %v6676
  %v6713 = vunpack.c.l.b16 %v6677
  %v6714 = vunpack.c.h.b16 %v6677
  %v6715 = vunpack.c.l.b16 %v6678
  %v6716 = vunpack.c.h.b16 %v6678
  %v6717 = vunpack.c.l.b16 %v6679
  %v6718 = vunpack.c.h.b16 %v6679
  %v6719 = vunpack.c.l.b16 %v6680
  %v6720 = vunpack.c.h.b16 %v6680
  %v6721 = vunpack.c.l.b16 %v6681
  %v6722 = vunpack.c.h.b16 %v6681
  %v6723 = vunpack.c.l.b16 %v6682
  %v6724 = vunpack.c.h.b16 %v6682
  %v6725 = vunpack.c.l.b16 %v6683
  %v6726 = vunpack.c.h.b16 %v6683
  %v6727 = vunpack.c.l.b16 %v6684
  %v6728 = vunpack.c.h.b16 %v6684
  %v6729 = vunpack.c.l.b16 %v6685
  %v6730 = vunpack.c.h.b16 %v6685
  %v6731 = vunpack.c.l.b16 %v6686
  %v6732 = vunpack.c.h.b16 %v6686
  %v6733 = vunpack.c.l.b16 %v6687
  %v6734 = vunpack.c.h.b16 %v6687
  %v6735 = vunpack.c.l.b16 %v6688
  %v6736 = vunpack.c.h.b16 %v6688
  %v6737 = vpack.c.b16 %v6709, %v6705
  %v6738 = vpack.c.b16 %v6710, %v6706
  %v6739 = vpack.c.b16 %v6711, %v6707
  %v6740 = vpack.c.b16 %v6712, %v6708
  %v6741 = vpack.c.b16 %v6717, %v6713
  %v6742 = vpack.c.b16 %v6718, %v6714
  %v6743 = vpack.c.b16 %v6719, %v6715
  %v6744 = vpack.c.b16 %v6720, %v6716
  %v6745 = vpack.c.b16 %v6725, %v6721
  %v6746 = vpack.c.b16 %v6726, %v6722
  %v6747 = vpack.c.b16 %v6727, %v6723
  %v6748 = vpack.c.b16 %v6728, %v6724
  %v6749 = vpack.c.b16 %v6733, %v6729
  %v6750 = vpack.c.b16 %v6734, %v6730
  %v6751 = vpack.c.b16 %v6735, %v6731
  %v6752 = vpack.c.b16 %v6736, %v6732
  %v6770 = vsel %vm1902, %v4561, 0
  %6772 = vmatprep.subr.bf16.mxu0 %v6738
  %6773 = vmatpush1.bf16.msra.mxu0 %v6737
  %6774 = vmatprep.subr.bf16.mxu0 %v6742
  %6775 = vmatpush1.bf16.msra.mxu0 %v6741
  %6776 = vmatprep.subr.bf16.mxu0 %v6746
  %6777 = vmatpush1.bf16.msra.mxu0 %v6745
  %6778 = vmatprep.subr.bf16.mxu0 %v6750
  %6779 = vmatpush1.bf16.msra.mxu0 %v6749
  %6780 = vmatprep.subr.bf16.mxu0 0
  %6781 = vmatpush1.bf16.msra.mxu0 0
  %6782 = vmatprep.subr.bf16.mxu0 0
  %6783 = vmatpush1.bf16.msra.mxu0 0
  %6784 = vmatprep.subr.bf16.mxu0 0
  %6785 = vmatpush1.bf16.msra.mxu0 0
  %6786 = vmatprep.subr.bf16.mxu0 0
  %6787 = vmatpush1.bf16.msra.mxu0 0
  %6788 = vmatprep.subr.bf16.mxu0 0
  %6789 = vmatpush1.bf16.msra.mxu0 0
  %6790 = vmatprep.subr.bf16.mxu0 0
  %6791 = vmatpush1.bf16.msra.mxu0 0
  %6792 = vmatprep.subr.bf16.mxu0 0
  %6793 = vmatpush1.bf16.msra.mxu0 0
  %6794 = vmatprep.subr.bf16.mxu0 0
  %6795 = vmatpush1.bf16.msra.mxu0 0
  %6796 = vmatprep.subr.bf16.mxu0 0
  %6797 = vmatpush1.bf16.msra.mxu0 0
  %6798 = vmatprep.subr.bf16.mxu0 0
  %6799 = vmatpush1.bf16.msra.mxu0 0
  %6800 = vmatprep.subr.bf16.mxu0 0
  %6801 = vmatpush1.bf16.msra.mxu0 0
  %6802 = vmatprep.subr.bf16.mxu0 0
  %6803 = vmatpush1.bf16.msra.mxu0 0
  %6804 = vmatprep.mubr.bf16.mxu0 0
  %6805 = vmatmul.mubr.bf16.gmra.mrb[0].mxu0 %v6770
  %v6806 = vpop.f32.mrb[0].mxu0
  %v6807 = vadd.f32 0.0, %v6806
  %v6808 = vpop.f32.mrb[0].mxu0
  %v6809 = vadd.f32 0.0, %v6808
  %v6810 = vpop.f32.mrb[0].mxu0
  %v6811 = vadd.f32 0.0, %v6810
  %v6812 = vpop.f32.mrb[0].mxu0
  %v6813 = vadd.f32 0.0, %v6812
  %6814 = vdwg.mxu0
  %6815 = vmatprep.subr.bf16.mxu0 %v6740
  %6816 = vmatpush1.bf16.msra.mxu0 %v6739
  %6817 = vmatprep.subr.bf16.mxu0 %v6744
  %6818 = vmatpush1.bf16.msra.mxu0 %v6743
  %6819 = vmatprep.subr.bf16.mxu0 %v6748
  %6820 = vmatpush1.bf16.msra.mxu0 %v6747
  %6821 = vmatprep.subr.bf16.mxu0 %v6752
  %6822 = vmatpush1.bf16.msra.mxu0 %v6751
  %6823 = vmatprep.subr.bf16.mxu0 0
  %6824 = vmatpush1.bf16.msra.mxu0 0
  %6825 = vmatprep.subr.bf16.mxu0 0
  %6826 = vmatpush1.bf16.msra.mxu0 0
  %6827 = vmatprep.subr.bf16.mxu0 0
  %6828 = vmatpush1.bf16.msra.mxu0 0
  %6829 = vmatprep.subr.bf16.mxu0 0
  %6830 = vmatpush1.bf16.msra.mxu0 0
  %6831 = vmatprep.subr.bf16.mxu0 0
  %6832 = vmatpush1.bf16.msra.mxu0 0
  %6833 = vmatprep.subr.bf16.mxu0 0
  %6834 = vmatpush1.bf16.msra.mxu0 0
  %6835 = vmatprep.subr.bf16.mxu0 0
  %6836 = vmatpush1.bf16.msra.mxu0 0
  %6837 = vmatprep.subr.bf16.mxu0 0
  %6838 = vmatpush1.bf16.msra.mxu0 0
  %6839 = vmatprep.subr.bf16.mxu0 0
  %6840 = vmatpush1.bf16.msra.mxu0 0
  %6841 = vmatprep.subr.bf16.mxu0 0
  %6842 = vmatpush1.bf16.msra.mxu0 0
  %6843 = vmatprep.subr.bf16.mxu0 0
  %6844 = vmatpush1.bf16.msra.mxu0 0
  %6845 = vmatprep.subr.bf16.mxu0 0
  %6846 = vmatpush1.bf16.msra.mxu0 0
  %6847 = vmatprep.mubr.bf16.mxu0 0
  %6848 = vmatmul.mubr.bf16.gmra.mrb[0].mxu0 %v6770
  %v6849 = vpop.f32.mrb[0].mxu0
  %v6850 = vadd.f32 0.0, %v6849
  %v6851 = vpop.f32.mrb[0].mxu0
  %v6852 = vadd.f32 0.0, %v6851
  %v6853 = vpop.f32.mrb[0].mxu0
  %v6854 = vadd.f32 0.0, %v6853
  %v6855 = vpop.f32.mrb[0].mxu0
  %v6856 = vadd.f32 0.0, %v6855
  %6857 = vdwg.mxu0
  %v6858 = vadd.f32 %v6665, %v6807
  %v6859 = vadd.f32 %v6666, %v6809
  %v6860 = vadd.f32 %v6667, %v6850
  %v6861 = vadd.f32 %v6668, %v6852
  %v6862 = vadd.f32 %v6669, %v6811
  %v6863 = vadd.f32 %v6670, %v6813
  %v6864 = vadd.f32 %v6671, %v6854
  %v6865 = vadd.f32 %v6672, %v6856
  %v6866 = vld [vmem:[%s8 + $0x600] sm:$0xff]
  %v6867 = vld [vmem:[%s8 + $0x608] sm:$0xff]
  %v6868 = vld [vmem:[%s8 + $0x610] sm:$0xff]
  %v6869 = vld [vmem:[%s8 + $0x618] sm:$0xff]
  %v6870 = vld [vmem:[%s8 + $0x620] sm:$0xff]
  %v6871 = vld [vmem:[%s8 + $0x628] sm:$0xff]
  %v6872 = vld [vmem:[%s8 + $0x630] sm:$0xff]
  %v6873 = vld [vmem:[%s8 + $0x638] sm:$0xff]
  %v6874 = vld [vmem:[%s8 + $0x640] sm:$0xff]
  %v6875 = vld [vmem:[%s8 + $0x648] sm:$0xff]
  %v6876 = vld [vmem:[%s8 + $0x650] sm:$0xff]
  %v6877 = vld [vmem:[%s8 + $0x658] sm:$0xff]
  %v6878 = vld [vmem:[%s8 + $0x660] sm:$0xff]
  %v6879 = vld [vmem:[%s8 + $0x668] sm:$0xff]
  %v6880 = vld [vmem:[%s8 + $0x670] sm:$0xff]
  %v6881 = vld [vmem:[%s8 + $0x678] sm:$0xff]
  %v6898 = vunpack.c.l.b16 %v6866
  %v6899 = vunpack.c.h.b16 %v6866
  %v6900 = vunpack.c.l.b16 %v6867
  %v6901 = vunpack.c.h.b16 %v6867
  %v6902 = vunpack.c.l.b16 %v6868
  %v6903 = vunpack.c.h.b16 %v6868
  %v6904 = vunpack.c.l.b16 %v6869
  %v6905 = vunpack.c.h.b16 %v6869
  %v6906 = vunpack.c.l.b16 %v6870
  %v6907 = vunpack.c.h.b16 %v6870
  %v6908 = vunpack.c.l.b16 %v6871
  %v6909 = vunpack.c.h.b16 %v6871
  %v6910 = vunpack.c.l.b16 %v6872
  %v6911 = vunpack.c.h.b16 %v6872
  %v6912 = vunpack.c.l.b16 %v6873
  %v6913 = vunpack.c.h.b16 %v6873
  %v6914 = vunpack.c.l.b16 %v6874
  %v6915 = vunpack.c.h.b16 %v6874
  %v6916 = vunpack.c.l.b16 %v6875
  %v6917 = vunpack.c.h.b16 %v6875
  %v6918 = vunpack.c.l.b16 %v6876
  %v6919 = vunpack.c.h.b16 %v6876
  %v6920 = vunpack.c.l.b16 %v6877
  %v6921 = vunpack.c.h.b16 %v6877
  %v6922 = vunpack.c.l.b16 %v6878
  %v6923 = vunpack.c.h.b16 %v6878
  %v6924 = vunpack.c.l.b16 %v6879
  %v6925 = vunpack.c.h.b16 %v6879
  %v6926 = vunpack.c.l.b16 %v6880
  %v6927 = vunpack.c.h.b16 %v6880
  %v6928 = vunpack.c.l.b16 %v6881
  %v6929 = vunpack.c.h.b16 %v6881
  %v6930 = vpack.c.b16 %v6902, %v6898
  %v6931 = vpack.c.b16 %v6903, %v6899
  %v6932 = vpack.c.b16 %v6904, %v6900
  %v6933 = vpack.c.b16 %v6905, %v6901
  %v6934 = vpack.c.b16 %v6910, %v6906
  %v6935 = vpack.c.b16 %v6911, %v6907
  %v6936 = vpack.c.b16 %v6912, %v6908
  %v6937 = vpack.c.b16 %v6913, %v6909
  %v6938 = vpack.c.b16 %v6918, %v6914
  %v6939 = vpack.c.b16 %v6919, %v6915
  %v6940 = vpack.c.b16 %v6920, %v6916
  %v6941 = vpack.c.b16 %v6921, %v6917
  %v6942 = vpack.c.b16 %v6926, %v6922
  %v6943 = vpack.c.b16 %v6927, %v6923
  %v6944 = vpack.c.b16 %v6928, %v6924
  %v6945 = vpack.c.b16 %v6929, %v6925
  %v6963 = vsel %vm1902, %v4562, 0
  %6965 = vmatprep.subr.bf16.mxu0 %v6931
  %6966 = vmatpush1.bf16.msra.mxu0 %v6930
  %6967 = vmatprep.subr.bf16.mxu0 %v6935
  %6968 = vmatpush1.bf16.msra.mxu0 %v6934
  %6969 = vmatprep.subr.bf16.mxu0 %v6939
  %6970 = vmatpush1.bf16.msra.mxu0 %v6938
  %6971 = vmatprep.subr.bf16.mxu0 %v6943
  %6972 = vmatpush1.bf16.msra.mxu0 %v6942
  %6973 = vmatprep.subr.bf16.mxu0 0
  %6974 = vmatpush1.bf16.msra.mxu0 0
  %6975 = vmatprep.subr.bf16.mxu0 0
  %6976 = vmatpush1.bf16.msra.mxu0 0
  %6977 = vmatprep.subr.bf16.mxu0 0
  %6978 = vmatpush1.bf16.msra.mxu0 0
  %6979 = vmatprep.subr.bf16.mxu0 0
  %6980 = vmatpush1.bf16.msra.mxu0 0
  %6981 = vmatprep.subr.bf16.mxu0 0
  %6982 = vmatpush1.bf16.msra.mxu0 0
  %6983 = vmatprep.subr.bf16.mxu0 0
  %6984 = vmatpush1.bf16.msra.mxu0 0
  %6985 = vmatprep.subr.bf16.mxu0 0
  %6986 = vmatpush1.bf16.msra.mxu0 0
  %6987 = vmatprep.subr.bf16.mxu0 0
  %6988 = vmatpush1.bf16.msra.mxu0 0
  %6989 = vmatprep.subr.bf16.mxu0 0
  %6990 = vmatpush1.bf16.msra.mxu0 0
  %6991 = vmatprep.subr.bf16.mxu0 0
  %6992 = vmatpush1.bf16.msra.mxu0 0
  %6993 = vmatprep.subr.bf16.mxu0 0
  %6994 = vmatpush1.bf16.msra.mxu0 0
  %6995 = vmatprep.subr.bf16.mxu0 0
  %6996 = vmatpush1.bf16.msra.mxu0 0
  %6997 = vmatprep.mubr.bf16.mxu0 0
  %6998 = vmatmul.mubr.bf16.gmra.mrb[0].mxu0 %v6963
  %v6999 = vpop.f32.mrb[0].mxu0
  %v7000 = vadd.f32 0.0, %v6999
  %v7001 = vpop.f32.mrb[0].mxu0
  %v7002 = vadd.f32 0.0, %v7001
  %v7003 = vpop.f32.mrb[0].mxu0
  %v7004 = vadd.f32 0.0, %v7003
  %v7005 = vpop.f32.mrb[0].mxu0
  %v7006 = vadd.f32 0.0, %v7005
  %7007 = vdwg.mxu0
  %7008 = vmatprep.subr.bf16.mxu0 %v6933
  %7009 = vmatpush1.bf16.msra.mxu0 %v6932
  %7010 = vmatprep.subr.bf16.mxu0 %v6937
  %7011 = vmatpush1.bf16.msra.mxu0 %v6936
  %7012 = vmatprep.subr.bf16.mxu0 %v6941
  %7013 = vmatpush1.bf16.msra.mxu0 %v6940
  %7014 = vmatprep.subr.bf16.mxu0 %v6945
  %7015 = vmatpush1.bf16.msra.mxu0 %v6944
  %7016 = vmatprep.subr.bf16.mxu0 0
  %7017 = vmatpush1.bf16.msra.mxu0 0
  %7018 = vmatprep.subr.bf16.mxu0 0
  %7019 = vmatpush1.bf16.msra.mxu0 0
  %7020 = vmatprep.subr.bf16.mxu0 0
  %7021 = vmatpush1.bf16.msra.mxu0 0
  %7022 = vmatprep.subr.bf16.mxu0 0
  %7023 = vmatpush1.bf16.msra.mxu0 0
  %7024 = vmatprep.subr.bf16.mxu0 0
  %7025 = vmatpush1.bf16.msra.mxu0 0
  %7026 = vmatprep.subr.bf16.mxu0 0
  %7027 = vmatpush1.bf16.msra.mxu0 0
  %7028 = vmatprep.subr.bf16.mxu0 0
  %7029 = vmatpush1.bf16.msra.mxu0 0
  %7030 = vmatprep.subr.bf16.mxu0 0
  %7031 = vmatpush1.bf16.msra.mxu0 0
  %7032 = vmatprep.subr.bf16.mxu0 0
  %7033 = vmatpush1.bf16.msra.mxu0 0
  %7034 = vmatprep.subr.bf16.mxu0 0
  %7035 = vmatpush1.bf16.msra.mxu0 0
  %7036 = vmatprep.subr.bf16.mxu0 0
  %7037 = vmatpush1.bf16.msra.mxu0 0
  %7038 = vmatprep.subr.bf16.mxu0 0
  %7039 = vmatpush1.bf16.msra.mxu0 0
  %7040 = vmatprep.mubr.bf16.mxu0 0
  %7041 = vmatmul.mubr.bf16.gmra.mrb[0].mxu0 %v6963
  %v7042 = vpop.f32.mrb[0].mxu0
  %v7043 = vadd.f32 0.0, %v7042
  %v7044 = vpop.f32.mrb[0].mxu0
  %v7045 = vadd.f32 0.0, %v7044
  %v7046 = vpop.f32.mrb[0].mxu0
  %v7047 = vadd.f32 0.0, %v7046
  %v7048 = vpop.f32.mrb[0].mxu0
  %v7049 = vadd.f32 0.0, %v7048
  %7050 = vdwg.mxu0
  %v7051 = vadd.f32 %v6858, %v7000
  %v7052 = vadd.f32 %v6859, %v7002
  %v7053 = vadd.f32 %v6860, %v7043
  %v7054 = vadd.f32 %v6861, %v7045
  %v7055 = vadd.f32 %v6862, %v7004
  %v7056 = vadd.f32 %v6863, %v7006
  %v7057 = vadd.f32 %v6864, %v7047
  %v7058 = vadd.f32 %v6865, %v7049
  %v7059 = vld [vmem:[%s8 + $0x680] sm:$0xff]
  %v7060 = vld [vmem:[%s8 + $0x688] sm:$0xff]
  %v7061 = vld [vmem:[%s8 + $0x690] sm:$0xff]
  %v7062 = vld [vmem:[%s8 + $0x698] sm:$0xff]
  %v7063 = vld [vmem:[%s8 + $0x6a0] sm:$0xff]
  %v7064 = vld [vmem:[%s8 + $0x6a8] sm:$0xff]
  %v7065 = vld [vmem:[%s8 + $0x6b0] sm:$0xff]
  %v7066 = vld [vmem:[%s8 + $0x6b8] sm:$0xff]
  %v7067 = vld [vmem:[%s8 + $0x6c0] sm:$0xff]
  %v7068 = vld [vmem:[%s8 + $0x6c8] sm:$0xff]
  %v7069 = vld [vmem:[%s8 + $0x6d0] sm:$0xff]
  %v7070 = vld [vmem:[%s8 + $0x6d8] sm:$0xff]
  %v7071 = vld [vmem:[%s8 + $0x6e0] sm:$0xff]
  %v7072 = vld [vmem:[%s8 + $0x6e8] sm:$0xff]
  %v7073 = vld [vmem:[%s8 + $0x6f0] sm:$0xff]
  %v7074 = vld [vmem:[%s8 + $0x6f8] sm:$0xff]
  %v7091 = vunpack.c.l.b16 %v7059
  %v7092 = vunpack.c.h.b16 %v7059
  %v7093 = vunpack.c.l.b16 %v7060
  %v7094 = vunpack.c.h.b16 %v7060
  %v7095 = vunpack.c.l.b16 %v7061
  %v7096 = vunpack.c.h.b16 %v7061
  %v7097 = vunpack.c.l.b16 %v7062
  %v7098 = vunpack.c.h.b16 %v7062
  %v7099 = vunpack.c.l.b16 %v7063
  %v7100 = vunpack.c.h.b16 %v7063
  %v7101 = vunpack.c.l.b16 %v7064
  %v7102 = vunpack.c.h.b16 %v7064
  %v7103 = vunpack.c.l.b16 %v7065
  %v7104 = vunpack.c.h.b16 %v7065
  %v7105 = vunpack.c.l.b16 %v7066
  %v7106 = vunpack.c.h.b16 %v7066
  %v7107 = vunpack.c.l.b16 %v7067
  %v7108 = vunpack.c.h.b16 %v7067
  %v7109 = vunpack.c.l.b16 %v7068
  %v7110 = vunpack.c.h.b16 %v7068
  %v7111 = vunpack.c.l.b16 %v7069
  %v7112 = vunpack.c.h.b16 %v7069
  %v7113 = vunpack.c.l.b16 %v7070
  %v7114 = vunpack.c.h.b16 %v7070
  %v7115 = vunpack.c.l.b16 %v7071
  %v7116 = vunpack.c.h.b16 %v7071
  %v7117 = vunpack.c.l.b16 %v7072
  %v7118 = vunpack.c.h.b16 %v7072
  %v7119 = vunpack.c.l.b16 %v7073
  %v7120 = vunpack.c.h.b16 %v7073
  %v7121 = vunpack.c.l.b16 %v7074
  %v7122 = vunpack.c.h.b16 %v7074
  %v7123 = vpack.c.b16 %v7095, %v7091
  %v7124 = vpack.c.b16 %v7096, %v7092
  %v7125 = vpack.c.b16 %v7097, %v7093
  %v7126 = vpack.c.b16 %v7098, %v7094
  %v7127 = vpack.c.b16 %v7103, %v7099
  %v7128 = vpack.c.b16 %v7104, %v7100
  %v7129 = vpack.c.b16 %v7105, %v7101
  %v7130 = vpack.c.b16 %v7106, %v7102
  %v7131 = vpack.c.b16 %v7111, %v7107
  %v7132 = vpack.c.b16 %v7112, %v7108
  %v7133 = vpack.c.b16 %v7113, %v7109
  %v7134 = vpack.c.b16 %v7114, %v7110
  %v7135 = vpack.c.b16 %v7119, %v7115
  %v7136 = vpack.c.b16 %v7120, %v7116
  %v7137 = vpack.c.b16 %v7121, %v7117
  %v7138 = vpack.c.b16 %v7122, %v7118
  %v7156 = vsel %vm1902, %v4563, 0
  %7158 = vmatprep.subr.bf16.mxu0 %v7124
  %7159 = vmatpush1.bf16.msra.mxu0 %v7123
  %7160 = vmatprep.subr.bf16.mxu0 %v7128
  %7161 = vmatpush1.bf16.msra.mxu0 %v7127
  %7162 = vmatprep.subr.bf16.mxu0 %v7132
  %7163 = vmatpush1.bf16.msra.mxu0 %v7131
  %7164 = vmatprep.subr.bf16.mxu0 %v7136
  %7165 = vmatpush1.bf16.msra.mxu0 %v7135
  %7166 = vmatprep.subr.bf16.mxu0 0
  %7167 = vmatpush1.bf16.msra.mxu0 0
  %7168 = vmatprep.subr.bf16.mxu0 0
  %7169 = vmatpush1.bf16.msra.mxu0 0
  %7170 = vmatprep.subr.bf16.mxu0 0
  %7171 = vmatpush1.bf16.msra.mxu0 0
  %7172 = vmatprep.subr.bf16.mxu0 0
  %7173 = vmatpush1.bf16.msra.mxu0 0
  %7174 = vmatprep.subr.bf16.mxu0 0
  %7175 = vmatpush1.bf16.msra.mxu0 0
  %7176 = vmatprep.subr.bf16.mxu0 0
  %7177 = vmatpush1.bf16.msra.mxu0 0
  %7178 = vmatprep.subr.bf16.mxu0 0
  %7179 = vmatpush1.bf16.msra.mxu0 0
  %7180 = vmatprep.subr.bf16.mxu0 0
  %7181 = vmatpush1.bf16.msra.mxu0 0
  %7182 = vmatprep.subr.bf16.mxu0 0
  %7183 = vmatpush1.bf16.msra.mxu0 0
  %7184 = vmatprep.subr.bf16.mxu0 0
  %7185 = vmatpush1.bf16.msra.mxu0 0
  %7186 = vmatprep.subr.bf16.mxu0 0
  %7187 = vmatpush1.bf16.msra.mxu0 0
  %7188 = vmatprep.subr.bf16.mxu0 0
  %7189 = vmatpush1.bf16.msra.mxu0 0
  %7190 = vmatprep.mubr.bf16.mxu0 0
  %7191 = vmatmul.mubr.bf16.gmra.mrb[0].mxu0 %v7156
  %v7192 = vpop.f32.mrb[0].mxu0
  %v7193 = vadd.f32 0.0, %v7192
  %v7194 = vpop.f32.mrb[0].mxu0
  %v7195 = vadd.f32 0.0, %v7194
  %v7196 = vpop.f32.mrb[0].mxu0
  %v7197 = vadd.f32 0.0, %v7196
  %v7198 = vpop.f32.mrb[0].mxu0
  %v7199 = vadd.f32 0.0, %v7198
  %7200 = vdwg.mxu0
  %7201 = vmatprep.subr.bf16.mxu0 %v7126
  %7202 = vmatpush1.bf16.msra.mxu0 %v7125
  %7203 = vmatprep.subr.bf16.mxu0 %v7130
  %7204 = vmatpush1.bf16.msra.mxu0 %v7129
  %7205 = vmatprep.subr.bf16.mxu0 %v7134
  %7206 = vmatpush1.bf16.msra.mxu0 %v7133
  %7207 = vmatprep.subr.bf16.mxu0 %v7138
  %7208 = vmatpush1.bf16.msra.mxu0 %v7137
  %7209 = vmatprep.subr.bf16.mxu0 0
  %7210 = vmatpush1.bf16.msra.mxu0 0
  %7211 = vmatprep.subr.bf16.mxu0 0
  %7212 = vmatpush1.bf16.msra.mxu0 0
  %7213 = vmatprep.subr.bf16.mxu0 0
  %7214 = vmatpush1.bf16.msra.mxu0 0
  %7215 = vmatprep.subr.bf16.mxu0 0
  %7216 = vmatpush1.bf16.msra.mxu0 0
  %7217 = vmatprep.subr.bf16.mxu0 0
  %7218 = vmatpush1.bf16.msra.mxu0 0
  %7219 = vmatprep.subr.bf16.mxu0 0
  %7220 = vmatpush1.bf16.msra.mxu0 0
  %7221 = vmatprep.subr.bf16.mxu0 0
  %7222 = vmatpush1.bf16.msra.mxu0 0
  %7223 = vmatprep.subr.bf16.mxu0 0
  %7224 = vmatpush1.bf16.msra.mxu0 0
  %7225 = vmatprep.subr.bf16.mxu0 0
  %7226 = vmatpush1.bf16.msra.mxu0 0
  %7227 = vmatprep.subr.bf16.mxu0 0
  %7228 = vmatpush1.bf16.msra.mxu0 0
  %7229 = vmatprep.subr.bf16.mxu0 0
  %7230 = vmatpush1.bf16.msra.mxu0 0
  %7231 = vmatprep.subr.bf16.mxu0 0
  %7232 = vmatpush1.bf16.msra.mxu0 0
  %7233 = vmatprep.mubr.bf16.mxu0 0
  %7234 = vmatmul.mubr.bf16.gmra.mrb[0].mxu0 %v7156
  %v7235 = vpop.f32.mrb[0].mxu0
  %v7236 = vadd.f32 0.0, %v7235
  %v7237 = vpop.f32.mrb[0].mxu0
  %v7238 = vadd.f32 0.0, %v7237
  %v7239 = vpop.f32.mrb[0].mxu0
  %v7240 = vadd.f32 0.0, %v7239
  %v7241 = vpop.f32.mrb[0].mxu0
  %v7242 = vadd.f32 0.0, %v7241
  %7243 = vdwg.mxu0
  %v7244 = vadd.f32 %v7051, %v7193
  %v7245 = vadd.f32 %v7052, %v7195
  %v7246 = vadd.f32 %v7053, %v7236
  %v7247 = vadd.f32 %v7054, %v7238
  %v7248 = vadd.f32 %v7055, %v7197
  %v7249 = vadd.f32 %v7056, %v7199
  %v7250 = vadd.f32 %v7057, %v7240
  %v7251 = vadd.f32 %v7058, %v7242
  %v7252 = vld [vmem:[%s8 + $0x700] sm:$0xff]
  %v7253 = vld [vmem:[%s8 + $0x708] sm:$0xff]
  %v7254 = vld [vmem:[%s8 + $0x710] sm:$0xff]
  %v7255 = vld [vmem:[%s8 + $0x718] sm:$0xff]
  %v7256 = vld [vmem:[%s8 + $0x720] sm:$0xff]
  %v7257 = vld [vmem:[%s8 + $0x728] sm:$0xff]
  %v7258 = vld [vmem:[%s8 + $0x730] sm:$0xff]
  %v7259 = vld [vmem:[%s8 + $0x738] sm:$0xff]
  %v7260 = vld [vmem:[%s8 + $0x740] sm:$0xff]
  %v7261 = vld [vmem:[%s8 + $0x748] sm:$0xff]
  %v7262 = vld [vmem:[%s8 + $0x750] sm:$0xff]
  %v7263 = vld [vmem:[%s8 + $0x758] sm:$0xff]
  %v7264 = vld [vmem:[%s8 + $0x760] sm:$0xff]
  %v7265 = vld [vmem:[%s8 + $0x768] sm:$0xff]
  %v7266 = vld [vmem:[%s8 + $0x770] sm:$0xff]
  %v7267 = vld [vmem:[%s8 + $0x778] sm:$0xff]
  %v7284 = vunpack.c.l.b16 %v7252
  %v7285 = vunpack.c.h.b16 %v7252
  %v7286 = vunpack.c.l.b16 %v7253
  %v7287 = vunpack.c.h.b16 %v7253
  %v7288 = vunpack.c.l.b16 %v7254
  %v7289 = vunpack.c.h.b16 %v7254
  %v7290 = vunpack.c.l.b16 %v7255
  %v7291 = vunpack.c.h.b16 %v7255
  %v7292 = vunpack.c.l.b16 %v7256
  %v7293 = vunpack.c.h.b16 %v7256
  %v7294 = vunpack.c.l.b16 %v7257
  %v7295 = vunpack.c.h.b16 %v7257
  %v7296 = vunpack.c.l.b16 %v7258
  %v7297 = vunpack.c.h.b16 %v7258
  %v7298 = vunpack.c.l.b16 %v7259
  %v7299 = vunpack.c.h.b16 %v7259
  %v7300 = vunpack.c.l.b16 %v7260
  %v7301 = vunpack.c.h.b16 %v7260
  %v7302 = vunpack.c.l.b16 %v7261
  %v7303 = vunpack.c.h.b16 %v7261
  %v7304 = vunpack.c.l.b16 %v7262
  %v7305 = vunpack.c.h.b16 %v7262
  %v7306 = vunpack.c.l.b16 %v7263
  %v7307 = vunpack.c.h.b16 %v7263
  %v7308 = vunpack.c.l.b16 %v7264
  %v7309 = vunpack.c.h.b16 %v7264
  %v7310 = vunpack.c.l.b16 %v7265
  %v7311 = vunpack.c.h.b16 %v7265
  %v7312 = vunpack.c.l.b16 %v7266
  %v7313 = vunpack.c.h.b16 %v7266
  %v7314 = vunpack.c.l.b16 %v7267
  %v7315 = vunpack.c.h.b16 %v7267
  %v7316 = vpack.c.b16 %v7288, %v7284
  %v7317 = vpack.c.b16 %v7289, %v7285
  %v7318 = vpack.c.b16 %v7290, %v7286
  %v7319 = vpack.c.b16 %v7291, %v7287
  %v7320 = vpack.c.b16 %v7296, %v7292
  %v7321 = vpack.c.b16 %v7297, %v7293
  %v7322 = vpack.c.b16 %v7298, %v7294
  %v7323 = vpack.c.b16 %v7299, %v7295
  %v7324 = vpack.c.b16 %v7304, %v7300
  %v7325 = vpack.c.b16 %v7305, %v7301
  %v7326 = vpack.c.b16 %v7306, %v7302
  %v7327 = vpack.c.b16 %v7307, %v7303
  %v7328 = vpack.c.b16 %v7312, %v7308
  %v7329 = vpack.c.b16 %v7313, %v7309
  %v7330 = vpack.c.b16 %v7314, %v7310
  %v7331 = vpack.c.b16 %v7315, %v7311
  %v7349 = vsel %vm1902, %v4564, 0
  %7351 = vmatprep.subr.bf16.mxu0 %v7317
  %7352 = vmatpush1.bf16.msra.mxu0 %v7316
  %7353 = vmatprep.subr.bf16.mxu0 %v7321
  %7354 = vmatpush1.bf16.msra.mxu0 %v7320
  %7355 = vmatprep.subr.bf16.mxu0 %v7325
  %7356 = vmatpush1.bf16.msra.mxu0 %v7324
  %7357 = vmatprep.subr.bf16.mxu0 %v7329
  %7358 = vmatpush1.bf16.msra.mxu0 %v7328
  %7359 = vmatprep.subr.bf16.mxu0 0
  %7360 = vmatpush1.bf16.msra.mxu0 0
  %7361 = vmatprep.subr.bf16.mxu0 0
  %7362 = vmatpush1.bf16.msra.mxu0 0
  %7363 = vmatprep.subr.bf16.mxu0 0
  %7364 = vmatpush1.bf16.msra.mxu0 0
  %7365 = vmatprep.subr.bf16.mxu0 0
  %7366 = vmatpush1.bf16.msra.mxu0 0
  %7367 = vmatprep.subr.bf16.mxu0 0
  %7368 = vmatpush1.bf16.msra.mxu0 0
  %7369 = vmatprep.subr.bf16.mxu0 0
  %7370 = vmatpush1.bf16.msra.mxu0 0
  %7371 = vmatprep.subr.bf16.mxu0 0
  %7372 = vmatpush1.bf16.msra.mxu0 0
  %7373 = vmatprep.subr.bf16.mxu0 0
  %7374 = vmatpush1.bf16.msra.mxu0 0
  %7375 = vmatprep.subr.bf16.mxu0 0
  %7376 = vmatpush1.bf16.msra.mxu0 0
  %7377 = vmatprep.subr.bf16.mxu0 0
  %7378 = vmatpush1.bf16.msra.mxu0 0
  %7379 = vmatprep.subr.bf16.mxu0 0
  %7380 = vmatpush1.bf16.msra.mxu0 0
  %7381 = vmatprep.subr.bf16.mxu0 0
  %7382 = vmatpush1.bf16.msra.mxu0 0
  %7383 = vmatprep.mubr.bf16.mxu0 0
  %7384 = vmatmul.mubr.bf16.gmra.mrb[0].mxu0 %v7349
  %v7385 = vpop.f32.mrb[0].mxu0
  %v7386 = vadd.f32 0.0, %v7385
  %v7387 = vpop.f32.mrb[0].mxu0
  %v7388 = vadd.f32 0.0, %v7387
  %v7389 = vpop.f32.mrb[0].mxu0
  %v7390 = vadd.f32 0.0, %v7389
  %v7391 = vpop.f32.mrb[0].mxu0
  %v7392 = vadd.f32 0.0, %v7391
  %7393 = vdwg.mxu0
  %7394 = vmatprep.subr.bf16.mxu0 %v7319
  %7395 = vmatpush1.bf16.msra.mxu0 %v7318
  %7396 = vmatprep.subr.bf16.mxu0 %v7323
  %7397 = vmatpush1.bf16.msra.mxu0 %v7322
  %7398 = vmatprep.subr.bf16.mxu0 %v7327
  %7399 = vmatpush1.bf16.msra.mxu0 %v7326
  %7400 = vmatprep.subr.bf16.mxu0 %v7331
  %7401 = vmatpush1.bf16.msra.mxu0 %v7330
  %7402 = vmatprep.subr.bf16.mxu0 0
  %7403 = vmatpush1.bf16.msra.mxu0 0
  %7404 = vmatprep.subr.bf16.mxu0 0
  %7405 = vmatpush1.bf16.msra.mxu0 0
  %7406 = vmatprep.subr.bf16.mxu0 0
  %7407 = vmatpush1.bf16.msra.mxu0 0
  %7408 = vmatprep.subr.bf16.mxu0 0
  %7409 = vmatpush1.bf16.msra.mxu0 0
  %7410 = vmatprep.subr.bf16.mxu0 0
  %7411 = vmatpush1.bf16.msra.mxu0 0
  %7412 = vmatprep.subr.bf16.mxu0 0
  %7413 = vmatpush1.bf16.msra.mxu0 0
  %7414 = vmatprep.subr.bf16.mxu0 0
  %7415 = vmatpush1.bf16.msra.mxu0 0
  %7416 = vmatprep.subr.bf16.mxu0 0
  %7417 = vmatpush1.bf16.msra.mxu0 0
  %7418 = vmatprep.subr.bf16.mxu0 0
  %7419 = vmatpush1.bf16.msra.mxu0 0
  %7420 = vmatprep.subr.bf16.mxu0 0
  %7421 = vmatpush1.bf16.msra.mxu0 0
  %7422 = vmatprep.subr.bf16.mxu0 0
  %7423 = vmatpush1.bf16.msra.mxu0 0
  %7424 = vmatprep.subr.bf16.mxu0 0
  %7425 = vmatpush1.bf16.msra.mxu0 0
  %7426 = vmatprep.mubr.bf16.mxu0 0
  %7427 = vmatmul.mubr.bf16.gmra.mrb[0].mxu0 %v7349
  %v7428 = vpop.f32.mrb[0].mxu0
  %v7429 = vadd.f32 0.0, %v7428
  %v7430 = vpop.f32.mrb[0].mxu0
  %v7431 = vadd.f32 0.0, %v7430
  %v7432 = vpop.f32.mrb[0].mxu0
  %v7433 = vadd.f32 0.0, %v7432
  %v7434 = vpop.f32.mrb[0].mxu0
  %v7435 = vadd.f32 0.0, %v7434
  %7436 = vdwg.mxu0
  %v7437 = vadd.f32 %v7244, %v7386
  %v7438 = vadd.f32 %v7245, %v7388
  %v7439 = vadd.f32 %v7246, %v7429
  %v7440 = vadd.f32 %v7247, %v7431
  %v7441 = vadd.f32 %v7248, %v7390
  %v7442 = vadd.f32 %v7249, %v7392
  %v7443 = vadd.f32 %v7250, %v7433
  %v7444 = vadd.f32 %v7251, %v7435
  %v7445 = vld [vmem:[%s8 + $0x780] sm:$0xff]
  %v7446 = vld [vmem:[%s8 + $0x788] sm:$0xff]
  %v7447 = vld [vmem:[%s8 + $0x790] sm:$0xff]
  %v7448 = vld [vmem:[%s8 + $0x798] sm:$0xff]
  %v7449 = vld [vmem:[%s8 + $0x7a0] sm:$0xff]
  %v7450 = vld [vmem:[%s8 + $0x7a8] sm:$0xff]
  %v7451 = vld [vmem:[%s8 + $0x7b0] sm:$0xff]
  %v7452 = vld [vmem:[%s8 + $0x7b8] sm:$0xff]
  %v7453 = vld [vmem:[%s8 + $0x7c0] sm:$0xff]
  %v7454 = vld [vmem:[%s8 + $0x7c8] sm:$0xff]
  %v7455 = vld [vmem:[%s8 + $0x7d0] sm:$0xff]
  %v7456 = vld [vmem:[%s8 + $0x7d8] sm:$0xff]
  %v7457 = vld [vmem:[%s8 + $0x7e0] sm:$0xff]
  %v7458 = vld [vmem:[%s8 + $0x7e8] sm:$0xff]
  %v7459 = vld [vmem:[%s8 + $0x7f0] sm:$0xff]
  %v7460 = vld [vmem:[%s8 + $0x7f8] sm:$0xff]
  %v7477 = vunpack.c.l.b16 %v7445
  %v7478 = vunpack.c.h.b16 %v7445
  %v7479 = vunpack.c.l.b16 %v7446
  %v7480 = vunpack.c.h.b16 %v7446
  %v7481 = vunpack.c.l.b16 %v7447
  %v7482 = vunpack.c.h.b16 %v7447
  %v7483 = vunpack.c.l.b16 %v7448
  %v7484 = vunpack.c.h.b16 %v7448
  %v7485 = vunpack.c.l.b16 %v7449
  %v7486 = vunpack.c.h.b16 %v7449
  %v7487 = vunpack.c.l.b16 %v7450
  %v7488 = vunpack.c.h.b16 %v7450
  %v7489 = vunpack.c.l.b16 %v7451
  %v7490 = vunpack.c.h.b16 %v7451
  %v7491 = vunpack.c.l.b16 %v7452
  %v7492 = vunpack.c.h.b16 %v7452
  %v7493 = vunpack.c.l.b16 %v7453
  %v7494 = vunpack.c.h.b16 %v7453
  %v7495 = vunpack.c.l.b16 %v7454
  %v7496 = vunpack.c.h.b16 %v7454
  %v7497 = vunpack.c.l.b16 %v7455
  %v7498 = vunpack.c.h.b16 %v7455
  %v7499 = vunpack.c.l.b16 %v7456
  %v7500 = vunpack.c.h.b16 %v7456
  %v7501 = vunpack.c.l.b16 %v7457
  %v7502 = vunpack.c.h.b16 %v7457
  %v7503 = vunpack.c.l.b16 %v7458
  %v7504 = vunpack.c.h.b16 %v7458
  %v7505 = vunpack.c.l.b16 %v7459
  %v7506 = vunpack.c.h.b16 %v7459
  %v7507 = vunpack.c.l.b16 %v7460
  %v7508 = vunpack.c.h.b16 %v7460
  %v7509 = vpack.c.b16 %v7481, %v7477
  %v7510 = vpack.c.b16 %v7482, %v7478
  %v7511 = vpack.c.b16 %v7483, %v7479
  %v7512 = vpack.c.b16 %v7484, %v7480
  %v7513 = vpack.c.b16 %v7489, %v7485
  %v7514 = vpack.c.b16 %v7490, %v7486
  %v7515 = vpack.c.b16 %v7491, %v7487
  %v7516 = vpack.c.b16 %v7492, %v7488
  %v7517 = vpack.c.b16 %v7497, %v7493
  %v7518 = vpack.c.b16 %v7498, %v7494
  %v7519 = vpack.c.b16 %v7499, %v7495
  %v7520 = vpack.c.b16 %v7500, %v7496
  %v7521 = vpack.c.b16 %v7505, %v7501
  %v7522 = vpack.c.b16 %v7506, %v7502
  %v7523 = vpack.c.b16 %v7507, %v7503
  %v7524 = vpack.c.b16 %v7508, %v7504
  %v7542 = vsel %vm1902, %v4565, 0
  %7544 = vmatprep.subr.bf16.mxu0 %v7510
  %7545 = vmatpush1.bf16.msra.mxu0 %v7509
  %7546 = vmatprep.subr.bf16.mxu0 %v7514
  %7547 = vmatpush1.bf16.msra.mxu0 %v7513
  %7548 = vmatprep.subr.bf16.mxu0 %v7518
  %7549 = vmatpush1.bf16.msra.mxu0 %v7517
  %7550 = vmatprep.subr.bf16.mxu0 %v7522
  %7551 = vmatpush1.bf16.msra.mxu0 %v7521
  %7552 = vmatprep.subr.bf16.mxu0 0
  %7553 = vmatpush1.bf16.msra.mxu0 0
  %7554 = vmatprep.subr.bf16.mxu0 0
  %7555 = vmatpush1.bf16.msra.mxu0 0
  %7556 = vmatprep.subr.bf16.mxu0 0
  %7557 = vmatpush1.bf16.msra.mxu0 0
  %7558 = vmatprep.subr.bf16.mxu0 0
  %7559 = vmatpush1.bf16.msra.mxu0 0
  %7560 = vmatprep.subr.bf16.mxu0 0
  %7561 = vmatpush1.bf16.msra.mxu0 0
  %7562 = vmatprep.subr.bf16.mxu0 0
  %7563 = vmatpush1.bf16.msra.mxu0 0
  %7564 = vmatprep.subr.bf16.mxu0 0
  %7565 = vmatpush1.bf16.msra.mxu0 0
  %7566 = vmatprep.subr.bf16.mxu0 0
  %7567 = vmatpush1.bf16.msra.mxu0 0
  %7568 = vmatprep.subr.bf16.mxu0 0
  %7569 = vmatpush1.bf16.msra.mxu0 0
  %7570 = vmatprep.subr.bf16.mxu0 0
  %7571 = vmatpush1.bf16.msra.mxu0 0
  %7572 = vmatprep.subr.bf16.mxu0 0
  %7573 = vmatpush1.bf16.msra.mxu0 0
  %7574 = vmatprep.subr.bf16.mxu0 0
  %7575 = vmatpush1.bf16.msra.mxu0 0
  %7576 = vmatprep.mubr.bf16.mxu0 0
  %7577 = vmatmul.mubr.bf16.gmra.mrb[0].mxu0 %v7542
  %v7578 = vpop.f32.mrb[0].mxu0
  %v7579 = vadd.f32 0.0, %v7578
  %v7580 = vpop.f32.mrb[0].mxu0
  %v7581 = vadd.f32 0.0, %v7580
  %v7582 = vpop.f32.mrb[0].mxu0
  %v7583 = vadd.f32 0.0, %v7582
  %v7584 = vpop.f32.mrb[0].mxu0
  %v7585 = vadd.f32 0.0, %v7584
  %7586 = vdwg.mxu0
  %7587 = vmatprep.subr.bf16.mxu0 %v7512
  %7588 = vmatpush1.bf16.msra.mxu0 %v7511
  %7589 = vmatprep.subr.bf16.mxu0 %v7516
  %7590 = vmatpush1.bf16.msra.mxu0 %v7515
  %7591 = vmatprep.subr.bf16.mxu0 %v7520
  %7592 = vmatpush1.bf16.msra.mxu0 %v7519
  %7593 = vmatprep.subr.bf16.mxu0 %v7524
  %7594 = vmatpush1.bf16.msra.mxu0 %v7523
  %7595 = vmatprep.subr.bf16.mxu0 0
  %7596 = vmatpush1.bf16.msra.mxu0 0
  %7597 = vmatprep.subr.bf16.mxu0 0
  %7598 = vmatpush1.bf16.msra.mxu0 0
  %7599 = vmatprep.subr.bf16.mxu0 0
  %7600 = vmatpush1.bf16.msra.mxu0 0
  %7601 = vmatprep.subr.bf16.mxu0 0
  %7602 = vmatpush1.bf16.msra.mxu0 0
  %7603 = vmatprep.subr.bf16.mxu0 0
  %7604 = vmatpush1.bf16.msra.mxu0 0
  %7605 = vmatprep.subr.bf16.mxu0 0
  %7606 = vmatpush1.bf16.msra.mxu0 0
  %7607 = vmatprep.subr.bf16.mxu0 0
  %7608 = vmatpush1.bf16.msra.mxu0 0
  %7609 = vmatprep.subr.bf16.mxu0 0
  %7610 = vmatpush1.bf16.msra.mxu0 0
  %7611 = vmatprep.subr.bf16.mxu0 0
  %7612 = vmatpush1.bf16.msra.mxu0 0
  %7613 = vmatprep.subr.bf16.mxu0 0
  %7614 = vmatpush1.bf16.msra.mxu0 0
  %7615 = vmatprep.subr.bf16.mxu0 0
  %7616 = vmatpush1.bf16.msra.mxu0 0
  %7617 = vmatprep.subr.bf16.mxu0 0
  %7618 = vmatpush1.bf16.msra.mxu0 0
  %7619 = vmatprep.mubr.bf16.mxu0 0
  %7620 = vmatmul.mubr.bf16.gmra.mrb[0].mxu0 %v7542
  %v7621 = vpop.f32.mrb[0].mxu0
  %v7622 = vadd.f32 0.0, %v7621
  %v7623 = vpop.f32.mrb[0].mxu0
  %v7624 = vadd.f32 0.0, %v7623
  %v7625 = vpop.f32.mrb[0].mxu0
  %v7626 = vadd.f32 0.0, %v7625
  %v7627 = vpop.f32.mrb[0].mxu0
  %v7628 = vadd.f32 0.0, %v7627
  %7629 = vdwg.mxu0
  %v7630 = vadd.f32 %v7437, %v7579
  %v7631 = vadd.f32 %v7438, %v7581
  %v7632 = vadd.f32 %v7439, %v7622
  %v7633 = vadd.f32 %v7440, %v7624
  %v7634 = vadd.f32 %v7441, %v7583
  %v7635 = vadd.f32 %v7442, %v7585
  %v7636 = vadd.f32 %v7443, %v7626
  %v7637 = vadd.f32 %v7444, %v7628
  %v7638 = vld [vmem:[%s9] sm:$0xf]
  %v7640 = vlaneseq
  %v7641 = vshrl.u32 %v7640, 7
  %v7642 = vsub.s32 0, %v7641
  %v7643 = vrot.slane %v7638, %v7642
  %v7644 = vlaneseq
  %v7645 = vshrl.u32 %v7644, 7
  %v7646 = vsub.s32 1, %v7645
  %v7647 = vrot.slane %v7638, %v7646
  %v7648 = vlaneseq
  %v7649 = vshrl.u32 %v7648, 7
  %v7650 = vsub.s32 2, %v7649
  %v7651 = vrot.slane %v7638, %v7650
  %v7652 = vlaneseq
  %v7653 = vshrl.u32 %v7652, 7
  %v7654 = vsub.s32 3, %v7653
  %v7655 = vrot.slane %v7638, %v7654
  %v7660 = vadd.f32 %v7630, %v7643
  %v7661 = vadd.f32 %v7631, %v7647
  %v7662 = vadd.f32 %v7632, %v7651
  %v7663 = vadd.f32 %v7633, %v7655
  %v7664 = vadd.f32 %v7634, %v7643
  %v7665 = vadd.f32 %v7635, %v7647
  %v7666 = vadd.f32 %v7636, %v7651
  %v7667 = vadd.f32 %v7637, %v7655
  %v7668 = vmax.f32 %v7660, 0.0
  %v7669 = vmax.f32 %v7661, 0.0
  %v7670 = vmax.f32 %v7662, 0.0
  %v7671 = vmax.f32 %v7663, 0.0
  %v7672 = vmax.f32 %v7664, 0.0
  %v7673 = vmax.f32 %v7665, 0.0
  %v7674 = vmax.f32 %v7666, 0.0
  %v7675 = vmax.f32 %v7667, 0.0
  %v7676 = vpack.c.bf16 %v7672, %v7668
  %v7677 = vpack.c.bf16 %v7673, %v7669
  %v7678 = vpack.c.bf16 %v7674, %v7670
  %v7679 = vpack.c.bf16 %v7675, %v7671
  %v7680 = vld [vmem:[%s10] sm:$0xf]
  %v7681 = vld [vmem:[%s10 + $0x4] sm:$0xf]
  %v7682 = vld [vmem:[%s10 + $0x8] sm:$0xf]
  %v7683 = vld [vmem:[%s10 + $0xc] sm:$0xf]
  %v7684 = vld [vmem:[%s10 + $0x10] sm:$0xf]
  %v7685 = vld [vmem:[%s10 + $0x14] sm:$0xf]
  %v7686 = vld [vmem:[%s10 + $0x18] sm:$0xf]
  %v7687 = vld [vmem:[%s10 + $0x1c] sm:$0xf]
  %v7688 = vld [vmem:[%s10 + $0x20] sm:$0xf]
  %v7689 = vld [vmem:[%s10 + $0x24] sm:$0xf]
  %v7690 = vld [vmem:[%s10 + $0x28] sm:$0xf]
  %v7691 = vld [vmem:[%s10 + $0x2c] sm:$0xf]
  %v7692 = vld [vmem:[%s10 + $0x30] sm:$0xf]
  %v7693 = vld [vmem:[%s10 + $0x34] sm:$0xf]
  %v7694 = vld [vmem:[%s10 + $0x38] sm:$0xf]
  %v7695 = vld [vmem:[%s10 + $0x3c] sm:$0xf]
  %v7696 = vld [vmem:[%s10 + $0x40] sm:$0xf]
  %v7697 = vld [vmem:[%s10 + $0x44] sm:$0xf]
  %v7698 = vld [vmem:[%s10 + $0x48] sm:$0xf]
  %v7699 = vld [vmem:[%s10 + $0x4c] sm:$0xf]
  %v7700 = vld [vmem:[%s10 + $0x50] sm:$0xf]
  %v7701 = vld [vmem:[%s10 + $0x54] sm:$0xf]
  %v7702 = vld [vmem:[%s10 + $0x58] sm:$0xf]
  %v7703 = vld [vmem:[%s10 + $0x5c] sm:$0xf]
  %v7704 = vld [vmem:[%s10 + $0x60] sm:$0xf]
  %v7705 = vld [vmem:[%s10 + $0x64] sm:$0xf]
  %v7706 = vld [vmem:[%s10 + $0x68] sm:$0xf]
  %v7707 = vld [vmem:[%s10 + $0x6c] sm:$0xf]
  %v7708 = vld [vmem:[%s10 + $0x70] sm:$0xf]
  %v7709 = vld [vmem:[%s10 + $0x74] sm:$0xf]
  %v7710 = vld [vmem:[%s10 + $0x78] sm:$0xf]
  %v7711 = vld [vmem:[%s10 + $0x7c] sm:$0xf]
  %v7712 = vld [vmem:[%s10 + $0x80] sm:$0xf]
  %v7713 = vld [vmem:[%s10 + $0x84] sm:$0xf]
  %v7714 = vld [vmem:[%s10 + $0x88] sm:$0xf]
  %v7715 = vld [vmem:[%s10 + $0x8c] sm:$0xf]
  %v7716 = vld [vmem:[%s10 + $0x90] sm:$0xf]
  %v7717 = vld [vmem:[%s10 + $0x94] sm:$0xf]
  %v7718 = vld [vmem:[%s10 + $0x98] sm:$0xf]
  %v7719 = vld [vmem:[%s10 + $0x9c] sm:$0xf]
  %v7720 = vld [vmem:[%s10 + $0xa0] sm:$0xf]
  %v7721 = vld [vmem:[%s10 + $0xa4] sm:$0xf]
  %v7722 = vld [vmem:[%s10 + $0xa8] sm:$0xf]
  %v7723 = vld [vmem:[%s10 + $0xac] sm:$0xf]
  %v7724 = vld [vmem:[%s10 + $0xb0] sm:$0xf]
  %v7725 = vld [vmem:[%s10 + $0xb4] sm:$0xf]
  %v7726 = vld [vmem:[%s10 + $0xb8] sm:$0xf]
  %v7727 = vld [vmem:[%s10 + $0xbc] sm:$0xf]
  %v7728 = vld [vmem:[%s10 + $0xc0] sm:$0xf]
  %v7729 = vld [vmem:[%s10 + $0xc4] sm:$0xf]
  %v7730 = vld [vmem:[%s10 + $0xc8] sm:$0xf]
  %v7731 = vld [vmem:[%s10 + $0xcc] sm:$0xf]
  %v7732 = vld [vmem:[%s10 + $0xd0] sm:$0xf]
  %v7733 = vld [vmem:[%s10 + $0xd4] sm:$0xf]
  %v7734 = vld [vmem:[%s10 + $0xd8] sm:$0xf]
  %v7735 = vld [vmem:[%s10 + $0xdc] sm:$0xf]
  %v7736 = vld [vmem:[%s10 + $0xe0] sm:$0xf]
  %v7737 = vld [vmem:[%s10 + $0xe4] sm:$0xf]
  %v7738 = vld [vmem:[%s10 + $0xe8] sm:$0xf]
  %v7739 = vld [vmem:[%s10 + $0xec] sm:$0xf]
  %v7740 = vld [vmem:[%s10 + $0xf0] sm:$0xf]
  %v7741 = vld [vmem:[%s10 + $0xf4] sm:$0xf]
  %v7742 = vld [vmem:[%s10 + $0xf8] sm:$0xf]
  %v7743 = vld [vmem:[%s10 + $0xfc] sm:$0xf]
  %v7744 = vld [vmem:[%s11] sm:$0x1]
  %v7746 = vlaneseq
  %v7747 = vshrl.u32 %v7746, 7
  %v7748 = vsub.s32 0, %v7747
  %v7749 = vrot.slane %v7744, %v7748
  %v7815 = vunpack.c.l.b16 %v7680
  %v7816 = vunpack.c.l.b16 %v7681
  %v7817 = vunpack.c.l.b16 %v7682
  %v7818 = vunpack.c.l.b16 %v7683
  %v7819 = vunpack.c.l.b16 %v7684
  %v7820 = vunpack.c.l.b16 %v7685
  %v7821 = vunpack.c.l.b16 %v7686
  %v7822 = vunpack.c.l.b16 %v7687
  %v7823 = vunpack.c.l.b16 %v7688
  %v7824 = vunpack.c.l.b16 %v7689
  %v7825 = vunpack.c.l.b16 %v7690
  %v7826 = vunpack.c.l.b16 %v7691
  %v7827 = vunpack.c.l.b16 %v7692
  %v7828 = vunpack.c.l.b16 %v7693
  %v7829 = vunpack.c.l.b16 %v7694
  %v7830 = vunpack.c.l.b16 %v7695
  %v7831 = vunpack.c.l.b16 %v7696
  %v7832 = vunpack.c.l.b16 %v7697
  %v7833 = vunpack.c.l.b16 %v7698
  %v7834 = vunpack.c.l.b16 %v7699
  %v7835 = vunpack.c.l.b16 %v7700
  %v7836 = vunpack.c.l.b16 %v7701
  %v7837 = vunpack.c.l.b16 %v7702
  %v7838 = vunpack.c.l.b16 %v7703
  %v7839 = vunpack.c.l.b16 %v7704
  %v7840 = vunpack.c.l.b16 %v7705
  %v7841 = vunpack.c.l.b16 %v7706
  %v7842 = vunpack.c.l.b16 %v7707
  %v7843 = vunpack.c.l.b16 %v7708
  %v7844 = vunpack.c.l.b16 %v7709
  %v7845 = vunpack.c.l.b16 %v7710
  %v7846 = vunpack.c.l.b16 %v7711
  %v7847 = vunpack.c.l.b16 %v7712
  %v7848 = vunpack.c.l.b16 %v7713
  %v7849 = vunpack.c.l.b16 %v7714
  %v7850 = vunpack.c.l.b16 %v7715
  %v7851 = vunpack.c.l.b16 %v7716
  %v7852 = vunpack.c.l.b16 %v7717
  %v7853 = vunpack.c.l.b16 %v7718
  %v7854 = vunpack.c.l.b16 %v7719
  %v7855 = vunpack.c.l.b16 %v7720
  %v7856 = vunpack.c.l.b16 %v7721
  %v7857 = vunpack.c.l.b16 %v7722
  %v7858 = vunpack.c.l.b16 %v7723
  %v7859 = vunpack.c.l.b16 %v7724
  %v7860 = vunpack.c.l.b16 %v7725
  %v7861 = vunpack.c.l.b16 %v7726
  %v7862 = vunpack.c.l.b16 %v7727
  %v7863 = vunpack.c.l.b16 %v7728
  %v7864 = vunpack.c.l.b16 %v7729
  %v7865 = vunpack.c.l.b16 %v7730
  %v7866 = vunpack.c.l.b16 %v7731
  %v7867 = vunpack.c.l.b16 %v7732
  %v7868 = vunpack.c.l.b16 %v7733
  %v7869 = vunpack.c.l.b16 %v7734
  %v7870 = vunpack.c.l.b16 %v7735
  %v7871 = vunpack.c.l.b16 %v7736
  %v7872 = vunpack.c.l.b16 %v7737
  %v7873 = vunpack.c.l.b16 %v7738
  %v7874 = vunpack.c.l.b16 %v7739
  %v7875 = vunpack.c.l.b16 %v7740
  %v7876 = vunpack.c.l.b16 %v7741
  %v7877 = vunpack.c.l.b16 %v7742
  %v7878 = vunpack.c.l.b16 %v7743
  %v7879 = vpack.c.b16 %v7816, %v7815
  %v7880 = vpack.c.b16 %v7818, %v7817
  %v7881 = vpack.c.b16 %v7820, %v7819
  %v7882 = vpack.c.b16 %v7822, %v7821
  %v7883 = vpack.c.b16 %v7824, %v7823
  %v7884 = vpack.c.b16 %v7826, %v7825
  %v7885 = vpack.c.b16 %v7828, %v7827
  %v7886 = vpack.c.b16 %v7830, %v7829
  %v7887 = vpack.c.b16 %v7832, %v7831
  %v7888 = vpack.c.b16 %v7834, %v7833
  %v7889 = vpack.c.b16 %v7836, %v7835
  %v7890 = vpack.c.b16 %v7838, %v7837
  %v7891 = vpack.c.b16 %v7840, %v7839
  %v7892 = vpack.c.b16 %v7842, %v7841
  %v7893 = vpack.c.b16 %v7844, %v7843
  %v7894 = vpack.c.b16 %v7846, %v7845
  %v7895 = vpack.c.b16 %v7848, %v7847
  %v7896 = vpack.c.b16 %v7850, %v7849
  %v7897 = vpack.c.b16 %v7852, %v7851
  %v7898 = vpack.c.b16 %v7854, %v7853
  %v7899 = vpack.c.b16 %v7856, %v7855
  %v7900 = vpack.c.b16 %v7858, %v7857
  %v7901 = vpack.c.b16 %v7860, %v7859
  %v7902 = vpack.c.b16 %v7862, %v7861
  %v7903 = vpack.c.b16 %v7864, %v7863
  %v7904 = vpack.c.b16 %v7866, %v7865
  %v7905 = vpack.c.b16 %v7868, %v7867
  %v7906 = vpack.c.b16 %v7870, %v7869
  %v7907 = vpack.c.b16 %v7872, %v7871
  %v7908 = vpack.c.b16 %v7874, %v7873
  %v7909 = vpack.c.b16 %v7876, %v7875
  %v7910 = vpack.c.b16 %v7878, %v7877
  %7943 = vmatprep.subr.bf16.mxu0 0
  %7944 = vmatpush1.bf16.msra.mxu0 %v7879
  %7945 = vmatprep.subr.bf16.mxu0 0
  %7946 = vmatpush1.bf16.msra.mxu0 %v7880
  %7947 = vmatprep.subr.bf16.mxu0 0
  %7948 = vmatpush1.bf16.msra.mxu0 %v7881
  %7949 = vmatprep.subr.bf16.mxu0 0
  %7950 = vmatpush1.bf16.msra.mxu0 %v7882
  %7951 = vmatprep.subr.bf16.mxu0 0
  %7952 = vmatpush1.bf16.msra.mxu0 %v7883
  %7953 = vmatprep.subr.bf16.mxu0 0
  %7954 = vmatpush1.bf16.msra.mxu0 %v7884
  %7955 = vmatprep.subr.bf16.mxu0 0
  %7956 = vmatpush1.bf16.msra.mxu0 %v7885
  %7957 = vmatprep.subr.bf16.mxu0 0
  %7958 = vmatpush1.bf16.msra.mxu0 %v7886
  %7959 = vmatprep.subr.bf16.mxu0 0
  %7960 = vmatpush1.bf16.msra.mxu0 %v7887
  %7961 = vmatprep.subr.bf16.mxu0 0
  %7962 = vmatpush1.bf16.msra.mxu0 %v7888
  %7963 = vmatprep.subr.bf16.mxu0 0
  %7964 = vmatpush1.bf16.msra.mxu0 %v7889
  %7965 = vmatprep.subr.bf16.mxu0 0
  %7966 = vmatpush1.bf16.msra.mxu0 %v7890
  %7967 = vmatprep.subr.bf16.mxu0 0
  %7968 = vmatpush1.bf16.msra.mxu0 %v7891
  %7969 = vmatprep.subr.bf16.mxu0 0
  %7970 = vmatpush1.bf16.msra.mxu0 %v7892
  %7971 = vmatprep.subr.bf16.mxu0 0
  %7972 = vmatpush1.bf16.msra.mxu0 %v7893
  %7973 = vmatprep.subr.bf16.mxu0 0
  %7974 = vmatpush1.bf16.msra.mxu0 %v7894
  %7975 = vmatprep.mubr.bf16.mxu0 %v7677
  %7976 = vmatmul.mubr.bf16.gmra.mrb[0].mxu0 %v7676
  %v7977 = vpop.f32.mrb[0].mxu0
  %v7978 = vadd.f32 %v7749, %v7977
  %v7979 = vpop.f32.mrb[0].mxu0
  %v7980 = vpop.f32.mrb[0].mxu0
  %v7981 = vadd.f32 %v7749, %v7980
  %v7982 = vpop.f32.mrb[0].mxu0
  %7983 = vdwg.mxu0
  %7984 = vmatprep.subr.bf16.mxu0 0
  %7985 = vmatpush1.bf16.msra.mxu0 %v7895
  %7986 = vmatprep.subr.bf16.mxu0 0
  %7987 = vmatpush1.bf16.msra.mxu0 %v7896
  %7988 = vmatprep.subr.bf16.mxu0 0
  %7989 = vmatpush1.bf16.msra.mxu0 %v7897
  %7990 = vmatprep.subr.bf16.mxu0 0
  %7991 = vmatpush1.bf16.msra.mxu0 %v7898
  %7992 = vmatprep.subr.bf16.mxu0 0
  %7993 = vmatpush1.bf16.msra.mxu0 %v7899
  %7994 = vmatprep.subr.bf16.mxu0 0
  %7995 = vmatpush1.bf16.msra.mxu0 %v7900
  %7996 = vmatprep.subr.bf16.mxu0 0
  %7997 = vmatpush1.bf16.msra.mxu0 %v7901
  %7998 = vmatprep.subr.bf16.mxu0 0
  %7999 = vmatpush1.bf16.msra.mxu0 %v7902
  %8000 = vmatprep.subr.bf16.mxu0 0
  %8001 = vmatpush1.bf16.msra.mxu0 %v7903
  %8002 = vmatprep.subr.bf16.mxu0 0
  %8003 = vmatpush1.bf16.msra.mxu0 %v7904
  %8004 = vmatprep.subr.bf16.mxu0 0
  %8005 = vmatpush1.bf16.msra.mxu0 %v7905
  %8006 = vmatprep.subr.bf16.mxu0 0
  %8007 = vmatpush1.bf16.msra.mxu0 %v7906
  %8008 = vmatprep.subr.bf16.mxu0 0
  %8009 = vmatpush1.bf16.msra.mxu0 %v7907
  %8010 = vmatprep.subr.bf16.mxu0 0
  %8011 = vmatpush1.bf16.msra.mxu0 %v7908
  %8012 = vmatprep.subr.bf16.mxu0 0
  %8013 = vmatpush1.bf16.msra.mxu0 %v7909
  %8014 = vmatprep.subr.bf16.mxu0 0
  %8015 = vmatpush1.bf16.msra.mxu0 %v7910
  %8016 = vmatprep.mubr.bf16.mxu0 %v7679
  %8017 = vmatmul.mubr.bf16.gmra.mrb[0].mxu0 %v7678
  %v8018 = vpop.f32.mrb[0].mxu0
  %v8019 = vadd.f32 %v7978, %v8018
  %v8020 = vpop.f32.mrb[0].mxu0
  %v8021 = vpop.f32.mrb[0].mxu0
  %v8022 = vadd.f32 %v7981, %v8021
  %v8023 = vpop.f32.mrb[0].mxu0
  %8024 = vdwg.mxu0
  %8025 = vst [vmem:[%s12] sm:$0xff] %v8019
  %8026 = vst [vmem:[%s12 + $0x8] sm:$0xff] %v8022
  // Predicated region
  $region50: #{net_c_mnist_forward.1} parent=0 // pred_check
    _
  $region51: #{net_c_mnist_forward.1} parent=0 // pred_check_branch
    %8028 = sbr.rel (0) target = $region53
  $region52: #{net_c_mnist_forward.1} parent=0 // pred_region
    _
  $region53: #{net_c_mnist_forward.1} parent=0 // pred_fallthru
    _
  // Predicated region
  $region54: #{net_c_mnist_forward.1} parent=0 // pred_check
    _
  $region55: #{net_c_mnist_forward.1} parent=0 // pred_check_branch
    %8030 = sbr.rel (0) target = $region57
  $region56: #{net_c_mnist_forward.1} parent=0 // pred_region
    _
  $region57: #{net_c_mnist_forward.1} parent=0 // pred_fallthru
    _

</llo_original>
